<compile_context>
chip_gen: v5e
topology: v5e:2x2
jax: 0.10.0
libtpu: 0.0.40
codegen_flags: <defaults>
</compile_context>

<pallas_src>
import functools

import jax
import jax.numpy as jnp
import numpy as np
from jax.experimental import pallas as pl
from jax.experimental.pallas import tpu as pltpu

BN_EPS = 1e-5


# --------------------------- BN folding helper ------------------------------ #

def _fold_bn(p, extra_scale=1.0):
    """Fold conv bias + BatchNorm(eval) into (scale, bias): relu(acc*scale+bias)."""
    scale = p["gamma"] / jnp.sqrt(p["var"] + BN_EPS)
    bias = p["beta"] + (p["b"] - p["mean"]) * scale
    return (scale * extra_scale).astype(jnp.float32), bias.astype(jnp.float32)


# ----------------------------- Pallas kernels ------------------------------- #

def _matmul_bn_relu_kernel(x_ref, w_ref, scale_ref, bias_ref, o_ref):
    # relu((x @ w) * scale + bias) -- 1x1 conv (as matmul) + folded BN + ReLU
    acc = jnp.dot(x_ref[...], w_ref[...], preferred_element_type=jnp.float32)
    o_ref[...] = jnp.maximum(acc * scale_ref[...] + bias_ref[...],
                             0.0).astype(o_ref.dtype)


def matmul_bn_relu(x, w, scale, bias, out_dtype=jnp.bfloat16):
    """relu((x @ w) * scale + bias); x: (M, K) bf16, w: (K, N) bf16."""
    M, K = x.shape
    Nout = w.shape[1]
    # Row tile: aim for >= 2 grid steps (megacore / pipelining), cap at 512.
    half = (M + 1) // 2
    tm = min(512, max(8, ((half + 7) // 8) * 8))
    tm = min(tm, max(8, ((M + 7) // 8) * 8))
    Mp = ((M + tm - 1) // tm) * tm
    if Mp != M:
        x = jnp.pad(x, ((0, Mp - M), (0, 0)))
    out = pl.pallas_call(
        _matmul_bn_relu_kernel,
        out_shape=jax.ShapeDtypeStruct((Mp, Nout), out_dtype),
        grid_spec=pltpu.PrefetchScalarGridSpec(
            num_scalar_prefetch=0,
            grid=(Mp // tm,),
            in_specs=[
                pl.BlockSpec((tm, K), lambda i: (i, 0)),
                pl.BlockSpec((K, Nout), lambda i: (0, 0)),
                pl.BlockSpec((1, Nout), lambda i: (0, 0)),
                pl.BlockSpec((1, Nout), lambda i: (0, 0)),
            ],
            out_specs=pl.BlockSpec((tm, Nout), lambda i: (i, 0)),
        ),
        compiler_params=pltpu.CompilerParams(dimension_semantics=("parallel",)),
    )(x, w, scale.reshape(1, Nout), bias.reshape(1, Nout))
    return out[:M]


def _conv_tap_kernel(x_ref, w_ref, scale_ref, bias_ref, o_ref, *, ntaps, axis):
    # Factorized (kh x 1) or (1 x kw) conv: accumulate `ntaps` shifted-window
    # matmuls over the padded VMEM tile (Cin stays the contraction dim -- no
    # im2col blow-up in HBM).
    _, Ho, Wo, Cout = o_ref.shape
    Cin = x_ref.shape[3]
    xv = x_ref[0]                                       # (Hp, Wp, Cin) bf16
    acc = jnp.zeros((Ho * Wo, Cout), jnp.float32)
    for t in range(ntaps):
        if axis == 1:                                   # (kh, 1) vertical taps
            tap = xv[t:t + Ho, :, :]
        else:                                           # (1, kw) horizontal taps
            tap = xv[:, t:t + Wo, :]
        acc = acc + jnp.dot(tap.reshape(Ho * Wo, Cin), w_ref[t],
                            preferred_element_type=jnp.float32)
    out = jnp.maximum(acc * scale_ref[...] + bias_ref[...], 0.0)
    o_ref[...] = out.reshape(o_ref.shape).astype(o_ref.dtype)


def conv_tap_bn_relu(x, p, out_dtype=jnp.bfloat16):
    """Conv2d with (kh,1)/(1,kw) kernel, stride 1, 'same' pad on the long axis,
    fused with folded BN + ReLU.  x: NHWC (bf16)."""
    N, H, W, Cin = x.shape
    kh, kw, _, Cout = p["w"].shape
    assert kh == 1 or kw == 1
    if kw == 1:                                         # (kh, 1), pad (kh//2, 0)
        ntaps, axis = kh, 1
        ph = kh // 2
        xp = jnp.pad(x, ((0, 0), (ph, ph), (0, 0), (0, 0)))
        wk = p["w"][:, 0]                               # (kh, Cin, Cout)
    else:                                               # (1, kw), pad (0, kw//2)
        ntaps, axis = kw, 2
        pw = kw // 2
        xp = jnp.pad(x, ((0, 0), (0, 0), (pw, pw), (0, 0)))
        wk = p["w"][0]                                  # (kw, Cin, Cout)
    scale, bias = _fold_bn(p)
    Hp, Wp = xp.shape[1], xp.shape[2]
    kernel = functools.partial(_conv_tap_kernel, ntaps=ntaps, axis=axis)
    return pl.pallas_call(
        kernel,
        out_shape=jax.ShapeDtypeStruct((N, H, W, Cout), out_dtype),
        grid_spec=pltpu.PrefetchScalarGridSpec(
            num_scalar_prefetch=0,
            grid=(N,),
            in_specs=[
                pl.BlockSpec((1, Hp, Wp, Cin), lambda b: (b, 0, 0, 0)),
                pl.BlockSpec((ntaps, Cin, Cout), lambda b: (0, 0, 0)),
                pl.BlockSpec((1, Cout), lambda b: (0, 0)),
                pl.BlockSpec((1, Cout), lambda b: (0, 0)),
            ],
            out_specs=pl.BlockSpec((1, H, W, Cout), lambda b: (b, 0, 0, 0)),
        ),
        compiler_params=pltpu.CompilerParams(dimension_semantics=("parallel",)),
    )(xp.astype(jnp.bfloat16), wk.astype(jnp.bfloat16),
      scale.reshape(1, Cout), bias.reshape(1, Cout))


def _avgpool_conv_bn_relu_kernel(x_ref, w_ref, scale_ref, bias_ref, o_ref):
    # Fused AvgPool2d(3, s=1, p=1) + 1x1 conv + folded BN + ReLU.
    # The 1/9 pool factor is folded into scale_ref by the wrapper.
    _, Ho, Wo, Cout = o_ref.shape
    Cin = x_ref.shape[3]
    xv = x_ref[0]                                       # (H+2, W+2, Cin) bf16
    # separable 3x3 sum: 3 taps along W, then 3 taps along H (f32 accumulate)
    rowsum = (xv[:, 0:Wo, :].astype(jnp.float32)
              + xv[:, 1:Wo + 1, :] + xv[:, 2:Wo + 2, :])        # (H+2, W, Cin)
    pooled = rowsum[0:Ho] + rowsum[1:Ho + 1] + rowsum[2:Ho + 2]  # (H, W, Cin)
    acc = jnp.dot(pooled.reshape(Ho * Wo, Cin).astype(jnp.bfloat16), w_ref[...],
                  preferred_element_type=jnp.float32)
    out = jnp.maximum(acc * scale_ref[...] + bias_ref[...], 0.0)
    o_ref[...] = out.reshape(o_ref.shape).astype(o_ref.dtype)


def avgpool_conv_bn_relu(x, p, out_dtype=jnp.bfloat16):
    """nn.AvgPool2d(3,1,1) followed by 1x1 Conv+BN+ReLU, as one kernel."""
    N, H, W, Cin = x.shape
    Cout = p["w"].shape[-1]
    xp = jnp.pad(x, ((0, 0), (1, 1), (1, 1), (0, 0)))
    scale, bias = _fold_bn(p, extra_scale=1.0 / 9.0)    # fold pool's 1/9
    wmat = p["w"].reshape(Cin, Cout).astype(jnp.bfloat16)
    return pl.pallas_call(
        _avgpool_conv_bn_relu_kernel,
        out_shape=jax.ShapeDtypeStruct((N, H, W, Cout), out_dtype),
        grid_spec=pltpu.PrefetchScalarGridSpec(
            num_scalar_prefetch=0,
            grid=(N,),
            in_specs=[
                pl.BlockSpec((1, H + 2, W + 2, Cin), lambda b: (b, 0, 0, 0)),
                pl.BlockSpec((Cin, Cout), lambda b: (0, 0)),
                pl.BlockSpec((1, Cout), lambda b: (0, 0)),
                pl.BlockSpec((1, Cout), lambda b: (0, 0)),
            ],
            out_specs=pl.BlockSpec((1, H, W, Cout), lambda b: (b, 0, 0, 0)),
        ),
        compiler_params=pltpu.CompilerParams(dimension_semantics=("parallel",)),
    )(xp.astype(jnp.bfloat16), wmat,
      scale.reshape(1, Cout), bias.reshape(1, Cout))


def head_1x1_bn_relu(x, plist, out_dtype=jnp.bfloat16):
    """Fuse several 1x1 Conv+BN+ReLU layers that share the same input into a
    single lane-dense matmul (weights concatenated along Cout), then split."""
    N, H, W, Cin = x.shape
    ws, scales, biases, splits = [], [], [], []
    for p in plist:
        Cout = p["w"].shape[-1]
        ws.append(p["w"].reshape(Cin, Cout))
        s, b = _fold_bn(p)
        scales.append(s)
        biases.append(b)
        splits.append(Cout)
    wcat = jnp.concatenate(ws, axis=1).astype(jnp.bfloat16)
    scat = jnp.concatenate(scales)
    bcat = jnp.concatenate(biases)
    out = matmul_bn_relu(x.reshape(N * H * W, Cin).astype(jnp.bfloat16),
                         wcat, scat, bcat, out_dtype)
    out = out.reshape(N, H, W, sum(splits))
    parts, off = [], 0
    for c in splits:
        parts.append(out[..., off:off + c])
        off += c
    return parts


# ------------------------------ block forward ------------------------------- #

def block2_module_b(x_nchw, params):
    x = jnp.transpose(x_nchw, (0, 2, 3, 1)).astype(jnp.bfloat16)  # NCHW -> NHWC
    # fused head: b1 (->192), b2_0 (->mid), b3_0 (->mid) share input x
    b1, b2, b3 = head_1x1_bn_relu(
        x, [params["b1"], params["b2_0"], params["b3_0"]])
    # branch2: (1,7) pad (0,3) -> (7,1) pad (3,0) -> 192
    b2 = conv_tap_bn_relu(b2, params["b2_1"])
    b2 = conv_tap_bn_relu(b2, params["b2_2"])
    # branch3: (7,1) -> (1,7) -> (7,1) -> (1,7) -> 192
    b3 = conv_tap_bn_relu(b3, params["b3_1"])
    b3 = conv_tap_bn_relu(b3, params["b3_2"])
    b3 = conv_tap_bn_relu(b3, params["b3_3"])
    b3 = conv_tap_bn_relu(b3, params["b3_4"])
    # branch4: fused avgpool 3x3/1/1 + 1x1 (768 -> 192)
    b4 = avgpool_conv_bn_relu(x, params["b4"])
    # TODO(synk): write branch outputs directly into channel slices of one
    # 768-wide slab to skip this concat copy (needs chained I/O aliasing).
    out = jnp.concatenate([b1, b2, b3, b4], axis=-1)
    return jnp.transpose(out, (0, 3, 1, 2)).astype(jnp.float32)   # NHWC -> NCHW


# --------------------------- deterministic init ------------------------------ #

def init_conv_bn(key, kh, kw, cin, cout):
    ks = jax.random.split(key, 6)
    return dict(
        w=0.05 * jax.random.normal(ks[0], (kh, kw, cin, cout), jnp.float32),
        b=0.05 * jax.random.normal(ks[1], (cout,), jnp.float32),
        gamma=1.0 + 0.1 * jax.random.normal(ks[2], (cout,), jnp.float32),
        beta=0.1 * jax.random.normal(ks[3], (cout,), jnp.float32),
        mean=0.1 * jax.random.normal(ks[4], (cout,), jnp.float32),
        var=0.5 + jnp.abs(jax.random.normal(ks[5], (cout,), jnp.float32)),
    )


def init_params(key, input_channel, middle_channel):
    keys = jax.random.split(key, 10)
    return {
        "b1":   init_conv_bn(keys[0], 1, 1, input_channel, 192),
        "b2_0": init_conv_bn(keys[1], 1, 1, input_channel, middle_channel),
        "b2_1": init_conv_bn(keys[2], 1, 7, middle_channel, middle_channel),
        "b2_2": init_conv_bn(keys[3], 7, 1, middle_channel, 192),
        "b3_0": init_conv_bn(keys[4], 1, 1, input_channel, middle_channel),
        "b3_1": init_conv_bn(keys[5], 7, 1, middle_channel, middle_channel),
        "b3_2": init_conv_bn(keys[6], 1, 7, middle_channel, middle_channel),
        "b3_3": init_conv_bn(keys[7], 7, 1, middle_channel, middle_channel),
        "b3_4": init_conv_bn(keys[8], 1, 7, middle_channel, 192),
        # branch4's 1x1 conv is hard-wired to 768 input channels in the module
        "b4":   init_conv_bn(keys[9], 1, 1, 768, 192),
    }


# ----------------------------- pure-JAX reference ---------------------------- #

def _ref_conv_bn_relu(x, p, pad=(0, 0)):
    out = jax.lax.conv_general_dilated(
        x, p["w"], (1, 1), [(pad[0], pad[0]), (pad[1], pad[1])],
        dimension_numbers=("NHWC", "HWIO", "NHWC"))
    scale = p["gamma"] / jnp.sqrt(p["var"] + BN_EPS)
    out = (out + p["b"] - p["mean"]) * scale + p["beta"]
    return jnp.maximum(out, 0.0)


def _ref_avgpool(x):
    s = jax.lax.reduce_window(x, 0.0, jax.lax.add, (1, 3, 3, 1), (1, 1, 1, 1),
                              [(0, 0), (1, 1), (1, 1), (0, 0)])
    return s / 9.0


def block2_module_b_ref(x_nchw, params):
    x = jnp.transpose(x_nchw, (0, 2, 3, 1))
    b1 = _ref_conv_bn_relu(x, params["b1"])
    b2 = _ref_conv_bn_relu(x, params["b2_0"])
    b2 = _ref_conv_bn_relu(b2, params["b2_1"], (0, 3))
    b2 = _ref_conv_bn_relu(b2, params["b2_2"], (3, 0))
    b3 = _ref_conv_bn_relu(x, params["b3_0"])
    b3 = _ref_conv_bn_relu(b3, params["b3_1"], (3, 0))
    b3 = _ref_conv_bn_relu(b3, params["b3_2"], (0, 3))
    b3 = _ref_conv_bn_relu(b3, params["b3_3"], (3, 0))
    b3 = _ref_conv_bn_relu(b3, params["b3_4"], (0, 3))
    b4 = _ref_conv_bn_relu(_ref_avgpool(x), params["b4"])
    out = jnp.concatenate([b1, b2, b3, b4], axis=-1)
    return jnp.transpose(out, (0, 3, 1, 2))


# ----------------------------------- main ------------------------------------ #

if __name__ == "__main__":
    key = jax.random.PRNGKey(0)
    kx, kp = jax.random.split(key)
    # branch4's ConvBnRelu(768, 192, 1) forces input_channel = 768; keep H/W small.
    N, C, H, W = 2, 768, 8, 8
    mid = 32
    x = jax.random.normal(kx, (N, C, H, W), jnp.float32)
    params = init_params(kp, C, mid)

    out = jax.jit(block2_module_b)(x, params)
    out = jax.block_until_ready(out)
    assert out.shape == (N, 192 * 4, H, W), out.shape

    ref = block2_module_b_ref(x, params)
    # bf16 matmul operands / bf16 inter-layer activations => slightly looser tol.
    np.testing.assert_allclose(np.asarray(out), np.asarray(ref),
                               rtol=5e-2, atol=5e-2)
    print("KERNEL_OK")
</pallas_src>

<mosaic_0001>
module attributes {stable_mosaic.version = 11 : i64} {
  func.func @_matmul_bn_relu_kernel(%arg0: i32, %arg1: memref<64x768xbf16, #tpu.memory_space<vmem>>, %arg2: memref<768x256xbf16, #tpu.memory_space<vmem>>, %arg3: memref<1x256xf32, #tpu.memory_space<vmem>>, %arg4: memref<1x256xf32, #tpu.memory_space<vmem>>, %arg5: memref<64x256xbf16, #tpu.memory_space<vmem>>) attributes {dimension_semantics = [#tpu.dimension_semantics<parallel>], iteration_bounds = array<i64: 2>, scalar_prefetch = 0 : i64, scratch_operands = 0 : i64, tpu.core_type = #tpu.core_type<tc>, window_params = [{transform_indices = @transform_0, window_bounds = array<i64: 64, 768>}, {pipeline_mode = #tpu.pipeline_mode<synchronous>, transform_indices = @transform_1, window_bounds = array<i64: 768, 256>}, {pipeline_mode = #tpu.pipeline_mode<synchronous>, transform_indices = @transform_2, window_bounds = array<i64: 1, 256>}, {pipeline_mode = #tpu.pipeline_mode<synchronous>, transform_indices = @transform_3, window_bounds = array<i64: 1, 256>}, {transform_indices = @transform_4, window_bounds = array<i64: 64, 256>}]} {
    %c0 = arith.constant 0 : index
    %c0_0 = arith.constant 0 : index
    %0 = vector.load %arg1[%c0, %c0_0] : memref<64x768xbf16, #tpu.memory_space<vmem>>, vector<64x768xbf16>
    %c0_1 = arith.constant 0 : index
    %c0_2 = arith.constant 0 : index
    %1 = vector.load %arg2[%c0_1, %c0_2] : memref<768x256xbf16, #tpu.memory_space<vmem>>, vector<768x256xbf16>
    %cst = arith.constant dense<0.000000e+00> : vector<64x256xf32>
    %2 = tpu.matmul %0, %1, %cst {dimension_numbers = #tpu.dot_dimension_numbers<[1], [0], [0], [1], [0, 0, 1, 1], [], []>} : vector<64x768xbf16>, vector<768x256xbf16>, vector<64x256xf32> -> vector<64x256xf32>
    %c0_3 = arith.constant 0 : index
    %c0_4 = arith.constant 0 : index
    %3 = vector.load %arg3[%c0_3, %c0_4] : memref<1x256xf32, #tpu.memory_space<vmem>>, vector<1x256xf32>
    %4 = vector.broadcast %3 : vector<1x256xf32> to vector<64x256xf32>
    %5 = arith.mulf %2, %4 : vector<64x256xf32>
    %c0_5 = arith.constant 0 : index
    %c0_6 = arith.constant 0 : index
    %6 = vector.load %arg4[%c0_5, %c0_6] : memref<1x256xf32, #tpu.memory_space<vmem>>, vector<1x256xf32>
    %7 = vector.broadcast %6 : vector<1x256xf32> to vector<64x256xf32>
    %8 = arith.addf %5, %7 : vector<64x256xf32>
    %cst_7 = arith.constant 0.000000e+00 : f32
    %9 = vector.broadcast %cst_7 : f32 to vector<64x256xf32>
    %10 = arith.maximumf %8, %9 : vector<64x256xf32>
    %11 = arith.truncf %10 : vector<64x256xf32> to vector<64x256xbf16>
    %c0_8 = arith.constant 0 : index
    %c0_9 = arith.constant 0 : index
    %12 = vector.load %arg5[%c0_8, %c0_9] : memref<64x256xbf16, #tpu.memory_space<vmem>>, vector<64x256xbf16>
    tpu.vector_store %arg5[%c0_8, %c0_9], %11 {strides = array<i32>} : memref<64x256xbf16, #tpu.memory_space<vmem>>, vector<64x256xbf16>,
    return
  }
  func.func @transform_0(%arg0: i32) -> (i32, i32) {
    %c0_i32 = arith.constant 0 : i32
    %c0_i32_0 = arith.constant 0 : i32
    return %arg0, %c0_i32 : i32, i32
  }
  func.func @transform_1(%arg0: i32) -> (i32, i32) {
    %c0_i32 = arith.constant 0 : i32
    %c0_i32_0 = arith.constant 0 : i32
    %c0_i32_1 = arith.constant 0 : i32
    return %c0_i32, %c0_i32_0 : i32, i32
  }
  func.func @transform_2(%arg0: i32) -> (i32, i32) {
    %c0_i32 = arith.constant 0 : i32
    %c0_i32_0 = arith.constant 0 : i32
    %c0_i32_1 = arith.constant 0 : i32
    return %c0_i32, %c0_i32_0 : i32, i32
  }
  func.func @transform_3(%arg0: i32) -> (i32, i32) {
    %c0_i32 = arith.constant 0 : i32
    %c0_i32_0 = arith.constant 0 : i32
    %c0_i32_1 = arith.constant 0 : i32
    return %c0_i32, %c0_i32_0 : i32, i32
  }
  func.func @transform_4(%arg0: i32) -> (i32, i32) {
    %c0_i32 = arith.constant 0 : i32
    %c0_i32_0 = arith.constant 0 : i32
    return %arg0, %c0_i32 : i32, i32
  }
}

module attributes {stable_mosaic.version = 11 : i64} {
  func.func @_conv_tap_kernel(%arg0: i32, %arg1: memref<1x14x8x32xbf16, #tpu.memory_space<vmem>>, %arg2: memref<7x32x32xbf16, #tpu.memory_space<vmem>>, %arg3: memref<1x32xf32, #tpu.memory_space<vmem>>, %arg4: memref<1x32xf32, #tpu.memory_space<vmem>>, %arg5: memref<1x8x8x32xbf16, #tpu.memory_space<vmem>>) attributes {dimension_semantics = [#tpu.dimension_semantics<parallel>], iteration_bounds = array<i64: 2>, scalar_prefetch = 0 : i64, scratch_operands = 0 : i64, tpu.core_type = #tpu.core_type<tc>, window_params = [{transform_indices = @transform_0, window_bounds = array<i64: 1, 14, 8, 32>}, {pipeline_mode = #tpu.pipeline_mode<synchronous>, transform_indices = @transform_1, window_bounds = array<i64: 7, 32, 32>}, {pipeline_mode = #tpu.pipeline_mode<synchronous>, transform_indices = @transform_2, window_bounds = array<i64: 1, 32>}, {pipeline_mode = #tpu.pipeline_mode<synchronous>, transform_indices = @transform_3, window_bounds = array<i64: 1, 32>}, {transform_indices = @transform_4, window_bounds = array<i64: 1, 8, 8, 32>}]} {
    %c0 = arith.constant 0 : index
    %c0_0 = arith.constant 0 : index
    %c0_1 = arith.constant 0 : index
    %c0_2 = arith.constant 0 : index
    %0 = vector.load %arg1[%c0, %c0_0, %c0_1, %c0_2] : memref<1x14x8x32xbf16, #tpu.memory_space<vmem>>, vector<1x14x8x32xbf16>
    %1 = vector.shape_cast %0 : vector<1x14x8x32xbf16> to vector<14x8x32xbf16>
    %cst = arith.constant 0.000000e+00 : f32
    %2 = vector.broadcast %cst : f32 to vector<64x32xf32>
    %3 = vector.extract_strided_slice %1 {offsets = [0, 0, 0], sizes = [8, 8, 32], strides = [1, 1, 1]} : vector<14x8x32xbf16> to vector<8x8x32xbf16>
    %4 = vector.shape_cast %3 : vector<8x8x32xbf16> to vector<64x32xbf16>
    %c0_3 = arith.constant 0 : index
    %c0_4 = arith.constant 0 : index
    %c0_5 = arith.constant 0 : index
    %5 = vector.load %arg2[%c0_3, %c0_4, %c0_5] : memref<7x32x32xbf16, #tpu.memory_space<vmem>>, vector<1x32x32xbf16>
    %6 = vector.shape_cast %5 : vector<1x32x32xbf16> to vector<32x32xbf16>
    %cst_6 = arith.constant dense<0.000000e+00> : vector<64x32xf32>
    %7 = tpu.matmul %4, %6, %cst_6 {dimension_numbers = #tpu.dot_dimension_numbers<[1], [0], [0], [1], [0, 0, 1, 1], [], []>} : vector<64x32xbf16>, vector<32x32xbf16>, vector<64x32xf32> -> vector<64x32xf32>
    %8 = arith.addf %2, %7 : vector<64x32xf32>
    %9 = vector.extract_strided_slice %1 {offsets = [1, 0, 0], sizes = [8, 8, 32], strides = [1, 1, 1]} : vector<14x8x32xbf16> to vector<8x8x32xbf16>
    %10 = vector.shape_cast %9 : vector<8x8x32xbf16> to vector<64x32xbf16>
    %c1 = arith.constant 1 : index
    %c0_7 = arith.constant 0 : index
    %c0_8 = arith.constant 0 : index
    %11 = vector.load %arg2[%c1, %c0_7, %c0_8] : memref<7x32x32xbf16, #tpu.memory_space<vmem>>, vector<1x32x32xbf16>
    %12 = vector.shape_cast %11 : vector<1x32x32xbf16> to vector<32x32xbf16>
    %cst_9 = arith.constant dense<0.000000e+00> : vector<64x32xf32>
    %13 = tpu.matmul %10, %12, %cst_9 {dimension_numbers = #tpu.dot_dimension_numbers<[1], [0], [0], [1], [0, 0, 1, 1], [], []>} : vector<64x32xbf16>, vector<32x32xbf16>, vector<64x32xf32> -> vector<64x32xf32>
    %14 = arith.addf %8, %13 : vector<64x32xf32>
    %15 = vector.extract_strided_slice %1 {offsets = [2, 0, 0], sizes = [8, 8, 32], strides = [1, 1, 1]} : vector<14x8x32xbf16> to vector<8x8x32xbf16>
    %16 = vector.shape_cast %15 : vector<8x8x32xbf16> to vector<64x32xbf16>
    %c2 = arith.constant 2 : index
    %c0_10 = arith.constant 0 : index
    %c0_11 = arith.constant 0 : index
    %17 = vector.load %arg2[%c2, %c0_10, %c0_11] : memref<7x32x32xbf16, #tpu.memory_space<vmem>>, vector<1x32x32xbf16>
    %18 = vector.shape_cast %17 : vector<1x32x32xbf16> to vector<32x32xbf16>
    %cst_12 = arith.constant dense<0.000000e+00> : vector<64x32xf32>
    %19 = tpu.matmul %16, %18, %cst_12 {dimension_numbers = #tpu.dot_dimension_numbers<[1], [0], [0], [1], [0, 0, 1, 1], [], []>} : vector<64x32xbf16>, vector<32x32xbf16>, vector<64x32xf32> -> vector<64x32xf32>
    %20 = arith.addf %14, %19 : vector<64x32xf32>
    %21 = vector.extract_strided_slice %1 {offsets = [3, 0, 0], sizes = [8, 8, 32], strides = [1, 1, 1]} : vector<14x8x32xbf16> to vector<8x8x32xbf16>
    %22 = vector.shape_cast %21 : vector<8x8x32xbf16> to vector<64x32xbf16>
    %c3 = arith.constant 3 : index
    %c0_13 = arith.constant 0 : index
    %c0_14 = arith.constant 0 : index
    %23 = vector.load %arg2[%c3, %c0_13, %c0_14] : memref<7x32x32xbf16, #tpu.memory_space<vmem>>, vector<1x32x32xbf16>
    %24 = vector.shape_cast %23 : vector<1x32x32xbf16> to vector<32x32xbf16>
    %cst_15 = arith.constant dense<0.000000e+00> : vector<64x32xf32>
    %25 = tpu.matmul %22, %24, %cst_15 {dimension_numbers = #tpu.dot_dimension_numbers<[1], [0], [0], [1], [0, 0, 1, 1], [], []>} : vector<64x32xbf16>, vector<32x32xbf16>, vector<64x32xf32> -> vector<64x32xf32>
    %26 = arith.addf %20, %25 : vector<64x32xf32>
    %27 = vector.extract_strided_slice %1 {offsets = [4, 0, 0], sizes = [8, 8, 32], strides = [1, 1, 1]} : vector<14x8x32xbf16> to vector<8x8x32xbf16>
    %28 = vector.shape_cast %27 : vector<8x8x32xbf16> to vector<64x32xbf16>
    %c4 = arith.constant 4 : index
    %c0_16 = arith.constant 0 : index
    %c0_17 = arith.constant 0 : index
    %29 = vector.load %arg2[%c4, %c0_16, %c0_17] : memref<7x32x32xbf16, #tpu.memory_space<vmem>>, vector<1x32x32xbf16>
    %30 = vector.shape_cast %29 : vector<1x32x32xbf16> to vector<32x32xbf16>
    %cst_18 = arith.constant dense<0.000000e+00> : vector<64x32xf32>
    %31 = tpu.matmul %28, %30, %cst_18 {dimension_numbers = #tpu.dot_dimension_numbers<[1], [0], [0], [1], [0, 0, 1, 1], [], []>} : vector<64x32xbf16>, vector<32x32xbf16>, vector<64x32xf32> -> vector<64x32xf32>
    %32 = arith.addf %26, %31 : vector<64x32xf32>
    %33 = vector.extract_strided_slice %1 {offsets = [5, 0, 0], sizes = [8, 8, 32], strides = [1, 1, 1]} : vector<14x8x32xbf16> to vector<8x8x32xbf16>
    %34 = vector.shape_cast %33 : vector<8x8x32xbf16> to vector<64x32xbf16>
    %c5 = arith.constant 5 : index
    %c0_19 = arith.constant 0 : index
    %c0_20 = arith.constant 0 : index
    %35 = vector.load %arg2[%c5, %c0_19, %c0_20] : memref<7x32x32xbf16, #tpu.memory_space<vmem>>, vector<1x32x32xbf16>
    %36 = vector.shape_cast %35 : vector<1x32x32xbf16> to vector<32x32xbf16>
    %cst_21 = arith.constant dense<0.000000e+00> : vector<64x32xf32>
    %37 = tpu.matmul %34, %36, %cst_21 {dimension_numbers = #tpu.dot_dimension_numbers<[1], [0], [0], [1], [0, 0, 1, 1], [], []>} : vector<64x32xbf16>, vector<32x32xbf16>, vector<64x32xf32> -> vector<64x32xf32>
    %38 = arith.addf %32, %37 : vector<64x32xf32>
    %39 = vector.extract_strided_slice %1 {offsets = [6, 0, 0], sizes = [8, 8, 32], strides = [1, 1, 1]} : vector<14x8x32xbf16> to vector<8x8x32xbf16>
    %40 = vector.shape_cast %39 : vector<8x8x32xbf16> to vector<64x32xbf16>
    %c6 = arith.constant 6 : index
    %c0_22 = arith.constant 0 : index
    %c0_23 = arith.constant 0 : index
    %41 = vector.load %arg2[%c6, %c0_22, %c0_23] : memref<7x32x32xbf16, #tpu.memory_space<vmem>>, vector<1x32x32xbf16>
    %42 = vector.shape_cast %41 : vector<1x32x32xbf16> to vector<32x32xbf16>
    %cst_24 = arith.constant dense<0.000000e+00> : vector<64x32xf32>
    %43 = tpu.matmul %40, %42, %cst_24 {dimension_numbers = #tpu.dot_dimension_numbers<[1], [0], [0], [1], [0, 0, 1, 1], [], []>} : vector<64x32xbf16>, vector<32x32xbf16>, vector<64x32xf32> -> vector<64x32xf32>
    %44 = arith.addf %38, %43 : vector<64x32xf32>
    %c0_25 = arith.constant 0 : index
    %c0_26 = arith.constant 0 : index
    %45 = vector.load %arg3[%c0_25, %c0_26] : memref<1x32xf32, #tpu.memory_space<vmem>>, vector<1x32xf32>
    %46 = vector.broadcast %45 : vector<1x32xf32> to vector<64x32xf32>
    %47 = arith.mulf %44, %46 : vector<64x32xf32>
    %c0_27 = arith.constant 0 : index
    %c0_28 = arith.constant 0 : index
    %48 = vector.load %arg4[%c0_27, %c0_28] : memref<1x32xf32, #tpu.memory_space<vmem>>, vector<1x32xf32>
    %49 = vector.broadcast %48 : vector<1x32xf32> to vector<64x32xf32>
    %50 = arith.addf %47, %49 : vector<64x32xf32>
    %cst_29 = arith.constant 0.000000e+00 : f32
    %51 = vector.broadcast %cst_29 : f32 to vector<64x32xf32>
    %52 = arith.maximumf %50, %51 : vector<64x32xf32>
    %53 = vector.shape_cast %52 : vector<64x32xf32> to vector<1x8x8x32xf32>
    %54 = arith.truncf %53 : vector<1x8x8x32xf32> to vector<1x8x8x32xbf16>
    %c0_30 = arith.constant 0 : index
    %c0_31 = arith.constant 0 : index
    %c0_32 = arith.constant 0 : index
    %c0_33 = arith.constant 0 : index
    %55 = vector.load %arg5[%c0_30, %c0_31, %c0_32, %c0_33] : memref<1x8x8x32xbf16, #tpu.memory_space<vmem>>, vector<1x8x8x32xbf16>
    tpu.vector_store %arg5[%c0_30, %c0_31, %c0_32, %c0_33], %54 {strides = array<i32>} : memref<1x8x8x32xbf16, #tpu.memory_space<vmem>>, vector<1x8x8x32xbf16>,
    return
  }
  func.func @transform_0(%arg0: i32) -> (i32, i32, i32, i32) {
    %c0_i32 = arith.constant 0 : i32
    %c0_i32_0 = arith.constant 0 : i32
    %c0_i32_1 = arith.constant 0 : i32
    %c0_i32_2 = arith.constant 0 : i32
    return %arg0, %c0_i32, %c0_i32_0, %c0_i32_1 : i32, i32, i32, i32
  }
  func.func @transform_1(%arg0: i32) -> (i32, i32, i32) {
    %c0_i32 = arith.constant 0 : i32
    %c0_i32_0 = arith.constant 0 : i32
    %c0_i32_1 = arith.constant 0 : i32
    %c0_i32_2 = arith.constant 0 : i32
    return %c0_i32, %c0_i32_0, %c0_i32_1 : i32, i32, i32
  }
  func.func @transform_2(%arg0: i32) -> (i32, i32) {
    %c0_i32 = arith.constant 0 : i32
    %c0_i32_0 = arith.constant 0 : i32
    %c0_i32_1 = arith.constant 0 : i32
    return %c0_i32, %c0_i32_0 : i32, i32
  }
  func.func @transform_3(%arg0: i32) -> (i32, i32) {
    %c0_i32 = arith.constant 0 : i32
    %c0_i32_0 = arith.constant 0 : i32
    %c0_i32_1 = arith.constant 0 : i32
    return %c0_i32, %c0_i32_0 : i32, i32
  }
  func.func @transform_4(%arg0: i32) -> (i32, i32, i32, i32) {
    %c0_i32 = arith.constant 0 : i32
    %c0_i32_0 = arith.constant 0 : i32
    %c0_i32_1 = arith.constant 0 : i32
    %c0_i32_2 = arith.constant 0 : i32
    return %arg0, %c0_i32, %c0_i32_0, %c0_i32_1 : i32, i32, i32, i32
  }
}

module attributes {stable_mosaic.version = 11 : i64} {
  func.func @_conv_tap_kernel(%arg0: i32, %arg1: memref<1x8x14x32xbf16, #tpu.memory_space<vmem>>, %arg2: memref<7x32x32xbf16, #tpu.memory_space<vmem>>, %arg3: memref<1x32xf32, #tpu.memory_space<vmem>>, %arg4: memref<1x32xf32, #tpu.memory_space<vmem>>, %arg5: memref<1x8x8x32xbf16, #tpu.memory_space<vmem>>) attributes {dimension_semantics = [#tpu.dimension_semantics<parallel>], iteration_bounds = array<i64: 2>, scalar_prefetch = 0 : i64, scratch_operands = 0 : i64, tpu.core_type = #tpu.core_type<tc>, window_params = [{transform_indices = @transform_0, window_bounds = array<i64: 1, 8, 14, 32>}, {pipeline_mode = #tpu.pipeline_mode<synchronous>, transform_indices = @transform_1, window_bounds = array<i64: 7, 32, 32>}, {pipeline_mode = #tpu.pipeline_mode<synchronous>, transform_indices = @transform_2, window_bounds = array<i64: 1, 32>}, {pipeline_mode = #tpu.pipeline_mode<synchronous>, transform_indices = @transform_3, window_bounds = array<i64: 1, 32>}, {transform_indices = @transform_4, window_bounds = array<i64: 1, 8, 8, 32>}]} {
    %c0 = arith.constant 0 : index
    %c0_0 = arith.constant 0 : index
    %c0_1 = arith.constant 0 : index
    %c0_2 = arith.constant 0 : index
    %0 = vector.load %arg1[%c0, %c0_0, %c0_1, %c0_2] : memref<1x8x14x32xbf16, #tpu.memory_space<vmem>>, vector<1x8x14x32xbf16>
    %1 = vector.shape_cast %0 : vector<1x8x14x32xbf16> to vector<8x14x32xbf16>
    %cst = arith.constant 0.000000e+00 : f32
    %2 = vector.broadcast %cst : f32 to vector<64x32xf32>
    %3 = vector.extract_strided_slice %1 {offsets = [0, 0, 0], sizes = [8, 8, 32], strides = [1, 1, 1]} : vector<8x14x32xbf16> to vector<8x8x32xbf16>
    %4 = vector.shape_cast %3 : vector<8x8x32xbf16> to vector<64x32xbf16>
    %c0_3 = arith.constant 0 : index
    %c0_4 = arith.constant 0 : index
    %c0_5 = arith.constant 0 : index
    %5 = vector.load %arg2[%c0_3, %c0_4, %c0_5] : memref<7x32x32xbf16, #tpu.memory_space<vmem>>, vector<1x32x32xbf16>
    %6 = vector.shape_cast %5 : vector<1x32x32xbf16> to vector<32x32xbf16>
    %cst_6 = arith.constant dense<0.000000e+00> : vector<64x32xf32>
    %7 = tpu.matmul %4, %6, %cst_6 {dimension_numbers = #tpu.dot_dimension_numbers<[1], [0], [0], [1], [0, 0, 1, 1], [], []>} : vector<64x32xbf16>, vector<32x32xbf16>, vector<64x32xf32> -> vector<64x32xf32>
    %8 = arith.addf %2, %7 : vector<64x32xf32>
    %9 = vector.extract_strided_slice %1 {offsets = [0, 1, 0], sizes = [8, 8, 32], strides = [1, 1, 1]} : vector<8x14x32xbf16> to vector<8x8x32xbf16>
    %10 = vector.shape_cast %9 : vector<8x8x32xbf16> to vector<64x32xbf16>
    %c1 = arith.constant 1 : index
    %c0_7 = arith.constant 0 : index
    %c0_8 = arith.constant 0 : index
    %11 = vector.load %arg2[%c1, %c0_7, %c0_8] : memref<7x32x32xbf16, #tpu.memory_space<vmem>>, vector<1x32x32xbf16>
    %12 = vector.shape_cast %11 : vector<1x32x32xbf16> to vector<32x32xbf16>
    %cst_9 = arith.constant dense<0.000000e+00> : vector<64x32xf32>
    %13 = tpu.matmul %10, %12, %cst_9 {dimension_numbers = #tpu.dot_dimension_numbers<[1], [0], [0], [1], [0, 0, 1, 1], [], []>} : vector<64x32xbf16>, vector<32x32xbf16>, vector<64x32xf32> -> vector<64x32xf32>
    %14 = arith.addf %8, %13 : vector<64x32xf32>
    %15 = vector.extract_strided_slice %1 {offsets = [0, 2, 0], sizes = [8, 8, 32], strides = [1, 1, 1]} : vector<8x14x32xbf16> to vector<8x8x32xbf16>
    %16 = vector.shape_cast %15 : vector<8x8x32xbf16> to vector<64x32xbf16>
    %c2 = arith.constant 2 : index
    %c0_10 = arith.constant 0 : index
    %c0_11 = arith.constant 0 : index
    %17 = vector.load %arg2[%c2, %c0_10, %c0_11] : memref<7x32x32xbf16, #tpu.memory_space<vmem>>, vector<1x32x32xbf16>
    %18 = vector.shape_cast %17 : vector<1x32x32xbf16> to vector<32x32xbf16>
    %cst_12 = arith.constant dense<0.000000e+00> : vector<64x32xf32>
    %19 = tpu.matmul %16, %18, %cst_12 {dimension_numbers = #tpu.dot_dimension_numbers<[1], [0], [0], [1], [0, 0, 1, 1], [], []>} : vector<64x32xbf16>, vector<32x32xbf16>, vector<64x32xf32> -> vector<64x32xf32>
    %20 = arith.addf %14, %19 : vector<64x32xf32>
    %21 = vector.extract_strided_slice %1 {offsets = [0, 3, 0], sizes = [8, 8, 32], strides = [1, 1, 1]} : vector<8x14x32xbf16> to vector<8x8x32xbf16>
    %22 = vector.shape_cast %21 : vector<8x8x32xbf16> to vector<64x32xbf16>
    %c3 = arith.constant 3 : index
    %c0_13 = arith.constant 0 : index
    %c0_14 = arith.constant 0 : index
    %23 = vector.load %arg2[%c3, %c0_13, %c0_14] : memref<7x32x32xbf16, #tpu.memory_space<vmem>>, vector<1x32x32xbf16>
    %24 = vector.shape_cast %23 : vector<1x32x32xbf16> to vector<32x32xbf16>
    %cst_15 = arith.constant dense<0.000000e+00> : vector<64x32xf32>
    %25 = tpu.matmul %22, %24, %cst_15 {dimension_numbers = #tpu.dot_dimension_numbers<[1], [0], [0], [1], [0, 0, 1, 1], [], []>} : vector<64x32xbf16>, vector<32x32xbf16>, vector<64x32xf32> -> vector<64x32xf32>
    %26 = arith.addf %20, %25 : vector<64x32xf32>
    %27 = vector.extract_strided_slice %1 {offsets = [0, 4, 0], sizes = [8, 8, 32], strides = [1, 1, 1]} : vector<8x14x32xbf16> to vector<8x8x32xbf16>
    %28 = vector.shape_cast %27 : vector<8x8x32xbf16> to vector<64x32xbf16>
    %c4 = arith.constant 4 : index
    %c0_16 = arith.constant 0 : index
    %c0_17 = arith.constant 0 : index
    %29 = vector.load %arg2[%c4, %c0_16, %c0_17] : memref<7x32x32xbf16, #tpu.memory_space<vmem>>, vector<1x32x32xbf16>
    %30 = vector.shape_cast %29 : vector<1x32x32xbf16> to vector<32x32xbf16>
    %cst_18 = arith.constant dense<0.000000e+00> : vector<64x32xf32>
    %31 = tpu.matmul %28, %30, %cst_18 {dimension_numbers = #tpu.dot_dimension_numbers<[1], [0], [0], [1], [0, 0, 1, 1], [], []>} : vector<64x32xbf16>, vector<32x32xbf16>, vector<64x32xf32> -> vector<64x32xf32>
    %32 = arith.addf %26, %31 : vector<64x32xf32>
    %33 = vector.extract_strided_slice %1 {offsets = [0, 5, 0], sizes = [8, 8, 32], strides = [1, 1, 1]} : vector<8x14x32xbf16> to vector<8x8x32xbf16>
    %34 = vector.shape_cast %33 : vector<8x8x32xbf16> to vector<64x32xbf16>
    %c5 = arith.constant 5 : index
    %c0_19 = arith.constant 0 : index
    %c0_20 = arith.constant 0 : index
    %35 = vector.load %arg2[%c5, %c0_19, %c0_20] : memref<7x32x32xbf16, #tpu.memory_space<vmem>>, vector<1x32x32xbf16>
    %36 = vector.shape_cast %35 : vector<1x32x32xbf16> to vector<32x32xbf16>
    %cst_21 = arith.constant dense<0.000000e+00> : vector<64x32xf32>
    %37 = tpu.matmul %34, %36, %cst_21 {dimension_numbers = #tpu.dot_dimension_numbers<[1], [0], [0], [1], [0, 0, 1, 1], [], []>} : vector<64x32xbf16>, vector<32x32xbf16>, vector<64x32xf32> -> vector<64x32xf32>
    %38 = arith.addf %32, %37 : vector<64x32xf32>
    %39 = vector.extract_strided_slice %1 {offsets = [0, 6, 0], sizes = [8, 8, 32], strides = [1, 1, 1]} : vector<8x14x32xbf16> to vector<8x8x32xbf16>
    %40 = vector.shape_cast %39 : vector<8x8x32xbf16> to vector<64x32xbf16>
    %c6 = arith.constant 6 : index
    %c0_22 = arith.constant 0 : index
    %c0_23 = arith.constant 0 : index
    %41 = vector.load %arg2[%c6, %c0_22, %c0_23] : memref<7x32x32xbf16, #tpu.memory_space<vmem>>, vector<1x32x32xbf16>
    %42 = vector.shape_cast %41 : vector<1x32x32xbf16> to vector<32x32xbf16>
    %cst_24 = arith.constant dense<0.000000e+00> : vector<64x32xf32>
    %43 = tpu.matmul %40, %42, %cst_24 {dimension_numbers = #tpu.dot_dimension_numbers<[1], [0], [0], [1], [0, 0, 1, 1], [], []>} : vector<64x32xbf16>, vector<32x32xbf16>, vector<64x32xf32> -> vector<64x32xf32>
    %44 = arith.addf %38, %43 : vector<64x32xf32>
    %c0_25 = arith.constant 0 : index
    %c0_26 = arith.constant 0 : index
    %45 = vector.load %arg3[%c0_25, %c0_26] : memref<1x32xf32, #tpu.memory_space<vmem>>, vector<1x32xf32>
    %46 = vector.broadcast %45 : vector<1x32xf32> to vector<64x32xf32>
    %47 = arith.mulf %44, %46 : vector<64x32xf32>
    %c0_27 = arith.constant 0 : index
    %c0_28 = arith.constant 0 : index
    %48 = vector.load %arg4[%c0_27, %c0_28] : memref<1x32xf32, #tpu.memory_space<vmem>>, vector<1x32xf32>
    %49 = vector.broadcast %48 : vector<1x32xf32> to vector<64x32xf32>
    %50 = arith.addf %47, %49 : vector<64x32xf32>
    %cst_29 = arith.constant 0.000000e+00 : f32
    %51 = vector.broadcast %cst_29 : f32 to vector<64x32xf32>
    %52 = arith.maximumf %50, %51 : vector<64x32xf32>
    %53 = vector.shape_cast %52 : vector<64x32xf32> to vector<1x8x8x32xf32>
    %54 = arith.truncf %53 : vector<1x8x8x32xf32> to vector<1x8x8x32xbf16>
    %c0_30 = arith.constant 0 : index
    %c0_31 = arith.constant 0 : index
    %c0_32 = arith.constant 0 : index
    %c0_33 = arith.constant 0 : index
    %55 = vector.load %arg5[%c0_30, %c0_31, %c0_32, %c0_33] : memref<1x8x8x32xbf16, #tpu.memory_space<vmem>>, vector<1x8x8x32xbf16>
    tpu.vector_store %arg5[%c0_30, %c0_31, %c0_32, %c0_33], %54 {strides = array<i32>} : memref<1x8x8x32xbf16, #tpu.memory_space<vmem>>, vector<1x8x8x32xbf16>,
    return
  }
  func.func @transform_0(%arg0: i32) -> (i32, i32, i32, i32) {
    %c0_i32 = arith.constant 0 : i32
    %c0_i32_0 = arith.constant 0 : i32
    %c0_i32_1 = arith.constant 0 : i32
    %c0_i32_2 = arith.constant 0 : i32
    return %arg0, %c0_i32, %c0_i32_0, %c0_i32_1 : i32, i32, i32, i32
  }
  func.func @transform_1(%arg0: i32) -> (i32, i32, i32) {
    %c0_i32 = arith.constant 0 : i32
    %c0_i32_0 = arith.constant 0 : i32
    %c0_i32_1 = arith.constant 0 : i32
    %c0_i32_2 = arith.constant 0 : i32
    return %c0_i32, %c0_i32_0, %c0_i32_1 : i32, i32, i32
  }
  func.func @transform_2(%arg0: i32) -> (i32, i32) {
    %c0_i32 = arith.constant 0 : i32
    %c0_i32_0 = arith.constant 0 : i32
    %c0_i32_1 = arith.constant 0 : i32
    return %c0_i32, %c0_i32_0 : i32, i32
  }
  func.func @transform_3(%arg0: i32) -> (i32, i32) {
    %c0_i32 = arith.constant 0 : i32
    %c0_i32_0 = arith.constant 0 : i32
    %c0_i32_1 = arith.constant 0 : i32
    return %c0_i32, %c0_i32_0 : i32, i32
  }
  func.func @transform_4(%arg0: i32) -> (i32, i32, i32, i32) {
    %c0_i32 = arith.constant 0 : i32
    %c0_i32_0 = arith.constant 0 : i32
    %c0_i32_1 = arith.constant 0 : i32
    %c0_i32_2 = arith.constant 0 : i32
    return %arg0, %c0_i32, %c0_i32_0, %c0_i32_1 : i32, i32, i32, i32
  }
}

module attributes {stable_mosaic.version = 11 : i64} {
  func.func @_conv_tap_kernel(%arg0: i32, %arg1: memref<1x8x14x32xbf16, #tpu.memory_space<vmem>>, %arg2: memref<7x32x192xbf16, #tpu.memory_space<vmem>>, %arg3: memref<1x192xf32, #tpu.memory_space<vmem>>, %arg4: memref<1x192xf32, #tpu.memory_space<vmem>>, %arg5: memref<1x8x8x192xbf16, #tpu.memory_space<vmem>>) attributes {dimension_semantics = [#tpu.dimension_semantics<parallel>], iteration_bounds = array<i64: 2>, scalar_prefetch = 0 : i64, scratch_operands = 0 : i64, tpu.core_type = #tpu.core_type<tc>, window_params = [{transform_indices = @transform_0, window_bounds = array<i64: 1, 8, 14, 32>}, {pipeline_mode = #tpu.pipeline_mode<synchronous>, transform_indices = @transform_1, window_bounds = array<i64: 7, 32, 192>}, {pipeline_mode = #tpu.pipeline_mode<synchronous>, transform_indices = @transform_2, window_bounds = array<i64: 1, 192>}, {pipeline_mode = #tpu.pipeline_mode<synchronous>, transform_indices = @transform_3, window_bounds = array<i64: 1, 192>}, {transform_indices = @transform_4, window_bounds = array<i64: 1, 8, 8, 192>}]} {
    %c0 = arith.constant 0 : index
    %c0_0 = arith.constant 0 : index
    %c0_1 = arith.constant 0 : index
    %c0_2 = arith.constant 0 : index
    %0 = vector.load %arg1[%c0, %c0_0, %c0_1, %c0_2] : memref<1x8x14x32xbf16, #tpu.memory_space<vmem>>, vector<1x8x14x32xbf16>
    %1 = vector.shape_cast %0 : vector<1x8x14x32xbf16> to vector<8x14x32xbf16>
    %cst = arith.constant 0.000000e+00 : f32
    %2 = vector.broadcast %cst : f32 to vector<64x192xf32>
    %3 = vector.extract_strided_slice %1 {offsets = [0, 0, 0], sizes = [8, 8, 32], strides = [1, 1, 1]} : vector<8x14x32xbf16> to vector<8x8x32xbf16>
    %4 = vector.shape_cast %3 : vector<8x8x32xbf16> to vector<64x32xbf16>
    %c0_3 = arith.constant 0 : index
    %c0_4 = arith.constant 0 : index
    %c0_5 = arith.constant 0 : index
    %5 = vector.load %arg2[%c0_3, %c0_4, %c0_5] : memref<7x32x192xbf16, #tpu.memory_space<vmem>>, vector<1x32x192xbf16>
    %6 = vector.shape_cast %5 : vector<1x32x192xbf16> to vector<32x192xbf16>
    %cst_6 = arith.constant dense<0.000000e+00> : vector<64x192xf32>
    %7 = tpu.matmul %4, %6, %cst_6 {dimension_numbers = #tpu.dot_dimension_numbers<[1], [0], [0], [1], [0, 0, 1, 1], [], []>} : vector<64x32xbf16>, vector<32x192xbf16>, vector<64x192xf32> -> vector<64x192xf32>
    %8 = arith.addf %2, %7 : vector<64x192xf32>
    %9 = vector.extract_strided_slice %1 {offsets = [0, 1, 0], sizes = [8, 8, 32], strides = [1, 1, 1]} : vector<8x14x32xbf16> to vector<8x8x32xbf16>
    %10 = vector.shape_cast %9 : vector<8x8x32xbf16> to vector<64x32xbf16>
    %c1 = arith.constant 1 : index
    %c0_7 = arith.constant 0 : index
    %c0_8 = arith.constant 0 : index
    %11 = vector.load %arg2[%c1, %c0_7, %c0_8] : memref<7x32x192xbf16, #tpu.memory_space<vmem>>, vector<1x32x192xbf16>
    %12 = vector.shape_cast %11 : vector<1x32x192xbf16> to vector<32x192xbf16>
    %cst_9 = arith.constant dense<0.000000e+00> : vector<64x192xf32>
    %13 = tpu.matmul %10, %12, %cst_9 {dimension_numbers = #tpu.dot_dimension_numbers<[1], [0], [0], [1], [0, 0, 1, 1], [], []>} : vector<64x32xbf16>, vector<32x192xbf16>, vector<64x192xf32> -> vector<64x192xf32>
    %14 = arith.addf %8, %13 : vector<64x192xf32>
    %15 = vector.extract_strided_slice %1 {offsets = [0, 2, 0], sizes = [8, 8, 32], strides = [1, 1, 1]} : vector<8x14x32xbf16> to vector<8x8x32xbf16>
    %16 = vector.shape_cast %15 : vector<8x8x32xbf16> to vector<64x32xbf16>
    %c2 = arith.constant 2 : index
    %c0_10 = arith.constant 0 : index
    %c0_11 = arith.constant 0 : index
    %17 = vector.load %arg2[%c2, %c0_10, %c0_11] : memref<7x32x192xbf16, #tpu.memory_space<vmem>>, vector<1x32x192xbf16>
    %18 = vector.shape_cast %17 : vector<1x32x192xbf16> to vector<32x192xbf16>
    %cst_12 = arith.constant dense<0.000000e+00> : vector<64x192xf32>
    %19 = tpu.matmul %16, %18, %cst_12 {dimension_numbers = #tpu.dot_dimension_numbers<[1], [0], [0], [1], [0, 0, 1, 1], [], []>} : vector<64x32xbf16>, vector<32x192xbf16>, vector<64x192xf32> -> vector<64x192xf32>
    %20 = arith.addf %14, %19 : vector<64x192xf32>
    %21 = vector.extract_strided_slice %1 {offsets = [0, 3, 0], sizes = [8, 8, 32], strides = [1, 1, 1]} : vector<8x14x32xbf16> to vector<8x8x32xbf16>
    %22 = vector.shape_cast %21 : vector<8x8x32xbf16> to vector<64x32xbf16>
    %c3 = arith.constant 3 : index
    %c0_13 = arith.constant 0 : index
    %c0_14 = arith.constant 0 : index
    %23 = vector.load %arg2[%c3, %c0_13, %c0_14] : memref<7x32x192xbf16, #tpu.memory_space<vmem>>, vector<1x32x192xbf16>
    %24 = vector.shape_cast %23 : vector<1x32x192xbf16> to vector<32x192xbf16>
    %cst_15 = arith.constant dense<0.000000e+00> : vector<64x192xf32>
    %25 = tpu.matmul %22, %24, %cst_15 {dimension_numbers = #tpu.dot_dimension_numbers<[1], [0], [0], [1], [0, 0, 1, 1], [], []>} : vector<64x32xbf16>, vector<32x192xbf16>, vector<64x192xf32> -> vector<64x192xf32>
    %26 = arith.addf %20, %25 : vector<64x192xf32>
    %27 = vector.extract_strided_slice %1 {offsets = [0, 4, 0], sizes = [8, 8, 32], strides = [1, 1, 1]} : vector<8x14x32xbf16> to vector<8x8x32xbf16>
    %28 = vector.shape_cast %27 : vector<8x8x32xbf16> to vector<64x32xbf16>
    %c4 = arith.constant 4 : index
    %c0_16 = arith.constant 0 : index
    %c0_17 = arith.constant 0 : index
    %29 = vector.load %arg2[%c4, %c0_16, %c0_17] : memref<7x32x192xbf16, #tpu.memory_space<vmem>>, vector<1x32x192xbf16>
    %30 = vector.shape_cast %29 : vector<1x32x192xbf16> to vector<32x192xbf16>
    %cst_18 = arith.constant dense<0.000000e+00> : vector<64x192xf32>
    %31 = tpu.matmul %28, %30, %cst_18 {dimension_numbers = #tpu.dot_dimension_numbers<[1], [0], [0], [1], [0, 0, 1, 1], [], []>} : vector<64x32xbf16>, vector<32x192xbf16>, vector<64x192xf32> -> vector<64x192xf32>
    %32 = arith.addf %26, %31 : vector<64x192xf32>
    %33 = vector.extract_strided_slice %1 {offsets = [0, 5, 0], sizes = [8, 8, 32], strides = [1, 1, 1]} : vector<8x14x32xbf16> to vector<8x8x32xbf16>
    %34 = vector.shape_cast %33 : vector<8x8x32xbf16> to vector<64x32xbf16>
    %c5 = arith.constant 5 : index
    %c0_19 = arith.constant 0 : index
    %c0_20 = arith.constant 0 : index
    %35 = vector.load %arg2[%c5, %c0_19, %c0_20] : memref<7x32x192xbf16, #tpu.memory_space<vmem>>, vector<1x32x192xbf16>
    %36 = vector.shape_cast %35 : vector<1x32x192xbf16> to vector<32x192xbf16>
    %cst_21 = arith.constant dense<0.000000e+00> : vector<64x192xf32>
    %37 = tpu.matmul %34, %36, %cst_21 {dimension_numbers = #tpu.dot_dimension_numbers<[1], [0], [0], [1], [0, 0, 1, 1], [], []>} : vector<64x32xbf16>, vector<32x192xbf16>, vector<64x192xf32> -> vector<64x192xf32>
    %38 = arith.addf %32, %37 : vector<64x192xf32>
    %39 = vector.extract_strided_slice %1 {offsets = [0, 6, 0], sizes = [8, 8, 32], strides = [1, 1, 1]} : vector<8x14x32xbf16> to vector<8x8x32xbf16>
    %40 = vector.shape_cast %39 : vector<8x8x32xbf16> to vector<64x32xbf16>
    %c6 = arith.constant 6 : index
    %c0_22 = arith.constant 0 : index
    %c0_23 = arith.constant 0 : index
    %41 = vector.load %arg2[%c6, %c0_22, %c0_23] : memref<7x32x192xbf16, #tpu.memory_space<vmem>>, vector<1x32x192xbf16>
    %42 = vector.shape_cast %41 : vector<1x32x192xbf16> to vector<32x192xbf16>
    %cst_24 = arith.constant dense<0.000000e+00> : vector<64x192xf32>
    %43 = tpu.matmul %40, %42, %cst_24 {dimension_numbers = #tpu.dot_dimension_numbers<[1], [0], [0], [1], [0, 0, 1, 1], [], []>} : vector<64x32xbf16>, vector<32x192xbf16>, vector<64x192xf32> -> vector<64x192xf32>
    %44 = arith.addf %38, %43 : vector<64x192xf32>
    %c0_25 = arith.constant 0 : index
    %c0_26 = arith.constant 0 : index
    %45 = vector.load %arg3[%c0_25, %c0_26] : memref<1x192xf32, #tpu.memory_space<vmem>>, vector<1x192xf32>
    %46 = vector.broadcast %45 : vector<1x192xf32> to vector<64x192xf32>
    %47 = arith.mulf %44, %46 : vector<64x192xf32>
    %c0_27 = arith.constant 0 : index
    %c0_28 = arith.constant 0 : index
    %48 = vector.load %arg4[%c0_27, %c0_28] : memref<1x192xf32, #tpu.memory_space<vmem>>, vector<1x192xf32>
    %49 = vector.broadcast %48 : vector<1x192xf32> to vector<64x192xf32>
    %50 = arith.addf %47, %49 : vector<64x192xf32>
    %cst_29 = arith.constant 0.000000e+00 : f32
    %51 = vector.broadcast %cst_29 : f32 to vector<64x192xf32>
    %52 = arith.maximumf %50, %51 : vector<64x192xf32>
    %53 = vector.shape_cast %52 : vector<64x192xf32> to vector<1x8x8x192xf32>
    %54 = arith.truncf %53 : vector<1x8x8x192xf32> to vector<1x8x8x192xbf16>
    %c0_30 = arith.constant 0 : index
    %c0_31 = arith.constant 0 : index
    %c0_32 = arith.constant 0 : index
    %c0_33 = arith.constant 0 : index
    %55 = vector.load %arg5[%c0_30, %c0_31, %c0_32, %c0_33] : memref<1x8x8x192xbf16, #tpu.memory_space<vmem>>, vector<1x8x8x192xbf16>
    tpu.vector_store %arg5[%c0_30, %c0_31, %c0_32, %c0_33], %54 {strides = array<i32>} : memref<1x8x8x192xbf16, #tpu.memory_space<vmem>>, vector<1x8x8x192xbf16>,
    return
  }
  func.func @transform_0(%arg0: i32) -> (i32, i32, i32, i32) {
    %c0_i32 = arith.constant 0 : i32
    %c0_i32_0 = arith.constant 0 : i32
    %c0_i32_1 = arith.constant 0 : i32
    %c0_i32_2 = arith.constant 0 : i32
    return %arg0, %c0_i32, %c0_i32_0, %c0_i32_1 : i32, i32, i32, i32
  }
  func.func @transform_1(%arg0: i32) -> (i32, i32, i32) {
    %c0_i32 = arith.constant 0 : i32
    %c0_i32_0 = arith.constant 0 : i32
    %c0_i32_1 = arith.constant 0 : i32
    %c0_i32_2 = arith.constant 0 : i32
    return %c0_i32, %c0_i32_0, %c0_i32_1 : i32, i32, i32
  }
  func.func @transform_2(%arg0: i32) -> (i32, i32) {
    %c0_i32 = arith.constant 0 : i32
    %c0_i32_0 = arith.constant 0 : i32
    %c0_i32_1 = arith.constant 0 : i32
    return %c0_i32, %c0_i32_0 : i32, i32
  }
  func.func @transform_3(%arg0: i32) -> (i32, i32) {
    %c0_i32 = arith.constant 0 : i32
    %c0_i32_0 = arith.constant 0 : i32
    %c0_i32_1 = arith.constant 0 : i32
    return %c0_i32, %c0_i32_0 : i32, i32
  }
  func.func @transform_4(%arg0: i32) -> (i32, i32, i32, i32) {
    %c0_i32 = arith.constant 0 : i32
    %c0_i32_0 = arith.constant 0 : i32
    %c0_i32_1 = arith.constant 0 : i32
    %c0_i32_2 = arith.constant 0 : i32
    return %arg0, %c0_i32, %c0_i32_0, %c0_i32_1 : i32, i32, i32, i32
  }
}

module attributes {stable_mosaic.version = 11 : i64} {
  func.func @_conv_tap_kernel(%arg0: i32, %arg1: memref<1x14x8x32xbf16, #tpu.memory_space<vmem>>, %arg2: memref<7x32x192xbf16, #tpu.memory_space<vmem>>, %arg3: memref<1x192xf32, #tpu.memory_space<vmem>>, %arg4: memref<1x192xf32, #tpu.memory_space<vmem>>, %arg5: memref<1x8x8x192xbf16, #tpu.memory_space<vmem>>) attributes {dimension_semantics = [#tpu.dimension_semantics<parallel>], iteration_bounds = array<i64: 2>, scalar_prefetch = 0 : i64, scratch_operands = 0 : i64, tpu.core_type = #tpu.core_type<tc>, window_params = [{transform_indices = @transform_0, window_bounds = array<i64: 1, 14, 8, 32>}, {pipeline_mode = #tpu.pipeline_mode<synchronous>, transform_indices = @transform_1, window_bounds = array<i64: 7, 32, 192>}, {pipeline_mode = #tpu.pipeline_mode<synchronous>, transform_indices = @transform_2, window_bounds = array<i64: 1, 192>}, {pipeline_mode = #tpu.pipeline_mode<synchronous>, transform_indices = @transform_3, window_bounds = array<i64: 1, 192>}, {transform_indices = @transform_4, window_bounds = array<i64: 1, 8, 8, 192>}]} {
    %c0 = arith.constant 0 : index
    %c0_0 = arith.constant 0 : index
    %c0_1 = arith.constant 0 : index
    %c0_2 = arith.constant 0 : index
    %0 = vector.load %arg1[%c0, %c0_0, %c0_1, %c0_2] : memref<1x14x8x32xbf16, #tpu.memory_space<vmem>>, vector<1x14x8x32xbf16>
    %1 = vector.shape_cast %0 : vector<1x14x8x32xbf16> to vector<14x8x32xbf16>
    %cst = arith.constant 0.000000e+00 : f32
    %2 = vector.broadcast %cst : f32 to vector<64x192xf32>
    %3 = vector.extract_strided_slice %1 {offsets = [0, 0, 0], sizes = [8, 8, 32], strides = [1, 1, 1]} : vector<14x8x32xbf16> to vector<8x8x32xbf16>
    %4 = vector.shape_cast %3 : vector<8x8x32xbf16> to vector<64x32xbf16>
    %c0_3 = arith.constant 0 : index
    %c0_4 = arith.constant 0 : index
    %c0_5 = arith.constant 0 : index
    %5 = vector.load %arg2[%c0_3, %c0_4, %c0_5] : memref<7x32x192xbf16, #tpu.memory_space<vmem>>, vector<1x32x192xbf16>
    %6 = vector.shape_cast %5 : vector<1x32x192xbf16> to vector<32x192xbf16>
    %cst_6 = arith.constant dense<0.000000e+00> : vector<64x192xf32>
    %7 = tpu.matmul %4, %6, %cst_6 {dimension_numbers = #tpu.dot_dimension_numbers<[1], [0], [0], [1], [0, 0, 1, 1], [], []>} : vector<64x32xbf16>, vector<32x192xbf16>, vector<64x192xf32> -> vector<64x192xf32>
    %8 = arith.addf %2, %7 : vector<64x192xf32>
    %9 = vector.extract_strided_slice %1 {offsets = [1, 0, 0], sizes = [8, 8, 32], strides = [1, 1, 1]} : vector<14x8x32xbf16> to vector<8x8x32xbf16>
    %10 = vector.shape_cast %9 : vector<8x8x32xbf16> to vector<64x32xbf16>
    %c1 = arith.constant 1 : index
    %c0_7 = arith.constant 0 : index
    %c0_8 = arith.constant 0 : index
    %11 = vector.load %arg2[%c1, %c0_7, %c0_8] : memref<7x32x192xbf16, #tpu.memory_space<vmem>>, vector<1x32x192xbf16>
    %12 = vector.shape_cast %11 : vector<1x32x192xbf16> to vector<32x192xbf16>
    %cst_9 = arith.constant dense<0.000000e+00> : vector<64x192xf32>
    %13 = tpu.matmul %10, %12, %cst_9 {dimension_numbers = #tpu.dot_dimension_numbers<[1], [0], [0], [1], [0, 0, 1, 1], [], []>} : vector<64x32xbf16>, vector<32x192xbf16>, vector<64x192xf32> -> vector<64x192xf32>
    %14 = arith.addf %8, %13 : vector<64x192xf32>
    %15 = vector.extract_strided_slice %1 {offsets = [2, 0, 0], sizes = [8, 8, 32], strides = [1, 1, 1]} : vector<14x8x32xbf16> to vector<8x8x32xbf16>
    %16 = vector.shape_cast %15 : vector<8x8x32xbf16> to vector<64x32xbf16>
    %c2 = arith.constant 2 : index
    %c0_10 = arith.constant 0 : index
    %c0_11 = arith.constant 0 : index
    %17 = vector.load %arg2[%c2, %c0_10, %c0_11] : memref<7x32x192xbf16, #tpu.memory_space<vmem>>, vector<1x32x192xbf16>
    %18 = vector.shape_cast %17 : vector<1x32x192xbf16> to vector<32x192xbf16>
    %cst_12 = arith.constant dense<0.000000e+00> : vector<64x192xf32>
    %19 = tpu.matmul %16, %18, %cst_12 {dimension_numbers = #tpu.dot_dimension_numbers<[1], [0], [0], [1], [0, 0, 1, 1], [], []>} : vector<64x32xbf16>, vector<32x192xbf16>, vector<64x192xf32> -> vector<64x192xf32>
    %20 = arith.addf %14, %19 : vector<64x192xf32>
    %21 = vector.extract_strided_slice %1 {offsets = [3, 0, 0], sizes = [8, 8, 32], strides = [1, 1, 1]} : vector<14x8x32xbf16> to vector<8x8x32xbf16>
    %22 = vector.shape_cast %21 : vector<8x8x32xbf16> to vector<64x32xbf16>
    %c3 = arith.constant 3 : index
    %c0_13 = arith.constant 0 : index
    %c0_14 = arith.constant 0 : index
    %23 = vector.load %arg2[%c3, %c0_13, %c0_14] : memref<7x32x192xbf16, #tpu.memory_space<vmem>>, vector<1x32x192xbf16>
    %24 = vector.shape_cast %23 : vector<1x32x192xbf16> to vector<32x192xbf16>
    %cst_15 = arith.constant dense<0.000000e+00> : vector<64x192xf32>
    %25 = tpu.matmul %22, %24, %cst_15 {dimension_numbers = #tpu.dot_dimension_numbers<[1], [0], [0], [1], [0, 0, 1, 1], [], []>} : vector<64x32xbf16>, vector<32x192xbf16>, vector<64x192xf32> -> vector<64x192xf32>
    %26 = arith.addf %20, %25 : vector<64x192xf32>
    %27 = vector.extract_strided_slice %1 {offsets = [4, 0, 0], sizes = [8, 8, 32], strides = [1, 1, 1]} : vector<14x8x32xbf16> to vector<8x8x32xbf16>
    %28 = vector.shape_cast %27 : vector<8x8x32xbf16> to vector<64x32xbf16>
    %c4 = arith.constant 4 : index
    %c0_16 = arith.constant 0 : index
    %c0_17 = arith.constant 0 : index
    %29 = vector.load %arg2[%c4, %c0_16, %c0_17] : memref<7x32x192xbf16, #tpu.memory_space<vmem>>, vector<1x32x192xbf16>
    %30 = vector.shape_cast %29 : vector<1x32x192xbf16> to vector<32x192xbf16>
    %cst_18 = arith.constant dense<0.000000e+00> : vector<64x192xf32>
    %31 = tpu.matmul %28, %30, %cst_18 {dimension_numbers = #tpu.dot_dimension_numbers<[1], [0], [0], [1], [0, 0, 1, 1], [], []>} : vector<64x32xbf16>, vector<32x192xbf16>, vector<64x192xf32> -> vector<64x192xf32>
    %32 = arith.addf %26, %31 : vector<64x192xf32>
    %33 = vector.extract_strided_slice %1 {offsets = [5, 0, 0], sizes = [8, 8, 32], strides = [1, 1, 1]} : vector<14x8x32xbf16> to vector<8x8x32xbf16>
    %34 = vector.shape_cast %33 : vector<8x8x32xbf16> to vector<64x32xbf16>
    %c5 = arith.constant 5 : index
    %c0_19 = arith.constant 0 : index
    %c0_20 = arith.constant 0 : index
    %35 = vector.load %arg2[%c5, %c0_19, %c0_20] : memref<7x32x192xbf16, #tpu.memory_space<vmem>>, vector<1x32x192xbf16>
    %36 = vector.shape_cast %35 : vector<1x32x192xbf16> to vector<32x192xbf16>
    %cst_21 = arith.constant dense<0.000000e+00> : vector<64x192xf32>
    %37 = tpu.matmul %34, %36, %cst_21 {dimension_numbers = #tpu.dot_dimension_numbers<[1], [0], [0], [1], [0, 0, 1, 1], [], []>} : vector<64x32xbf16>, vector<32x192xbf16>, vector<64x192xf32> -> vector<64x192xf32>
    %38 = arith.addf %32, %37 : vector<64x192xf32>
    %39 = vector.extract_strided_slice %1 {offsets = [6, 0, 0], sizes = [8, 8, 32], strides = [1, 1, 1]} : vector<14x8x32xbf16> to vector<8x8x32xbf16>
    %40 = vector.shape_cast %39 : vector<8x8x32xbf16> to vector<64x32xbf16>
    %c6 = arith.constant 6 : index
    %c0_22 = arith.constant 0 : index
    %c0_23 = arith.constant 0 : index
    %41 = vector.load %arg2[%c6, %c0_22, %c0_23] : memref<7x32x192xbf16, #tpu.memory_space<vmem>>, vector<1x32x192xbf16>
    %42 = vector.shape_cast %41 : vector<1x32x192xbf16> to vector<32x192xbf16>
    %cst_24 = arith.constant dense<0.000000e+00> : vector<64x192xf32>
    %43 = tpu.matmul %40, %42, %cst_24 {dimension_numbers = #tpu.dot_dimension_numbers<[1], [0], [0], [1], [0, 0, 1, 1], [], []>} : vector<64x32xbf16>, vector<32x192xbf16>, vector<64x192xf32> -> vector<64x192xf32>
    %44 = arith.addf %38, %43 : vector<64x192xf32>
    %c0_25 = arith.constant 0 : index
    %c0_26 = arith.constant 0 : index
    %45 = vector.load %arg3[%c0_25, %c0_26] : memref<1x192xf32, #tpu.memory_space<vmem>>, vector<1x192xf32>
    %46 = vector.broadcast %45 : vector<1x192xf32> to vector<64x192xf32>
    %47 = arith.mulf %44, %46 : vector<64x192xf32>
    %c0_27 = arith.constant 0 : index
    %c0_28 = arith.constant 0 : index
    %48 = vector.load %arg4[%c0_27, %c0_28] : memref<1x192xf32, #tpu.memory_space<vmem>>, vector<1x192xf32>
    %49 = vector.broadcast %48 : vector<1x192xf32> to vector<64x192xf32>
    %50 = arith.addf %47, %49 : vector<64x192xf32>
    %cst_29 = arith.constant 0.000000e+00 : f32
    %51 = vector.broadcast %cst_29 : f32 to vector<64x192xf32>
    %52 = arith.maximumf %50, %51 : vector<64x192xf32>
    %53 = vector.shape_cast %52 : vector<64x192xf32> to vector<1x8x8x192xf32>
    %54 = arith.truncf %53 : vector<1x8x8x192xf32> to vector<1x8x8x192xbf16>
    %c0_30 = arith.constant 0 : index
    %c0_31 = arith.constant 0 : index
    %c0_32 = arith.constant 0 : index
    %c0_33 = arith.constant 0 : index
    %55 = vector.load %arg5[%c0_30, %c0_31, %c0_32, %c0_33] : memref<1x8x8x192xbf16, #tpu.memory_space<vmem>>, vector<1x8x8x192xbf16>
    tpu.vector_store %arg5[%c0_30, %c0_31, %c0_32, %c0_33], %54 {strides = array<i32>} : memref<1x8x8x192xbf16, #tpu.memory_space<vmem>>, vector<1x8x8x192xbf16>,
    return
  }
  func.func @transform_0(%arg0: i32) -> (i32, i32, i32, i32) {
    %c0_i32 = arith.constant 0 : i32
    %c0_i32_0 = arith.constant 0 : i32
    %c0_i32_1 = arith.constant 0 : i32
    %c0_i32_2 = arith.constant 0 : i32
    return %arg0, %c0_i32, %c0_i32_0, %c0_i32_1 : i32, i32, i32, i32
  }
  func.func @transform_1(%arg0: i32) -> (i32, i32, i32) {
    %c0_i32 = arith.constant 0 : i32
    %c0_i32_0 = arith.constant 0 : i32
    %c0_i32_1 = arith.constant 0 : i32
    %c0_i32_2 = arith.constant 0 : i32
    return %c0_i32, %c0_i32_0, %c0_i32_1 : i32, i32, i32
  }
  func.func @transform_2(%arg0: i32) -> (i32, i32) {
    %c0_i32 = arith.constant 0 : i32
    %c0_i32_0 = arith.constant 0 : i32
    %c0_i32_1 = arith.constant 0 : i32
    return %c0_i32, %c0_i32_0 : i32, i32
  }
  func.func @transform_3(%arg0: i32) -> (i32, i32) {
    %c0_i32 = arith.constant 0 : i32
    %c0_i32_0 = arith.constant 0 : i32
    %c0_i32_1 = arith.constant 0 : i32
    return %c0_i32, %c0_i32_0 : i32, i32
  }
  func.func @transform_4(%arg0: i32) -> (i32, i32, i32, i32) {
    %c0_i32 = arith.constant 0 : i32
    %c0_i32_0 = arith.constant 0 : i32
    %c0_i32_1 = arith.constant 0 : i32
    %c0_i32_2 = arith.constant 0 : i32
    return %arg0, %c0_i32, %c0_i32_0, %c0_i32_1 : i32, i32, i32, i32
  }
}

module attributes {stable_mosaic.version = 11 : i64} {
  func.func @_avgpool_conv_bn_relu_kernel(%arg0: i32, %arg1: memref<1x10x10x768xbf16, #tpu.memory_space<vmem>>, %arg2: memref<768x192xbf16, #tpu.memory_space<vmem>>, %arg3: memref<1x192xf32, #tpu.memory_space<vmem>>, %arg4: memref<1x192xf32, #tpu.memory_space<vmem>>, %arg5: memref<1x8x8x192xbf16, #tpu.memory_space<vmem>>) attributes {dimension_semantics = [#tpu.dimension_semantics<parallel>], iteration_bounds = array<i64: 2>, scalar_prefetch = 0 : i64, scratch_operands = 0 : i64, tpu.core_type = #tpu.core_type<tc>, window_params = [{transform_indices = @transform_0, window_bounds = array<i64: 1, 10, 10, 768>}, {pipeline_mode = #tpu.pipeline_mode<synchronous>, transform_indices = @transform_1, window_bounds = array<i64: 768, 192>}, {pipeline_mode = #tpu.pipeline_mode<synchronous>, transform_indices = @transform_2, window_bounds = array<i64: 1, 192>}, {pipeline_mode = #tpu.pipeline_mode<synchronous>, transform_indices = @transform_3, window_bounds = array<i64: 1, 192>}, {transform_indices = @transform_4, window_bounds = array<i64: 1, 8, 8, 192>}]} {
    %c0 = arith.constant 0 : index
    %c0_0 = arith.constant 0 : index
    %c0_1 = arith.constant 0 : index
    %c0_2 = arith.constant 0 : index
    %0 = vector.load %arg1[%c0, %c0_0, %c0_1, %c0_2] : memref<1x10x10x768xbf16, #tpu.memory_space<vmem>>, vector<1x10x10x768xbf16>
    %1 = vector.shape_cast %0 : vector<1x10x10x768xbf16> to vector<10x10x768xbf16>
    %2 = vector.extract_strided_slice %1 {offsets = [0, 0, 0], sizes = [10, 8, 768], strides = [1, 1, 1]} : vector<10x10x768xbf16> to vector<10x8x768xbf16>
    %3 = arith.extf %2 : vector<10x8x768xbf16> to vector<10x8x768xf32>
    %4 = vector.extract_strided_slice %1 {offsets = [0, 1, 0], sizes = [10, 8, 768], strides = [1, 1, 1]} : vector<10x10x768xbf16> to vector<10x8x768xbf16>
    %5 = arith.extf %4 : vector<10x8x768xbf16> to vector<10x8x768xf32>
    %6 = arith.addf %3, %5 : vector<10x8x768xf32>
    %7 = vector.extract_strided_slice %1 {offsets = [0, 2, 0], sizes = [10, 8, 768], strides = [1, 1, 1]} : vector<10x10x768xbf16> to vector<10x8x768xbf16>
    %8 = arith.extf %7 : vector<10x8x768xbf16> to vector<10x8x768xf32>
    %9 = arith.addf %6, %8 : vector<10x8x768xf32>
    %10 = vector.extract_strided_slice %9 {offsets = [0, 0, 0], sizes = [8, 8, 768], strides = [1, 1, 1]} : vector<10x8x768xf32> to vector<8x8x768xf32>
    %11 = vector.extract_strided_slice %9 {offsets = [1, 0, 0], sizes = [8, 8, 768], strides = [1, 1, 1]} : vector<10x8x768xf32> to vector<8x8x768xf32>
    %12 = arith.addf %10, %11 : vector<8x8x768xf32>
    %13 = vector.extract_strided_slice %9 {offsets = [2, 0, 0], sizes = [8, 8, 768], strides = [1, 1, 1]} : vector<10x8x768xf32> to vector<8x8x768xf32>
    %14 = arith.addf %12, %13 : vector<8x8x768xf32>
    %15 = vector.shape_cast %14 : vector<8x8x768xf32> to vector<64x768xf32>
    %16 = arith.truncf %15 : vector<64x768xf32> to vector<64x768xbf16>
    %c0_3 = arith.constant 0 : index
    %c0_4 = arith.constant 0 : index
    %17 = vector.load %arg2[%c0_3, %c0_4] : memref<768x192xbf16, #tpu.memory_space<vmem>>, vector<768x192xbf16>
    %cst = arith.constant dense<0.000000e+00> : vector<64x192xf32>
    %18 = tpu.matmul %16, %17, %cst {dimension_numbers = #tpu.dot_dimension_numbers<[1], [0], [0], [1], [0, 0, 1, 1], [], []>} : vector<64x768xbf16>, vector<768x192xbf16>, vector<64x192xf32> -> vector<64x192xf32>
    %c0_5 = arith.constant 0 : index
    %c0_6 = arith.constant 0 : index
    %19 = vector.load %arg3[%c0_5, %c0_6] : memref<1x192xf32, #tpu.memory_space<vmem>>, vector<1x192xf32>
    %20 = vector.broadcast %19 : vector<1x192xf32> to vector<64x192xf32>
    %21 = arith.mulf %18, %20 : vector<64x192xf32>
    %c0_7 = arith.constant 0 : index
    %c0_8 = arith.constant 0 : index
    %22 = vector.load %arg4[%c0_7, %c0_8] : memref<1x192xf32, #tpu.memory_space<vmem>>, vector<1x192xf32>
    %23 = vector.broadcast %22 : vector<1x192xf32> to vector<64x192xf32>
    %24 = arith.addf %21, %23 : vector<64x192xf32>
    %cst_9 = arith.constant 0.000000e+00 : f32
    %25 = vector.broadcast %cst_9 : f32 to vector<64x192xf32>
    %26 = arith.maximumf %24, %25 : vector<64x192xf32>
    %27 = vector.shape_cast %26 : vector<64x192xf32> to vector<1x8x8x192xf32>
    %28 = arith.truncf %27 : vector<1x8x8x192xf32> to vector<1x8x8x192xbf16>
    %c0_10 = arith.constant 0 : index
    %c0_11 = arith.constant 0 : index
    %c0_12 = arith.constant 0 : index
    %c0_13 = arith.constant 0 : index
    %29 = vector.load %arg5[%c0_10, %c0_11, %c0_12, %c0_13] : memref<1x8x8x192xbf16, #tpu.memory_space<vmem>>, vector<1x8x8x192xbf16>
    tpu.vector_store %arg5[%c0_10, %c0_11, %c0_12, %c0_13], %28 {strides = array<i32>} : memref<1x8x8x192xbf16, #tpu.memory_space<vmem>>, vector<1x8x8x192xbf16>,
    return
  }
  func.func @transform_0(%arg0: i32) -> (i32, i32, i32, i32) {
    %c0_i32 = arith.constant 0 : i32
    %c0_i32_0 = arith.constant 0 : i32
    %c0_i32_1 = arith.constant 0 : i32
    %c0_i32_2 = arith.constant 0 : i32
    return %arg0, %c0_i32, %c0_i32_0, %c0_i32_1 : i32, i32, i32, i32
  }
  func.func @transform_1(%arg0: i32) -> (i32, i32) {
    %c0_i32 = arith.constant 0 : i32
    %c0_i32_0 = arith.constant 0 : i32
    %c0_i32_1 = arith.constant 0 : i32
    return %c0_i32, %c0_i32_0 : i32, i32
  }
  func.func @transform_2(%arg0: i32) -> (i32, i32) {
    %c0_i32 = arith.constant 0 : i32
    %c0_i32_0 = arith.constant 0 : i32
    %c0_i32_1 = arith.constant 0 : i32
    return %c0_i32, %c0_i32_0 : i32, i32
  }
  func.func @transform_3(%arg0: i32) -> (i32, i32) {
    %c0_i32 = arith.constant 0 : i32
    %c0_i32_0 = arith.constant 0 : i32
    %c0_i32_1 = arith.constant 0 : i32
    return %c0_i32, %c0_i32_0 : i32, i32
  }
  func.func @transform_4(%arg0: i32) -> (i32, i32, i32, i32) {
    %c0_i32 = arith.constant 0 : i32
    %c0_i32_0 = arith.constant 0 : i32
    %c0_i32_1 = arith.constant 0 : i32
    %c0_i32_2 = arith.constant 0 : i32
    return %arg0, %c0_i32, %c0_i32_0, %c0_i32_1 : i32, i32, i32, i32
  }
}

</mosaic_0001>

<llo_original>
// kernel: block2_module_b.11
$region0: #{block2_module_b.11}
  #allocation0 [shape = 'u32[]', space=smem, size = 0x4, offset = 0x4, fixed_abs, tag = 'smem constant byte address 0x4 - core index']
  #allocation1 [shape = 'u32[72,128]{1,0:T(1,128)}', space=vmem, size = 0x9000, scoped, tag = 'internal scratch']
  %s0 = inlined_call_operand.vmem [shape: bf16[2,14,8,32], index: 0, kind: input, shape index: {}]
  %s1 = inlined_call_operand.vmem [shape: bf16[7,32,32], index: 1, kind: input, shape index: {}]
  %s2 = inlined_call_operand.vmem [shape: f32[1,32], index: 2, kind: input, shape index: {}]
  %s3 = inlined_call_operand.vmem [shape: f32[1,32], index: 3, kind: input, shape index: {}]
  %s4 = inlined_call_operand.vmem [shape: bf16[2,8,8,32], index: 4, kind: output, shape index: {}]
  %s5 = sld [smem:[#allocation0]]
  $region49: #{block2_module_b.11} parent=0
    _
  %s7 = ssub.s32 1, %s5
  %s8 = scalar_select 0, %s7, %s5
  loop: start=0, step=1, limit=4
  $region2: #{block2_module_b.11} parent=0 // loop_pre_header
    _
  $region3: #{block2_module_b.11} parent=0 // loop_header
    %s10 = sphi 0, %s14
    %p11 = scmp.ge.s32.totalorder %s10, 4
    %s20 = sphi 0, %s22
    %s23 = sphi 0, %s20
    %s24 = sphi 0, %s23
    %s40 = sphi 0, %s24
    %s44 = sphi 0, %s44
    %s46 = sphi 0, %s44
    %s47 = sphi 0, %s46
    %s61 = sphi 0, %s47
    %s65 = sphi 0, %s65
    %s67 = sphi 0, %s65
    %s68 = sphi 0, %s67
    %s82 = sphi 0, %s68
    %s86 = sphi 0, %s86
    %s88 = sphi 0, %s86
    %s89 = sphi 0, %s88
    %s103 = sphi 0, %s89
    %s109 = sphi 0, %s111
    %s112 = sphi 0, %s109
    %s113 = sphi 0, %s112
    %s129 = sphi 0, %s113
  $region4: #{block2_module_b.11} parent=0 // loop_header_branch
    %13 = sbr.rel (%p11) target = $region8
  $region5: #{block2_module_b.11} parent=0 // loop_body
    %s15 = ssub.s32 %s10, 1
    %s16 = ssub.s32 %s10, 2
    %s17 = sadd.s32 %s10, 1
    %s18 = ssub.s32 %s10, %s17
    %p19 = scmp.eq.s32.totalorder %s18, 0
    %s21 = sadd.s32 %s20, 1
    %s22 = scalar_select %p19, %s20, %s21
    %p25 = pneg %p19
    %p26 = scmp.eq.s32.totalorder %s10, 1
    %p27 = por %p25, %p26
    %p28 = scmp.ne.s32.totalorder %s20, %s23
    %p29 = scmp.eq.s32.totalorder %s10, 0
    %p30 = por %p28, %p29
    %p31 = scmp.ne.s32.totalorder %s20, %s23
    %p32 = scmp.eq.s32.totalorder %s15, 1
    %p33 = por %p31, %p32
    %p34 = scmp.ne.s32.totalorder %s23, %s24
    %p35 = scmp.eq.s32.totalorder %s15, 0
    %p36 = por %p34, %p35
    %p37 = scmp.ne.s32.totalorder %s23, %s24
    %p38 = scmp.eq.s32.totalorder %s16, 1
    %p39 = por %p37, %p38
    %p41 = scmp.ne.s32.totalorder %s24, %s40
    %p42 = scmp.eq.s32.totalorder %s16, 0
    %p43 = por %p41, %p42
    %s45 = sadd.s32 %s44, 1
    %p48 = scmp.eq.s32.totalorder %s10, 1
    %p49 = scmp.ne.s32.totalorder %s44, %s46
    %p50 = scmp.eq.s32.totalorder %s10, 0
    %p51 = por %p49, %p50
    %p52 = scmp.ne.s32.totalorder %s44, %s46
    %p53 = scmp.eq.s32.totalorder %s15, 1
    %p54 = por %p52, %p53
    %p55 = scmp.ne.s32.totalorder %s46, %s47
    %p56 = scmp.eq.s32.totalorder %s15, 0
    %p57 = por %p55, %p56
    %p58 = scmp.ne.s32.totalorder %s46, %s47
    %p59 = scmp.eq.s32.totalorder %s16, 1
    %p60 = por %p58, %p59
    %p62 = scmp.ne.s32.totalorder %s47, %s61
    %p63 = scmp.eq.s32.totalorder %s16, 0
    %p64 = por %p62, %p63
    %s66 = sadd.s32 %s65, 1
    %p69 = scmp.eq.s32.totalorder %s10, 1
    %p70 = scmp.ne.s32.totalorder %s65, %s67
    %p71 = scmp.eq.s32.totalorder %s10, 0
    %p72 = por %p70, %p71
    %p73 = scmp.ne.s32.totalorder %s65, %s67
    %p74 = scmp.eq.s32.totalorder %s15, 1
    %p75 = por %p73, %p74
    %p76 = scmp.ne.s32.totalorder %s67, %s68
    %p77 = scmp.eq.s32.totalorder %s15, 0
    %p78 = por %p76, %p77
    %p79 = scmp.ne.s32.totalorder %s67, %s68
    %p80 = scmp.eq.s32.totalorder %s16, 1
    %p81 = por %p79, %p80
    %p83 = scmp.ne.s32.totalorder %s68, %s82
    %p84 = scmp.eq.s32.totalorder %s16, 0
    %p85 = por %p83, %p84
    %s87 = sadd.s32 %s86, 1
    %p90 = scmp.eq.s32.totalorder %s10, 1
    %p91 = scmp.ne.s32.totalorder %s86, %s88
    %p92 = scmp.eq.s32.totalorder %s10, 0
    %p93 = por %p91, %p92
    %p94 = scmp.ne.s32.totalorder %s86, %s88
    %p95 = scmp.eq.s32.totalorder %s15, 1
    %p96 = por %p94, %p95
    %p97 = scmp.ne.s32.totalorder %s88, %s89
    %p98 = scmp.eq.s32.totalorder %s15, 0
    %p99 = por %p97, %p98
    %p100 = scmp.ne.s32.totalorder %s88, %s89
    %p101 = scmp.eq.s32.totalorder %s16, 1
    %p102 = por %p100, %p101
    %p104 = scmp.ne.s32.totalorder %s89, %s103
    %p105 = scmp.eq.s32.totalorder %s16, 0
    %p106 = por %p104, %p105
    %s107 = ssub.s32 %s10, %s17
    %p108 = scmp.eq.s32.totalorder %s107, 0
    %s110 = sadd.s32 %s109, 1
    %s111 = scalar_select %p108, %s109, %s110
    %p114 = pneg %p108
    %p115 = scmp.eq.s32.totalorder %s10, 1
    %p116 = por %p114, %p115
    %p117 = scmp.ne.s32.totalorder %s109, %s112
    %p118 = scmp.eq.s32.totalorder %s10, 0
    %p119 = por %p117, %p118
    %p120 = scmp.ne.s32.totalorder %s109, %s112
    %p121 = scmp.eq.s32.totalorder %s15, 1
    %p122 = por %p120, %p121
    %p123 = scmp.ne.s32.totalorder %s112, %s113
    %p124 = scmp.eq.s32.totalorder %s15, 0
    %p125 = por %p123, %p124
    %p126 = scmp.ne.s32.totalorder %s112, %s113
    %p127 = scmp.eq.s32.totalorder %s16, 1
    %p128 = por %p126, %p127
    %p130 = scmp.ne.s32.totalorder %s113, %s129
    %p131 = scmp.eq.s32.totalorder %s16, 0
    %p132 = por %p130, %p131
    %p133 = scmp.le.s32.totalorder 1, %s10
    %p134 = scmp.lt.s32.totalorder %s10, 3
    %p135 = pnand %p133, %p134
    %p136 = pneg %p135
    // Predicated region
    $region9: #{block2_module_b.11} parent=5 // pred_check
      _
    $region10: #{block2_module_b.11} parent=5 // pred_check_branch
      %138 = sbr.rel (%p135) target = $region12
    $region11: #{block2_module_b.11} parent=5 // pred_region
      %s139 = ssub.s32 %s10, 1
      // Predicated region
      $region13: #{block2_module_b.11} parent=11 // pred_check
        %p140 = pneg %p57
      $region14: #{block2_module_b.11} parent=11 // pred_check_branch
        %142 = sbr.rel (%p140) target = $region16
      $region15: #{block2_module_b.11} parent=11 // pred_region
        _
      $region16: #{block2_module_b.11} parent=11 // pred_fallthru
        _
      // Predicated region
      $region17: #{block2_module_b.11} parent=11 // pred_check
        %p143 = pneg %p78
      $region18: #{block2_module_b.11} parent=11 // pred_check_branch
        %145 = sbr.rel (%p143) target = $region20
      $region19: #{block2_module_b.11} parent=11 // pred_region
        _
      $region20: #{block2_module_b.11} parent=11 // pred_fallthru
        _
      // Predicated region
      $region21: #{block2_module_b.11} parent=11 // pred_check
        %p146 = pneg %p99
      $region22: #{block2_module_b.11} parent=11 // pred_check_branch
        %148 = sbr.rel (%p146) target = $region24
      $region23: #{block2_module_b.11} parent=11 // pred_region
        _
      $region24: #{block2_module_b.11} parent=11 // pred_fallthru
        _
    $region12: #{block2_module_b.11} parent=5 // pred_fallthru
      _
    %p149 = scmp.lt.s32.totalorder %s10, 2
    // Predicated region
    $region25: #{block2_module_b.11} parent=5 // pred_check
      %p150 = pneg %p149
    $region26: #{block2_module_b.11} parent=5 // pred_check_branch
      %152 = sbr.rel (%p150) target = $region28
    $region27: #{block2_module_b.11} parent=5 // pred_region
      // Predicated region
      $region29: #{block2_module_b.11} parent=27 // pred_check
        %p153 = pneg %p30
      $region30: #{block2_module_b.11} parent=27 // pred_check_branch
        %155 = sbr.rel (%p153) target = $region32
      $region31: #{block2_module_b.11} parent=27 // pred_region
        %p156 = scmp.lt.s32.totalorder %s10, 1
        %s157 = scalar_select %p156, %s10, 1
        %s158 = smul.addr %s157, 14
        %s159 = smul.addr %s158, 4
        %s160 = scalar_lea.vmem %s0, %s159
      $region32: #{block2_module_b.11} parent=27 // pred_fallthru
        _
    $region28: #{block2_module_b.11} parent=5 // pred_fallthru
      _
    %p161 = scmp.le.s32.totalorder 1, %s10
    %p162 = scmp.lt.s32.totalorder %s10, 3
    %p163 = pnand %p161, %p162
    %p164 = pneg %p163
    // Predicated region
    $region33: #{block2_module_b.11} parent=5 // pred_check
      _
    $region34: #{block2_module_b.11} parent=5 // pred_check_branch
      %166 = sbr.rel (%p163) target = $region36
    $region35: #{block2_module_b.11} parent=5 // pred_region
      %s167 = ssub.s32 %s10, 1
      %p168 = scmp.lt.s32.totalorder %s15, 1
      %s169 = scalar_select %p168, %s15, 1
      %s170 = smul.addr %s169, 14
      %s171 = smul.addr %s170, 4
      %s172 = scalar_lea.vmem %s0, %s171
      %p173 = pneg %p36
      %p174 = pneg %p33
      %p175 = pneg %p57
      %p176 = pneg %p54
      %p177 = pneg %p78
      %p178 = pneg %p75
      %p179 = pneg %p99
      %p180 = pneg %p96
      %p181 = pneg %p125
      %p182 = pneg %p122
      %p183 = scmp.lt.s32.totalorder %s15, 1
      %s184 = scalar_select %p183, %s15, 1
      %s185 = smul.addr %s184, 8
      %s186 = smul.addr %s185, 4
      %s187 = scalar_lea.vmem %s4, %s186
      %p188 = scmp.lt.s32.totalorder %s15, 1
      %s189 = scalar_select %p188, %s15, 1
      %s190 = smul.addr %s189, 14
      %s191 = smul.addr %s190, 4
      %s192 = scalar_lea.vmem %s0, %s191
      %p193 = scmp.lt.s32.totalorder %s15, 1
      %s194 = scalar_select %p193, %s15, 1
      %s195 = smul.addr %s194, 8
      %s196 = smul.addr %s195, 4
      %s197 = scalar_lea.vmem %s4, %s196
      %v199 = vld [vmem:[%s192] sm:$0xf]
      %v200 = vld [vmem:[%s192 + $0x4] sm:$0xf]
      %v201 = vld [vmem:[%s192 + $0x8] sm:$0xf]
      %v202 = vld [vmem:[%s192 + $0xc] sm:$0xf]
      %v203 = vld [vmem:[%s192 + $0x10] sm:$0xf]
      %v204 = vld [vmem:[%s192 + $0x14] sm:$0xf]
      %v205 = vld [vmem:[%s192 + $0x18] sm:$0xf]
      %v206 = vld [vmem:[%s192 + $0x1c] sm:$0xf]
      %v207 = vld [vmem:[%s192 + $0x20] sm:$0xf]
      %v208 = vld [vmem:[%s192 + $0x24] sm:$0xf]
      %v209 = vld [vmem:[%s192 + $0x28] sm:$0xf]
      %v210 = vld [vmem:[%s192 + $0x2c] sm:$0xf]
      %v211 = vld [vmem:[%s192 + $0x30] sm:$0xf]
      %v212 = vld [vmem:[%s192 + $0x34] sm:$0xf]
      %v213 = vld [vmem:[%s1] sm:$0xf]
      %v214 = vld [vmem:[%s1 + $0x4] sm:$0xf]
      %v215 = vld [vmem:[%s1 + $0x8] sm:$0xf]
      %v216 = vld [vmem:[%s1 + $0xc] sm:$0xf]
      %s217 = scalar_lea.vmem %s1, 16
      %v218 = vld [vmem:[%s217] sm:$0xf]
      %v219 = vld [vmem:[%s217 + $0x4] sm:$0xf]
      %v220 = vld [vmem:[%s217 + $0x8] sm:$0xf]
      %v221 = vld [vmem:[%s217 + $0xc] sm:$0xf]
      %v230 = vunpack.c.l.b16 %v200
      %v231 = vunpack.c.l.b16 %v201
      %v232 = vunpack.c.l.b16 %v202
      %v233 = vunpack.c.l.b16 %v203
      %v234 = vunpack.c.l.b16 %v204
      %v235 = vunpack.c.l.b16 %v205
      %v236 = vunpack.c.l.b16 %v206
      %v237 = vunpack.c.l.b16 %v207
      %v238 = vpack.c.b16 %v231, %v230
      %v239 = vpack.c.b16 %v233, %v232
      %v240 = vpack.c.b16 %v235, %v234
      %v241 = vpack.c.b16 %v237, %v236
      %v246 = vunpack.c.l.b16 %v218
      %v247 = vunpack.c.l.b16 %v219
      %v248 = vunpack.c.l.b16 %v220
      %v249 = vunpack.c.l.b16 %v221
      %v250 = vpack.c.b16 %v247, %v246
      %v251 = vpack.c.b16 %v249, %v248
      %vm254 = vcmask 261120
      %v256 = vsel %vm254, %v238, 0
      %v259 = vsel %vm254, %v239, 0
      %v262 = vsel %vm254, %v240, 0
      %v265 = vsel %vm254, %v241, 0
      %267 = vmatpush.bf16.msra.mxu0 0
      %268 = vmatpush.bf16.msra.mxu0 0
      %269 = vmatpush.bf16.msra.mxu0 0
      %270 = vmatpush.bf16.msra.mxu0 0
      %271 = vmatpush.bf16.msra.mxu0 0
      %272 = vmatpush.bf16.msra.mxu0 0
      %273 = vmatpush.bf16.msra.mxu0 %v251
      %274 = vmatpush.bf16.msra.mxu0 %v250
      %275 = vmatmul.bf16.gmra.mxu0 %v256
      %v276 = vpop.f32.mrf.mxu0
      %v277 = vadd.f32 0.0, %v276
      %v278 = vpop.f32.mrf.mxu0
      %v279 = vadd.f32 0.0, %v278
      %280 = vmatmul.bf16.gmra.mxu0 %v259
      %v281 = vpop.f32.mrf.mxu0
      %v282 = vadd.f32 0.0, %v281
      %v283 = vpop.f32.mrf.mxu0
      %v284 = vadd.f32 0.0, %v283
      %285 = vmatmul.bf16.gmra.mxu0 %v262
      %v286 = vpop.f32.mrf.mxu0
      %v287 = vadd.f32 0.0, %v286
      %v288 = vpop.f32.mrf.mxu0
      %v289 = vadd.f32 0.0, %v288
      %290 = vmatmul.bf16.gmra.mxu0 %v265
      %v291 = vpop.f32.mrf.mxu0
      %v292 = vadd.f32 0.0, %v291
      %v293 = vpop.f32.mrf.mxu0
      %v294 = vadd.f32 0.0, %v293
      %295 = vdwg.mxu0
      %v297 = vunpack.c.l.b16 %v199
      %v298 = vpack.c.b16 %v230, %v297
      %v299 = vpack.c.b16 %v232, %v231
      %v300 = vpack.c.b16 %v234, %v233
      %v301 = vpack.c.b16 %v236, %v235
      %v306 = vunpack.c.l.b16 %v213
      %v307 = vunpack.c.l.b16 %v214
      %v308 = vunpack.c.l.b16 %v215
      %v309 = vunpack.c.l.b16 %v216
      %v310 = vpack.c.b16 %v307, %v306
      %v311 = vpack.c.b16 %v309, %v308
      %v315 = vsel %vm254, %v298, 0
      %v318 = vsel %vm254, %v299, 0
      %v321 = vsel %vm254, %v300, 0
      %v324 = vsel %vm254, %v301, 0
      %326 = vmatpush.bf16.msra.mxu0 0
      %327 = vmatpush.bf16.msra.mxu0 0
      %328 = vmatpush.bf16.msra.mxu0 0
      %329 = vmatpush.bf16.msra.mxu0 0
      %330 = vmatpush.bf16.msra.mxu0 0
      %331 = vmatpush.bf16.msra.mxu0 0
      %332 = vmatpush.bf16.msra.mxu0 %v311
      %333 = vmatpush.bf16.msra.mxu0 %v310
      %334 = vmatmul.bf16.gmra.mxu0 %v315
      %v335 = vpop.f32.mrf.mxu0
      %v336 = vadd.f32 %v277, %v335
      %v337 = vpop.f32.mrf.mxu0
      %v338 = vadd.f32 %v279, %v337
      %339 = vmatmul.bf16.gmra.mxu0 %v318
      %v340 = vpop.f32.mrf.mxu0
      %v341 = vadd.f32 %v282, %v340
      %v342 = vpop.f32.mrf.mxu0
      %v343 = vadd.f32 %v284, %v342
      %344 = vmatmul.bf16.gmra.mxu0 %v321
      %v345 = vpop.f32.mrf.mxu0
      %v346 = vadd.f32 %v287, %v345
      %v347 = vpop.f32.mrf.mxu0
      %v348 = vadd.f32 %v289, %v347
      %349 = vmatmul.bf16.gmra.mxu0 %v324
      %v350 = vpop.f32.mrf.mxu0
      %v351 = vadd.f32 %v292, %v350
      %v352 = vpop.f32.mrf.mxu0
      %v353 = vadd.f32 %v294, %v352
      %354 = vdwg.mxu0
      %s355 = scalar_lea.vmem %s1, 32
      %v356 = vld [vmem:[%s355] sm:$0xf]
      %v357 = vld [vmem:[%s355 + $0x4] sm:$0xf]
      %v358 = vld [vmem:[%s355 + $0x8] sm:$0xf]
      %v359 = vld [vmem:[%s355 + $0xc] sm:$0xf]
      %v361 = vunpack.c.l.b16 %v208
      %v362 = vpack.c.b16 %v361, %v237
      %v367 = vunpack.c.l.b16 %v356
      %v368 = vunpack.c.l.b16 %v357
      %v369 = vunpack.c.l.b16 %v358
      %v370 = vunpack.c.l.b16 %v359
      %v371 = vpack.c.b16 %v368, %v367
      %v372 = vpack.c.b16 %v370, %v369
      %v376 = vsel %vm254, %v362, 0
      %378 = vmatpush.bf16.msra.mxu0 0
      %379 = vmatpush.bf16.msra.mxu0 0
      %380 = vmatpush.bf16.msra.mxu0 0
      %381 = vmatpush.bf16.msra.mxu0 0
      %382 = vmatpush.bf16.msra.mxu0 0
      %383 = vmatpush.bf16.msra.mxu0 0
      %384 = vmatpush.bf16.msra.mxu0 %v372
      %385 = vmatpush.bf16.msra.mxu0 %v371
      %386 = vmatmul.bf16.gmra.mxu0 %v318
      %v387 = vpop.f32.mrf.mxu0
      %v388 = vadd.f32 0.0, %v387
      %v389 = vpop.f32.mrf.mxu0
      %v390 = vadd.f32 0.0, %v389
      %391 = vmatmul.bf16.gmra.mxu0 %v321
      %v392 = vpop.f32.mrf.mxu0
      %v393 = vadd.f32 0.0, %v392
      %v394 = vpop.f32.mrf.mxu0
      %v395 = vadd.f32 0.0, %v394
      %396 = vmatmul.bf16.gmra.mxu0 %v324
      %v397 = vpop.f32.mrf.mxu0
      %v398 = vadd.f32 0.0, %v397
      %v399 = vpop.f32.mrf.mxu0
      %v400 = vadd.f32 0.0, %v399
      %401 = vmatmul.bf16.gmra.mxu0 %v376
      %v402 = vpop.f32.mrf.mxu0
      %v403 = vadd.f32 0.0, %v402
      %v404 = vpop.f32.mrf.mxu0
      %v405 = vadd.f32 0.0, %v404
      %406 = vdwg.mxu0
      %v407 = vadd.f32 %v336, %v388
      %v408 = vadd.f32 %v338, %v390
      %v409 = vadd.f32 %v341, %v393
      %v410 = vadd.f32 %v343, %v395
      %v411 = vadd.f32 %v346, %v398
      %v412 = vadd.f32 %v348, %v400
      %v413 = vadd.f32 %v351, %v403
      %v414 = vadd.f32 %v353, %v405
      %s415 = scalar_lea.vmem %s1, 48
      %v416 = vld [vmem:[%s415] sm:$0xf]
      %v417 = vld [vmem:[%s415 + $0x4] sm:$0xf]
      %v418 = vld [vmem:[%s415 + $0x8] sm:$0xf]
      %v419 = vld [vmem:[%s415 + $0xc] sm:$0xf]
      %v421 = vunpack.c.l.b16 %v209
      %v422 = vpack.c.b16 %v421, %v361
      %v427 = vunpack.c.l.b16 %v416
      %v428 = vunpack.c.l.b16 %v417
      %v429 = vunpack.c.l.b16 %v418
      %v430 = vunpack.c.l.b16 %v419
      %v431 = vpack.c.b16 %v428, %v427
      %v432 = vpack.c.b16 %v430, %v429
      %v436 = vsel %vm254, %v422, 0
      %438 = vmatpush.bf16.msra.mxu0 0
      %439 = vmatpush.bf16.msra.mxu0 0
      %440 = vmatpush.bf16.msra.mxu0 0
      %441 = vmatpush.bf16.msra.mxu0 0
      %442 = vmatpush.bf16.msra.mxu0 0
      %443 = vmatpush.bf16.msra.mxu0 0
      %444 = vmatpush.bf16.msra.mxu0 %v432
      %445 = vmatpush.bf16.msra.mxu0 %v431
      %446 = vmatmul.bf16.gmra.mxu0 %v259
      %v447 = vpop.f32.mrf.mxu0
      %v448 = vadd.f32 0.0, %v447
      %v449 = vpop.f32.mrf.mxu0
      %v450 = vadd.f32 0.0, %v449
      %451 = vmatmul.bf16.gmra.mxu0 %v262
      %v452 = vpop.f32.mrf.mxu0
      %v453 = vadd.f32 0.0, %v452
      %v454 = vpop.f32.mrf.mxu0
      %v455 = vadd.f32 0.0, %v454
      %456 = vmatmul.bf16.gmra.mxu0 %v265
      %v457 = vpop.f32.mrf.mxu0
      %v458 = vadd.f32 0.0, %v457
      %v459 = vpop.f32.mrf.mxu0
      %v460 = vadd.f32 0.0, %v459
      %461 = vmatmul.bf16.gmra.mxu0 %v436
      %v462 = vpop.f32.mrf.mxu0
      %v463 = vadd.f32 0.0, %v462
      %v464 = vpop.f32.mrf.mxu0
      %v465 = vadd.f32 0.0, %v464
      %466 = vdwg.mxu0
      %v467 = vadd.f32 %v407, %v448
      %v468 = vadd.f32 %v408, %v450
      %v469 = vadd.f32 %v409, %v453
      %v470 = vadd.f32 %v410, %v455
      %v471 = vadd.f32 %v411, %v458
      %v472 = vadd.f32 %v412, %v460
      %v473 = vadd.f32 %v413, %v463
      %v474 = vadd.f32 %v414, %v465
      %s475 = scalar_lea.vmem %s1, 64
      %v476 = vld [vmem:[%s475] sm:$0xf]
      %v477 = vld [vmem:[%s475 + $0x4] sm:$0xf]
      %v478 = vld [vmem:[%s475 + $0x8] sm:$0xf]
      %v479 = vld [vmem:[%s475 + $0xc] sm:$0xf]
      %v481 = vunpack.c.l.b16 %v210
      %v482 = vpack.c.b16 %v481, %v421
      %v487 = vunpack.c.l.b16 %v476
      %v488 = vunpack.c.l.b16 %v477
      %v489 = vunpack.c.l.b16 %v478
      %v490 = vunpack.c.l.b16 %v479
      %v491 = vpack.c.b16 %v488, %v487
      %v492 = vpack.c.b16 %v490, %v489
      %v496 = vsel %vm254, %v482, 0
      %498 = vmatpush.bf16.msra.mxu0 0
      %499 = vmatpush.bf16.msra.mxu0 0
      %500 = vmatpush.bf16.msra.mxu0 0
      %501 = vmatpush.bf16.msra.mxu0 0
      %502 = vmatpush.bf16.msra.mxu0 0
      %503 = vmatpush.bf16.msra.mxu0 0
      %504 = vmatpush.bf16.msra.mxu0 %v492
      %505 = vmatpush.bf16.msra.mxu0 %v491
      %506 = vmatmul.bf16.gmra.mxu0 %v321
      %v507 = vpop.f32.mrf.mxu0
      %v508 = vadd.f32 0.0, %v507
      %v509 = vpop.f32.mrf.mxu0
      %v510 = vadd.f32 0.0, %v509
      %511 = vmatmul.bf16.gmra.mxu0 %v324
      %v512 = vpop.f32.mrf.mxu0
      %v513 = vadd.f32 0.0, %v512
      %v514 = vpop.f32.mrf.mxu0
      %v515 = vadd.f32 0.0, %v514
      %516 = vmatmul.bf16.gmra.mxu0 %v376
      %v517 = vpop.f32.mrf.mxu0
      %v518 = vadd.f32 0.0, %v517
      %v519 = vpop.f32.mrf.mxu0
      %v520 = vadd.f32 0.0, %v519
      %521 = vmatmul.bf16.gmra.mxu0 %v496
      %v522 = vpop.f32.mrf.mxu0
      %v523 = vadd.f32 0.0, %v522
      %v524 = vpop.f32.mrf.mxu0
      %v525 = vadd.f32 0.0, %v524
      %526 = vdwg.mxu0
      %v527 = vadd.f32 %v467, %v508
      %v528 = vadd.f32 %v468, %v510
      %v529 = vadd.f32 %v469, %v513
      %v530 = vadd.f32 %v470, %v515
      %v531 = vadd.f32 %v471, %v518
      %v532 = vadd.f32 %v472, %v520
      %v533 = vadd.f32 %v473, %v523
      %v534 = vadd.f32 %v474, %v525
      %s535 = scalar_lea.vmem %s1, 80
      %v536 = vld [vmem:[%s535] sm:$0xf]
      %v537 = vld [vmem:[%s535 + $0x4] sm:$0xf]
      %v538 = vld [vmem:[%s535 + $0x8] sm:$0xf]
      %v539 = vld [vmem:[%s535 + $0xc] sm:$0xf]
      %v541 = vunpack.c.l.b16 %v211
      %v542 = vpack.c.b16 %v541, %v481
      %v547 = vunpack.c.l.b16 %v536
      %v548 = vunpack.c.l.b16 %v537
      %v549 = vunpack.c.l.b16 %v538
      %v550 = vunpack.c.l.b16 %v539
      %v551 = vpack.c.b16 %v548, %v547
      %v552 = vpack.c.b16 %v550, %v549
      %v556 = vsel %vm254, %v542, 0
      %558 = vmatpush.bf16.msra.mxu0 0
      %559 = vmatpush.bf16.msra.mxu0 0
      %560 = vmatpush.bf16.msra.mxu0 0
      %561 = vmatpush.bf16.msra.mxu0 0
      %562 = vmatpush.bf16.msra.mxu0 0
      %563 = vmatpush.bf16.msra.mxu0 0
      %564 = vmatpush.bf16.msra.mxu0 %v552
      %565 = vmatpush.bf16.msra.mxu0 %v551
      %566 = vmatmul.bf16.gmra.mxu0 %v262
      %v567 = vpop.f32.mrf.mxu0
      %v568 = vadd.f32 0.0, %v567
      %v569 = vpop.f32.mrf.mxu0
      %v570 = vadd.f32 0.0, %v569
      %571 = vmatmul.bf16.gmra.mxu0 %v265
      %v572 = vpop.f32.mrf.mxu0
      %v573 = vadd.f32 0.0, %v572
      %v574 = vpop.f32.mrf.mxu0
      %v575 = vadd.f32 0.0, %v574
      %576 = vmatmul.bf16.gmra.mxu0 %v436
      %v577 = vpop.f32.mrf.mxu0
      %v578 = vadd.f32 0.0, %v577
      %v579 = vpop.f32.mrf.mxu0
      %v580 = vadd.f32 0.0, %v579
      %581 = vmatmul.bf16.gmra.mxu0 %v556
      %v582 = vpop.f32.mrf.mxu0
      %v583 = vadd.f32 0.0, %v582
      %v584 = vpop.f32.mrf.mxu0
      %v585 = vadd.f32 0.0, %v584
      %586 = vdwg.mxu0
      %v587 = vadd.f32 %v527, %v568
      %v588 = vadd.f32 %v528, %v570
      %v589 = vadd.f32 %v529, %v573
      %v590 = vadd.f32 %v530, %v575
      %v591 = vadd.f32 %v531, %v578
      %v592 = vadd.f32 %v532, %v580
      %v593 = vadd.f32 %v533, %v583
      %v594 = vadd.f32 %v534, %v585
      %s595 = scalar_lea.vmem %s1, 96
      %v596 = vld [vmem:[%s595] sm:$0xf]
      %v597 = vld [vmem:[%s595 + $0x4] sm:$0xf]
      %v598 = vld [vmem:[%s595 + $0x8] sm:$0xf]
      %v599 = vld [vmem:[%s595 + $0xc] sm:$0xf]
      %v601 = vunpack.c.l.b16 %v212
      %v602 = vpack.c.b16 %v601, %v541
      %v607 = vunpack.c.l.b16 %v596
      %v608 = vunpack.c.l.b16 %v597
      %v609 = vunpack.c.l.b16 %v598
      %v610 = vunpack.c.l.b16 %v599
      %v611 = vpack.c.b16 %v608, %v607
      %v612 = vpack.c.b16 %v610, %v609
      %v616 = vsel %vm254, %v602, 0
      %618 = vmatpush.bf16.msra.mxu0 0
      %619 = vmatpush.bf16.msra.mxu0 0
      %620 = vmatpush.bf16.msra.mxu0 0
      %621 = vmatpush.bf16.msra.mxu0 0
      %622 = vmatpush.bf16.msra.mxu0 0
      %623 = vmatpush.bf16.msra.mxu0 0
      %624 = vmatpush.bf16.msra.mxu0 %v612
      %625 = vmatpush.bf16.msra.mxu0 %v611
      %626 = vmatmul.bf16.gmra.mxu0 %v324
      %v627 = vpop.f32.mrf.mxu0
      %v628 = vadd.f32 0.0, %v627
      %v629 = vpop.f32.mrf.mxu0
      %v630 = vadd.f32 0.0, %v629
      %631 = vmatmul.bf16.gmra.mxu0 %v376
      %v632 = vpop.f32.mrf.mxu0
      %v633 = vadd.f32 0.0, %v632
      %v634 = vpop.f32.mrf.mxu0
      %v635 = vadd.f32 0.0, %v634
      %636 = vmatmul.bf16.gmra.mxu0 %v496
      %v637 = vpop.f32.mrf.mxu0
      %v638 = vadd.f32 0.0, %v637
      %v639 = vpop.f32.mrf.mxu0
      %v640 = vadd.f32 0.0, %v639
      %641 = vmatmul.bf16.gmra.mxu0 %v616
      %v642 = vpop.f32.mrf.mxu0
      %v643 = vadd.f32 0.0, %v642
      %v644 = vpop.f32.mrf.mxu0
      %v645 = vadd.f32 0.0, %v644
      %646 = vdwg.mxu0
      %v647 = vadd.f32 %v587, %v628
      %v648 = vadd.f32 %v588, %v630
      %v649 = vadd.f32 %v589, %v633
      %v650 = vadd.f32 %v590, %v635
      %v651 = vadd.f32 %v591, %v638
      %v652 = vadd.f32 %v592, %v640
      %v653 = vadd.f32 %v593, %v643
      %v654 = vadd.f32 %v594, %v645
      %v655 = vld [vmem:[%s2] sm:$0x1]
      %v657 = vperm.slane %v655, 0
      %v659 = vmul.f32 %v647, %v657
      %v660 = vmul.f32 %v648, %v657
      %v661 = vmul.f32 %v649, %v657
      %v662 = vmul.f32 %v650, %v657
      %v663 = vmul.f32 %v651, %v657
      %v664 = vmul.f32 %v652, %v657
      %v665 = vmul.f32 %v653, %v657
      %v666 = vmul.f32 %v654, %v657
      %v667 = vld [vmem:[%s3] sm:$0x1]
      %v669 = vperm.slane %v667, 0
      %v671 = vadd.f32 %v659, %v669
      %v672 = vadd.f32 %v660, %v669
      %v673 = vadd.f32 %v661, %v669
      %v674 = vadd.f32 %v662, %v669
      %v675 = vadd.f32 %v663, %v669
      %v676 = vadd.f32 %v664, %v669
      %v677 = vadd.f32 %v665, %v669
      %v678 = vadd.f32 %v666, %v669
      %v679 = vmax.f32 %v671, 0.0
      %v680 = vmax.f32 %v672, 0.0
      %v681 = vmax.f32 %v673, 0.0
      %v682 = vmax.f32 %v674, 0.0
      %v683 = vmax.f32 %v675, 0.0
      %v684 = vmax.f32 %v676, 0.0
      %v685 = vmax.f32 %v677, 0.0
      %v686 = vmax.f32 %v678, 0.0
      %v687 = vpack.c.bf16 %v679, %v679
      %v688 = vpack.c.bf16 %v680, %v680
      %v689 = vpack.c.bf16 %v681, %v681
      %v690 = vpack.c.bf16 %v682, %v682
      %v691 = vpack.c.bf16 %v683, %v683
      %v692 = vpack.c.bf16 %v684, %v684
      %v693 = vpack.c.bf16 %v685, %v685
      %v694 = vpack.c.bf16 %v686, %v686
      %vm695 = vcmask 257024
      %696 = vst.msk [vmem:[%s197] sm:$0xf] %vm695, %v687
      %697 = vst.msk [vmem:[%s197 + $0x4] sm:$0xf] %vm695, %v688
      %698 = vst.msk [vmem:[%s197 + $0x8] sm:$0xf] %vm695, %v689
      %699 = vst.msk [vmem:[%s197 + $0xc] sm:$0xf] %vm695, %v690
      %700 = vst.msk [vmem:[%s197 + $0x10] sm:$0xf] %vm695, %v691
      %701 = vst.msk [vmem:[%s197 + $0x14] sm:$0xf] %vm695, %v692
      %702 = vst.msk [vmem:[%s197 + $0x18] sm:$0xf] %vm695, %v693
      %703 = vst.msk [vmem:[%s197 + $0x1c] sm:$0xf] %vm695, %v694
      %p704 = scmp.lt.s32.totalorder %s15, 1
      %s705 = scalar_select %p704, %s15, 1
      %s706 = smul.addr %s705, 8
      %s707 = smul.addr %s706, 4
      %s708 = scalar_lea.vmem %s4, %s707
      // Predicated region
      $region37: #{block2_module_b.11} parent=35 // pred_check
        %p709 = pneg %p122
      $region38: #{block2_module_b.11} parent=35 // pred_check_branch
        %711 = sbr.rel (%p709) target = $region40
      $region39: #{block2_module_b.11} parent=35 // pred_region
        _
      $region40: #{block2_module_b.11} parent=35 // pred_fallthru
        _
    $region36: #{block2_module_b.11} parent=5 // pred_fallthru
      _
    %p712 = scmp.le.s32.totalorder 2, %s10
    // Predicated region
    $region41: #{block2_module_b.11} parent=5 // pred_check
      %p713 = pneg %p712
    $region42: #{block2_module_b.11} parent=5 // pred_check_branch
      %715 = sbr.rel (%p713) target = $region44
    $region43: #{block2_module_b.11} parent=5 // pred_region
      %s716 = ssub.s32 %s10, 2
      // Predicated region
      $region45: #{block2_module_b.11} parent=43 // pred_check
        %p717 = pneg %p128
      $region46: #{block2_module_b.11} parent=43 // pred_check_branch
        %719 = sbr.rel (%p717) target = $region48
      $region47: #{block2_module_b.11} parent=43 // pred_region
        %p720 = scmp.lt.s32.totalorder %s16, 1
        %s721 = scalar_select %p720, %s16, 1
        %s722 = smul.addr %s721, 8
        %s723 = smul.addr %s722, 4
        %s724 = scalar_lea.vmem %s4, %s723
      $region48: #{block2_module_b.11} parent=43 // pred_fallthru
        _
    $region44: #{block2_module_b.11} parent=5 // pred_fallthru
      _
  $region6: #{block2_module_b.11} parent=0 // loop_footer
    %s14 = sadd.s32 1, %s10
  $region7: #{block2_module_b.11} parent=0 // loop_footer_branch
    %9 = sbr.rel target = $region3
  $region8: #{block2_module_b.11} parent=0 // loop_exit
    _

// kernel: block2_module_b.8
$region0: #{block2_module_b.8}
  #allocation0 [shape = 'u32[]', space=smem, size = 0x4, offset = 0x4, fixed_abs, tag = 'smem constant byte address 0x4 - core index']
  #allocation1 [shape = 'u32[72,128]{1,0:T(1,128)}', space=vmem, size = 0x9000, scoped, tag = 'internal scratch']
  %s0 = inlined_call_operand.vmem [shape: bf16[128,768], index: 0, kind: input, shape index: {}]
  %s1 = inlined_call_operand.vmem [shape: bf16[768,256], index: 1, kind: input, shape index: {}]
  %s2 = inlined_call_operand.vmem [shape: f32[1,256], index: 2, kind: input, shape index: {}]
  %s3 = inlined_call_operand.vmem [shape: f32[1,256], index: 3, kind: input, shape index: {}]
  %s4 = inlined_call_operand.vmem [shape: bf16[128,256], index: 4, kind: output, shape index: {}]
  %s5 = sld [smem:[#allocation0]]
  $region49: #{block2_module_b.8} parent=0
    _
  %s7 = ssub.s32 1, %s5
  %s8 = scalar_select 0, %s7, %s5
  loop: start=0, step=1, limit=4
  $region2: #{block2_module_b.8} parent=0 // loop_pre_header
    _
  $region3: #{block2_module_b.8} parent=0 // loop_header
    %s10 = sphi 0, %s14
    %p11 = scmp.ge.s32.totalorder %s10, 4
    %s20 = sphi 0, %s22
    %s23 = sphi 0, %s20
    %s24 = sphi 0, %s23
    %s40 = sphi 0, %s24
    %s44 = sphi 0, %s44
    %s46 = sphi 0, %s44
    %s47 = sphi 0, %s46
    %s61 = sphi 0, %s47
    %s65 = sphi 0, %s65
    %s67 = sphi 0, %s65
    %s68 = sphi 0, %s67
    %s82 = sphi 0, %s68
    %s86 = sphi 0, %s86
    %s88 = sphi 0, %s86
    %s89 = sphi 0, %s88
    %s103 = sphi 0, %s89
    %s109 = sphi 0, %s111
    %s112 = sphi 0, %s109
    %s113 = sphi 0, %s112
    %s129 = sphi 0, %s113
  $region4: #{block2_module_b.8} parent=0 // loop_header_branch
    %13 = sbr.rel (%p11) target = $region8
  $region5: #{block2_module_b.8} parent=0 // loop_body
    %s15 = ssub.s32 %s10, 1
    %s16 = ssub.s32 %s10, 2
    %s17 = sadd.s32 %s10, 1
    %s18 = ssub.s32 %s10, %s17
    %p19 = scmp.eq.s32.totalorder %s18, 0
    %s21 = sadd.s32 %s20, 1
    %s22 = scalar_select %p19, %s20, %s21
    %p25 = pneg %p19
    %p26 = scmp.eq.s32.totalorder %s10, 1
    %p27 = por %p25, %p26
    %p28 = scmp.ne.s32.totalorder %s20, %s23
    %p29 = scmp.eq.s32.totalorder %s10, 0
    %p30 = por %p28, %p29
    %p31 = scmp.ne.s32.totalorder %s20, %s23
    %p32 = scmp.eq.s32.totalorder %s15, 1
    %p33 = por %p31, %p32
    %p34 = scmp.ne.s32.totalorder %s23, %s24
    %p35 = scmp.eq.s32.totalorder %s15, 0
    %p36 = por %p34, %p35
    %p37 = scmp.ne.s32.totalorder %s23, %s24
    %p38 = scmp.eq.s32.totalorder %s16, 1
    %p39 = por %p37, %p38
    %p41 = scmp.ne.s32.totalorder %s24, %s40
    %p42 = scmp.eq.s32.totalorder %s16, 0
    %p43 = por %p41, %p42
    %s45 = sadd.s32 %s44, 1
    %p48 = scmp.eq.s32.totalorder %s10, 1
    %p49 = scmp.ne.s32.totalorder %s44, %s46
    %p50 = scmp.eq.s32.totalorder %s10, 0
    %p51 = por %p49, %p50
    %p52 = scmp.ne.s32.totalorder %s44, %s46
    %p53 = scmp.eq.s32.totalorder %s15, 1
    %p54 = por %p52, %p53
    %p55 = scmp.ne.s32.totalorder %s46, %s47
    %p56 = scmp.eq.s32.totalorder %s15, 0
    %p57 = por %p55, %p56
    %p58 = scmp.ne.s32.totalorder %s46, %s47
    %p59 = scmp.eq.s32.totalorder %s16, 1
    %p60 = por %p58, %p59
    %p62 = scmp.ne.s32.totalorder %s47, %s61
    %p63 = scmp.eq.s32.totalorder %s16, 0
    %p64 = por %p62, %p63
    %s66 = sadd.s32 %s65, 1
    %p69 = scmp.eq.s32.totalorder %s10, 1
    %p70 = scmp.ne.s32.totalorder %s65, %s67
    %p71 = scmp.eq.s32.totalorder %s10, 0
    %p72 = por %p70, %p71
    %p73 = scmp.ne.s32.totalorder %s65, %s67
    %p74 = scmp.eq.s32.totalorder %s15, 1
    %p75 = por %p73, %p74
    %p76 = scmp.ne.s32.totalorder %s67, %s68
    %p77 = scmp.eq.s32.totalorder %s15, 0
    %p78 = por %p76, %p77
    %p79 = scmp.ne.s32.totalorder %s67, %s68
    %p80 = scmp.eq.s32.totalorder %s16, 1
    %p81 = por %p79, %p80
    %p83 = scmp.ne.s32.totalorder %s68, %s82
    %p84 = scmp.eq.s32.totalorder %s16, 0
    %p85 = por %p83, %p84
    %s87 = sadd.s32 %s86, 1
    %p90 = scmp.eq.s32.totalorder %s10, 1
    %p91 = scmp.ne.s32.totalorder %s86, %s88
    %p92 = scmp.eq.s32.totalorder %s10, 0
    %p93 = por %p91, %p92
    %p94 = scmp.ne.s32.totalorder %s86, %s88
    %p95 = scmp.eq.s32.totalorder %s15, 1
    %p96 = por %p94, %p95
    %p97 = scmp.ne.s32.totalorder %s88, %s89
    %p98 = scmp.eq.s32.totalorder %s15, 0
    %p99 = por %p97, %p98
    %p100 = scmp.ne.s32.totalorder %s88, %s89
    %p101 = scmp.eq.s32.totalorder %s16, 1
    %p102 = por %p100, %p101
    %p104 = scmp.ne.s32.totalorder %s89, %s103
    %p105 = scmp.eq.s32.totalorder %s16, 0
    %p106 = por %p104, %p105
    %s107 = ssub.s32 %s10, %s17
    %p108 = scmp.eq.s32.totalorder %s107, 0
    %s110 = sadd.s32 %s109, 1
    %s111 = scalar_select %p108, %s109, %s110
    %p114 = pneg %p108
    %p115 = scmp.eq.s32.totalorder %s10, 1
    %p116 = por %p114, %p115
    %p117 = scmp.ne.s32.totalorder %s109, %s112
    %p118 = scmp.eq.s32.totalorder %s10, 0
    %p119 = por %p117, %p118
    %p120 = scmp.ne.s32.totalorder %s109, %s112
    %p121 = scmp.eq.s32.totalorder %s15, 1
    %p122 = por %p120, %p121
    %p123 = scmp.ne.s32.totalorder %s112, %s113
    %p124 = scmp.eq.s32.totalorder %s15, 0
    %p125 = por %p123, %p124
    %p126 = scmp.ne.s32.totalorder %s112, %s113
    %p127 = scmp.eq.s32.totalorder %s16, 1
    %p128 = por %p126, %p127
    %p130 = scmp.ne.s32.totalorder %s113, %s129
    %p131 = scmp.eq.s32.totalorder %s16, 0
    %p132 = por %p130, %p131
    %p133 = scmp.le.s32.totalorder 1, %s10
    %p134 = scmp.lt.s32.totalorder %s10, 3
    %p135 = pnand %p133, %p134
    %p136 = pneg %p135
    // Predicated region
    $region9: #{block2_module_b.8} parent=5 // pred_check
      _
    $region10: #{block2_module_b.8} parent=5 // pred_check_branch
      %138 = sbr.rel (%p135) target = $region12
    $region11: #{block2_module_b.8} parent=5 // pred_region
      %s139 = ssub.s32 %s10, 1
      // Predicated region
      $region13: #{block2_module_b.8} parent=11 // pred_check
        %p140 = pneg %p57
      $region14: #{block2_module_b.8} parent=11 // pred_check_branch
        %142 = sbr.rel (%p140) target = $region16
      $region15: #{block2_module_b.8} parent=11 // pred_region
        _
      $region16: #{block2_module_b.8} parent=11 // pred_fallthru
        _
      // Predicated region
      $region17: #{block2_module_b.8} parent=11 // pred_check
        %p143 = pneg %p78
      $region18: #{block2_module_b.8} parent=11 // pred_check_branch
        %145 = sbr.rel (%p143) target = $region20
      $region19: #{block2_module_b.8} parent=11 // pred_region
        _
      $region20: #{block2_module_b.8} parent=11 // pred_fallthru
        _
      // Predicated region
      $region21: #{block2_module_b.8} parent=11 // pred_check
        %p146 = pneg %p99
      $region22: #{block2_module_b.8} parent=11 // pred_check_branch
        %148 = sbr.rel (%p146) target = $region24
      $region23: #{block2_module_b.8} parent=11 // pred_region
        _
      $region24: #{block2_module_b.8} parent=11 // pred_fallthru
        _
    $region12: #{block2_module_b.8} parent=5 // pred_fallthru
      _
    %p149 = scmp.lt.s32.totalorder %s10, 2
    // Predicated region
    $region25: #{block2_module_b.8} parent=5 // pred_check
      %p150 = pneg %p149
    $region26: #{block2_module_b.8} parent=5 // pred_check_branch
      %152 = sbr.rel (%p150) target = $region28
    $region27: #{block2_module_b.8} parent=5 // pred_region
      // Predicated region
      $region29: #{block2_module_b.8} parent=27 // pred_check
        %p153 = pneg %p30
      $region30: #{block2_module_b.8} parent=27 // pred_check_branch
        %155 = sbr.rel (%p153) target = $region32
      $region31: #{block2_module_b.8} parent=27 // pred_region
        %s156 = smul.u32 8, %s10
        %p157 = scmp.lt.s32.totalorder %s156, 15
        %s158 = scalar_select %p157, %s156, 15
        %s159 = smul.addr %s158, 6
        %s160 = smul.addr %s159, 4
        %s161 = scalar_lea.vmem %s0, %s160
        %s162 = smul.u32 8, %s10
      $region32: #{block2_module_b.8} parent=27 // pred_fallthru
        _
    $region28: #{block2_module_b.8} parent=5 // pred_fallthru
      _
    %p163 = scmp.le.s32.totalorder 1, %s10
    %p164 = scmp.lt.s32.totalorder %s10, 3
    %p165 = pnand %p163, %p164
    %p166 = pneg %p165
    // Predicated region
    $region33: #{block2_module_b.8} parent=5 // pred_check
      _
    $region34: #{block2_module_b.8} parent=5 // pred_check_branch
      %168 = sbr.rel (%p165) target = $region36
    $region35: #{block2_module_b.8} parent=5 // pred_region
      %s169 = ssub.s32 %s10, 1
      %s170 = smul.u32 8, %s15
      %p171 = scmp.lt.s32.totalorder %s170, 15
      %s172 = scalar_select %p171, %s170, 15
      %s173 = smul.addr %s172, 6
      %s174 = smul.addr %s173, 4
      %s175 = scalar_lea.vmem %s0, %s174
      %p176 = pneg %p36
      %p177 = pneg %p33
      %p178 = pneg %p57
      %p179 = pneg %p54
      %p180 = pneg %p78
      %p181 = pneg %p75
      %p182 = pneg %p99
      %p183 = pneg %p96
      %p184 = pneg %p125
      %p185 = pneg %p122
      %s186 = smul.u32 8, %s15
      %p187 = scmp.lt.s32.totalorder %s186, 15
      %s188 = scalar_select %p187, %s186, 15
      %s189 = smul.addr %s188, 2
      %s190 = smul.addr %s189, 4
      %s191 = scalar_lea.vmem %s4, %s190
      %s192 = smul.u32 8, %s15
      %p193 = scmp.lt.s32.totalorder %s192, 15
      %s194 = scalar_select %p193, %s192, 15
      %s195 = smul.addr %s194, 6
      %s196 = smul.addr %s195, 4
      %s197 = scalar_lea.vmem %s0, %s196
      %s198 = smul.u32 8, %s15
      %s199 = smul.u32 8, %s15
      %p200 = scmp.lt.s32.totalorder %s199, 15
      %s201 = scalar_select %p200, %s199, 15
      %s202 = smul.addr %s201, 2
      %s203 = smul.addr %s202, 4
      %s204 = scalar_lea.vmem %s4, %s203
      %s205 = smul.u32 8, %s15
      %v206 = vld [vmem:[%s197] sm:$0xff]
      %v207 = vld [vmem:[%s197 + $0x8] sm:$0xff]
      %v208 = vld [vmem:[%s197 + $0x10] sm:$0xff]
      %v209 = vld [vmem:[%s197 + $0x18] sm:$0xff]
      %v210 = vld [vmem:[%s197 + $0x20] sm:$0xff]
      %v211 = vld [vmem:[%s197 + $0x28] sm:$0xff]
      %v212 = vld [vmem:[%s197 + $0x30] sm:$0xff]
      %v213 = vld [vmem:[%s197 + $0x38] sm:$0xff]
      %v214 = vld [vmem:[%s197 + $0x40] sm:$0xff]
      %v215 = vld [vmem:[%s197 + $0x48] sm:$0xff]
      %v216 = vld [vmem:[%s197 + $0x50] sm:$0xff]
      %v217 = vld [vmem:[%s197 + $0x58] sm:$0xff]
      %v218 = vld [vmem:[%s197 + $0x60] sm:$0xff]
      %v219 = vld [vmem:[%s197 + $0x68] sm:$0xff]
      %v220 = vld [vmem:[%s197 + $0x70] sm:$0xff]
      %v221 = vld [vmem:[%s197 + $0x78] sm:$0xff]
      %v222 = vld [vmem:[%s197 + $0x80] sm:$0xff]
      %v223 = vld [vmem:[%s197 + $0x88] sm:$0xff]
      %v224 = vld [vmem:[%s197 + $0x90] sm:$0xff]
      %v225 = vld [vmem:[%s197 + $0x98] sm:$0xff]
      %v226 = vld [vmem:[%s197 + $0xa0] sm:$0xff]
      %v227 = vld [vmem:[%s197 + $0xa8] sm:$0xff]
      %v228 = vld [vmem:[%s197 + $0xb0] sm:$0xff]
      %v229 = vld [vmem:[%s197 + $0xb8] sm:$0xff]
      %v230 = vld [vmem:[%s1] sm:$0xff]
      %v231 = vld [vmem:[%s1 + $0x8] sm:$0xff]
      %v232 = vld [vmem:[%s1 + $0x10] sm:$0xff]
      %v233 = vld [vmem:[%s1 + $0x18] sm:$0xff]
      %v234 = vld [vmem:[%s1 + $0x20] sm:$0xff]
      %v235 = vld [vmem:[%s1 + $0x28] sm:$0xff]
      %v236 = vld [vmem:[%s1 + $0x30] sm:$0xff]
      %v237 = vld [vmem:[%s1 + $0x38] sm:$0xff]
      %v238 = vld [vmem:[%s1 + $0x40] sm:$0xff]
      %v239 = vld [vmem:[%s1 + $0x48] sm:$0xff]
      %v240 = vld [vmem:[%s1 + $0x50] sm:$0xff]
      %v241 = vld [vmem:[%s1 + $0x58] sm:$0xff]
      %v242 = vld [vmem:[%s1 + $0x60] sm:$0xff]
      %v243 = vld [vmem:[%s1 + $0x68] sm:$0xff]
      %v244 = vld [vmem:[%s1 + $0x70] sm:$0xff]
      %v245 = vld [vmem:[%s1 + $0x78] sm:$0xff]
      %v246 = vld [vmem:[%s1 + $0x80] sm:$0xff]
      %v247 = vld [vmem:[%s1 + $0x88] sm:$0xff]
      %v248 = vld [vmem:[%s1 + $0x90] sm:$0xff]
      %v249 = vld [vmem:[%s1 + $0x98] sm:$0xff]
      %v250 = vld [vmem:[%s1 + $0xa0] sm:$0xff]
      %v251 = vld [vmem:[%s1 + $0xa8] sm:$0xff]
      %v252 = vld [vmem:[%s1 + $0xb0] sm:$0xff]
      %v253 = vld [vmem:[%s1 + $0xb8] sm:$0xff]
      %v254 = vld [vmem:[%s1 + $0xc0] sm:$0xff]
      %v255 = vld [vmem:[%s1 + $0xc8] sm:$0xff]
      %v256 = vld [vmem:[%s1 + $0xd0] sm:$0xff]
      %v257 = vld [vmem:[%s1 + $0xd8] sm:$0xff]
      %v258 = vld [vmem:[%s1 + $0xe0] sm:$0xff]
      %v259 = vld [vmem:[%s1 + $0xe8] sm:$0xff]
      %v260 = vld [vmem:[%s1 + $0xf0] sm:$0xff]
      %v261 = vld [vmem:[%s1 + $0xf8] sm:$0xff]
      %v262 = vld [vmem:[%s1 + $0x100] sm:$0xff]
      %v263 = vld [vmem:[%s1 + $0x108] sm:$0xff]
      %v264 = vld [vmem:[%s1 + $0x110] sm:$0xff]
      %v265 = vld [vmem:[%s1 + $0x118] sm:$0xff]
      %v266 = vld [vmem:[%s1 + $0x120] sm:$0xff]
      %v267 = vld [vmem:[%s1 + $0x128] sm:$0xff]
      %v268 = vld [vmem:[%s1 + $0x130] sm:$0xff]
      %v269 = vld [vmem:[%s1 + $0x138] sm:$0xff]
      %v270 = vld [vmem:[%s1 + $0x140] sm:$0xff]
      %v271 = vld [vmem:[%s1 + $0x148] sm:$0xff]
      %v272 = vld [vmem:[%s1 + $0x150] sm:$0xff]
      %v273 = vld [vmem:[%s1 + $0x158] sm:$0xff]
      %v274 = vld [vmem:[%s1 + $0x160] sm:$0xff]
      %v275 = vld [vmem:[%s1 + $0x168] sm:$0xff]
      %v276 = vld [vmem:[%s1 + $0x170] sm:$0xff]
      %v277 = vld [vmem:[%s1 + $0x178] sm:$0xff]
      %v278 = vld [vmem:[%s1 + $0x180] sm:$0xff]
      %v279 = vld [vmem:[%s1 + $0x188] sm:$0xff]
      %v280 = vld [vmem:[%s1 + $0x190] sm:$0xff]
      %v281 = vld [vmem:[%s1 + $0x198] sm:$0xff]
      %v282 = vld [vmem:[%s1 + $0x1a0] sm:$0xff]
      %v283 = vld [vmem:[%s1 + $0x1a8] sm:$0xff]
      %v284 = vld [vmem:[%s1 + $0x1b0] sm:$0xff]
      %v285 = vld [vmem:[%s1 + $0x1b8] sm:$0xff]
      %v286 = vld [vmem:[%s1 + $0x1c0] sm:$0xff]
      %v287 = vld [vmem:[%s1 + $0x1c8] sm:$0xff]
      %v288 = vld [vmem:[%s1 + $0x1d0] sm:$0xff]
      %v289 = vld [vmem:[%s1 + $0x1d8] sm:$0xff]
      %v290 = vld [vmem:[%s1 + $0x1e0] sm:$0xff]
      %v291 = vld [vmem:[%s1 + $0x1e8] sm:$0xff]
      %v292 = vld [vmem:[%s1 + $0x1f0] sm:$0xff]
      %v293 = vld [vmem:[%s1 + $0x1f8] sm:$0xff]
      %v294 = vld [vmem:[%s1 + $0x200] sm:$0xff]
      %v295 = vld [vmem:[%s1 + $0x208] sm:$0xff]
      %v296 = vld [vmem:[%s1 + $0x210] sm:$0xff]
      %v297 = vld [vmem:[%s1 + $0x218] sm:$0xff]
      %v298 = vld [vmem:[%s1 + $0x220] sm:$0xff]
      %v299 = vld [vmem:[%s1 + $0x228] sm:$0xff]
      %v300 = vld [vmem:[%s1 + $0x230] sm:$0xff]
      %v301 = vld [vmem:[%s1 + $0x238] sm:$0xff]
      %v302 = vld [vmem:[%s1 + $0x240] sm:$0xff]
      %v303 = vld [vmem:[%s1 + $0x248] sm:$0xff]
      %v304 = vld [vmem:[%s1 + $0x250] sm:$0xff]
      %v305 = vld [vmem:[%s1 + $0x258] sm:$0xff]
      %v306 = vld [vmem:[%s1 + $0x260] sm:$0xff]
      %v307 = vld [vmem:[%s1 + $0x268] sm:$0xff]
      %v308 = vld [vmem:[%s1 + $0x270] sm:$0xff]
      %v309 = vld [vmem:[%s1 + $0x278] sm:$0xff]
      %v310 = vld [vmem:[%s1 + $0x280] sm:$0xff]
      %v311 = vld [vmem:[%s1 + $0x288] sm:$0xff]
      %v312 = vld [vmem:[%s1 + $0x290] sm:$0xff]
      %v313 = vld [vmem:[%s1 + $0x298] sm:$0xff]
      %v314 = vld [vmem:[%s1 + $0x2a0] sm:$0xff]
      %v315 = vld [vmem:[%s1 + $0x2a8] sm:$0xff]
      %v316 = vld [vmem:[%s1 + $0x2b0] sm:$0xff]
      %v317 = vld [vmem:[%s1 + $0x2b8] sm:$0xff]
      %v318 = vld [vmem:[%s1 + $0x2c0] sm:$0xff]
      %v319 = vld [vmem:[%s1 + $0x2c8] sm:$0xff]
      %v320 = vld [vmem:[%s1 + $0x2d0] sm:$0xff]
      %v321 = vld [vmem:[%s1 + $0x2d8] sm:$0xff]
      %v322 = vld [vmem:[%s1 + $0x2e0] sm:$0xff]
      %v323 = vld [vmem:[%s1 + $0x2e8] sm:$0xff]
      %v324 = vld [vmem:[%s1 + $0x2f0] sm:$0xff]
      %v325 = vld [vmem:[%s1 + $0x2f8] sm:$0xff]
      %v350 = vunpack.c.l.b16 %v206
      %v351 = vunpack.c.h.b16 %v206
      %v352 = vunpack.c.l.b16 %v207
      %v353 = vunpack.c.h.b16 %v207
      %v354 = vunpack.c.l.b16 %v208
      %v355 = vunpack.c.h.b16 %v208
      %v356 = vunpack.c.l.b16 %v209
      %v357 = vunpack.c.h.b16 %v209
      %v358 = vunpack.c.l.b16 %v210
      %v359 = vunpack.c.h.b16 %v210
      %v360 = vunpack.c.l.b16 %v211
      %v361 = vunpack.c.h.b16 %v211
      %v362 = vunpack.c.l.b16 %v212
      %v363 = vunpack.c.h.b16 %v212
      %v364 = vunpack.c.l.b16 %v213
      %v365 = vunpack.c.h.b16 %v213
      %v366 = vunpack.c.l.b16 %v214
      %v367 = vunpack.c.h.b16 %v214
      %v368 = vunpack.c.l.b16 %v215
      %v369 = vunpack.c.h.b16 %v215
      %v370 = vunpack.c.l.b16 %v216
      %v371 = vunpack.c.h.b16 %v216
      %v372 = vunpack.c.l.b16 %v217
      %v373 = vunpack.c.h.b16 %v217
      %v374 = vunpack.c.l.b16 %v218
      %v375 = vunpack.c.h.b16 %v218
      %v376 = vunpack.c.l.b16 %v219
      %v377 = vunpack.c.h.b16 %v219
      %v378 = vunpack.c.l.b16 %v220
      %v379 = vunpack.c.h.b16 %v220
      %v380 = vunpack.c.l.b16 %v221
      %v381 = vunpack.c.h.b16 %v221
      %v382 = vunpack.c.l.b16 %v222
      %v383 = vunpack.c.h.b16 %v222
      %v384 = vunpack.c.l.b16 %v223
      %v385 = vunpack.c.h.b16 %v223
      %v386 = vunpack.c.l.b16 %v224
      %v387 = vunpack.c.h.b16 %v224
      %v388 = vunpack.c.l.b16 %v225
      %v389 = vunpack.c.h.b16 %v225
      %v390 = vunpack.c.l.b16 %v226
      %v391 = vunpack.c.h.b16 %v226
      %v392 = vunpack.c.l.b16 %v227
      %v393 = vunpack.c.h.b16 %v227
      %v394 = vunpack.c.l.b16 %v228
      %v395 = vunpack.c.h.b16 %v228
      %v396 = vunpack.c.l.b16 %v229
      %v397 = vunpack.c.h.b16 %v229
      %v398 = vpack.c.b16 %v356, %v350
      %v399 = vpack.c.b16 %v357, %v351
      %v400 = vpack.c.b16 %v358, %v352
      %v401 = vpack.c.b16 %v359, %v353
      %v402 = vpack.c.b16 %v360, %v354
      %v403 = vpack.c.b16 %v361, %v355
      %v404 = vpack.c.b16 %v368, %v362
      %v405 = vpack.c.b16 %v369, %v363
      %v406 = vpack.c.b16 %v370, %v364
      %v407 = vpack.c.b16 %v371, %v365
      %v408 = vpack.c.b16 %v372, %v366
      %v409 = vpack.c.b16 %v373, %v367
      %v410 = vpack.c.b16 %v380, %v374
      %v411 = vpack.c.b16 %v381, %v375
      %v412 = vpack.c.b16 %v382, %v376
      %v413 = vpack.c.b16 %v383, %v377
      %v414 = vpack.c.b16 %v384, %v378
      %v415 = vpack.c.b16 %v385, %v379
      %v416 = vpack.c.b16 %v392, %v386
      %v417 = vpack.c.b16 %v393, %v387
      %v418 = vpack.c.b16 %v394, %v388
      %v419 = vpack.c.b16 %v395, %v389
      %v420 = vpack.c.b16 %v396, %v390
      %v421 = vpack.c.b16 %v397, %v391
      %v542 = vunpack.c.l.b16 %v230
      %v543 = vunpack.c.h.b16 %v230
      %v544 = vunpack.c.l.b16 %v231
      %v545 = vunpack.c.h.b16 %v231
      %v546 = vunpack.c.l.b16 %v232
      %v547 = vunpack.c.h.b16 %v232
      %v548 = vunpack.c.l.b16 %v233
      %v549 = vunpack.c.h.b16 %v233
      %v550 = vunpack.c.l.b16 %v234
      %v551 = vunpack.c.h.b16 %v234
      %v552 = vunpack.c.l.b16 %v235
      %v553 = vunpack.c.h.b16 %v235
      %v554 = vunpack.c.l.b16 %v236
      %v555 = vunpack.c.h.b16 %v236
      %v556 = vunpack.c.l.b16 %v237
      %v557 = vunpack.c.h.b16 %v237
      %v558 = vunpack.c.l.b16 %v238
      %v559 = vunpack.c.h.b16 %v238
      %v560 = vunpack.c.l.b16 %v239
      %v561 = vunpack.c.h.b16 %v239
      %v562 = vunpack.c.l.b16 %v240
      %v563 = vunpack.c.h.b16 %v240
      %v564 = vunpack.c.l.b16 %v241
      %v565 = vunpack.c.h.b16 %v241
      %v566 = vunpack.c.l.b16 %v242
      %v567 = vunpack.c.h.b16 %v242
      %v568 = vunpack.c.l.b16 %v243
      %v569 = vunpack.c.h.b16 %v243
      %v570 = vunpack.c.l.b16 %v244
      %v571 = vunpack.c.h.b16 %v244
      %v572 = vunpack.c.l.b16 %v245
      %v573 = vunpack.c.h.b16 %v245
      %v574 = vunpack.c.l.b16 %v246
      %v575 = vunpack.c.h.b16 %v246
      %v576 = vunpack.c.l.b16 %v247
      %v577 = vunpack.c.h.b16 %v247
      %v578 = vunpack.c.l.b16 %v248
      %v579 = vunpack.c.h.b16 %v248
      %v580 = vunpack.c.l.b16 %v249
      %v581 = vunpack.c.h.b16 %v249
      %v582 = vunpack.c.l.b16 %v250
      %v583 = vunpack.c.h.b16 %v250
      %v584 = vunpack.c.l.b16 %v251
      %v585 = vunpack.c.h.b16 %v251
      %v586 = vunpack.c.l.b16 %v252
      %v587 = vunpack.c.h.b16 %v252
      %v588 = vunpack.c.l.b16 %v253
      %v589 = vunpack.c.h.b16 %v253
      %v590 = vunpack.c.l.b16 %v254
      %v591 = vunpack.c.h.b16 %v254
      %v592 = vunpack.c.l.b16 %v255
      %v593 = vunpack.c.h.b16 %v255
      %v594 = vunpack.c.l.b16 %v256
      %v595 = vunpack.c.h.b16 %v256
      %v596 = vunpack.c.l.b16 %v257
      %v597 = vunpack.c.h.b16 %v257
      %v598 = vunpack.c.l.b16 %v258
      %v599 = vunpack.c.h.b16 %v258
      %v600 = vunpack.c.l.b16 %v259
      %v601 = vunpack.c.h.b16 %v259
      %v602 = vunpack.c.l.b16 %v260
      %v603 = vunpack.c.h.b16 %v260
      %v604 = vunpack.c.l.b16 %v261
      %v605 = vunpack.c.h.b16 %v261
      %v606 = vunpack.c.l.b16 %v262
      %v607 = vunpack.c.h.b16 %v262
      %v608 = vunpack.c.l.b16 %v263
      %v609 = vunpack.c.h.b16 %v263
      %v610 = vunpack.c.l.b16 %v264
      %v611 = vunpack.c.h.b16 %v264
      %v612 = vunpack.c.l.b16 %v265
      %v613 = vunpack.c.h.b16 %v265
      %v614 = vunpack.c.l.b16 %v266
      %v615 = vunpack.c.h.b16 %v266
      %v616 = vunpack.c.l.b16 %v267
      %v617 = vunpack.c.h.b16 %v267
      %v618 = vunpack.c.l.b16 %v268
      %v619 = vunpack.c.h.b16 %v268
      %v620 = vunpack.c.l.b16 %v269
      %v621 = vunpack.c.h.b16 %v269
      %v622 = vunpack.c.l.b16 %v270
      %v623 = vunpack.c.h.b16 %v270
      %v624 = vunpack.c.l.b16 %v271
      %v625 = vunpack.c.h.b16 %v271
      %v626 = vunpack.c.l.b16 %v272
      %v627 = vunpack.c.h.b16 %v272
      %v628 = vunpack.c.l.b16 %v273
      %v629 = vunpack.c.h.b16 %v273
      %v630 = vunpack.c.l.b16 %v274
      %v631 = vunpack.c.h.b16 %v274
      %v632 = vunpack.c.l.b16 %v275
      %v633 = vunpack.c.h.b16 %v275
      %v634 = vunpack.c.l.b16 %v276
      %v635 = vunpack.c.h.b16 %v276
      %v636 = vunpack.c.l.b16 %v277
      %v637 = vunpack.c.h.b16 %v277
      %v638 = vunpack.c.l.b16 %v278
      %v639 = vunpack.c.h.b16 %v278
      %v640 = vunpack.c.l.b16 %v279
      %v641 = vunpack.c.h.b16 %v279
      %v642 = vunpack.c.l.b16 %v280
      %v643 = vunpack.c.h.b16 %v280
      %v644 = vunpack.c.l.b16 %v281
      %v645 = vunpack.c.h.b16 %v281
      %v646 = vunpack.c.l.b16 %v282
      %v647 = vunpack.c.h.b16 %v282
      %v648 = vunpack.c.l.b16 %v283
      %v649 = vunpack.c.h.b16 %v283
      %v650 = vunpack.c.l.b16 %v284
      %v651 = vunpack.c.h.b16 %v284
      %v652 = vunpack.c.l.b16 %v285
      %v653 = vunpack.c.h.b16 %v285
      %v654 = vunpack.c.l.b16 %v286
      %v655 = vunpack.c.h.b16 %v286
      %v656 = vunpack.c.l.b16 %v287
      %v657 = vunpack.c.h.b16 %v287
      %v658 = vunpack.c.l.b16 %v288
      %v659 = vunpack.c.h.b16 %v288
      %v660 = vunpack.c.l.b16 %v289
      %v661 = vunpack.c.h.b16 %v289
      %v662 = vunpack.c.l.b16 %v290
      %v663 = vunpack.c.h.b16 %v290
      %v664 = vunpack.c.l.b16 %v291
      %v665 = vunpack.c.h.b16 %v291
      %v666 = vunpack.c.l.b16 %v292
      %v667 = vunpack.c.h.b16 %v292
      %v668 = vunpack.c.l.b16 %v293
      %v669 = vunpack.c.h.b16 %v293
      %v670 = vunpack.c.l.b16 %v294
      %v671 = vunpack.c.h.b16 %v294
      %v672 = vunpack.c.l.b16 %v295
      %v673 = vunpack.c.h.b16 %v295
      %v674 = vunpack.c.l.b16 %v296
      %v675 = vunpack.c.h.b16 %v296
      %v676 = vunpack.c.l.b16 %v297
      %v677 = vunpack.c.h.b16 %v297
      %v678 = vunpack.c.l.b16 %v298
      %v679 = vunpack.c.h.b16 %v298
      %v680 = vunpack.c.l.b16 %v299
      %v681 = vunpack.c.h.b16 %v299
      %v682 = vunpack.c.l.b16 %v300
      %v683 = vunpack.c.h.b16 %v300
      %v684 = vunpack.c.l.b16 %v301
      %v685 = vunpack.c.h.b16 %v301
      %v686 = vunpack.c.l.b16 %v302
      %v687 = vunpack.c.h.b16 %v302
      %v688 = vunpack.c.l.b16 %v303
      %v689 = vunpack.c.h.b16 %v303
      %v690 = vunpack.c.l.b16 %v304
      %v691 = vunpack.c.h.b16 %v304
      %v692 = vunpack.c.l.b16 %v305
      %v693 = vunpack.c.h.b16 %v305
      %v694 = vunpack.c.l.b16 %v306
      %v695 = vunpack.c.h.b16 %v306
      %v696 = vunpack.c.l.b16 %v307
      %v697 = vunpack.c.h.b16 %v307
      %v698 = vunpack.c.l.b16 %v308
      %v699 = vunpack.c.h.b16 %v308
      %v700 = vunpack.c.l.b16 %v309
      %v701 = vunpack.c.h.b16 %v309
      %v702 = vunpack.c.l.b16 %v310
      %v703 = vunpack.c.h.b16 %v310
      %v704 = vunpack.c.l.b16 %v311
      %v705 = vunpack.c.h.b16 %v311
      %v706 = vunpack.c.l.b16 %v312
      %v707 = vunpack.c.h.b16 %v312
      %v708 = vunpack.c.l.b16 %v313
      %v709 = vunpack.c.h.b16 %v313
      %v710 = vunpack.c.l.b16 %v314
      %v711 = vunpack.c.h.b16 %v314
      %v712 = vunpack.c.l.b16 %v315
      %v713 = vunpack.c.h.b16 %v315
      %v714 = vunpack.c.l.b16 %v316
      %v715 = vunpack.c.h.b16 %v316
      %v716 = vunpack.c.l.b16 %v317
      %v717 = vunpack.c.h.b16 %v317
      %v718 = vunpack.c.l.b16 %v318
      %v719 = vunpack.c.h.b16 %v318
      %v720 = vunpack.c.l.b16 %v319
      %v721 = vunpack.c.h.b16 %v319
      %v722 = vunpack.c.l.b16 %v320
      %v723 = vunpack.c.h.b16 %v320
      %v724 = vunpack.c.l.b16 %v321
      %v725 = vunpack.c.h.b16 %v321
      %v726 = vunpack.c.l.b16 %v322
      %v727 = vunpack.c.h.b16 %v322
      %v728 = vunpack.c.l.b16 %v323
      %v729 = vunpack.c.h.b16 %v323
      %v730 = vunpack.c.l.b16 %v324
      %v731 = vunpack.c.h.b16 %v324
      %v732 = vunpack.c.l.b16 %v325
      %v733 = vunpack.c.h.b16 %v325
      %v734 = vpack.c.b16 %v544, %v542
      %v735 = vpack.c.b16 %v545, %v543
      %v736 = vpack.c.b16 %v548, %v546
      %v737 = vpack.c.b16 %v549, %v547
      %v738 = vpack.c.b16 %v552, %v550
      %v739 = vpack.c.b16 %v553, %v551
      %v740 = vpack.c.b16 %v556, %v554
      %v741 = vpack.c.b16 %v557, %v555
      %v742 = vpack.c.b16 %v560, %v558
      %v743 = vpack.c.b16 %v561, %v559
      %v744 = vpack.c.b16 %v564, %v562
      %v745 = vpack.c.b16 %v565, %v563
      %v746 = vpack.c.b16 %v568, %v566
      %v747 = vpack.c.b16 %v569, %v567
      %v748 = vpack.c.b16 %v572, %v570
      %v749 = vpack.c.b16 %v573, %v571
      %v750 = vpack.c.b16 %v576, %v574
      %v751 = vpack.c.b16 %v577, %v575
      %v752 = vpack.c.b16 %v580, %v578
      %v753 = vpack.c.b16 %v581, %v579
      %v754 = vpack.c.b16 %v584, %v582
      %v755 = vpack.c.b16 %v585, %v583
      %v756 = vpack.c.b16 %v588, %v586
      %v757 = vpack.c.b16 %v589, %v587
      %v758 = vpack.c.b16 %v592, %v590
      %v759 = vpack.c.b16 %v593, %v591
      %v760 = vpack.c.b16 %v596, %v594
      %v761 = vpack.c.b16 %v597, %v595
      %v762 = vpack.c.b16 %v600, %v598
      %v763 = vpack.c.b16 %v601, %v599
      %v764 = vpack.c.b16 %v604, %v602
      %v765 = vpack.c.b16 %v605, %v603
      %v766 = vpack.c.b16 %v608, %v606
      %v767 = vpack.c.b16 %v609, %v607
      %v768 = vpack.c.b16 %v612, %v610
      %v769 = vpack.c.b16 %v613, %v611
      %v770 = vpack.c.b16 %v616, %v614
      %v771 = vpack.c.b16 %v617, %v615
      %v772 = vpack.c.b16 %v620, %v618
      %v773 = vpack.c.b16 %v621, %v619
      %v774 = vpack.c.b16 %v624, %v622
      %v775 = vpack.c.b16 %v625, %v623
      %v776 = vpack.c.b16 %v628, %v626
      %v777 = vpack.c.b16 %v629, %v627
      %v778 = vpack.c.b16 %v632, %v630
      %v779 = vpack.c.b16 %v633, %v631
      %v780 = vpack.c.b16 %v636, %v634
      %v781 = vpack.c.b16 %v637, %v635
      %v782 = vpack.c.b16 %v640, %v638
      %v783 = vpack.c.b16 %v641, %v639
      %v784 = vpack.c.b16 %v644, %v642
      %v785 = vpack.c.b16 %v645, %v643
      %v786 = vpack.c.b16 %v648, %v646
      %v787 = vpack.c.b16 %v649, %v647
      %v788 = vpack.c.b16 %v652, %v650
      %v789 = vpack.c.b16 %v653, %v651
      %v790 = vpack.c.b16 %v656, %v654
      %v791 = vpack.c.b16 %v657, %v655
      %v792 = vpack.c.b16 %v660, %v658
      %v793 = vpack.c.b16 %v661, %v659
      %v794 = vpack.c.b16 %v664, %v662
      %v795 = vpack.c.b16 %v665, %v663
      %v796 = vpack.c.b16 %v668, %v666
      %v797 = vpack.c.b16 %v669, %v667
      %v798 = vpack.c.b16 %v672, %v670
      %v799 = vpack.c.b16 %v673, %v671
      %v800 = vpack.c.b16 %v676, %v674
      %v801 = vpack.c.b16 %v677, %v675
      %v802 = vpack.c.b16 %v680, %v678
      %v803 = vpack.c.b16 %v681, %v679
      %v804 = vpack.c.b16 %v684, %v682
      %v805 = vpack.c.b16 %v685, %v683
      %v806 = vpack.c.b16 %v688, %v686
      %v807 = vpack.c.b16 %v689, %v687
      %v808 = vpack.c.b16 %v692, %v690
      %v809 = vpack.c.b16 %v693, %v691
      %v810 = vpack.c.b16 %v696, %v694
      %v811 = vpack.c.b16 %v697, %v695
      %v812 = vpack.c.b16 %v700, %v698
      %v813 = vpack.c.b16 %v701, %v699
      %v814 = vpack.c.b16 %v704, %v702
      %v815 = vpack.c.b16 %v705, %v703
      %v816 = vpack.c.b16 %v708, %v706
      %v817 = vpack.c.b16 %v709, %v707
      %v818 = vpack.c.b16 %v712, %v710
      %v819 = vpack.c.b16 %v713, %v711
      %v820 = vpack.c.b16 %v716, %v714
      %v821 = vpack.c.b16 %v717, %v715
      %v822 = vpack.c.b16 %v720, %v718
      %v823 = vpack.c.b16 %v721, %v719
      %v824 = vpack.c.b16 %v724, %v722
      %v825 = vpack.c.b16 %v725, %v723
      %v826 = vpack.c.b16 %v728, %v726
      %v827 = vpack.c.b16 %v729, %v727
      %v828 = vpack.c.b16 %v732, %v730
      %v829 = vpack.c.b16 %v733, %v731
      %926 = vmatpush.bf16.msra.mxu0 %v748
      %927 = vmatpush.bf16.msra.mxu0 %v746
      %928 = vmatpush.bf16.msra.mxu0 %v744
      %929 = vmatpush.bf16.msra.mxu0 %v742
      %930 = vmatpush.bf16.msra.mxu0 %v740
      %931 = vmatpush.bf16.msra.mxu0 %v738
      %932 = vmatpush.bf16.msra.mxu0 %v736
      %933 = vmatpush.bf16.msra.mxu0 %v734
      %934 = vmatmul.bf16.gmra.mxu0 %v398
      %v935 = vpop.f32.mrf.mxu0
      %v936 = vadd.f32 0.0, %v935
      %v937 = vpop.f32.mrf.mxu0
      %v938 = vadd.f32 0.0, %v937
      %939 = vmatmul.bf16.gmra.mxu0 %v404
      %v940 = vpop.f32.mrf.mxu0
      %v941 = vadd.f32 0.0, %v940
      %v942 = vpop.f32.mrf.mxu0
      %v943 = vadd.f32 0.0, %v942
      %944 = vmatmul.bf16.gmra.mxu0 %v410
      %v945 = vpop.f32.mrf.mxu0
      %v946 = vadd.f32 0.0, %v945
      %v947 = vpop.f32.mrf.mxu0
      %v948 = vadd.f32 0.0, %v947
      %949 = vmatmul.bf16.gmra.mxu0 %v416
      %v950 = vpop.f32.mrf.mxu0
      %v951 = vadd.f32 0.0, %v950
      %v952 = vpop.f32.mrf.mxu0
      %v953 = vadd.f32 0.0, %v952
      %954 = vdwg.mxu0
      %955 = vmatpush.bf16.msra.mxu0 %v764
      %956 = vmatpush.bf16.msra.mxu0 %v762
      %957 = vmatpush.bf16.msra.mxu0 %v760
      %958 = vmatpush.bf16.msra.mxu0 %v758
      %959 = vmatpush.bf16.msra.mxu0 %v756
      %960 = vmatpush.bf16.msra.mxu0 %v754
      %961 = vmatpush.bf16.msra.mxu0 %v752
      %962 = vmatpush.bf16.msra.mxu0 %v750
      %963 = vmatmul.bf16.gmra.mxu0 %v399
      %v964 = vpop.f32.mrf.mxu0
      %v965 = vadd.f32 %v936, %v964
      %v966 = vpop.f32.mrf.mxu0
      %v967 = vadd.f32 %v938, %v966
      %968 = vmatmul.bf16.gmra.mxu0 %v405
      %v969 = vpop.f32.mrf.mxu0
      %v970 = vadd.f32 %v941, %v969
      %v971 = vpop.f32.mrf.mxu0
      %v972 = vadd.f32 %v943, %v971
      %973 = vmatmul.bf16.gmra.mxu0 %v411
      %v974 = vpop.f32.mrf.mxu0
      %v975 = vadd.f32 %v946, %v974
      %v976 = vpop.f32.mrf.mxu0
      %v977 = vadd.f32 %v948, %v976
      %978 = vmatmul.bf16.gmra.mxu0 %v417
      %v979 = vpop.f32.mrf.mxu0
      %v980 = vadd.f32 %v951, %v979
      %v981 = vpop.f32.mrf.mxu0
      %v982 = vadd.f32 %v953, %v981
      %983 = vdwg.mxu0
      %984 = vmatpush.bf16.msra.mxu0 %v780
      %985 = vmatpush.bf16.msra.mxu0 %v778
      %986 = vmatpush.bf16.msra.mxu0 %v776
      %987 = vmatpush.bf16.msra.mxu0 %v774
      %988 = vmatpush.bf16.msra.mxu0 %v772
      %989 = vmatpush.bf16.msra.mxu0 %v770
      %990 = vmatpush.bf16.msra.mxu0 %v768
      %991 = vmatpush.bf16.msra.mxu0 %v766
      %992 = vmatmul.bf16.gmra.mxu0 %v400
      %v993 = vpop.f32.mrf.mxu0
      %v994 = vadd.f32 %v965, %v993
      %v995 = vpop.f32.mrf.mxu0
      %v996 = vadd.f32 %v967, %v995
      %997 = vmatmul.bf16.gmra.mxu0 %v406
      %v998 = vpop.f32.mrf.mxu0
      %v999 = vadd.f32 %v970, %v998
      %v1000 = vpop.f32.mrf.mxu0
      %v1001 = vadd.f32 %v972, %v1000
      %1002 = vmatmul.bf16.gmra.mxu0 %v412
      %v1003 = vpop.f32.mrf.mxu0
      %v1004 = vadd.f32 %v975, %v1003
      %v1005 = vpop.f32.mrf.mxu0
      %v1006 = vadd.f32 %v977, %v1005
      %1007 = vmatmul.bf16.gmra.mxu0 %v418
      %v1008 = vpop.f32.mrf.mxu0
      %v1009 = vadd.f32 %v980, %v1008
      %v1010 = vpop.f32.mrf.mxu0
      %v1011 = vadd.f32 %v982, %v1010
      %1012 = vdwg.mxu0
      %1013 = vmatpush.bf16.msra.mxu0 %v796
      %1014 = vmatpush.bf16.msra.mxu0 %v794
      %1015 = vmatpush.bf16.msra.mxu0 %v792
      %1016 = vmatpush.bf16.msra.mxu0 %v790
      %1017 = vmatpush.bf16.msra.mxu0 %v788
      %1018 = vmatpush.bf16.msra.mxu0 %v786
      %1019 = vmatpush.bf16.msra.mxu0 %v784
      %1020 = vmatpush.bf16.msra.mxu0 %v782
      %1021 = vmatmul.bf16.gmra.mxu0 %v401
      %v1022 = vpop.f32.mrf.mxu0
      %v1023 = vadd.f32 %v994, %v1022
      %v1024 = vpop.f32.mrf.mxu0
      %v1025 = vadd.f32 %v996, %v1024
      %1026 = vmatmul.bf16.gmra.mxu0 %v407
      %v1027 = vpop.f32.mrf.mxu0
      %v1028 = vadd.f32 %v999, %v1027
      %v1029 = vpop.f32.mrf.mxu0
      %v1030 = vadd.f32 %v1001, %v1029
      %1031 = vmatmul.bf16.gmra.mxu0 %v413
      %v1032 = vpop.f32.mrf.mxu0
      %v1033 = vadd.f32 %v1004, %v1032
      %v1034 = vpop.f32.mrf.mxu0
      %v1035 = vadd.f32 %v1006, %v1034
      %1036 = vmatmul.bf16.gmra.mxu0 %v419
      %v1037 = vpop.f32.mrf.mxu0
      %v1038 = vadd.f32 %v1009, %v1037
      %v1039 = vpop.f32.mrf.mxu0
      %v1040 = vadd.f32 %v1011, %v1039
      %1041 = vdwg.mxu0
      %1042 = vmatpush.bf16.msra.mxu0 %v812
      %1043 = vmatpush.bf16.msra.mxu0 %v810
      %1044 = vmatpush.bf16.msra.mxu0 %v808
      %1045 = vmatpush.bf16.msra.mxu0 %v806
      %1046 = vmatpush.bf16.msra.mxu0 %v804
      %1047 = vmatpush.bf16.msra.mxu0 %v802
      %1048 = vmatpush.bf16.msra.mxu0 %v800
      %1049 = vmatpush.bf16.msra.mxu0 %v798
      %1050 = vmatmul.bf16.gmra.mxu0 %v402
      %v1051 = vpop.f32.mrf.mxu0
      %v1052 = vadd.f32 %v1023, %v1051
      %v1053 = vpop.f32.mrf.mxu0
      %v1054 = vadd.f32 %v1025, %v1053
      %1055 = vmatmul.bf16.gmra.mxu0 %v408
      %v1056 = vpop.f32.mrf.mxu0
      %v1057 = vadd.f32 %v1028, %v1056
      %v1058 = vpop.f32.mrf.mxu0
      %v1059 = vadd.f32 %v1030, %v1058
      %1060 = vmatmul.bf16.gmra.mxu0 %v414
      %v1061 = vpop.f32.mrf.mxu0
      %v1062 = vadd.f32 %v1033, %v1061
      %v1063 = vpop.f32.mrf.mxu0
      %v1064 = vadd.f32 %v1035, %v1063
      %1065 = vmatmul.bf16.gmra.mxu0 %v420
      %v1066 = vpop.f32.mrf.mxu0
      %v1067 = vadd.f32 %v1038, %v1066
      %v1068 = vpop.f32.mrf.mxu0
      %v1069 = vadd.f32 %v1040, %v1068
      %1070 = vdwg.mxu0
      %1071 = vmatpush.bf16.msra.mxu0 %v828
      %1072 = vmatpush.bf16.msra.mxu0 %v826
      %1073 = vmatpush.bf16.msra.mxu0 %v824
      %1074 = vmatpush.bf16.msra.mxu0 %v822
      %1075 = vmatpush.bf16.msra.mxu0 %v820
      %1076 = vmatpush.bf16.msra.mxu0 %v818
      %1077 = vmatpush.bf16.msra.mxu0 %v816
      %1078 = vmatpush.bf16.msra.mxu0 %v814
      %1079 = vmatmul.bf16.gmra.mxu0 %v403
      %v1080 = vpop.f32.mrf.mxu0
      %v1081 = vadd.f32 %v1052, %v1080
      %v1082 = vpop.f32.mrf.mxu0
      %v1083 = vadd.f32 %v1054, %v1082
      %1084 = vmatmul.bf16.gmra.mxu0 %v409
      %v1085 = vpop.f32.mrf.mxu0
      %v1086 = vadd.f32 %v1057, %v1085
      %v1087 = vpop.f32.mrf.mxu0
      %v1088 = vadd.f32 %v1059, %v1087
      %1089 = vmatmul.bf16.gmra.mxu0 %v415
      %v1090 = vpop.f32.mrf.mxu0
      %v1091 = vadd.f32 %v1062, %v1090
      %v1092 = vpop.f32.mrf.mxu0
      %v1093 = vadd.f32 %v1064, %v1092
      %1094 = vmatmul.bf16.gmra.mxu0 %v421
      %v1095 = vpop.f32.mrf.mxu0
      %v1096 = vadd.f32 %v1067, %v1095
      %v1097 = vpop.f32.mrf.mxu0
      %v1098 = vadd.f32 %v1069, %v1097
      %1099 = vdwg.mxu0
      %1100 = vmatpush.bf16.msra.mxu0 %v749
      %1101 = vmatpush.bf16.msra.mxu0 %v747
      %1102 = vmatpush.bf16.msra.mxu0 %v745
      %1103 = vmatpush.bf16.msra.mxu0 %v743
      %1104 = vmatpush.bf16.msra.mxu0 %v741
      %1105 = vmatpush.bf16.msra.mxu0 %v739
      %1106 = vmatpush.bf16.msra.mxu0 %v737
      %1107 = vmatpush.bf16.msra.mxu0 %v735
      %1108 = vmatmul.bf16.gmra.mxu0 %v398
      %v1109 = vpop.f32.mrf.mxu0
      %v1110 = vadd.f32 0.0, %v1109
      %v1111 = vpop.f32.mrf.mxu0
      %v1112 = vadd.f32 0.0, %v1111
      %1113 = vmatmul.bf16.gmra.mxu0 %v404
      %v1114 = vpop.f32.mrf.mxu0
      %v1115 = vadd.f32 0.0, %v1114
      %v1116 = vpop.f32.mrf.mxu0
      %v1117 = vadd.f32 0.0, %v1116
      %1118 = vmatmul.bf16.gmra.mxu0 %v410
      %v1119 = vpop.f32.mrf.mxu0
      %v1120 = vadd.f32 0.0, %v1119
      %v1121 = vpop.f32.mrf.mxu0
      %v1122 = vadd.f32 0.0, %v1121
      %1123 = vmatmul.bf16.gmra.mxu0 %v416
      %v1124 = vpop.f32.mrf.mxu0
      %v1125 = vadd.f32 0.0, %v1124
      %v1126 = vpop.f32.mrf.mxu0
      %v1127 = vadd.f32 0.0, %v1126
      %1128 = vdwg.mxu0
      %1129 = vmatpush.bf16.msra.mxu0 %v765
      %1130 = vmatpush.bf16.msra.mxu0 %v763
      %1131 = vmatpush.bf16.msra.mxu0 %v761
      %1132 = vmatpush.bf16.msra.mxu0 %v759
      %1133 = vmatpush.bf16.msra.mxu0 %v757
      %1134 = vmatpush.bf16.msra.mxu0 %v755
      %1135 = vmatpush.bf16.msra.mxu0 %v753
      %1136 = vmatpush.bf16.msra.mxu0 %v751
      %1137 = vmatmul.bf16.gmra.mxu0 %v399
      %v1138 = vpop.f32.mrf.mxu0
      %v1139 = vadd.f32 %v1110, %v1138
      %v1140 = vpop.f32.mrf.mxu0
      %v1141 = vadd.f32 %v1112, %v1140
      %1142 = vmatmul.bf16.gmra.mxu0 %v405
      %v1143 = vpop.f32.mrf.mxu0
      %v1144 = vadd.f32 %v1115, %v1143
      %v1145 = vpop.f32.mrf.mxu0
      %v1146 = vadd.f32 %v1117, %v1145
      %1147 = vmatmul.bf16.gmra.mxu0 %v411
      %v1148 = vpop.f32.mrf.mxu0
      %v1149 = vadd.f32 %v1120, %v1148
      %v1150 = vpop.f32.mrf.mxu0
      %v1151 = vadd.f32 %v1122, %v1150
      %1152 = vmatmul.bf16.gmra.mxu0 %v417
      %v1153 = vpop.f32.mrf.mxu0
      %v1154 = vadd.f32 %v1125, %v1153
      %v1155 = vpop.f32.mrf.mxu0
      %v1156 = vadd.f32 %v1127, %v1155
      %1157 = vdwg.mxu0
      %1158 = vmatpush.bf16.msra.mxu0 %v781
      %1159 = vmatpush.bf16.msra.mxu0 %v779
      %1160 = vmatpush.bf16.msra.mxu0 %v777
      %1161 = vmatpush.bf16.msra.mxu0 %v775
      %1162 = vmatpush.bf16.msra.mxu0 %v773
      %1163 = vmatpush.bf16.msra.mxu0 %v771
      %1164 = vmatpush.bf16.msra.mxu0 %v769
      %1165 = vmatpush.bf16.msra.mxu0 %v767
      %1166 = vmatmul.bf16.gmra.mxu0 %v400
      %v1167 = vpop.f32.mrf.mxu0
      %v1168 = vadd.f32 %v1139, %v1167
      %v1169 = vpop.f32.mrf.mxu0
      %v1170 = vadd.f32 %v1141, %v1169
      %1171 = vmatmul.bf16.gmra.mxu0 %v406
      %v1172 = vpop.f32.mrf.mxu0
      %v1173 = vadd.f32 %v1144, %v1172
      %v1174 = vpop.f32.mrf.mxu0
      %v1175 = vadd.f32 %v1146, %v1174
      %1176 = vmatmul.bf16.gmra.mxu0 %v412
      %v1177 = vpop.f32.mrf.mxu0
      %v1178 = vadd.f32 %v1149, %v1177
      %v1179 = vpop.f32.mrf.mxu0
      %v1180 = vadd.f32 %v1151, %v1179
      %1181 = vmatmul.bf16.gmra.mxu0 %v418
      %v1182 = vpop.f32.mrf.mxu0
      %v1183 = vadd.f32 %v1154, %v1182
      %v1184 = vpop.f32.mrf.mxu0
      %v1185 = vadd.f32 %v1156, %v1184
      %1186 = vdwg.mxu0
      %1187 = vmatpush.bf16.msra.mxu0 %v797
      %1188 = vmatpush.bf16.msra.mxu0 %v795
      %1189 = vmatpush.bf16.msra.mxu0 %v793
      %1190 = vmatpush.bf16.msra.mxu0 %v791
      %1191 = vmatpush.bf16.msra.mxu0 %v789
      %1192 = vmatpush.bf16.msra.mxu0 %v787
      %1193 = vmatpush.bf16.msra.mxu0 %v785
      %1194 = vmatpush.bf16.msra.mxu0 %v783
      %1195 = vmatmul.bf16.gmra.mxu0 %v401
      %v1196 = vpop.f32.mrf.mxu0
      %v1197 = vadd.f32 %v1168, %v1196
      %v1198 = vpop.f32.mrf.mxu0
      %v1199 = vadd.f32 %v1170, %v1198
      %1200 = vmatmul.bf16.gmra.mxu0 %v407
      %v1201 = vpop.f32.mrf.mxu0
      %v1202 = vadd.f32 %v1173, %v1201
      %v1203 = vpop.f32.mrf.mxu0
      %v1204 = vadd.f32 %v1175, %v1203
      %1205 = vmatmul.bf16.gmra.mxu0 %v413
      %v1206 = vpop.f32.mrf.mxu0
      %v1207 = vadd.f32 %v1178, %v1206
      %v1208 = vpop.f32.mrf.mxu0
      %v1209 = vadd.f32 %v1180, %v1208
      %1210 = vmatmul.bf16.gmra.mxu0 %v419
      %v1211 = vpop.f32.mrf.mxu0
      %v1212 = vadd.f32 %v1183, %v1211
      %v1213 = vpop.f32.mrf.mxu0
      %v1214 = vadd.f32 %v1185, %v1213
      %1215 = vdwg.mxu0
      %1216 = vmatpush.bf16.msra.mxu0 %v813
      %1217 = vmatpush.bf16.msra.mxu0 %v811
      %1218 = vmatpush.bf16.msra.mxu0 %v809
      %1219 = vmatpush.bf16.msra.mxu0 %v807
      %1220 = vmatpush.bf16.msra.mxu0 %v805
      %1221 = vmatpush.bf16.msra.mxu0 %v803
      %1222 = vmatpush.bf16.msra.mxu0 %v801
      %1223 = vmatpush.bf16.msra.mxu0 %v799
      %1224 = vmatmul.bf16.gmra.mxu0 %v402
      %v1225 = vpop.f32.mrf.mxu0
      %v1226 = vadd.f32 %v1197, %v1225
      %v1227 = vpop.f32.mrf.mxu0
      %v1228 = vadd.f32 %v1199, %v1227
      %1229 = vmatmul.bf16.gmra.mxu0 %v408
      %v1230 = vpop.f32.mrf.mxu0
      %v1231 = vadd.f32 %v1202, %v1230
      %v1232 = vpop.f32.mrf.mxu0
      %v1233 = vadd.f32 %v1204, %v1232
      %1234 = vmatmul.bf16.gmra.mxu0 %v414
      %v1235 = vpop.f32.mrf.mxu0
      %v1236 = vadd.f32 %v1207, %v1235
      %v1237 = vpop.f32.mrf.mxu0
      %v1238 = vadd.f32 %v1209, %v1237
      %1239 = vmatmul.bf16.gmra.mxu0 %v420
      %v1240 = vpop.f32.mrf.mxu0
      %v1241 = vadd.f32 %v1212, %v1240
      %v1242 = vpop.f32.mrf.mxu0
      %v1243 = vadd.f32 %v1214, %v1242
      %1244 = vdwg.mxu0
      %1245 = vmatpush.bf16.msra.mxu0 %v829
      %1246 = vmatpush.bf16.msra.mxu0 %v827
      %1247 = vmatpush.bf16.msra.mxu0 %v825
      %1248 = vmatpush.bf16.msra.mxu0 %v823
      %1249 = vmatpush.bf16.msra.mxu0 %v821
      %1250 = vmatpush.bf16.msra.mxu0 %v819
      %1251 = vmatpush.bf16.msra.mxu0 %v817
      %1252 = vmatpush.bf16.msra.mxu0 %v815
      %1253 = vmatmul.bf16.gmra.mxu0 %v403
      %v1254 = vpop.f32.mrf.mxu0
      %v1255 = vadd.f32 %v1226, %v1254
      %v1256 = vpop.f32.mrf.mxu0
      %v1257 = vadd.f32 %v1228, %v1256
      %1258 = vmatmul.bf16.gmra.mxu0 %v409
      %v1259 = vpop.f32.mrf.mxu0
      %v1260 = vadd.f32 %v1231, %v1259
      %v1261 = vpop.f32.mrf.mxu0
      %v1262 = vadd.f32 %v1233, %v1261
      %1263 = vmatmul.bf16.gmra.mxu0 %v415
      %v1264 = vpop.f32.mrf.mxu0
      %v1265 = vadd.f32 %v1236, %v1264
      %v1266 = vpop.f32.mrf.mxu0
      %v1267 = vadd.f32 %v1238, %v1266
      %1268 = vmatmul.bf16.gmra.mxu0 %v421
      %v1269 = vpop.f32.mrf.mxu0
      %v1270 = vadd.f32 %v1241, %v1269
      %v1271 = vpop.f32.mrf.mxu0
      %v1272 = vadd.f32 %v1243, %v1271
      %1273 = vdwg.mxu0
      %v1274 = vld [vmem:[%s2] sm:$0x3]
      %v1276 = vperm.slane %v1274, 0
      %v1277 = vperm.slane %v1274, 1
      %v1280 = vmul.f32 %v1081, %v1276
      %v1281 = vmul.f32 %v1255, %v1277
      %v1282 = vmul.f32 %v1083, %v1276
      %v1283 = vmul.f32 %v1257, %v1277
      %v1284 = vmul.f32 %v1086, %v1276
      %v1285 = vmul.f32 %v1260, %v1277
      %v1286 = vmul.f32 %v1088, %v1276
      %v1287 = vmul.f32 %v1262, %v1277
      %v1288 = vmul.f32 %v1091, %v1276
      %v1289 = vmul.f32 %v1265, %v1277
      %v1290 = vmul.f32 %v1093, %v1276
      %v1291 = vmul.f32 %v1267, %v1277
      %v1292 = vmul.f32 %v1096, %v1276
      %v1293 = vmul.f32 %v1270, %v1277
      %v1294 = vmul.f32 %v1098, %v1276
      %v1295 = vmul.f32 %v1272, %v1277
      %v1296 = vld [vmem:[%s3] sm:$0x3]
      %v1298 = vperm.slane %v1296, 0
      %v1299 = vperm.slane %v1296, 1
      %v1302 = vadd.f32 %v1280, %v1298
      %v1303 = vadd.f32 %v1281, %v1299
      %v1304 = vadd.f32 %v1282, %v1298
      %v1305 = vadd.f32 %v1283, %v1299
      %v1306 = vadd.f32 %v1284, %v1298
      %v1307 = vadd.f32 %v1285, %v1299
      %v1308 = vadd.f32 %v1286, %v1298
      %v1309 = vadd.f32 %v1287, %v1299
      %v1310 = vadd.f32 %v1288, %v1298
      %v1311 = vadd.f32 %v1289, %v1299
      %v1312 = vadd.f32 %v1290, %v1298
      %v1313 = vadd.f32 %v1291, %v1299
      %v1314 = vadd.f32 %v1292, %v1298
      %v1315 = vadd.f32 %v1293, %v1299
      %v1316 = vadd.f32 %v1294, %v1298
      %v1317 = vadd.f32 %v1295, %v1299
      %v1318 = vmax.f32 %v1302, 0.0
      %v1319 = vmax.f32 %v1303, 0.0
      %v1320 = vmax.f32 %v1304, 0.0
      %v1321 = vmax.f32 %v1305, 0.0
      %v1322 = vmax.f32 %v1306, 0.0
      %v1323 = vmax.f32 %v1307, 0.0
      %v1324 = vmax.f32 %v1308, 0.0
      %v1325 = vmax.f32 %v1309, 0.0
      %v1326 = vmax.f32 %v1310, 0.0
      %v1327 = vmax.f32 %v1311, 0.0
      %v1328 = vmax.f32 %v1312, 0.0
      %v1329 = vmax.f32 %v1313, 0.0
      %v1330 = vmax.f32 %v1314, 0.0
      %v1331 = vmax.f32 %v1315, 0.0
      %v1332 = vmax.f32 %v1316, 0.0
      %v1333 = vmax.f32 %v1317, 0.0
      %v1334 = vpack.c.bf16 %v1319, %v1318
      %v1335 = vpack.c.bf16 %v1321, %v1320
      %v1336 = vpack.c.bf16 %v1323, %v1322
      %v1337 = vpack.c.bf16 %v1325, %v1324
      %v1338 = vpack.c.bf16 %v1327, %v1326
      %v1339 = vpack.c.bf16 %v1329, %v1328
      %v1340 = vpack.c.bf16 %v1331, %v1330
      %v1341 = vpack.c.bf16 %v1333, %v1332
      %1342 = vst [vmem:[%s204] sm:$0xff] %v1334
      %1343 = vst [vmem:[%s204 + $0x8] sm:$0xff] %v1335
      %1344 = vst [vmem:[%s204 + $0x10] sm:$0xff] %v1336
      %1345 = vst [vmem:[%s204 + $0x18] sm:$0xff] %v1337
      %1346 = vst [vmem:[%s204 + $0x20] sm:$0xff] %v1338
      %1347 = vst [vmem:[%s204 + $0x28] sm:$0xff] %v1339
      %1348 = vst [vmem:[%s204 + $0x30] sm:$0xff] %v1340
      %1349 = vst [vmem:[%s204 + $0x38] sm:$0xff] %v1341
      %s1350 = smul.u32 8, %s15
      %p1351 = scmp.lt.s32.totalorder %s1350, 15
      %s1352 = scalar_select %p1351, %s1350, 15
      %s1353 = smul.addr %s1352, 2
      %s1354 = smul.addr %s1353, 4
      %s1355 = scalar_lea.vmem %s4, %s1354
      // Predicated region
      $region37: #{block2_module_b.8} parent=35 // pred_check
        %p1356 = pneg %p122
      $region38: #{block2_module_b.8} parent=35 // pred_check_branch
        %1358 = sbr.rel (%p1356) target = $region40
      $region39: #{block2_module_b.8} parent=35 // pred_region
        %s1359 = smul.u32 8, %s15
      $region40: #{block2_module_b.8} parent=35 // pred_fallthru
        _
    $region36: #{block2_module_b.8} parent=5 // pred_fallthru
      _
    %p1360 = scmp.le.s32.totalorder 2, %s10
    // Predicated region
    $region41: #{block2_module_b.8} parent=5 // pred_check
      %p1361 = pneg %p1360
    $region42: #{block2_module_b.8} parent=5 // pred_check_branch
      %1363 = sbr.rel (%p1361) target = $region44
    $region43: #{block2_module_b.8} parent=5 // pred_region
      %s1364 = ssub.s32 %s10, 2
      // Predicated region
      $region45: #{block2_module_b.8} parent=43 // pred_check
        %p1365 = pneg %p128
      $region46: #{block2_module_b.8} parent=43 // pred_check_branch
        %1367 = sbr.rel (%p1365) target = $region48
      $region47: #{block2_module_b.8} parent=43 // pred_region
        %s1368 = smul.u32 8, %s16
        %p1369 = scmp.lt.s32.totalorder %s1368, 15
        %s1370 = scalar_select %p1369, %s1368, 15
        %s1371 = smul.addr %s1370, 2
        %s1372 = smul.addr %s1371, 4
        %s1373 = scalar_lea.vmem %s4, %s1372
      $region48: #{block2_module_b.8} parent=43 // pred_fallthru
        _
    $region44: #{block2_module_b.8} parent=5 // pred_fallthru
      _
  $region6: #{block2_module_b.8} parent=0 // loop_footer
    %s14 = sadd.s32 1, %s10
  $region7: #{block2_module_b.8} parent=0 // loop_footer_branch
    %9 = sbr.rel target = $region3
  $region8: #{block2_module_b.8} parent=0 // loop_exit
    _

// kernel: block2_module_b.12
$region0: #{block2_module_b.12}
  #allocation0 [shape = 'u32[]', space=smem, size = 0x4, offset = 0x4, fixed_abs, tag = 'smem constant byte address 0x4 - core index']
  #allocation1 [shape = 'u32[72,128]{1,0:T(1,128)}', space=vmem, size = 0x9000, scoped, tag = 'internal scratch']
  %s0 = inlined_call_operand.vmem [shape: bf16[2,8,14,32], index: 0, kind: input, shape index: {}]
  %s1 = inlined_call_operand.vmem [shape: bf16[7,32,32], index: 1, kind: input, shape index: {}]
  %s2 = inlined_call_operand.vmem [shape: f32[1,32], index: 2, kind: input, shape index: {}]
  %s3 = inlined_call_operand.vmem [shape: f32[1,32], index: 3, kind: input, shape index: {}]
  %s4 = inlined_call_operand.vmem [shape: bf16[2,8,8,32], index: 4, kind: output, shape index: {}]
  %s5 = sld [smem:[#allocation0]]
  $region49: #{block2_module_b.12} parent=0
    _
  %s7 = ssub.s32 1, %s5
  %s8 = scalar_select 0, %s7, %s5
  loop: start=0, step=1, limit=4
  $region2: #{block2_module_b.12} parent=0 // loop_pre_header
    _
  $region3: #{block2_module_b.12} parent=0 // loop_header
    %s10 = sphi 0, %s14
    %p11 = scmp.ge.s32.totalorder %s10, 4
    %s20 = sphi 0, %s22
    %s23 = sphi 0, %s20
    %s24 = sphi 0, %s23
    %s40 = sphi 0, %s24
    %s44 = sphi 0, %s44
    %s46 = sphi 0, %s44
    %s47 = sphi 0, %s46
    %s61 = sphi 0, %s47
    %s65 = sphi 0, %s65
    %s67 = sphi 0, %s65
    %s68 = sphi 0, %s67
    %s82 = sphi 0, %s68
    %s86 = sphi 0, %s86
    %s88 = sphi 0, %s86
    %s89 = sphi 0, %s88
    %s103 = sphi 0, %s89
    %s109 = sphi 0, %s111
    %s112 = sphi 0, %s109
    %s113 = sphi 0, %s112
    %s129 = sphi 0, %s113
  $region4: #{block2_module_b.12} parent=0 // loop_header_branch
    %13 = sbr.rel (%p11) target = $region8
  $region5: #{block2_module_b.12} parent=0 // loop_body
    %s15 = ssub.s32 %s10, 1
    %s16 = ssub.s32 %s10, 2
    %s17 = sadd.s32 %s10, 1
    %s18 = ssub.s32 %s10, %s17
    %p19 = scmp.eq.s32.totalorder %s18, 0
    %s21 = sadd.s32 %s20, 1
    %s22 = scalar_select %p19, %s20, %s21
    %p25 = pneg %p19
    %p26 = scmp.eq.s32.totalorder %s10, 1
    %p27 = por %p25, %p26
    %p28 = scmp.ne.s32.totalorder %s20, %s23
    %p29 = scmp.eq.s32.totalorder %s10, 0
    %p30 = por %p28, %p29
    %p31 = scmp.ne.s32.totalorder %s20, %s23
    %p32 = scmp.eq.s32.totalorder %s15, 1
    %p33 = por %p31, %p32
    %p34 = scmp.ne.s32.totalorder %s23, %s24
    %p35 = scmp.eq.s32.totalorder %s15, 0
    %p36 = por %p34, %p35
    %p37 = scmp.ne.s32.totalorder %s23, %s24
    %p38 = scmp.eq.s32.totalorder %s16, 1
    %p39 = por %p37, %p38
    %p41 = scmp.ne.s32.totalorder %s24, %s40
    %p42 = scmp.eq.s32.totalorder %s16, 0
    %p43 = por %p41, %p42
    %s45 = sadd.s32 %s44, 1
    %p48 = scmp.eq.s32.totalorder %s10, 1
    %p49 = scmp.ne.s32.totalorder %s44, %s46
    %p50 = scmp.eq.s32.totalorder %s10, 0
    %p51 = por %p49, %p50
    %p52 = scmp.ne.s32.totalorder %s44, %s46
    %p53 = scmp.eq.s32.totalorder %s15, 1
    %p54 = por %p52, %p53
    %p55 = scmp.ne.s32.totalorder %s46, %s47
    %p56 = scmp.eq.s32.totalorder %s15, 0
    %p57 = por %p55, %p56
    %p58 = scmp.ne.s32.totalorder %s46, %s47
    %p59 = scmp.eq.s32.totalorder %s16, 1
    %p60 = por %p58, %p59
    %p62 = scmp.ne.s32.totalorder %s47, %s61
    %p63 = scmp.eq.s32.totalorder %s16, 0
    %p64 = por %p62, %p63
    %s66 = sadd.s32 %s65, 1
    %p69 = scmp.eq.s32.totalorder %s10, 1
    %p70 = scmp.ne.s32.totalorder %s65, %s67
    %p71 = scmp.eq.s32.totalorder %s10, 0
    %p72 = por %p70, %p71
    %p73 = scmp.ne.s32.totalorder %s65, %s67
    %p74 = scmp.eq.s32.totalorder %s15, 1
    %p75 = por %p73, %p74
    %p76 = scmp.ne.s32.totalorder %s67, %s68
    %p77 = scmp.eq.s32.totalorder %s15, 0
    %p78 = por %p76, %p77
    %p79 = scmp.ne.s32.totalorder %s67, %s68
    %p80 = scmp.eq.s32.totalorder %s16, 1
    %p81 = por %p79, %p80
    %p83 = scmp.ne.s32.totalorder %s68, %s82
    %p84 = scmp.eq.s32.totalorder %s16, 0
    %p85 = por %p83, %p84
    %s87 = sadd.s32 %s86, 1
    %p90 = scmp.eq.s32.totalorder %s10, 1
    %p91 = scmp.ne.s32.totalorder %s86, %s88
    %p92 = scmp.eq.s32.totalorder %s10, 0
    %p93 = por %p91, %p92
    %p94 = scmp.ne.s32.totalorder %s86, %s88
    %p95 = scmp.eq.s32.totalorder %s15, 1
    %p96 = por %p94, %p95
    %p97 = scmp.ne.s32.totalorder %s88, %s89
    %p98 = scmp.eq.s32.totalorder %s15, 0
    %p99 = por %p97, %p98
    %p100 = scmp.ne.s32.totalorder %s88, %s89
    %p101 = scmp.eq.s32.totalorder %s16, 1
    %p102 = por %p100, %p101
    %p104 = scmp.ne.s32.totalorder %s89, %s103
    %p105 = scmp.eq.s32.totalorder %s16, 0
    %p106 = por %p104, %p105
    %s107 = ssub.s32 %s10, %s17
    %p108 = scmp.eq.s32.totalorder %s107, 0
    %s110 = sadd.s32 %s109, 1
    %s111 = scalar_select %p108, %s109, %s110
    %p114 = pneg %p108
    %p115 = scmp.eq.s32.totalorder %s10, 1
    %p116 = por %p114, %p115
    %p117 = scmp.ne.s32.totalorder %s109, %s112
    %p118 = scmp.eq.s32.totalorder %s10, 0
    %p119 = por %p117, %p118
    %p120 = scmp.ne.s32.totalorder %s109, %s112
    %p121 = scmp.eq.s32.totalorder %s15, 1
    %p122 = por %p120, %p121
    %p123 = scmp.ne.s32.totalorder %s112, %s113
    %p124 = scmp.eq.s32.totalorder %s15, 0
    %p125 = por %p123, %p124
    %p126 = scmp.ne.s32.totalorder %s112, %s113
    %p127 = scmp.eq.s32.totalorder %s16, 1
    %p128 = por %p126, %p127
    %p130 = scmp.ne.s32.totalorder %s113, %s129
    %p131 = scmp.eq.s32.totalorder %s16, 0
    %p132 = por %p130, %p131
    %p133 = scmp.le.s32.totalorder 1, %s10
    %p134 = scmp.lt.s32.totalorder %s10, 3
    %p135 = pnand %p133, %p134
    %p136 = pneg %p135
    // Predicated region
    $region9: #{block2_module_b.12} parent=5 // pred_check
      _
    $region10: #{block2_module_b.12} parent=5 // pred_check_branch
      %138 = sbr.rel (%p135) target = $region12
    $region11: #{block2_module_b.12} parent=5 // pred_region
      %s139 = ssub.s32 %s10, 1
      // Predicated region
      $region13: #{block2_module_b.12} parent=11 // pred_check
        %p140 = pneg %p57
      $region14: #{block2_module_b.12} parent=11 // pred_check_branch
        %142 = sbr.rel (%p140) target = $region16
      $region15: #{block2_module_b.12} parent=11 // pred_region
        _
      $region16: #{block2_module_b.12} parent=11 // pred_fallthru
        _
      // Predicated region
      $region17: #{block2_module_b.12} parent=11 // pred_check
        %p143 = pneg %p78
      $region18: #{block2_module_b.12} parent=11 // pred_check_branch
        %145 = sbr.rel (%p143) target = $region20
      $region19: #{block2_module_b.12} parent=11 // pred_region
        _
      $region20: #{block2_module_b.12} parent=11 // pred_fallthru
        _
      // Predicated region
      $region21: #{block2_module_b.12} parent=11 // pred_check
        %p146 = pneg %p99
      $region22: #{block2_module_b.12} parent=11 // pred_check_branch
        %148 = sbr.rel (%p146) target = $region24
      $region23: #{block2_module_b.12} parent=11 // pred_region
        _
      $region24: #{block2_module_b.12} parent=11 // pred_fallthru
        _
    $region12: #{block2_module_b.12} parent=5 // pred_fallthru
      _
    %p149 = scmp.lt.s32.totalorder %s10, 2
    // Predicated region
    $region25: #{block2_module_b.12} parent=5 // pred_check
      %p150 = pneg %p149
    $region26: #{block2_module_b.12} parent=5 // pred_check_branch
      %152 = sbr.rel (%p150) target = $region28
    $region27: #{block2_module_b.12} parent=5 // pred_region
      // Predicated region
      $region29: #{block2_module_b.12} parent=27 // pred_check
        %p153 = pneg %p30
      $region30: #{block2_module_b.12} parent=27 // pred_check_branch
        %155 = sbr.rel (%p153) target = $region32
      $region31: #{block2_module_b.12} parent=27 // pred_region
        %p156 = scmp.lt.s32.totalorder %s10, 1
        %s157 = scalar_select %p156, %s10, 1
        %s158 = smul.addr %s157, 16
        %s159 = smul.addr %s158, 4
        %s160 = scalar_lea.vmem %s0, %s159
      $region32: #{block2_module_b.12} parent=27 // pred_fallthru
        _
    $region28: #{block2_module_b.12} parent=5 // pred_fallthru
      _
    %p161 = scmp.le.s32.totalorder 1, %s10
    %p162 = scmp.lt.s32.totalorder %s10, 3
    %p163 = pnand %p161, %p162
    %p164 = pneg %p163
    // Predicated region
    $region33: #{block2_module_b.12} parent=5 // pred_check
      _
    $region34: #{block2_module_b.12} parent=5 // pred_check_branch
      %166 = sbr.rel (%p163) target = $region36
    $region35: #{block2_module_b.12} parent=5 // pred_region
      %s167 = ssub.s32 %s10, 1
      %p168 = scmp.lt.s32.totalorder %s15, 1
      %s169 = scalar_select %p168, %s15, 1
      %s170 = smul.addr %s169, 16
      %s171 = smul.addr %s170, 4
      %s172 = scalar_lea.vmem %s0, %s171
      %p173 = pneg %p36
      %p174 = pneg %p33
      %p175 = pneg %p57
      %p176 = pneg %p54
      %p177 = pneg %p78
      %p178 = pneg %p75
      %p179 = pneg %p99
      %p180 = pneg %p96
      %p181 = pneg %p125
      %p182 = pneg %p122
      %p183 = scmp.lt.s32.totalorder %s15, 1
      %s184 = scalar_select %p183, %s15, 1
      %s185 = smul.addr %s184, 8
      %s186 = smul.addr %s185, 4
      %s187 = scalar_lea.vmem %s4, %s186
      %p188 = scmp.lt.s32.totalorder %s15, 1
      %s189 = scalar_select %p188, %s15, 1
      %s190 = smul.addr %s189, 16
      %s191 = smul.addr %s190, 4
      %s192 = scalar_lea.vmem %s0, %s191
      %p193 = scmp.lt.s32.totalorder %s15, 1
      %s194 = scalar_select %p193, %s15, 1
      %s195 = smul.addr %s194, 8
      %s196 = smul.addr %s195, 4
      %s197 = scalar_lea.vmem %s4, %s196
      %v199 = vld [vmem:[%s192] sm:$0xf]
      %v200 = vld [vmem:[%s192 + $0x4] sm:$0x7]
      %v201 = vld [vmem:[%s192 + $0x8] sm:$0xf]
      %v202 = vld [vmem:[%s192 + $0xc] sm:$0x7]
      %v203 = vld [vmem:[%s192 + $0x10] sm:$0xf]
      %v204 = vld [vmem:[%s192 + $0x14] sm:$0x7]
      %v205 = vld [vmem:[%s192 + $0x18] sm:$0xf]
      %v206 = vld [vmem:[%s192 + $0x1c] sm:$0x7]
      %v207 = vld [vmem:[%s192 + $0x20] sm:$0xf]
      %v208 = vld [vmem:[%s192 + $0x24] sm:$0x7]
      %v209 = vld [vmem:[%s192 + $0x28] sm:$0xf]
      %v210 = vld [vmem:[%s192 + $0x2c] sm:$0x7]
      %v211 = vld [vmem:[%s192 + $0x30] sm:$0xf]
      %v212 = vld [vmem:[%s192 + $0x34] sm:$0x7]
      %v213 = vld [vmem:[%s192 + $0x38] sm:$0xf]
      %v214 = vld [vmem:[%s192 + $0x3c] sm:$0x7]
      %v215 = vld [vmem:[%s1] sm:$0xf]
      %v216 = vld [vmem:[%s1 + $0x4] sm:$0xf]
      %v217 = vld [vmem:[%s1 + $0x8] sm:$0xf]
      %v218 = vld [vmem:[%s1 + $0xc] sm:$0xf]
      %vm219 = vsmask.f32 3328
      %vm220 = vsmask.f32 7440
      %vm221 = vmor %vm219, %vm220
      %v223 = vshrl.u32 %v199, 16
      %v225 = vrot.slane %v223, 4
      %v226 = vshll.u32 %v199, 16
      %v228 = vrot.slane %v226, 5
      %v229 = vor.u32 %v225, %v228
      %v230 = vrot.slane %v229, 4
      %v232 = vshll.u32 %v200, 16
      %v234 = vrot.slane %v232, 5
      %v235 = vsel %vm221, %v230, %v234
      %v237 = vshrl.u32 %v201, 16
      %v239 = vrot.slane %v237, 4
      %v240 = vshll.u32 %v201, 16
      %v242 = vrot.slane %v240, 5
      %v243 = vor.u32 %v239, %v242
      %v244 = vrot.slane %v243, 4
      %v246 = vshll.u32 %v202, 16
      %v248 = vrot.slane %v246, 5
      %v249 = vsel %vm221, %v244, %v248
      %v251 = vshrl.u32 %v203, 16
      %v253 = vrot.slane %v251, 4
      %v254 = vshll.u32 %v203, 16
      %v256 = vrot.slane %v254, 5
      %v257 = vor.u32 %v253, %v256
      %v258 = vrot.slane %v257, 4
      %v260 = vshll.u32 %v204, 16
      %v262 = vrot.slane %v260, 5
      %v263 = vsel %vm221, %v258, %v262
      %v265 = vshrl.u32 %v205, 16
      %v267 = vrot.slane %v265, 4
      %v268 = vshll.u32 %v205, 16
      %v270 = vrot.slane %v268, 5
      %v271 = vor.u32 %v267, %v270
      %v272 = vrot.slane %v271, 4
      %v274 = vshll.u32 %v206, 16
      %v276 = vrot.slane %v274, 5
      %v277 = vsel %vm221, %v272, %v276
      %v279 = vshrl.u32 %v207, 16
      %v281 = vrot.slane %v279, 4
      %v282 = vshll.u32 %v207, 16
      %v284 = vrot.slane %v282, 5
      %v285 = vor.u32 %v281, %v284
      %v286 = vrot.slane %v285, 4
      %v288 = vshll.u32 %v208, 16
      %v290 = vrot.slane %v288, 5
      %v291 = vsel %vm221, %v286, %v290
      %v293 = vshrl.u32 %v209, 16
      %v295 = vrot.slane %v293, 4
      %v296 = vshll.u32 %v209, 16
      %v298 = vrot.slane %v296, 5
      %v299 = vor.u32 %v295, %v298
      %v300 = vrot.slane %v299, 4
      %v302 = vshll.u32 %v210, 16
      %v304 = vrot.slane %v302, 5
      %v305 = vsel %vm221, %v300, %v304
      %v307 = vshrl.u32 %v211, 16
      %v309 = vrot.slane %v307, 4
      %v310 = vshll.u32 %v211, 16
      %v312 = vrot.slane %v310, 5
      %v313 = vor.u32 %v309, %v312
      %v314 = vrot.slane %v313, 4
      %v316 = vshll.u32 %v212, 16
      %v318 = vrot.slane %v316, 5
      %v319 = vsel %vm221, %v314, %v318
      %v321 = vshrl.u32 %v213, 16
      %v323 = vrot.slane %v321, 4
      %v324 = vshll.u32 %v213, 16
      %v326 = vrot.slane %v324, 5
      %v327 = vor.u32 %v323, %v326
      %v328 = vrot.slane %v327, 4
      %v330 = vshll.u32 %v214, 16
      %v332 = vrot.slane %v330, 5
      %v333 = vsel %vm221, %v328, %v332
      %s334 = scalar_lea.vmem %s1, 16
      %v335 = vld [vmem:[%s334] sm:$0xf]
      %v336 = vld [vmem:[%s334 + $0x4] sm:$0xf]
      %v337 = vld [vmem:[%s334 + $0x8] sm:$0xf]
      %v338 = vld [vmem:[%s334 + $0xc] sm:$0xf]
      %v339 = vunpack.c.l.b16 %v235
      %v340 = vunpack.c.l.b16 %v249
      %v341 = vunpack.c.l.b16 %v263
      %v342 = vunpack.c.l.b16 %v277
      %v343 = vunpack.c.l.b16 %v291
      %v344 = vunpack.c.l.b16 %v305
      %v345 = vunpack.c.l.b16 %v319
      %v346 = vunpack.c.l.b16 %v333
      %v347 = vpack.c.b16 %v340, %v339
      %v348 = vpack.c.b16 %v342, %v341
      %v349 = vpack.c.b16 %v344, %v343
      %v350 = vpack.c.b16 %v346, %v345
      %v355 = vunpack.c.l.b16 %v335
      %v356 = vunpack.c.l.b16 %v336
      %v357 = vunpack.c.l.b16 %v337
      %v358 = vunpack.c.l.b16 %v338
      %v359 = vpack.c.b16 %v356, %v355
      %v360 = vpack.c.b16 %v358, %v357
      %vm363 = vcmask 261120
      %v365 = vsel %vm363, %v347, 0
      %v368 = vsel %vm363, %v348, 0
      %v371 = vsel %vm363, %v349, 0
      %v374 = vsel %vm363, %v350, 0
      %376 = vmatpush.bf16.msra.mxu0 0
      %377 = vmatpush.bf16.msra.mxu0 0
      %378 = vmatpush.bf16.msra.mxu0 0
      %379 = vmatpush.bf16.msra.mxu0 0
      %380 = vmatpush.bf16.msra.mxu0 0
      %381 = vmatpush.bf16.msra.mxu0 0
      %382 = vmatpush.bf16.msra.mxu0 %v360
      %383 = vmatpush.bf16.msra.mxu0 %v359
      %384 = vmatmul.bf16.gmra.mxu0 %v365
      %v385 = vpop.f32.mrf.mxu0
      %v386 = vadd.f32 0.0, %v385
      %v387 = vpop.f32.mrf.mxu0
      %v388 = vadd.f32 0.0, %v387
      %389 = vmatmul.bf16.gmra.mxu0 %v368
      %v390 = vpop.f32.mrf.mxu0
      %v391 = vadd.f32 0.0, %v390
      %v392 = vpop.f32.mrf.mxu0
      %v393 = vadd.f32 0.0, %v392
      %394 = vmatmul.bf16.gmra.mxu0 %v371
      %v395 = vpop.f32.mrf.mxu0
      %v396 = vadd.f32 0.0, %v395
      %v397 = vpop.f32.mrf.mxu0
      %v398 = vadd.f32 0.0, %v397
      %399 = vmatmul.bf16.gmra.mxu0 %v374
      %v400 = vpop.f32.mrf.mxu0
      %v401 = vadd.f32 0.0, %v400
      %v402 = vpop.f32.mrf.mxu0
      %v403 = vadd.f32 0.0, %v402
      %404 = vdwg.mxu0
      %v413 = vunpack.c.l.b16 %v199
      %v414 = vunpack.c.l.b16 %v201
      %v415 = vunpack.c.l.b16 %v203
      %v416 = vunpack.c.l.b16 %v205
      %v417 = vunpack.c.l.b16 %v207
      %v418 = vunpack.c.l.b16 %v209
      %v419 = vunpack.c.l.b16 %v211
      %v420 = vunpack.c.l.b16 %v213
      %v421 = vpack.c.b16 %v414, %v413
      %v422 = vpack.c.b16 %v416, %v415
      %v423 = vpack.c.b16 %v418, %v417
      %v424 = vpack.c.b16 %v420, %v419
      %v429 = vunpack.c.l.b16 %v215
      %v430 = vunpack.c.l.b16 %v216
      %v431 = vunpack.c.l.b16 %v217
      %v432 = vunpack.c.l.b16 %v218
      %v433 = vpack.c.b16 %v430, %v429
      %v434 = vpack.c.b16 %v432, %v431
      %v438 = vsel %vm363, %v421, 0
      %v441 = vsel %vm363, %v422, 0
      %v444 = vsel %vm363, %v423, 0
      %v447 = vsel %vm363, %v424, 0
      %449 = vmatpush.bf16.msra.mxu0 0
      %450 = vmatpush.bf16.msra.mxu0 0
      %451 = vmatpush.bf16.msra.mxu0 0
      %452 = vmatpush.bf16.msra.mxu0 0
      %453 = vmatpush.bf16.msra.mxu0 0
      %454 = vmatpush.bf16.msra.mxu0 0
      %455 = vmatpush.bf16.msra.mxu0 %v434
      %456 = vmatpush.bf16.msra.mxu0 %v433
      %457 = vmatmul.bf16.gmra.mxu0 %v438
      %v458 = vpop.f32.mrf.mxu0
      %v459 = vadd.f32 %v386, %v458
      %v460 = vpop.f32.mrf.mxu0
      %v461 = vadd.f32 %v388, %v460
      %462 = vmatmul.bf16.gmra.mxu0 %v441
      %v463 = vpop.f32.mrf.mxu0
      %v464 = vadd.f32 %v391, %v463
      %v465 = vpop.f32.mrf.mxu0
      %v466 = vadd.f32 %v393, %v465
      %467 = vmatmul.bf16.gmra.mxu0 %v444
      %v468 = vpop.f32.mrf.mxu0
      %v469 = vadd.f32 %v396, %v468
      %v470 = vpop.f32.mrf.mxu0
      %v471 = vadd.f32 %v398, %v470
      %472 = vmatmul.bf16.gmra.mxu0 %v447
      %v473 = vpop.f32.mrf.mxu0
      %v474 = vadd.f32 %v401, %v473
      %v475 = vpop.f32.mrf.mxu0
      %v476 = vadd.f32 %v403, %v475
      %477 = vdwg.mxu0
      %vm486 = vcmask 1042432
      %vm487 = vcmask 1046532
      %vm488 = vmor %vm486, %vm487
      %v489 = vrot.slane %v199, 5
      %v490 = vrot.slane %v489, 4
      %v491 = vrot.slane %v200, 5
      %v492 = vsel %vm488, %v490, %v491
      %v493 = vrot.slane %v201, 5
      %v494 = vrot.slane %v493, 4
      %v495 = vrot.slane %v202, 5
      %v496 = vsel %vm488, %v494, %v495
      %v497 = vrot.slane %v203, 5
      %v498 = vrot.slane %v497, 4
      %v499 = vrot.slane %v204, 5
      %v500 = vsel %vm488, %v498, %v499
      %v501 = vrot.slane %v205, 5
      %v502 = vrot.slane %v501, 4
      %v503 = vrot.slane %v206, 5
      %v504 = vsel %vm488, %v502, %v503
      %v505 = vrot.slane %v207, 5
      %v506 = vrot.slane %v505, 4
      %v507 = vrot.slane %v208, 5
      %v508 = vsel %vm488, %v506, %v507
      %v509 = vrot.slane %v209, 5
      %v510 = vrot.slane %v509, 4
      %v511 = vrot.slane %v210, 5
      %v512 = vsel %vm488, %v510, %v511
      %v513 = vrot.slane %v211, 5
      %v514 = vrot.slane %v513, 4
      %v515 = vrot.slane %v212, 5
      %v516 = vsel %vm488, %v514, %v515
      %v517 = vrot.slane %v213, 5
      %v518 = vrot.slane %v517, 4
      %v519 = vrot.slane %v214, 5
      %v520 = vsel %vm488, %v518, %v519
      %s521 = scalar_lea.vmem %s1, 32
      %v522 = vld [vmem:[%s521] sm:$0xf]
      %v523 = vld [vmem:[%s521 + $0x4] sm:$0xf]
      %v524 = vld [vmem:[%s521 + $0x8] sm:$0xf]
      %v525 = vld [vmem:[%s521 + $0xc] sm:$0xf]
      %v526 = vunpack.c.l.b16 %v492
      %v527 = vunpack.c.l.b16 %v496
      %v528 = vunpack.c.l.b16 %v500
      %v529 = vunpack.c.l.b16 %v504
      %v530 = vunpack.c.l.b16 %v508
      %v531 = vunpack.c.l.b16 %v512
      %v532 = vunpack.c.l.b16 %v516
      %v533 = vunpack.c.l.b16 %v520
      %v534 = vpack.c.b16 %v527, %v526
      %v535 = vpack.c.b16 %v529, %v528
      %v536 = vpack.c.b16 %v531, %v530
      %v537 = vpack.c.b16 %v533, %v532
      %v542 = vunpack.c.l.b16 %v522
      %v543 = vunpack.c.l.b16 %v523
      %v544 = vunpack.c.l.b16 %v524
      %v545 = vunpack.c.l.b16 %v525
      %v546 = vpack.c.b16 %v543, %v542
      %v547 = vpack.c.b16 %v545, %v544
      %v551 = vsel %vm363, %v534, 0
      %v554 = vsel %vm363, %v535, 0
      %v557 = vsel %vm363, %v536, 0
      %v560 = vsel %vm363, %v537, 0
      %562 = vmatpush.bf16.msra.mxu0 0
      %563 = vmatpush.bf16.msra.mxu0 0
      %564 = vmatpush.bf16.msra.mxu0 0
      %565 = vmatpush.bf16.msra.mxu0 0
      %566 = vmatpush.bf16.msra.mxu0 0
      %567 = vmatpush.bf16.msra.mxu0 0
      %568 = vmatpush.bf16.msra.mxu0 %v547
      %569 = vmatpush.bf16.msra.mxu0 %v546
      %570 = vmatmul.bf16.gmra.mxu0 %v551
      %v571 = vpop.f32.mrf.mxu0
      %v572 = vadd.f32 0.0, %v571
      %v573 = vpop.f32.mrf.mxu0
      %v574 = vadd.f32 0.0, %v573
      %575 = vmatmul.bf16.gmra.mxu0 %v554
      %v576 = vpop.f32.mrf.mxu0
      %v577 = vadd.f32 0.0, %v576
      %v578 = vpop.f32.mrf.mxu0
      %v579 = vadd.f32 0.0, %v578
      %580 = vmatmul.bf16.gmra.mxu0 %v557
      %v581 = vpop.f32.mrf.mxu0
      %v582 = vadd.f32 0.0, %v581
      %v583 = vpop.f32.mrf.mxu0
      %v584 = vadd.f32 0.0, %v583
      %585 = vmatmul.bf16.gmra.mxu0 %v560
      %v586 = vpop.f32.mrf.mxu0
      %v587 = vadd.f32 0.0, %v586
      %v588 = vpop.f32.mrf.mxu0
      %v589 = vadd.f32 0.0, %v588
      %590 = vdwg.mxu0
      %v591 = vadd.f32 %v459, %v572
      %v592 = vadd.f32 %v461, %v574
      %v593 = vadd.f32 %v464, %v577
      %v594 = vadd.f32 %v466, %v579
      %v595 = vadd.f32 %v469, %v582
      %v596 = vadd.f32 %v471, %v584
      %v597 = vadd.f32 %v474, %v587
      %v598 = vadd.f32 %v476, %v589
      %vm599 = vsmask.f32 2304
      %vm600 = vsmask.f32 6416
      %vm601 = vmor %vm599, %vm600
      %v602 = vrot.slane %v223, 5
      %v603 = vrot.slane %v226, 6
      %v604 = vor.u32 %v602, %v603
      %v605 = vrot.slane %v604, 4
      %v606 = vshrl.u32 %v200, 16
      %v608 = vrot.slane %v606, 5
      %v609 = vrot.slane %v232, 6
      %v610 = vor.u32 %v608, %v609
      %v611 = vsel %vm601, %v605, %v610
      %v612 = vrot.slane %v237, 5
      %v613 = vrot.slane %v240, 6
      %v614 = vor.u32 %v612, %v613
      %v615 = vrot.slane %v614, 4
      %v616 = vshrl.u32 %v202, 16
      %v618 = vrot.slane %v616, 5
      %v619 = vrot.slane %v246, 6
      %v620 = vor.u32 %v618, %v619
      %v621 = vsel %vm601, %v615, %v620
      %v622 = vrot.slane %v251, 5
      %v623 = vrot.slane %v254, 6
      %v624 = vor.u32 %v622, %v623
      %v625 = vrot.slane %v624, 4
      %v626 = vshrl.u32 %v204, 16
      %v628 = vrot.slane %v626, 5
      %v629 = vrot.slane %v260, 6
      %v630 = vor.u32 %v628, %v629
      %v631 = vsel %vm601, %v625, %v630
      %v632 = vrot.slane %v265, 5
      %v633 = vrot.slane %v268, 6
      %v634 = vor.u32 %v632, %v633
      %v635 = vrot.slane %v634, 4
      %v636 = vshrl.u32 %v206, 16
      %v638 = vrot.slane %v636, 5
      %v639 = vrot.slane %v274, 6
      %v640 = vor.u32 %v638, %v639
      %v641 = vsel %vm601, %v635, %v640
      %v642 = vrot.slane %v279, 5
      %v643 = vrot.slane %v282, 6
      %v644 = vor.u32 %v642, %v643
      %v645 = vrot.slane %v644, 4
      %v646 = vshrl.u32 %v208, 16
      %v648 = vrot.slane %v646, 5
      %v649 = vrot.slane %v288, 6
      %v650 = vor.u32 %v648, %v649
      %v651 = vsel %vm601, %v645, %v650
      %v652 = vrot.slane %v293, 5
      %v653 = vrot.slane %v296, 6
      %v654 = vor.u32 %v652, %v653
      %v655 = vrot.slane %v654, 4
      %v656 = vshrl.u32 %v210, 16
      %v658 = vrot.slane %v656, 5
      %v659 = vrot.slane %v302, 6
      %v660 = vor.u32 %v658, %v659
      %v661 = vsel %vm601, %v655, %v660
      %v662 = vrot.slane %v307, 5
      %v663 = vrot.slane %v310, 6
      %v664 = vor.u32 %v662, %v663
      %v665 = vrot.slane %v664, 4
      %v666 = vshrl.u32 %v212, 16
      %v668 = vrot.slane %v666, 5
      %v669 = vrot.slane %v316, 6
      %v670 = vor.u32 %v668, %v669
      %v671 = vsel %vm601, %v665, %v670
      %v672 = vrot.slane %v321, 5
      %v673 = vrot.slane %v324, 6
      %v674 = vor.u32 %v672, %v673
      %v675 = vrot.slane %v674, 4
      %v676 = vshrl.u32 %v214, 16
      %v678 = vrot.slane %v676, 5
      %v679 = vrot.slane %v330, 6
      %v680 = vor.u32 %v678, %v679
      %v681 = vsel %vm601, %v675, %v680
      %s682 = scalar_lea.vmem %s1, 48
      %v683 = vld [vmem:[%s682] sm:$0xf]
      %v684 = vld [vmem:[%s682 + $0x4] sm:$0xf]
      %v685 = vld [vmem:[%s682 + $0x8] sm:$0xf]
      %v686 = vld [vmem:[%s682 + $0xc] sm:$0xf]
      %v687 = vunpack.c.l.b16 %v611
      %v688 = vunpack.c.l.b16 %v621
      %v689 = vunpack.c.l.b16 %v631
      %v690 = vunpack.c.l.b16 %v641
      %v691 = vunpack.c.l.b16 %v651
      %v692 = vunpack.c.l.b16 %v661
      %v693 = vunpack.c.l.b16 %v671
      %v694 = vunpack.c.l.b16 %v681
      %v695 = vpack.c.b16 %v688, %v687
      %v696 = vpack.c.b16 %v690, %v689
      %v697 = vpack.c.b16 %v692, %v691
      %v698 = vpack.c.b16 %v694, %v693
      %v703 = vunpack.c.l.b16 %v683
      %v704 = vunpack.c.l.b16 %v684
      %v705 = vunpack.c.l.b16 %v685
      %v706 = vunpack.c.l.b16 %v686
      %v707 = vpack.c.b16 %v704, %v703
      %v708 = vpack.c.b16 %v706, %v705
      %v712 = vsel %vm363, %v695, 0
      %v715 = vsel %vm363, %v696, 0
      %v718 = vsel %vm363, %v697, 0
      %v721 = vsel %vm363, %v698, 0
      %723 = vmatpush.bf16.msra.mxu0 0
      %724 = vmatpush.bf16.msra.mxu0 0
      %725 = vmatpush.bf16.msra.mxu0 0
      %726 = vmatpush.bf16.msra.mxu0 0
      %727 = vmatpush.bf16.msra.mxu0 0
      %728 = vmatpush.bf16.msra.mxu0 0
      %729 = vmatpush.bf16.msra.mxu0 %v708
      %730 = vmatpush.bf16.msra.mxu0 %v707
      %731 = vmatmul.bf16.gmra.mxu0 %v712
      %v732 = vpop.f32.mrf.mxu0
      %v733 = vadd.f32 0.0, %v732
      %v734 = vpop.f32.mrf.mxu0
      %v735 = vadd.f32 0.0, %v734
      %736 = vmatmul.bf16.gmra.mxu0 %v715
      %v737 = vpop.f32.mrf.mxu0
      %v738 = vadd.f32 0.0, %v737
      %v739 = vpop.f32.mrf.mxu0
      %v740 = vadd.f32 0.0, %v739
      %741 = vmatmul.bf16.gmra.mxu0 %v718
      %v742 = vpop.f32.mrf.mxu0
      %v743 = vadd.f32 0.0, %v742
      %v744 = vpop.f32.mrf.mxu0
      %v745 = vadd.f32 0.0, %v744
      %746 = vmatmul.bf16.gmra.mxu0 %v721
      %v747 = vpop.f32.mrf.mxu0
      %v748 = vadd.f32 0.0, %v747
      %v749 = vpop.f32.mrf.mxu0
      %v750 = vadd.f32 0.0, %v749
      %751 = vdwg.mxu0
      %v752 = vadd.f32 %v591, %v733
      %v753 = vadd.f32 %v592, %v735
      %v754 = vadd.f32 %v593, %v738
      %v755 = vadd.f32 %v594, %v740
      %v756 = vadd.f32 %v595, %v743
      %v757 = vadd.f32 %v596, %v745
      %v758 = vadd.f32 %v597, %v748
      %v759 = vadd.f32 %v598, %v750
      %vm760 = vcmask 1041408
      %vm761 = vcmask 1045508
      %vm762 = vmor %vm760, %vm761
      %v763 = vrot.slane %v199, 6
      %v764 = vrot.slane %v763, 4
      %v765 = vrot.slane %v200, 6
      %v766 = vsel %vm762, %v764, %v765
      %v767 = vrot.slane %v201, 6
      %v768 = vrot.slane %v767, 4
      %v769 = vrot.slane %v202, 6
      %v770 = vsel %vm762, %v768, %v769
      %v771 = vrot.slane %v203, 6
      %v772 = vrot.slane %v771, 4
      %v773 = vrot.slane %v204, 6
      %v774 = vsel %vm762, %v772, %v773
      %v775 = vrot.slane %v205, 6
      %v776 = vrot.slane %v775, 4
      %v777 = vrot.slane %v206, 6
      %v778 = vsel %vm762, %v776, %v777
      %v779 = vrot.slane %v207, 6
      %v780 = vrot.slane %v779, 4
      %v781 = vrot.slane %v208, 6
      %v782 = vsel %vm762, %v780, %v781
      %v783 = vrot.slane %v209, 6
      %v784 = vrot.slane %v783, 4
      %v785 = vrot.slane %v210, 6
      %v786 = vsel %vm762, %v784, %v785
      %v787 = vrot.slane %v211, 6
      %v788 = vrot.slane %v787, 4
      %v789 = vrot.slane %v212, 6
      %v790 = vsel %vm762, %v788, %v789
      %v791 = vrot.slane %v213, 6
      %v792 = vrot.slane %v791, 4
      %v793 = vrot.slane %v214, 6
      %v794 = vsel %vm762, %v792, %v793
      %s795 = scalar_lea.vmem %s1, 64
      %v796 = vld [vmem:[%s795] sm:$0xf]
      %v797 = vld [vmem:[%s795 + $0x4] sm:$0xf]
      %v798 = vld [vmem:[%s795 + $0x8] sm:$0xf]
      %v799 = vld [vmem:[%s795 + $0xc] sm:$0xf]
      %v800 = vunpack.c.l.b16 %v766
      %v801 = vunpack.c.l.b16 %v770
      %v802 = vunpack.c.l.b16 %v774
      %v803 = vunpack.c.l.b16 %v778
      %v804 = vunpack.c.l.b16 %v782
      %v805 = vunpack.c.l.b16 %v786
      %v806 = vunpack.c.l.b16 %v790
      %v807 = vunpack.c.l.b16 %v794
      %v808 = vpack.c.b16 %v801, %v800
      %v809 = vpack.c.b16 %v803, %v802
      %v810 = vpack.c.b16 %v805, %v804
      %v811 = vpack.c.b16 %v807, %v806
      %v816 = vunpack.c.l.b16 %v796
      %v817 = vunpack.c.l.b16 %v797
      %v818 = vunpack.c.l.b16 %v798
      %v819 = vunpack.c.l.b16 %v799
      %v820 = vpack.c.b16 %v817, %v816
      %v821 = vpack.c.b16 %v819, %v818
      %v825 = vsel %vm363, %v808, 0
      %v828 = vsel %vm363, %v809, 0
      %v831 = vsel %vm363, %v810, 0
      %v834 = vsel %vm363, %v811, 0
      %836 = vmatpush.bf16.msra.mxu0 0
      %837 = vmatpush.bf16.msra.mxu0 0
      %838 = vmatpush.bf16.msra.mxu0 0
      %839 = vmatpush.bf16.msra.mxu0 0
      %840 = vmatpush.bf16.msra.mxu0 0
      %841 = vmatpush.bf16.msra.mxu0 0
      %842 = vmatpush.bf16.msra.mxu0 %v821
      %843 = vmatpush.bf16.msra.mxu0 %v820
      %844 = vmatmul.bf16.gmra.mxu0 %v825
      %v845 = vpop.f32.mrf.mxu0
      %v846 = vadd.f32 0.0, %v845
      %v847 = vpop.f32.mrf.mxu0
      %v848 = vadd.f32 0.0, %v847
      %849 = vmatmul.bf16.gmra.mxu0 %v828
      %v850 = vpop.f32.mrf.mxu0
      %v851 = vadd.f32 0.0, %v850
      %v852 = vpop.f32.mrf.mxu0
      %v853 = vadd.f32 0.0, %v852
      %854 = vmatmul.bf16.gmra.mxu0 %v831
      %v855 = vpop.f32.mrf.mxu0
      %v856 = vadd.f32 0.0, %v855
      %v857 = vpop.f32.mrf.mxu0
      %v858 = vadd.f32 0.0, %v857
      %859 = vmatmul.bf16.gmra.mxu0 %v834
      %v860 = vpop.f32.mrf.mxu0
      %v861 = vadd.f32 0.0, %v860
      %v862 = vpop.f32.mrf.mxu0
      %v863 = vadd.f32 0.0, %v862
      %864 = vdwg.mxu0
      %v865 = vadd.f32 %v752, %v846
      %v866 = vadd.f32 %v753, %v848
      %v867 = vadd.f32 %v754, %v851
      %v868 = vadd.f32 %v755, %v853
      %v869 = vadd.f32 %v756, %v856
      %v870 = vadd.f32 %v757, %v858
      %v871 = vadd.f32 %v758, %v861
      %v872 = vadd.f32 %v759, %v863
      %vm873 = vsmask.f32 1280
      %vm874 = vsmask.f32 5392
      %vm875 = vmor %vm873, %vm874
      %v876 = vrot.slane %v223, 6
      %v877 = vrot.slane %v226, 7
      %v878 = vor.u32 %v876, %v877
      %v879 = vrot.slane %v878, 4
      %v880 = vrot.slane %v606, 6
      %v881 = vrot.slane %v232, 7
      %v882 = vor.u32 %v880, %v881
      %v883 = vsel %vm875, %v879, %v882
      %v884 = vrot.slane %v237, 6
      %v885 = vrot.slane %v240, 7
      %v886 = vor.u32 %v884, %v885
      %v887 = vrot.slane %v886, 4
      %v888 = vrot.slane %v616, 6
      %v889 = vrot.slane %v246, 7
      %v890 = vor.u32 %v888, %v889
      %v891 = vsel %vm875, %v887, %v890
      %v892 = vrot.slane %v251, 6
      %v893 = vrot.slane %v254, 7
      %v894 = vor.u32 %v892, %v893
      %v895 = vrot.slane %v894, 4
      %v896 = vrot.slane %v626, 6
      %v897 = vrot.slane %v260, 7
      %v898 = vor.u32 %v896, %v897
      %v899 = vsel %vm875, %v895, %v898
      %v900 = vrot.slane %v265, 6
      %v901 = vrot.slane %v268, 7
      %v902 = vor.u32 %v900, %v901
      %v903 = vrot.slane %v902, 4
      %v904 = vrot.slane %v636, 6
      %v905 = vrot.slane %v274, 7
      %v906 = vor.u32 %v904, %v905
      %v907 = vsel %vm875, %v903, %v906
      %v908 = vrot.slane %v279, 6
      %v909 = vrot.slane %v282, 7
      %v910 = vor.u32 %v908, %v909
      %v911 = vrot.slane %v910, 4
      %v912 = vrot.slane %v646, 6
      %v913 = vrot.slane %v288, 7
      %v914 = vor.u32 %v912, %v913
      %v915 = vsel %vm875, %v911, %v914
      %v916 = vrot.slane %v293, 6
      %v917 = vrot.slane %v296, 7
      %v918 = vor.u32 %v916, %v917
      %v919 = vrot.slane %v918, 4
      %v920 = vrot.slane %v656, 6
      %v921 = vrot.slane %v302, 7
      %v922 = vor.u32 %v920, %v921
      %v923 = vsel %vm875, %v919, %v922
      %v924 = vrot.slane %v307, 6
      %v925 = vrot.slane %v310, 7
      %v926 = vor.u32 %v924, %v925
      %v927 = vrot.slane %v926, 4
      %v928 = vrot.slane %v666, 6
      %v929 = vrot.slane %v316, 7
      %v930 = vor.u32 %v928, %v929
      %v931 = vsel %vm875, %v927, %v930
      %v932 = vrot.slane %v321, 6
      %v933 = vrot.slane %v324, 7
      %v934 = vor.u32 %v932, %v933
      %v935 = vrot.slane %v934, 4
      %v936 = vrot.slane %v676, 6
      %v937 = vrot.slane %v330, 7
      %v938 = vor.u32 %v936, %v937
      %v939 = vsel %vm875, %v935, %v938
      %s940 = scalar_lea.vmem %s1, 80
      %v941 = vld [vmem:[%s940] sm:$0xf]
      %v942 = vld [vmem:[%s940 + $0x4] sm:$0xf]
      %v943 = vld [vmem:[%s940 + $0x8] sm:$0xf]
      %v944 = vld [vmem:[%s940 + $0xc] sm:$0xf]
      %v945 = vunpack.c.l.b16 %v883
      %v946 = vunpack.c.l.b16 %v891
      %v947 = vunpack.c.l.b16 %v899
      %v948 = vunpack.c.l.b16 %v907
      %v949 = vunpack.c.l.b16 %v915
      %v950 = vunpack.c.l.b16 %v923
      %v951 = vunpack.c.l.b16 %v931
      %v952 = vunpack.c.l.b16 %v939
      %v953 = vpack.c.b16 %v946, %v945
      %v954 = vpack.c.b16 %v948, %v947
      %v955 = vpack.c.b16 %v950, %v949
      %v956 = vpack.c.b16 %v952, %v951
      %v961 = vunpack.c.l.b16 %v941
      %v962 = vunpack.c.l.b16 %v942
      %v963 = vunpack.c.l.b16 %v943
      %v964 = vunpack.c.l.b16 %v944
      %v965 = vpack.c.b16 %v962, %v961
      %v966 = vpack.c.b16 %v964, %v963
      %v970 = vsel %vm363, %v953, 0
      %v973 = vsel %vm363, %v954, 0
      %v976 = vsel %vm363, %v955, 0
      %v979 = vsel %vm363, %v956, 0
      %981 = vmatpush.bf16.msra.mxu0 0
      %982 = vmatpush.bf16.msra.mxu0 0
      %983 = vmatpush.bf16.msra.mxu0 0
      %984 = vmatpush.bf16.msra.mxu0 0
      %985 = vmatpush.bf16.msra.mxu0 0
      %986 = vmatpush.bf16.msra.mxu0 0
      %987 = vmatpush.bf16.msra.mxu0 %v966
      %988 = vmatpush.bf16.msra.mxu0 %v965
      %989 = vmatmul.bf16.gmra.mxu0 %v970
      %v990 = vpop.f32.mrf.mxu0
      %v991 = vadd.f32 0.0, %v990
      %v992 = vpop.f32.mrf.mxu0
      %v993 = vadd.f32 0.0, %v992
      %994 = vmatmul.bf16.gmra.mxu0 %v973
      %v995 = vpop.f32.mrf.mxu0
      %v996 = vadd.f32 0.0, %v995
      %v997 = vpop.f32.mrf.mxu0
      %v998 = vadd.f32 0.0, %v997
      %999 = vmatmul.bf16.gmra.mxu0 %v976
      %v1000 = vpop.f32.mrf.mxu0
      %v1001 = vadd.f32 0.0, %v1000
      %v1002 = vpop.f32.mrf.mxu0
      %v1003 = vadd.f32 0.0, %v1002
      %1004 = vmatmul.bf16.gmra.mxu0 %v979
      %v1005 = vpop.f32.mrf.mxu0
      %v1006 = vadd.f32 0.0, %v1005
      %v1007 = vpop.f32.mrf.mxu0
      %v1008 = vadd.f32 0.0, %v1007
      %1009 = vdwg.mxu0
      %v1010 = vadd.f32 %v865, %v991
      %v1011 = vadd.f32 %v866, %v993
      %v1012 = vadd.f32 %v867, %v996
      %v1013 = vadd.f32 %v868, %v998
      %v1014 = vadd.f32 %v869, %v1001
      %v1015 = vadd.f32 %v870, %v1003
      %v1016 = vadd.f32 %v871, %v1006
      %v1017 = vadd.f32 %v872, %v1008
      %vm1018 = vcmask 1040384
      %vm1019 = vcmask 1044484
      %vm1020 = vmor %vm1018, %vm1019
      %v1021 = vrot.slane %v199, 7
      %v1022 = vrot.slane %v1021, 4
      %v1023 = vrot.slane %v200, 7
      %v1024 = vsel %vm1020, %v1022, %v1023
      %v1025 = vrot.slane %v201, 7
      %v1026 = vrot.slane %v1025, 4
      %v1027 = vrot.slane %v202, 7
      %v1028 = vsel %vm1020, %v1026, %v1027
      %v1029 = vrot.slane %v203, 7
      %v1030 = vrot.slane %v1029, 4
      %v1031 = vrot.slane %v204, 7
      %v1032 = vsel %vm1020, %v1030, %v1031
      %v1033 = vrot.slane %v205, 7
      %v1034 = vrot.slane %v1033, 4
      %v1035 = vrot.slane %v206, 7
      %v1036 = vsel %vm1020, %v1034, %v1035
      %v1037 = vrot.slane %v207, 7
      %v1038 = vrot.slane %v1037, 4
      %v1039 = vrot.slane %v208, 7
      %v1040 = vsel %vm1020, %v1038, %v1039
      %v1041 = vrot.slane %v209, 7
      %v1042 = vrot.slane %v1041, 4
      %v1043 = vrot.slane %v210, 7
      %v1044 = vsel %vm1020, %v1042, %v1043
      %v1045 = vrot.slane %v211, 7
      %v1046 = vrot.slane %v1045, 4
      %v1047 = vrot.slane %v212, 7
      %v1048 = vsel %vm1020, %v1046, %v1047
      %v1049 = vrot.slane %v213, 7
      %v1050 = vrot.slane %v1049, 4
      %v1051 = vrot.slane %v214, 7
      %v1052 = vsel %vm1020, %v1050, %v1051
      %s1053 = scalar_lea.vmem %s1, 96
      %v1054 = vld [vmem:[%s1053] sm:$0xf]
      %v1055 = vld [vmem:[%s1053 + $0x4] sm:$0xf]
      %v1056 = vld [vmem:[%s1053 + $0x8] sm:$0xf]
      %v1057 = vld [vmem:[%s1053 + $0xc] sm:$0xf]
      %v1058 = vunpack.c.l.b16 %v1024
      %v1059 = vunpack.c.l.b16 %v1028
      %v1060 = vunpack.c.l.b16 %v1032
      %v1061 = vunpack.c.l.b16 %v1036
      %v1062 = vunpack.c.l.b16 %v1040
      %v1063 = vunpack.c.l.b16 %v1044
      %v1064 = vunpack.c.l.b16 %v1048
      %v1065 = vunpack.c.l.b16 %v1052
      %v1066 = vpack.c.b16 %v1059, %v1058
      %v1067 = vpack.c.b16 %v1061, %v1060
      %v1068 = vpack.c.b16 %v1063, %v1062
      %v1069 = vpack.c.b16 %v1065, %v1064
      %v1074 = vunpack.c.l.b16 %v1054
      %v1075 = vunpack.c.l.b16 %v1055
      %v1076 = vunpack.c.l.b16 %v1056
      %v1077 = vunpack.c.l.b16 %v1057
      %v1078 = vpack.c.b16 %v1075, %v1074
      %v1079 = vpack.c.b16 %v1077, %v1076
      %v1083 = vsel %vm363, %v1066, 0
      %v1086 = vsel %vm363, %v1067, 0
      %v1089 = vsel %vm363, %v1068, 0
      %v1092 = vsel %vm363, %v1069, 0
      %1094 = vmatpush.bf16.msra.mxu0 0
      %1095 = vmatpush.bf16.msra.mxu0 0
      %1096 = vmatpush.bf16.msra.mxu0 0
      %1097 = vmatpush.bf16.msra.mxu0 0
      %1098 = vmatpush.bf16.msra.mxu0 0
      %1099 = vmatpush.bf16.msra.mxu0 0
      %1100 = vmatpush.bf16.msra.mxu0 %v1079
      %1101 = vmatpush.bf16.msra.mxu0 %v1078
      %1102 = vmatmul.bf16.gmra.mxu0 %v1083
      %v1103 = vpop.f32.mrf.mxu0
      %v1104 = vadd.f32 0.0, %v1103
      %v1105 = vpop.f32.mrf.mxu0
      %v1106 = vadd.f32 0.0, %v1105
      %1107 = vmatmul.bf16.gmra.mxu0 %v1086
      %v1108 = vpop.f32.mrf.mxu0
      %v1109 = vadd.f32 0.0, %v1108
      %v1110 = vpop.f32.mrf.mxu0
      %v1111 = vadd.f32 0.0, %v1110
      %1112 = vmatmul.bf16.gmra.mxu0 %v1089
      %v1113 = vpop.f32.mrf.mxu0
      %v1114 = vadd.f32 0.0, %v1113
      %v1115 = vpop.f32.mrf.mxu0
      %v1116 = vadd.f32 0.0, %v1115
      %1117 = vmatmul.bf16.gmra.mxu0 %v1092
      %v1118 = vpop.f32.mrf.mxu0
      %v1119 = vadd.f32 0.0, %v1118
      %v1120 = vpop.f32.mrf.mxu0
      %v1121 = vadd.f32 0.0, %v1120
      %1122 = vdwg.mxu0
      %v1123 = vadd.f32 %v1010, %v1104
      %v1124 = vadd.f32 %v1011, %v1106
      %v1125 = vadd.f32 %v1012, %v1109
      %v1126 = vadd.f32 %v1013, %v1111
      %v1127 = vadd.f32 %v1014, %v1114
      %v1128 = vadd.f32 %v1015, %v1116
      %v1129 = vadd.f32 %v1016, %v1119
      %v1130 = vadd.f32 %v1017, %v1121
      %v1131 = vld [vmem:[%s2] sm:$0x1]
      %v1133 = vperm.slane %v1131, 0
      %v1135 = vmul.f32 %v1123, %v1133
      %v1136 = vmul.f32 %v1124, %v1133
      %v1137 = vmul.f32 %v1125, %v1133
      %v1138 = vmul.f32 %v1126, %v1133
      %v1139 = vmul.f32 %v1127, %v1133
      %v1140 = vmul.f32 %v1128, %v1133
      %v1141 = vmul.f32 %v1129, %v1133
      %v1142 = vmul.f32 %v1130, %v1133
      %v1143 = vld [vmem:[%s3] sm:$0x1]
      %v1145 = vperm.slane %v1143, 0
      %v1147 = vadd.f32 %v1135, %v1145
      %v1148 = vadd.f32 %v1136, %v1145
      %v1149 = vadd.f32 %v1137, %v1145
      %v1150 = vadd.f32 %v1138, %v1145
      %v1151 = vadd.f32 %v1139, %v1145
      %v1152 = vadd.f32 %v1140, %v1145
      %v1153 = vadd.f32 %v1141, %v1145
      %v1154 = vadd.f32 %v1142, %v1145
      %v1155 = vmax.f32 %v1147, 0.0
      %v1156 = vmax.f32 %v1148, 0.0
      %v1157 = vmax.f32 %v1149, 0.0
      %v1158 = vmax.f32 %v1150, 0.0
      %v1159 = vmax.f32 %v1151, 0.0
      %v1160 = vmax.f32 %v1152, 0.0
      %v1161 = vmax.f32 %v1153, 0.0
      %v1162 = vmax.f32 %v1154, 0.0
      %v1163 = vpack.c.bf16 %v1155, %v1155
      %v1164 = vpack.c.bf16 %v1156, %v1156
      %v1165 = vpack.c.bf16 %v1157, %v1157
      %v1166 = vpack.c.bf16 %v1158, %v1158
      %v1167 = vpack.c.bf16 %v1159, %v1159
      %v1168 = vpack.c.bf16 %v1160, %v1160
      %v1169 = vpack.c.bf16 %v1161, %v1161
      %v1170 = vpack.c.bf16 %v1162, %v1162
      %vm1171 = vcmask 257024
      %1172 = vst.msk [vmem:[%s197] sm:$0xf] %vm1171, %v1163
      %1173 = vst.msk [vmem:[%s197 + $0x4] sm:$0xf] %vm1171, %v1164
      %1174 = vst.msk [vmem:[%s197 + $0x8] sm:$0xf] %vm1171, %v1165
      %1175 = vst.msk [vmem:[%s197 + $0xc] sm:$0xf] %vm1171, %v1166
      %1176 = vst.msk [vmem:[%s197 + $0x10] sm:$0xf] %vm1171, %v1167
      %1177 = vst.msk [vmem:[%s197 + $0x14] sm:$0xf] %vm1171, %v1168
      %1178 = vst.msk [vmem:[%s197 + $0x18] sm:$0xf] %vm1171, %v1169
      %1179 = vst.msk [vmem:[%s197 + $0x1c] sm:$0xf] %vm1171, %v1170
      %p1180 = scmp.lt.s32.totalorder %s15, 1
      %s1181 = scalar_select %p1180, %s15, 1
      %s1182 = smul.addr %s1181, 8
      %s1183 = smul.addr %s1182, 4
      %s1184 = scalar_lea.vmem %s4, %s1183
      // Predicated region
      $region37: #{block2_module_b.12} parent=35 // pred_check
        %p1185 = pneg %p122
      $region38: #{block2_module_b.12} parent=35 // pred_check_branch
        %1187 = sbr.rel (%p1185) target = $region40
      $region39: #{block2_module_b.12} parent=35 // pred_region
        _
      $region40: #{block2_module_b.12} parent=35 // pred_fallthru
        _
    $region36: #{block2_module_b.12} parent=5 // pred_fallthru
      _
    %p1188 = scmp.le.s32.totalorder 2, %s10
    // Predicated region
    $region41: #{block2_module_b.12} parent=5 // pred_check
      %p1189 = pneg %p1188
    $region42: #{block2_module_b.12} parent=5 // pred_check_branch
      %1191 = sbr.rel (%p1189) target = $region44
    $region43: #{block2_module_b.12} parent=5 // pred_region
      %s1192 = ssub.s32 %s10, 2
      // Predicated region
      $region45: #{block2_module_b.12} parent=43 // pred_check
        %p1193 = pneg %p128
      $region46: #{block2_module_b.12} parent=43 // pred_check_branch
        %1195 = sbr.rel (%p1193) target = $region48
      $region47: #{block2_module_b.12} parent=43 // pred_region
        %p1196 = scmp.lt.s32.totalorder %s16, 1
        %s1197 = scalar_select %p1196, %s16, 1
        %s1198 = smul.addr %s1197, 8
        %s1199 = smul.addr %s1198, 4
        %s1200 = scalar_lea.vmem %s4, %s1199
      $region48: #{block2_module_b.12} parent=43 // pred_fallthru
        _
    $region44: #{block2_module_b.12} parent=5 // pred_fallthru
      _
  $region6: #{block2_module_b.12} parent=0 // loop_footer
    %s14 = sadd.s32 1, %s10
  $region7: #{block2_module_b.12} parent=0 // loop_footer_branch
    %9 = sbr.rel target = $region3
  $region8: #{block2_module_b.12} parent=0 // loop_exit
    _

// kernel: block2_module_b.14
$region0: #{block2_module_b.14}
  #allocation0 [shape = 'u32[]', space=smem, size = 0x4, offset = 0x4, fixed_abs, tag = 'smem constant byte address 0x4 - core index']
  #allocation1 [shape = 'u32[72,128]{1,0:T(1,128)}', space=vmem, size = 0x9000, scoped, tag = 'internal scratch']
  %s0 = inlined_call_operand.vmem [shape: bf16[2,8,14,32], index: 0, kind: input, shape index: {}]
  %s1 = inlined_call_operand.vmem [shape: bf16[7,32,192], index: 1, kind: input, shape index: {}]
  %s2 = inlined_call_operand.vmem [shape: f32[1,192], index: 2, kind: input, shape index: {}]
  %s3 = inlined_call_operand.vmem [shape: f32[1,192], index: 3, kind: input, shape index: {}]
  %s4 = inlined_call_operand.vmem [shape: bf16[2,8,8,192], index: 4, kind: output, shape index: {}]
  %s5 = sld [smem:[#allocation0]]
  $region49: #{block2_module_b.14} parent=0
    _
  %s7 = ssub.s32 1, %s5
  %s8 = scalar_select 0, %s7, %s5
  loop: start=0, step=1, limit=4
  $region2: #{block2_module_b.14} parent=0 // loop_pre_header
    _
  $region3: #{block2_module_b.14} parent=0 // loop_header
    %s10 = sphi 0, %s14
    %p11 = scmp.ge.s32.totalorder %s10, 4
    %s20 = sphi 0, %s22
    %s23 = sphi 0, %s20
    %s24 = sphi 0, %s23
    %s40 = sphi 0, %s24
    %s44 = sphi 0, %s44
    %s46 = sphi 0, %s44
    %s47 = sphi 0, %s46
    %s61 = sphi 0, %s47
    %s65 = sphi 0, %s65
    %s67 = sphi 0, %s65
    %s68 = sphi 0, %s67
    %s82 = sphi 0, %s68
    %s86 = sphi 0, %s86
    %s88 = sphi 0, %s86
    %s89 = sphi 0, %s88
    %s103 = sphi 0, %s89
    %s109 = sphi 0, %s111
    %s112 = sphi 0, %s109
    %s113 = sphi 0, %s112
    %s129 = sphi 0, %s113
  $region4: #{block2_module_b.14} parent=0 // loop_header_branch
    %13 = sbr.rel (%p11) target = $region8
  $region5: #{block2_module_b.14} parent=0 // loop_body
    %s15 = ssub.s32 %s10, 1
    %s16 = ssub.s32 %s10, 2
    %s17 = sadd.s32 %s10, 1
    %s18 = ssub.s32 %s10, %s17
    %p19 = scmp.eq.s32.totalorder %s18, 0
    %s21 = sadd.s32 %s20, 1
    %s22 = scalar_select %p19, %s20, %s21
    %p25 = pneg %p19
    %p26 = scmp.eq.s32.totalorder %s10, 1
    %p27 = por %p25, %p26
    %p28 = scmp.ne.s32.totalorder %s20, %s23
    %p29 = scmp.eq.s32.totalorder %s10, 0
    %p30 = por %p28, %p29
    %p31 = scmp.ne.s32.totalorder %s20, %s23
    %p32 = scmp.eq.s32.totalorder %s15, 1
    %p33 = por %p31, %p32
    %p34 = scmp.ne.s32.totalorder %s23, %s24
    %p35 = scmp.eq.s32.totalorder %s15, 0
    %p36 = por %p34, %p35
    %p37 = scmp.ne.s32.totalorder %s23, %s24
    %p38 = scmp.eq.s32.totalorder %s16, 1
    %p39 = por %p37, %p38
    %p41 = scmp.ne.s32.totalorder %s24, %s40
    %p42 = scmp.eq.s32.totalorder %s16, 0
    %p43 = por %p41, %p42
    %s45 = sadd.s32 %s44, 1
    %p48 = scmp.eq.s32.totalorder %s10, 1
    %p49 = scmp.ne.s32.totalorder %s44, %s46
    %p50 = scmp.eq.s32.totalorder %s10, 0
    %p51 = por %p49, %p50
    %p52 = scmp.ne.s32.totalorder %s44, %s46
    %p53 = scmp.eq.s32.totalorder %s15, 1
    %p54 = por %p52, %p53
    %p55 = scmp.ne.s32.totalorder %s46, %s47
    %p56 = scmp.eq.s32.totalorder %s15, 0
    %p57 = por %p55, %p56
    %p58 = scmp.ne.s32.totalorder %s46, %s47
    %p59 = scmp.eq.s32.totalorder %s16, 1
    %p60 = por %p58, %p59
    %p62 = scmp.ne.s32.totalorder %s47, %s61
    %p63 = scmp.eq.s32.totalorder %s16, 0
    %p64 = por %p62, %p63
    %s66 = sadd.s32 %s65, 1
    %p69 = scmp.eq.s32.totalorder %s10, 1
    %p70 = scmp.ne.s32.totalorder %s65, %s67
    %p71 = scmp.eq.s32.totalorder %s10, 0
    %p72 = por %p70, %p71
    %p73 = scmp.ne.s32.totalorder %s65, %s67
    %p74 = scmp.eq.s32.totalorder %s15, 1
    %p75 = por %p73, %p74
    %p76 = scmp.ne.s32.totalorder %s67, %s68
    %p77 = scmp.eq.s32.totalorder %s15, 0
    %p78 = por %p76, %p77
    %p79 = scmp.ne.s32.totalorder %s67, %s68
    %p80 = scmp.eq.s32.totalorder %s16, 1
    %p81 = por %p79, %p80
    %p83 = scmp.ne.s32.totalorder %s68, %s82
    %p84 = scmp.eq.s32.totalorder %s16, 0
    %p85 = por %p83, %p84
    %s87 = sadd.s32 %s86, 1
    %p90 = scmp.eq.s32.totalorder %s10, 1
    %p91 = scmp.ne.s32.totalorder %s86, %s88
    %p92 = scmp.eq.s32.totalorder %s10, 0
    %p93 = por %p91, %p92
    %p94 = scmp.ne.s32.totalorder %s86, %s88
    %p95 = scmp.eq.s32.totalorder %s15, 1
    %p96 = por %p94, %p95
    %p97 = scmp.ne.s32.totalorder %s88, %s89
    %p98 = scmp.eq.s32.totalorder %s15, 0
    %p99 = por %p97, %p98
    %p100 = scmp.ne.s32.totalorder %s88, %s89
    %p101 = scmp.eq.s32.totalorder %s16, 1
    %p102 = por %p100, %p101
    %p104 = scmp.ne.s32.totalorder %s89, %s103
    %p105 = scmp.eq.s32.totalorder %s16, 0
    %p106 = por %p104, %p105
    %s107 = ssub.s32 %s10, %s17
    %p108 = scmp.eq.s32.totalorder %s107, 0
    %s110 = sadd.s32 %s109, 1
    %s111 = scalar_select %p108, %s109, %s110
    %p114 = pneg %p108
    %p115 = scmp.eq.s32.totalorder %s10, 1
    %p116 = por %p114, %p115
    %p117 = scmp.ne.s32.totalorder %s109, %s112
    %p118 = scmp.eq.s32.totalorder %s10, 0
    %p119 = por %p117, %p118
    %p120 = scmp.ne.s32.totalorder %s109, %s112
    %p121 = scmp.eq.s32.totalorder %s15, 1
    %p122 = por %p120, %p121
    %p123 = scmp.ne.s32.totalorder %s112, %s113
    %p124 = scmp.eq.s32.totalorder %s15, 0
    %p125 = por %p123, %p124
    %p126 = scmp.ne.s32.totalorder %s112, %s113
    %p127 = scmp.eq.s32.totalorder %s16, 1
    %p128 = por %p126, %p127
    %p130 = scmp.ne.s32.totalorder %s113, %s129
    %p131 = scmp.eq.s32.totalorder %s16, 0
    %p132 = por %p130, %p131
    %p133 = scmp.le.s32.totalorder 1, %s10
    %p134 = scmp.lt.s32.totalorder %s10, 3
    %p135 = pnand %p133, %p134
    %p136 = pneg %p135
    // Predicated region
    $region9: #{block2_module_b.14} parent=5 // pred_check
      _
    $region10: #{block2_module_b.14} parent=5 // pred_check_branch
      %138 = sbr.rel (%p135) target = $region12
    $region11: #{block2_module_b.14} parent=5 // pred_region
      %s139 = ssub.s32 %s10, 1
      // Predicated region
      $region13: #{block2_module_b.14} parent=11 // pred_check
        %p140 = pneg %p57
      $region14: #{block2_module_b.14} parent=11 // pred_check_branch
        %142 = sbr.rel (%p140) target = $region16
      $region15: #{block2_module_b.14} parent=11 // pred_region
        _
      $region16: #{block2_module_b.14} parent=11 // pred_fallthru
        _
      // Predicated region
      $region17: #{block2_module_b.14} parent=11 // pred_check
        %p143 = pneg %p78
      $region18: #{block2_module_b.14} parent=11 // pred_check_branch
        %145 = sbr.rel (%p143) target = $region20
      $region19: #{block2_module_b.14} parent=11 // pred_region
        _
      $region20: #{block2_module_b.14} parent=11 // pred_fallthru
        _
      // Predicated region
      $region21: #{block2_module_b.14} parent=11 // pred_check
        %p146 = pneg %p99
      $region22: #{block2_module_b.14} parent=11 // pred_check_branch
        %148 = sbr.rel (%p146) target = $region24
      $region23: #{block2_module_b.14} parent=11 // pred_region
        _
      $region24: #{block2_module_b.14} parent=11 // pred_fallthru
        _
    $region12: #{block2_module_b.14} parent=5 // pred_fallthru
      _
    %p149 = scmp.lt.s32.totalorder %s10, 2
    // Predicated region
    $region25: #{block2_module_b.14} parent=5 // pred_check
      %p150 = pneg %p149
    $region26: #{block2_module_b.14} parent=5 // pred_check_branch
      %152 = sbr.rel (%p150) target = $region28
    $region27: #{block2_module_b.14} parent=5 // pred_region
      // Predicated region
      $region29: #{block2_module_b.14} parent=27 // pred_check
        %p153 = pneg %p30
      $region30: #{block2_module_b.14} parent=27 // pred_check_branch
        %155 = sbr.rel (%p153) target = $region32
      $region31: #{block2_module_b.14} parent=27 // pred_region
        %p156 = scmp.lt.s32.totalorder %s10, 1
        %s157 = scalar_select %p156, %s10, 1
        %s158 = smul.addr %s157, 16
        %s159 = smul.addr %s158, 4
        %s160 = scalar_lea.vmem %s0, %s159
      $region32: #{block2_module_b.14} parent=27 // pred_fallthru
        _
    $region28: #{block2_module_b.14} parent=5 // pred_fallthru
      _
    %p161 = scmp.le.s32.totalorder 1, %s10
    %p162 = scmp.lt.s32.totalorder %s10, 3
    %p163 = pnand %p161, %p162
    %p164 = pneg %p163
    // Predicated region
    $region33: #{block2_module_b.14} parent=5 // pred_check
      _
    $region34: #{block2_module_b.14} parent=5 // pred_check_branch
      %166 = sbr.rel (%p163) target = $region36
    $region35: #{block2_module_b.14} parent=5 // pred_region
      %s167 = ssub.s32 %s10, 1
      %p168 = scmp.lt.s32.totalorder %s15, 1
      %s169 = scalar_select %p168, %s15, 1
      %s170 = smul.addr %s169, 16
      %s171 = smul.addr %s170, 4
      %s172 = scalar_lea.vmem %s0, %s171
      %p173 = pneg %p36
      %p174 = pneg %p33
      %p175 = pneg %p57
      %p176 = pneg %p54
      %p177 = pneg %p78
      %p178 = pneg %p75
      %p179 = pneg %p99
      %p180 = pneg %p96
      %p181 = pneg %p125
      %p182 = pneg %p122
      %p183 = scmp.lt.s32.totalorder %s15, 1
      %s184 = scalar_select %p183, %s15, 1
      %s185 = smul.addr %s184, 16
      %s186 = smul.addr %s185, 4
      %s187 = scalar_lea.vmem %s4, %s186
      %p188 = scmp.lt.s32.totalorder %s15, 1
      %s189 = scalar_select %p188, %s15, 1
      %s190 = smul.addr %s189, 16
      %s191 = smul.addr %s190, 4
      %s192 = scalar_lea.vmem %s0, %s191
      %p193 = scmp.lt.s32.totalorder %s15, 1
      %s194 = scalar_select %p193, %s15, 1
      %s195 = smul.addr %s194, 16
      %s196 = smul.addr %s195, 4
      %s197 = scalar_lea.vmem %s4, %s196
      %v199 = vld [vmem:[%s192] sm:$0xf]
      %v200 = vld [vmem:[%s192 + $0x4] sm:$0x7]
      %v201 = vld [vmem:[%s192 + $0x8] sm:$0xf]
      %v202 = vld [vmem:[%s192 + $0xc] sm:$0x7]
      %v203 = vld [vmem:[%s192 + $0x10] sm:$0xf]
      %v204 = vld [vmem:[%s192 + $0x14] sm:$0x7]
      %v205 = vld [vmem:[%s192 + $0x18] sm:$0xf]
      %v206 = vld [vmem:[%s192 + $0x1c] sm:$0x7]
      %v207 = vld [vmem:[%s192 + $0x20] sm:$0xf]
      %v208 = vld [vmem:[%s192 + $0x24] sm:$0x7]
      %v209 = vld [vmem:[%s192 + $0x28] sm:$0xf]
      %v210 = vld [vmem:[%s192 + $0x2c] sm:$0x7]
      %v211 = vld [vmem:[%s192 + $0x30] sm:$0xf]
      %v212 = vld [vmem:[%s192 + $0x34] sm:$0x7]
      %v213 = vld [vmem:[%s192 + $0x38] sm:$0xf]
      %v214 = vld [vmem:[%s192 + $0x3c] sm:$0x7]
      %v215 = vld [vmem:[%s1] sm:$0xff]
      %v216 = vld [vmem:[%s1 + $0x8] sm:$0xff]
      %v217 = vld [vmem:[%s1 + $0x10] sm:$0xff]
      %v218 = vld [vmem:[%s1 + $0x18] sm:$0xff]
      %vm219 = vsmask.f32 3328
      %vm220 = vsmask.f32 7440
      %vm221 = vmor %vm219, %vm220
      %v223 = vshrl.u32 %v199, 16
      %v225 = vrot.slane %v223, 4
      %v226 = vshll.u32 %v199, 16
      %v228 = vrot.slane %v226, 5
      %v229 = vor.u32 %v225, %v228
      %v230 = vrot.slane %v229, 4
      %v232 = vshll.u32 %v200, 16
      %v234 = vrot.slane %v232, 5
      %v235 = vsel %vm221, %v230, %v234
      %v237 = vshrl.u32 %v201, 16
      %v239 = vrot.slane %v237, 4
      %v240 = vshll.u32 %v201, 16
      %v242 = vrot.slane %v240, 5
      %v243 = vor.u32 %v239, %v242
      %v244 = vrot.slane %v243, 4
      %v246 = vshll.u32 %v202, 16
      %v248 = vrot.slane %v246, 5
      %v249 = vsel %vm221, %v244, %v248
      %v251 = vshrl.u32 %v203, 16
      %v253 = vrot.slane %v251, 4
      %v254 = vshll.u32 %v203, 16
      %v256 = vrot.slane %v254, 5
      %v257 = vor.u32 %v253, %v256
      %v258 = vrot.slane %v257, 4
      %v260 = vshll.u32 %v204, 16
      %v262 = vrot.slane %v260, 5
      %v263 = vsel %vm221, %v258, %v262
      %v265 = vshrl.u32 %v205, 16
      %v267 = vrot.slane %v265, 4
      %v268 = vshll.u32 %v205, 16
      %v270 = vrot.slane %v268, 5
      %v271 = vor.u32 %v267, %v270
      %v272 = vrot.slane %v271, 4
      %v274 = vshll.u32 %v206, 16
      %v276 = vrot.slane %v274, 5
      %v277 = vsel %vm221, %v272, %v276
      %v279 = vshrl.u32 %v207, 16
      %v281 = vrot.slane %v279, 4
      %v282 = vshll.u32 %v207, 16
      %v284 = vrot.slane %v282, 5
      %v285 = vor.u32 %v281, %v284
      %v286 = vrot.slane %v285, 4
      %v288 = vshll.u32 %v208, 16
      %v290 = vrot.slane %v288, 5
      %v291 = vsel %vm221, %v286, %v290
      %v293 = vshrl.u32 %v209, 16
      %v295 = vrot.slane %v293, 4
      %v296 = vshll.u32 %v209, 16
      %v298 = vrot.slane %v296, 5
      %v299 = vor.u32 %v295, %v298
      %v300 = vrot.slane %v299, 4
      %v302 = vshll.u32 %v210, 16
      %v304 = vrot.slane %v302, 5
      %v305 = vsel %vm221, %v300, %v304
      %v307 = vshrl.u32 %v211, 16
      %v309 = vrot.slane %v307, 4
      %v310 = vshll.u32 %v211, 16
      %v312 = vrot.slane %v310, 5
      %v313 = vor.u32 %v309, %v312
      %v314 = vrot.slane %v313, 4
      %v316 = vshll.u32 %v212, 16
      %v318 = vrot.slane %v316, 5
      %v319 = vsel %vm221, %v314, %v318
      %v321 = vshrl.u32 %v213, 16
      %v323 = vrot.slane %v321, 4
      %v324 = vshll.u32 %v213, 16
      %v326 = vrot.slane %v324, 5
      %v327 = vor.u32 %v323, %v326
      %v328 = vrot.slane %v327, 4
      %v330 = vshll.u32 %v214, 16
      %v332 = vrot.slane %v330, 5
      %v333 = vsel %vm221, %v328, %v332
      %s334 = scalar_lea.vmem %s1, 32
      %v335 = vld [vmem:[%s334] sm:$0xff]
      %v336 = vld [vmem:[%s334 + $0x8] sm:$0xff]
      %v337 = vld [vmem:[%s334 + $0x10] sm:$0xff]
      %v338 = vld [vmem:[%s334 + $0x18] sm:$0xff]
      %v339 = vunpack.c.l.b16 %v235
      %v340 = vunpack.c.l.b16 %v249
      %v341 = vunpack.c.l.b16 %v263
      %v342 = vunpack.c.l.b16 %v277
      %v343 = vunpack.c.l.b16 %v291
      %v344 = vunpack.c.l.b16 %v305
      %v345 = vunpack.c.l.b16 %v319
      %v346 = vunpack.c.l.b16 %v333
      %v347 = vpack.c.b16 %v340, %v339
      %v348 = vpack.c.b16 %v342, %v341
      %v349 = vpack.c.b16 %v344, %v343
      %v350 = vpack.c.b16 %v346, %v345
      %v355 = vunpack.c.l.b16 %v335
      %v356 = vunpack.c.h.b16 %v335
      %v357 = vunpack.c.l.b16 %v336
      %v358 = vunpack.c.h.b16 %v336
      %v359 = vunpack.c.l.b16 %v337
      %v360 = vunpack.c.h.b16 %v337
      %v361 = vunpack.c.l.b16 %v338
      %v362 = vunpack.c.h.b16 %v338
      %v363 = vpack.c.b16 %v357, %v355
      %v364 = vpack.c.b16 %v358, %v356
      %v365 = vpack.c.b16 %v361, %v359
      %v366 = vpack.c.b16 %v362, %v360
      %vm371 = vcmask 261120
      %v373 = vsel %vm371, %v347, 0
      %v376 = vsel %vm371, %v348, 0
      %v379 = vsel %vm371, %v349, 0
      %v382 = vsel %vm371, %v350, 0
      %384 = vmatpush.bf16.msra.mxu0 0
      %385 = vmatpush.bf16.msra.mxu0 0
      %386 = vmatpush.bf16.msra.mxu0 0
      %387 = vmatpush.bf16.msra.mxu0 0
      %388 = vmatpush.bf16.msra.mxu0 0
      %389 = vmatpush.bf16.msra.mxu0 0
      %390 = vmatpush.bf16.msra.mxu0 %v365
      %391 = vmatpush.bf16.msra.mxu0 %v363
      %392 = vmatmul.bf16.gmra.mxu0 %v373
      %v393 = vpop.f32.mrf.mxu0
      %v394 = vadd.f32 0.0, %v393
      %v395 = vpop.f32.mrf.mxu0
      %v396 = vadd.f32 0.0, %v395
      %397 = vmatmul.bf16.gmra.mxu0 %v376
      %v398 = vpop.f32.mrf.mxu0
      %v399 = vadd.f32 0.0, %v398
      %v400 = vpop.f32.mrf.mxu0
      %v401 = vadd.f32 0.0, %v400
      %402 = vmatmul.bf16.gmra.mxu0 %v379
      %v403 = vpop.f32.mrf.mxu0
      %v404 = vadd.f32 0.0, %v403
      %v405 = vpop.f32.mrf.mxu0
      %v406 = vadd.f32 0.0, %v405
      %407 = vmatmul.bf16.gmra.mxu0 %v382
      %v408 = vpop.f32.mrf.mxu0
      %v409 = vadd.f32 0.0, %v408
      %v410 = vpop.f32.mrf.mxu0
      %v411 = vadd.f32 0.0, %v410
      %412 = vdwg.mxu0
      %413 = vmatpush.bf16.msra.mxu0 0
      %414 = vmatpush.bf16.msra.mxu0 0
      %415 = vmatpush.bf16.msra.mxu0 0
      %416 = vmatpush.bf16.msra.mxu0 0
      %417 = vmatpush.bf16.msra.mxu0 0
      %418 = vmatpush.bf16.msra.mxu0 0
      %419 = vmatpush.bf16.msra.mxu0 %v366
      %420 = vmatpush.bf16.msra.mxu0 %v364
      %421 = vmatmul.bf16.gmra.mxu0 %v373
      %v422 = vpop.f32.mrf.mxu0
      %v423 = vadd.f32 0.0, %v422
      %v424 = vpop.f32.mrf.mxu0
      %v425 = vadd.f32 0.0, %v424
      %426 = vmatmul.bf16.gmra.mxu0 %v376
      %v427 = vpop.f32.mrf.mxu0
      %v428 = vadd.f32 0.0, %v427
      %v429 = vpop.f32.mrf.mxu0
      %v430 = vadd.f32 0.0, %v429
      %431 = vmatmul.bf16.gmra.mxu0 %v379
      %v432 = vpop.f32.mrf.mxu0
      %v433 = vadd.f32 0.0, %v432
      %v434 = vpop.f32.mrf.mxu0
      %v435 = vadd.f32 0.0, %v434
      %436 = vmatmul.bf16.gmra.mxu0 %v382
      %v437 = vpop.f32.mrf.mxu0
      %v438 = vadd.f32 0.0, %v437
      %v439 = vpop.f32.mrf.mxu0
      %v440 = vadd.f32 0.0, %v439
      %441 = vdwg.mxu0
      %v450 = vunpack.c.l.b16 %v199
      %v451 = vunpack.c.l.b16 %v201
      %v452 = vunpack.c.l.b16 %v203
      %v453 = vunpack.c.l.b16 %v205
      %v454 = vunpack.c.l.b16 %v207
      %v455 = vunpack.c.l.b16 %v209
      %v456 = vunpack.c.l.b16 %v211
      %v457 = vunpack.c.l.b16 %v213
      %v458 = vpack.c.b16 %v451, %v450
      %v459 = vpack.c.b16 %v453, %v452
      %v460 = vpack.c.b16 %v455, %v454
      %v461 = vpack.c.b16 %v457, %v456
      %v466 = vunpack.c.l.b16 %v215
      %v467 = vunpack.c.h.b16 %v215
      %v468 = vunpack.c.l.b16 %v216
      %v469 = vunpack.c.h.b16 %v216
      %v470 = vunpack.c.l.b16 %v217
      %v471 = vunpack.c.h.b16 %v217
      %v472 = vunpack.c.l.b16 %v218
      %v473 = vunpack.c.h.b16 %v218
      %v474 = vpack.c.b16 %v468, %v466
      %v475 = vpack.c.b16 %v469, %v467
      %v476 = vpack.c.b16 %v472, %v470
      %v477 = vpack.c.b16 %v473, %v471
      %v483 = vsel %vm371, %v458, 0
      %v486 = vsel %vm371, %v459, 0
      %v489 = vsel %vm371, %v460, 0
      %v492 = vsel %vm371, %v461, 0
      %494 = vmatpush.bf16.msra.mxu0 0
      %495 = vmatpush.bf16.msra.mxu0 0
      %496 = vmatpush.bf16.msra.mxu0 0
      %497 = vmatpush.bf16.msra.mxu0 0
      %498 = vmatpush.bf16.msra.mxu0 0
      %499 = vmatpush.bf16.msra.mxu0 0
      %500 = vmatpush.bf16.msra.mxu0 %v476
      %501 = vmatpush.bf16.msra.mxu0 %v474
      %502 = vmatmul.bf16.gmra.mxu0 %v483
      %v503 = vpop.f32.mrf.mxu0
      %v504 = vadd.f32 %v394, %v503
      %v505 = vpop.f32.mrf.mxu0
      %v506 = vadd.f32 %v396, %v505
      %507 = vmatmul.bf16.gmra.mxu0 %v486
      %v508 = vpop.f32.mrf.mxu0
      %v509 = vadd.f32 %v399, %v508
      %v510 = vpop.f32.mrf.mxu0
      %v511 = vadd.f32 %v401, %v510
      %512 = vmatmul.bf16.gmra.mxu0 %v489
      %v513 = vpop.f32.mrf.mxu0
      %v514 = vadd.f32 %v404, %v513
      %v515 = vpop.f32.mrf.mxu0
      %v516 = vadd.f32 %v406, %v515
      %517 = vmatmul.bf16.gmra.mxu0 %v492
      %v518 = vpop.f32.mrf.mxu0
      %v519 = vadd.f32 %v409, %v518
      %v520 = vpop.f32.mrf.mxu0
      %v521 = vadd.f32 %v411, %v520
      %522 = vdwg.mxu0
      %523 = vmatpush.bf16.msra.mxu0 0
      %524 = vmatpush.bf16.msra.mxu0 0
      %525 = vmatpush.bf16.msra.mxu0 0
      %526 = vmatpush.bf16.msra.mxu0 0
      %527 = vmatpush.bf16.msra.mxu0 0
      %528 = vmatpush.bf16.msra.mxu0 0
      %529 = vmatpush.bf16.msra.mxu0 %v477
      %530 = vmatpush.bf16.msra.mxu0 %v475
      %531 = vmatmul.bf16.gmra.mxu0 %v483
      %v532 = vpop.f32.mrf.mxu0
      %v533 = vadd.f32 %v423, %v532
      %v534 = vpop.f32.mrf.mxu0
      %v535 = vadd.f32 %v425, %v534
      %536 = vmatmul.bf16.gmra.mxu0 %v486
      %v537 = vpop.f32.mrf.mxu0
      %v538 = vadd.f32 %v428, %v537
      %v539 = vpop.f32.mrf.mxu0
      %v540 = vadd.f32 %v430, %v539
      %541 = vmatmul.bf16.gmra.mxu0 %v489
      %v542 = vpop.f32.mrf.mxu0
      %v543 = vadd.f32 %v433, %v542
      %v544 = vpop.f32.mrf.mxu0
      %v545 = vadd.f32 %v435, %v544
      %546 = vmatmul.bf16.gmra.mxu0 %v492
      %v547 = vpop.f32.mrf.mxu0
      %v548 = vadd.f32 %v438, %v547
      %v549 = vpop.f32.mrf.mxu0
      %v550 = vadd.f32 %v440, %v549
      %551 = vdwg.mxu0
      %vm560 = vcmask 1042432
      %vm561 = vcmask 1046532
      %vm562 = vmor %vm560, %vm561
      %v563 = vrot.slane %v199, 5
      %v564 = vrot.slane %v563, 4
      %v565 = vrot.slane %v200, 5
      %v566 = vsel %vm562, %v564, %v565
      %v567 = vrot.slane %v201, 5
      %v568 = vrot.slane %v567, 4
      %v569 = vrot.slane %v202, 5
      %v570 = vsel %vm562, %v568, %v569
      %v571 = vrot.slane %v203, 5
      %v572 = vrot.slane %v571, 4
      %v573 = vrot.slane %v204, 5
      %v574 = vsel %vm562, %v572, %v573
      %v575 = vrot.slane %v205, 5
      %v576 = vrot.slane %v575, 4
      %v577 = vrot.slane %v206, 5
      %v578 = vsel %vm562, %v576, %v577
      %v579 = vrot.slane %v207, 5
      %v580 = vrot.slane %v579, 4
      %v581 = vrot.slane %v208, 5
      %v582 = vsel %vm562, %v580, %v581
      %v583 = vrot.slane %v209, 5
      %v584 = vrot.slane %v583, 4
      %v585 = vrot.slane %v210, 5
      %v586 = vsel %vm562, %v584, %v585
      %v587 = vrot.slane %v211, 5
      %v588 = vrot.slane %v587, 4
      %v589 = vrot.slane %v212, 5
      %v590 = vsel %vm562, %v588, %v589
      %v591 = vrot.slane %v213, 5
      %v592 = vrot.slane %v591, 4
      %v593 = vrot.slane %v214, 5
      %v594 = vsel %vm562, %v592, %v593
      %s595 = scalar_lea.vmem %s1, 64
      %v596 = vld [vmem:[%s595] sm:$0xff]
      %v597 = vld [vmem:[%s595 + $0x8] sm:$0xff]
      %v598 = vld [vmem:[%s595 + $0x10] sm:$0xff]
      %v599 = vld [vmem:[%s595 + $0x18] sm:$0xff]
      %v600 = vunpack.c.l.b16 %v566
      %v601 = vunpack.c.l.b16 %v570
      %v602 = vunpack.c.l.b16 %v574
      %v603 = vunpack.c.l.b16 %v578
      %v604 = vunpack.c.l.b16 %v582
      %v605 = vunpack.c.l.b16 %v586
      %v606 = vunpack.c.l.b16 %v590
      %v607 = vunpack.c.l.b16 %v594
      %v608 = vpack.c.b16 %v601, %v600
      %v609 = vpack.c.b16 %v603, %v602
      %v610 = vpack.c.b16 %v605, %v604
      %v611 = vpack.c.b16 %v607, %v606
      %v616 = vunpack.c.l.b16 %v596
      %v617 = vunpack.c.h.b16 %v596
      %v618 = vunpack.c.l.b16 %v597
      %v619 = vunpack.c.h.b16 %v597
      %v620 = vunpack.c.l.b16 %v598
      %v621 = vunpack.c.h.b16 %v598
      %v622 = vunpack.c.l.b16 %v599
      %v623 = vunpack.c.h.b16 %v599
      %v624 = vpack.c.b16 %v618, %v616
      %v625 = vpack.c.b16 %v619, %v617
      %v626 = vpack.c.b16 %v622, %v620
      %v627 = vpack.c.b16 %v623, %v621
      %v633 = vsel %vm371, %v608, 0
      %v636 = vsel %vm371, %v609, 0
      %v639 = vsel %vm371, %v610, 0
      %v642 = vsel %vm371, %v611, 0
      %644 = vmatpush.bf16.msra.mxu0 0
      %645 = vmatpush.bf16.msra.mxu0 0
      %646 = vmatpush.bf16.msra.mxu0 0
      %647 = vmatpush.bf16.msra.mxu0 0
      %648 = vmatpush.bf16.msra.mxu0 0
      %649 = vmatpush.bf16.msra.mxu0 0
      %650 = vmatpush.bf16.msra.mxu0 %v626
      %651 = vmatpush.bf16.msra.mxu0 %v624
      %652 = vmatmul.bf16.gmra.mxu0 %v633
      %v653 = vpop.f32.mrf.mxu0
      %v654 = vadd.f32 0.0, %v653
      %v655 = vpop.f32.mrf.mxu0
      %v656 = vadd.f32 0.0, %v655
      %657 = vmatmul.bf16.gmra.mxu0 %v636
      %v658 = vpop.f32.mrf.mxu0
      %v659 = vadd.f32 0.0, %v658
      %v660 = vpop.f32.mrf.mxu0
      %v661 = vadd.f32 0.0, %v660
      %662 = vmatmul.bf16.gmra.mxu0 %v639
      %v663 = vpop.f32.mrf.mxu0
      %v664 = vadd.f32 0.0, %v663
      %v665 = vpop.f32.mrf.mxu0
      %v666 = vadd.f32 0.0, %v665
      %667 = vmatmul.bf16.gmra.mxu0 %v642
      %v668 = vpop.f32.mrf.mxu0
      %v669 = vadd.f32 0.0, %v668
      %v670 = vpop.f32.mrf.mxu0
      %v671 = vadd.f32 0.0, %v670
      %672 = vdwg.mxu0
      %673 = vmatpush.bf16.msra.mxu0 0
      %674 = vmatpush.bf16.msra.mxu0 0
      %675 = vmatpush.bf16.msra.mxu0 0
      %676 = vmatpush.bf16.msra.mxu0 0
      %677 = vmatpush.bf16.msra.mxu0 0
      %678 = vmatpush.bf16.msra.mxu0 0
      %679 = vmatpush.bf16.msra.mxu0 %v627
      %680 = vmatpush.bf16.msra.mxu0 %v625
      %681 = vmatmul.bf16.gmra.mxu0 %v633
      %v682 = vpop.f32.mrf.mxu0
      %v683 = vadd.f32 0.0, %v682
      %v684 = vpop.f32.mrf.mxu0
      %v685 = vadd.f32 0.0, %v684
      %686 = vmatmul.bf16.gmra.mxu0 %v636
      %v687 = vpop.f32.mrf.mxu0
      %v688 = vadd.f32 0.0, %v687
      %v689 = vpop.f32.mrf.mxu0
      %v690 = vadd.f32 0.0, %v689
      %691 = vmatmul.bf16.gmra.mxu0 %v639
      %v692 = vpop.f32.mrf.mxu0
      %v693 = vadd.f32 0.0, %v692
      %v694 = vpop.f32.mrf.mxu0
      %v695 = vadd.f32 0.0, %v694
      %696 = vmatmul.bf16.gmra.mxu0 %v642
      %v697 = vpop.f32.mrf.mxu0
      %v698 = vadd.f32 0.0, %v697
      %v699 = vpop.f32.mrf.mxu0
      %v700 = vadd.f32 0.0, %v699
      %701 = vdwg.mxu0
      %v702 = vadd.f32 %v504, %v654
      %v703 = vadd.f32 %v533, %v683
      %v704 = vadd.f32 %v506, %v656
      %v705 = vadd.f32 %v535, %v685
      %v706 = vadd.f32 %v509, %v659
      %v707 = vadd.f32 %v538, %v688
      %v708 = vadd.f32 %v511, %v661
      %v709 = vadd.f32 %v540, %v690
      %v710 = vadd.f32 %v514, %v664
      %v711 = vadd.f32 %v543, %v693
      %v712 = vadd.f32 %v516, %v666
      %v713 = vadd.f32 %v545, %v695
      %v714 = vadd.f32 %v519, %v669
      %v715 = vadd.f32 %v548, %v698
      %v716 = vadd.f32 %v521, %v671
      %v717 = vadd.f32 %v550, %v700
      %vm718 = vsmask.f32 2304
      %vm719 = vsmask.f32 6416
      %vm720 = vmor %vm718, %vm719
      %v721 = vrot.slane %v223, 5
      %v722 = vrot.slane %v226, 6
      %v723 = vor.u32 %v721, %v722
      %v724 = vrot.slane %v723, 4
      %v725 = vshrl.u32 %v200, 16
      %v727 = vrot.slane %v725, 5
      %v728 = vrot.slane %v232, 6
      %v729 = vor.u32 %v727, %v728
      %v730 = vsel %vm720, %v724, %v729
      %v731 = vrot.slane %v237, 5
      %v732 = vrot.slane %v240, 6
      %v733 = vor.u32 %v731, %v732
      %v734 = vrot.slane %v733, 4
      %v735 = vshrl.u32 %v202, 16
      %v737 = vrot.slane %v735, 5
      %v738 = vrot.slane %v246, 6
      %v739 = vor.u32 %v737, %v738
      %v740 = vsel %vm720, %v734, %v739
      %v741 = vrot.slane %v251, 5
      %v742 = vrot.slane %v254, 6
      %v743 = vor.u32 %v741, %v742
      %v744 = vrot.slane %v743, 4
      %v745 = vshrl.u32 %v204, 16
      %v747 = vrot.slane %v745, 5
      %v748 = vrot.slane %v260, 6
      %v749 = vor.u32 %v747, %v748
      %v750 = vsel %vm720, %v744, %v749
      %v751 = vrot.slane %v265, 5
      %v752 = vrot.slane %v268, 6
      %v753 = vor.u32 %v751, %v752
      %v754 = vrot.slane %v753, 4
      %v755 = vshrl.u32 %v206, 16
      %v757 = vrot.slane %v755, 5
      %v758 = vrot.slane %v274, 6
      %v759 = vor.u32 %v757, %v758
      %v760 = vsel %vm720, %v754, %v759
      %v761 = vrot.slane %v279, 5
      %v762 = vrot.slane %v282, 6
      %v763 = vor.u32 %v761, %v762
      %v764 = vrot.slane %v763, 4
      %v765 = vshrl.u32 %v208, 16
      %v767 = vrot.slane %v765, 5
      %v768 = vrot.slane %v288, 6
      %v769 = vor.u32 %v767, %v768
      %v770 = vsel %vm720, %v764, %v769
      %v771 = vrot.slane %v293, 5
      %v772 = vrot.slane %v296, 6
      %v773 = vor.u32 %v771, %v772
      %v774 = vrot.slane %v773, 4
      %v775 = vshrl.u32 %v210, 16
      %v777 = vrot.slane %v775, 5
      %v778 = vrot.slane %v302, 6
      %v779 = vor.u32 %v777, %v778
      %v780 = vsel %vm720, %v774, %v779
      %v781 = vrot.slane %v307, 5
      %v782 = vrot.slane %v310, 6
      %v783 = vor.u32 %v781, %v782
      %v784 = vrot.slane %v783, 4
      %v785 = vshrl.u32 %v212, 16
      %v787 = vrot.slane %v785, 5
      %v788 = vrot.slane %v316, 6
      %v789 = vor.u32 %v787, %v788
      %v790 = vsel %vm720, %v784, %v789
      %v791 = vrot.slane %v321, 5
      %v792 = vrot.slane %v324, 6
      %v793 = vor.u32 %v791, %v792
      %v794 = vrot.slane %v793, 4
      %v795 = vshrl.u32 %v214, 16
      %v797 = vrot.slane %v795, 5
      %v798 = vrot.slane %v330, 6
      %v799 = vor.u32 %v797, %v798
      %v800 = vsel %vm720, %v794, %v799
      %s801 = scalar_lea.vmem %s1, 96
      %v802 = vld [vmem:[%s801] sm:$0xff]
      %v803 = vld [vmem:[%s801 + $0x8] sm:$0xff]
      %v804 = vld [vmem:[%s801 + $0x10] sm:$0xff]
      %v805 = vld [vmem:[%s801 + $0x18] sm:$0xff]
      %v806 = vunpack.c.l.b16 %v730
      %v807 = vunpack.c.l.b16 %v740
      %v808 = vunpack.c.l.b16 %v750
      %v809 = vunpack.c.l.b16 %v760
      %v810 = vunpack.c.l.b16 %v770
      %v811 = vunpack.c.l.b16 %v780
      %v812 = vunpack.c.l.b16 %v790
      %v813 = vunpack.c.l.b16 %v800
      %v814 = vpack.c.b16 %v807, %v806
      %v815 = vpack.c.b16 %v809, %v808
      %v816 = vpack.c.b16 %v811, %v810
      %v817 = vpack.c.b16 %v813, %v812
      %v822 = vunpack.c.l.b16 %v802
      %v823 = vunpack.c.h.b16 %v802
      %v824 = vunpack.c.l.b16 %v803
      %v825 = vunpack.c.h.b16 %v803
      %v826 = vunpack.c.l.b16 %v804
      %v827 = vunpack.c.h.b16 %v804
      %v828 = vunpack.c.l.b16 %v805
      %v829 = vunpack.c.h.b16 %v805
      %v830 = vpack.c.b16 %v824, %v822
      %v831 = vpack.c.b16 %v825, %v823
      %v832 = vpack.c.b16 %v828, %v826
      %v833 = vpack.c.b16 %v829, %v827
      %v839 = vsel %vm371, %v814, 0
      %v842 = vsel %vm371, %v815, 0
      %v845 = vsel %vm371, %v816, 0
      %v848 = vsel %vm371, %v817, 0
      %850 = vmatpush.bf16.msra.mxu0 0
      %851 = vmatpush.bf16.msra.mxu0 0
      %852 = vmatpush.bf16.msra.mxu0 0
      %853 = vmatpush.bf16.msra.mxu0 0
      %854 = vmatpush.bf16.msra.mxu0 0
      %855 = vmatpush.bf16.msra.mxu0 0
      %856 = vmatpush.bf16.msra.mxu0 %v832
      %857 = vmatpush.bf16.msra.mxu0 %v830
      %858 = vmatmul.bf16.gmra.mxu0 %v839
      %v859 = vpop.f32.mrf.mxu0
      %v860 = vadd.f32 0.0, %v859
      %v861 = vpop.f32.mrf.mxu0
      %v862 = vadd.f32 0.0, %v861
      %863 = vmatmul.bf16.gmra.mxu0 %v842
      %v864 = vpop.f32.mrf.mxu0
      %v865 = vadd.f32 0.0, %v864
      %v866 = vpop.f32.mrf.mxu0
      %v867 = vadd.f32 0.0, %v866
      %868 = vmatmul.bf16.gmra.mxu0 %v845
      %v869 = vpop.f32.mrf.mxu0
      %v870 = vadd.f32 0.0, %v869
      %v871 = vpop.f32.mrf.mxu0
      %v872 = vadd.f32 0.0, %v871
      %873 = vmatmul.bf16.gmra.mxu0 %v848
      %v874 = vpop.f32.mrf.mxu0
      %v875 = vadd.f32 0.0, %v874
      %v876 = vpop.f32.mrf.mxu0
      %v877 = vadd.f32 0.0, %v876
      %878 = vdwg.mxu0
      %879 = vmatpush.bf16.msra.mxu0 0
      %880 = vmatpush.bf16.msra.mxu0 0
      %881 = vmatpush.bf16.msra.mxu0 0
      %882 = vmatpush.bf16.msra.mxu0 0
      %883 = vmatpush.bf16.msra.mxu0 0
      %884 = vmatpush.bf16.msra.mxu0 0
      %885 = vmatpush.bf16.msra.mxu0 %v833
      %886 = vmatpush.bf16.msra.mxu0 %v831
      %887 = vmatmul.bf16.gmra.mxu0 %v839
      %v888 = vpop.f32.mrf.mxu0
      %v889 = vadd.f32 0.0, %v888
      %v890 = vpop.f32.mrf.mxu0
      %v891 = vadd.f32 0.0, %v890
      %892 = vmatmul.bf16.gmra.mxu0 %v842
      %v893 = vpop.f32.mrf.mxu0
      %v894 = vadd.f32 0.0, %v893
      %v895 = vpop.f32.mrf.mxu0
      %v896 = vadd.f32 0.0, %v895
      %897 = vmatmul.bf16.gmra.mxu0 %v845
      %v898 = vpop.f32.mrf.mxu0
      %v899 = vadd.f32 0.0, %v898
      %v900 = vpop.f32.mrf.mxu0
      %v901 = vadd.f32 0.0, %v900
      %902 = vmatmul.bf16.gmra.mxu0 %v848
      %v903 = vpop.f32.mrf.mxu0
      %v904 = vadd.f32 0.0, %v903
      %v905 = vpop.f32.mrf.mxu0
      %v906 = vadd.f32 0.0, %v905
      %907 = vdwg.mxu0
      %v908 = vadd.f32 %v702, %v860
      %v909 = vadd.f32 %v703, %v889
      %v910 = vadd.f32 %v704, %v862
      %v911 = vadd.f32 %v705, %v891
      %v912 = vadd.f32 %v706, %v865
      %v913 = vadd.f32 %v707, %v894
      %v914 = vadd.f32 %v708, %v867
      %v915 = vadd.f32 %v709, %v896
      %v916 = vadd.f32 %v710, %v870
      %v917 = vadd.f32 %v711, %v899
      %v918 = vadd.f32 %v712, %v872
      %v919 = vadd.f32 %v713, %v901
      %v920 = vadd.f32 %v714, %v875
      %v921 = vadd.f32 %v715, %v904
      %v922 = vadd.f32 %v716, %v877
      %v923 = vadd.f32 %v717, %v906
      %vm924 = vcmask 1041408
      %vm925 = vcmask 1045508
      %vm926 = vmor %vm924, %vm925
      %v927 = vrot.slane %v199, 6
      %v928 = vrot.slane %v927, 4
      %v929 = vrot.slane %v200, 6
      %v930 = vsel %vm926, %v928, %v929
      %v931 = vrot.slane %v201, 6
      %v932 = vrot.slane %v931, 4
      %v933 = vrot.slane %v202, 6
      %v934 = vsel %vm926, %v932, %v933
      %v935 = vrot.slane %v203, 6
      %v936 = vrot.slane %v935, 4
      %v937 = vrot.slane %v204, 6
      %v938 = vsel %vm926, %v936, %v937
      %v939 = vrot.slane %v205, 6
      %v940 = vrot.slane %v939, 4
      %v941 = vrot.slane %v206, 6
      %v942 = vsel %vm926, %v940, %v941
      %v943 = vrot.slane %v207, 6
      %v944 = vrot.slane %v943, 4
      %v945 = vrot.slane %v208, 6
      %v946 = vsel %vm926, %v944, %v945
      %v947 = vrot.slane %v209, 6
      %v948 = vrot.slane %v947, 4
      %v949 = vrot.slane %v210, 6
      %v950 = vsel %vm926, %v948, %v949
      %v951 = vrot.slane %v211, 6
      %v952 = vrot.slane %v951, 4
      %v953 = vrot.slane %v212, 6
      %v954 = vsel %vm926, %v952, %v953
      %v955 = vrot.slane %v213, 6
      %v956 = vrot.slane %v955, 4
      %v957 = vrot.slane %v214, 6
      %v958 = vsel %vm926, %v956, %v957
      %s959 = scalar_lea.vmem %s1, 128
      %v960 = vld [vmem:[%s959] sm:$0xff]
      %v961 = vld [vmem:[%s959 + $0x8] sm:$0xff]
      %v962 = vld [vmem:[%s959 + $0x10] sm:$0xff]
      %v963 = vld [vmem:[%s959 + $0x18] sm:$0xff]
      %v964 = vunpack.c.l.b16 %v930
      %v965 = vunpack.c.l.b16 %v934
      %v966 = vunpack.c.l.b16 %v938
      %v967 = vunpack.c.l.b16 %v942
      %v968 = vunpack.c.l.b16 %v946
      %v969 = vunpack.c.l.b16 %v950
      %v970 = vunpack.c.l.b16 %v954
      %v971 = vunpack.c.l.b16 %v958
      %v972 = vpack.c.b16 %v965, %v964
      %v973 = vpack.c.b16 %v967, %v966
      %v974 = vpack.c.b16 %v969, %v968
      %v975 = vpack.c.b16 %v971, %v970
      %v980 = vunpack.c.l.b16 %v960
      %v981 = vunpack.c.h.b16 %v960
      %v982 = vunpack.c.l.b16 %v961
      %v983 = vunpack.c.h.b16 %v961
      %v984 = vunpack.c.l.b16 %v962
      %v985 = vunpack.c.h.b16 %v962
      %v986 = vunpack.c.l.b16 %v963
      %v987 = vunpack.c.h.b16 %v963
      %v988 = vpack.c.b16 %v982, %v980
      %v989 = vpack.c.b16 %v983, %v981
      %v990 = vpack.c.b16 %v986, %v984
      %v991 = vpack.c.b16 %v987, %v985
      %v997 = vsel %vm371, %v972, 0
      %v1000 = vsel %vm371, %v973, 0
      %v1003 = vsel %vm371, %v974, 0
      %v1006 = vsel %vm371, %v975, 0
      %1008 = vmatpush.bf16.msra.mxu0 0
      %1009 = vmatpush.bf16.msra.mxu0 0
      %1010 = vmatpush.bf16.msra.mxu0 0
      %1011 = vmatpush.bf16.msra.mxu0 0
      %1012 = vmatpush.bf16.msra.mxu0 0
      %1013 = vmatpush.bf16.msra.mxu0 0
      %1014 = vmatpush.bf16.msra.mxu0 %v990
      %1015 = vmatpush.bf16.msra.mxu0 %v988
      %1016 = vmatmul.bf16.gmra.mxu0 %v997
      %v1017 = vpop.f32.mrf.mxu0
      %v1018 = vadd.f32 0.0, %v1017
      %v1019 = vpop.f32.mrf.mxu0
      %v1020 = vadd.f32 0.0, %v1019
      %1021 = vmatmul.bf16.gmra.mxu0 %v1000
      %v1022 = vpop.f32.mrf.mxu0
      %v1023 = vadd.f32 0.0, %v1022
      %v1024 = vpop.f32.mrf.mxu0
      %v1025 = vadd.f32 0.0, %v1024
      %1026 = vmatmul.bf16.gmra.mxu0 %v1003
      %v1027 = vpop.f32.mrf.mxu0
      %v1028 = vadd.f32 0.0, %v1027
      %v1029 = vpop.f32.mrf.mxu0
      %v1030 = vadd.f32 0.0, %v1029
      %1031 = vmatmul.bf16.gmra.mxu0 %v1006
      %v1032 = vpop.f32.mrf.mxu0
      %v1033 = vadd.f32 0.0, %v1032
      %v1034 = vpop.f32.mrf.mxu0
      %v1035 = vadd.f32 0.0, %v1034
      %1036 = vdwg.mxu0
      %1037 = vmatpush.bf16.msra.mxu0 0
      %1038 = vmatpush.bf16.msra.mxu0 0
      %1039 = vmatpush.bf16.msra.mxu0 0
      %1040 = vmatpush.bf16.msra.mxu0 0
      %1041 = vmatpush.bf16.msra.mxu0 0
      %1042 = vmatpush.bf16.msra.mxu0 0
      %1043 = vmatpush.bf16.msra.mxu0 %v991
      %1044 = vmatpush.bf16.msra.mxu0 %v989
      %1045 = vmatmul.bf16.gmra.mxu0 %v997
      %v1046 = vpop.f32.mrf.mxu0
      %v1047 = vadd.f32 0.0, %v1046
      %v1048 = vpop.f32.mrf.mxu0
      %v1049 = vadd.f32 0.0, %v1048
      %1050 = vmatmul.bf16.gmra.mxu0 %v1000
      %v1051 = vpop.f32.mrf.mxu0
      %v1052 = vadd.f32 0.0, %v1051
      %v1053 = vpop.f32.mrf.mxu0
      %v1054 = vadd.f32 0.0, %v1053
      %1055 = vmatmul.bf16.gmra.mxu0 %v1003
      %v1056 = vpop.f32.mrf.mxu0
      %v1057 = vadd.f32 0.0, %v1056
      %v1058 = vpop.f32.mrf.mxu0
      %v1059 = vadd.f32 0.0, %v1058
      %1060 = vmatmul.bf16.gmra.mxu0 %v1006
      %v1061 = vpop.f32.mrf.mxu0
      %v1062 = vadd.f32 0.0, %v1061
      %v1063 = vpop.f32.mrf.mxu0
      %v1064 = vadd.f32 0.0, %v1063
      %1065 = vdwg.mxu0
      %v1066 = vadd.f32 %v908, %v1018
      %v1067 = vadd.f32 %v909, %v1047
      %v1068 = vadd.f32 %v910, %v1020
      %v1069 = vadd.f32 %v911, %v1049
      %v1070 = vadd.f32 %v912, %v1023
      %v1071 = vadd.f32 %v913, %v1052
      %v1072 = vadd.f32 %v914, %v1025
      %v1073 = vadd.f32 %v915, %v1054
      %v1074 = vadd.f32 %v916, %v1028
      %v1075 = vadd.f32 %v917, %v1057
      %v1076 = vadd.f32 %v918, %v1030
      %v1077 = vadd.f32 %v919, %v1059
      %v1078 = vadd.f32 %v920, %v1033
      %v1079 = vadd.f32 %v921, %v1062
      %v1080 = vadd.f32 %v922, %v1035
      %v1081 = vadd.f32 %v923, %v1064
      %vm1082 = vsmask.f32 1280
      %vm1083 = vsmask.f32 5392
      %vm1084 = vmor %vm1082, %vm1083
      %v1085 = vrot.slane %v223, 6
      %v1086 = vrot.slane %v226, 7
      %v1087 = vor.u32 %v1085, %v1086
      %v1088 = vrot.slane %v1087, 4
      %v1089 = vrot.slane %v725, 6
      %v1090 = vrot.slane %v232, 7
      %v1091 = vor.u32 %v1089, %v1090
      %v1092 = vsel %vm1084, %v1088, %v1091
      %v1093 = vrot.slane %v237, 6
      %v1094 = vrot.slane %v240, 7
      %v1095 = vor.u32 %v1093, %v1094
      %v1096 = vrot.slane %v1095, 4
      %v1097 = vrot.slane %v735, 6
      %v1098 = vrot.slane %v246, 7
      %v1099 = vor.u32 %v1097, %v1098
      %v1100 = vsel %vm1084, %v1096, %v1099
      %v1101 = vrot.slane %v251, 6
      %v1102 = vrot.slane %v254, 7
      %v1103 = vor.u32 %v1101, %v1102
      %v1104 = vrot.slane %v1103, 4
      %v1105 = vrot.slane %v745, 6
      %v1106 = vrot.slane %v260, 7
      %v1107 = vor.u32 %v1105, %v1106
      %v1108 = vsel %vm1084, %v1104, %v1107
      %v1109 = vrot.slane %v265, 6
      %v1110 = vrot.slane %v268, 7
      %v1111 = vor.u32 %v1109, %v1110
      %v1112 = vrot.slane %v1111, 4
      %v1113 = vrot.slane %v755, 6
      %v1114 = vrot.slane %v274, 7
      %v1115 = vor.u32 %v1113, %v1114
      %v1116 = vsel %vm1084, %v1112, %v1115
      %v1117 = vrot.slane %v279, 6
      %v1118 = vrot.slane %v282, 7
      %v1119 = vor.u32 %v1117, %v1118
      %v1120 = vrot.slane %v1119, 4
      %v1121 = vrot.slane %v765, 6
      %v1122 = vrot.slane %v288, 7
      %v1123 = vor.u32 %v1121, %v1122
      %v1124 = vsel %vm1084, %v1120, %v1123
      %v1125 = vrot.slane %v293, 6
      %v1126 = vrot.slane %v296, 7
      %v1127 = vor.u32 %v1125, %v1126
      %v1128 = vrot.slane %v1127, 4
      %v1129 = vrot.slane %v775, 6
      %v1130 = vrot.slane %v302, 7
      %v1131 = vor.u32 %v1129, %v1130
      %v1132 = vsel %vm1084, %v1128, %v1131
      %v1133 = vrot.slane %v307, 6
      %v1134 = vrot.slane %v310, 7
      %v1135 = vor.u32 %v1133, %v1134
      %v1136 = vrot.slane %v1135, 4
      %v1137 = vrot.slane %v785, 6
      %v1138 = vrot.slane %v316, 7
      %v1139 = vor.u32 %v1137, %v1138
      %v1140 = vsel %vm1084, %v1136, %v1139
      %v1141 = vrot.slane %v321, 6
      %v1142 = vrot.slane %v324, 7
      %v1143 = vor.u32 %v1141, %v1142
      %v1144 = vrot.slane %v1143, 4
      %v1145 = vrot.slane %v795, 6
      %v1146 = vrot.slane %v330, 7
      %v1147 = vor.u32 %v1145, %v1146
      %v1148 = vsel %vm1084, %v1144, %v1147
      %s1149 = scalar_lea.vmem %s1, 160
      %v1150 = vld [vmem:[%s1149] sm:$0xff]
      %v1151 = vld [vmem:[%s1149 + $0x8] sm:$0xff]
      %v1152 = vld [vmem:[%s1149 + $0x10] sm:$0xff]
      %v1153 = vld [vmem:[%s1149 + $0x18] sm:$0xff]
      %v1154 = vunpack.c.l.b16 %v1092
      %v1155 = vunpack.c.l.b16 %v1100
      %v1156 = vunpack.c.l.b16 %v1108
      %v1157 = vunpack.c.l.b16 %v1116
      %v1158 = vunpack.c.l.b16 %v1124
      %v1159 = vunpack.c.l.b16 %v1132
      %v1160 = vunpack.c.l.b16 %v1140
      %v1161 = vunpack.c.l.b16 %v1148
      %v1162 = vpack.c.b16 %v1155, %v1154
      %v1163 = vpack.c.b16 %v1157, %v1156
      %v1164 = vpack.c.b16 %v1159, %v1158
      %v1165 = vpack.c.b16 %v1161, %v1160
      %v1170 = vunpack.c.l.b16 %v1150
      %v1171 = vunpack.c.h.b16 %v1150
      %v1172 = vunpack.c.l.b16 %v1151
      %v1173 = vunpack.c.h.b16 %v1151
      %v1174 = vunpack.c.l.b16 %v1152
      %v1175 = vunpack.c.h.b16 %v1152
      %v1176 = vunpack.c.l.b16 %v1153
      %v1177 = vunpack.c.h.b16 %v1153
      %v1178 = vpack.c.b16 %v1172, %v1170
      %v1179 = vpack.c.b16 %v1173, %v1171
      %v1180 = vpack.c.b16 %v1176, %v1174
      %v1181 = vpack.c.b16 %v1177, %v1175
      %v1187 = vsel %vm371, %v1162, 0
      %v1190 = vsel %vm371, %v1163, 0
      %v1193 = vsel %vm371, %v1164, 0
      %v1196 = vsel %vm371, %v1165, 0
      %1198 = vmatpush.bf16.msra.mxu0 0
      %1199 = vmatpush.bf16.msra.mxu0 0
      %1200 = vmatpush.bf16.msra.mxu0 0
      %1201 = vmatpush.bf16.msra.mxu0 0
      %1202 = vmatpush.bf16.msra.mxu0 0
      %1203 = vmatpush.bf16.msra.mxu0 0
      %1204 = vmatpush.bf16.msra.mxu0 %v1180
      %1205 = vmatpush.bf16.msra.mxu0 %v1178
      %1206 = vmatmul.bf16.gmra.mxu0 %v1187
      %v1207 = vpop.f32.mrf.mxu0
      %v1208 = vadd.f32 0.0, %v1207
      %v1209 = vpop.f32.mrf.mxu0
      %v1210 = vadd.f32 0.0, %v1209
      %1211 = vmatmul.bf16.gmra.mxu0 %v1190
      %v1212 = vpop.f32.mrf.mxu0
      %v1213 = vadd.f32 0.0, %v1212
      %v1214 = vpop.f32.mrf.mxu0
      %v1215 = vadd.f32 0.0, %v1214
      %1216 = vmatmul.bf16.gmra.mxu0 %v1193
      %v1217 = vpop.f32.mrf.mxu0
      %v1218 = vadd.f32 0.0, %v1217
      %v1219 = vpop.f32.mrf.mxu0
      %v1220 = vadd.f32 0.0, %v1219
      %1221 = vmatmul.bf16.gmra.mxu0 %v1196
      %v1222 = vpop.f32.mrf.mxu0
      %v1223 = vadd.f32 0.0, %v1222
      %v1224 = vpop.f32.mrf.mxu0
      %v1225 = vadd.f32 0.0, %v1224
      %1226 = vdwg.mxu0
      %1227 = vmatpush.bf16.msra.mxu0 0
      %1228 = vmatpush.bf16.msra.mxu0 0
      %1229 = vmatpush.bf16.msra.mxu0 0
      %1230 = vmatpush.bf16.msra.mxu0 0
      %1231 = vmatpush.bf16.msra.mxu0 0
      %1232 = vmatpush.bf16.msra.mxu0 0
      %1233 = vmatpush.bf16.msra.mxu0 %v1181
      %1234 = vmatpush.bf16.msra.mxu0 %v1179
      %1235 = vmatmul.bf16.gmra.mxu0 %v1187
      %v1236 = vpop.f32.mrf.mxu0
      %v1237 = vadd.f32 0.0, %v1236
      %v1238 = vpop.f32.mrf.mxu0
      %v1239 = vadd.f32 0.0, %v1238
      %1240 = vmatmul.bf16.gmra.mxu0 %v1190
      %v1241 = vpop.f32.mrf.mxu0
      %v1242 = vadd.f32 0.0, %v1241
      %v1243 = vpop.f32.mrf.mxu0
      %v1244 = vadd.f32 0.0, %v1243
      %1245 = vmatmul.bf16.gmra.mxu0 %v1193
      %v1246 = vpop.f32.mrf.mxu0
      %v1247 = vadd.f32 0.0, %v1246
      %v1248 = vpop.f32.mrf.mxu0
      %v1249 = vadd.f32 0.0, %v1248
      %1250 = vmatmul.bf16.gmra.mxu0 %v1196
      %v1251 = vpop.f32.mrf.mxu0
      %v1252 = vadd.f32 0.0, %v1251
      %v1253 = vpop.f32.mrf.mxu0
      %v1254 = vadd.f32 0.0, %v1253
      %1255 = vdwg.mxu0
      %v1256 = vadd.f32 %v1066, %v1208
      %v1257 = vadd.f32 %v1067, %v1237
      %v1258 = vadd.f32 %v1068, %v1210
      %v1259 = vadd.f32 %v1069, %v1239
      %v1260 = vadd.f32 %v1070, %v1213
      %v1261 = vadd.f32 %v1071, %v1242
      %v1262 = vadd.f32 %v1072, %v1215
      %v1263 = vadd.f32 %v1073, %v1244
      %v1264 = vadd.f32 %v1074, %v1218
      %v1265 = vadd.f32 %v1075, %v1247
      %v1266 = vadd.f32 %v1076, %v1220
      %v1267 = vadd.f32 %v1077, %v1249
      %v1268 = vadd.f32 %v1078, %v1223
      %v1269 = vadd.f32 %v1079, %v1252
      %v1270 = vadd.f32 %v1080, %v1225
      %v1271 = vadd.f32 %v1081, %v1254
      %vm1272 = vcmask 1040384
      %vm1273 = vcmask 1044484
      %vm1274 = vmor %vm1272, %vm1273
      %v1275 = vrot.slane %v199, 7
      %v1276 = vrot.slane %v1275, 4
      %v1277 = vrot.slane %v200, 7
      %v1278 = vsel %vm1274, %v1276, %v1277
      %v1279 = vrot.slane %v201, 7
      %v1280 = vrot.slane %v1279, 4
      %v1281 = vrot.slane %v202, 7
      %v1282 = vsel %vm1274, %v1280, %v1281
      %v1283 = vrot.slane %v203, 7
      %v1284 = vrot.slane %v1283, 4
      %v1285 = vrot.slane %v204, 7
      %v1286 = vsel %vm1274, %v1284, %v1285
      %v1287 = vrot.slane %v205, 7
      %v1288 = vrot.slane %v1287, 4
      %v1289 = vrot.slane %v206, 7
      %v1290 = vsel %vm1274, %v1288, %v1289
      %v1291 = vrot.slane %v207, 7
      %v1292 = vrot.slane %v1291, 4
      %v1293 = vrot.slane %v208, 7
      %v1294 = vsel %vm1274, %v1292, %v1293
      %v1295 = vrot.slane %v209, 7
      %v1296 = vrot.slane %v1295, 4
      %v1297 = vrot.slane %v210, 7
      %v1298 = vsel %vm1274, %v1296, %v1297
      %v1299 = vrot.slane %v211, 7
      %v1300 = vrot.slane %v1299, 4
      %v1301 = vrot.slane %v212, 7
      %v1302 = vsel %vm1274, %v1300, %v1301
      %v1303 = vrot.slane %v213, 7
      %v1304 = vrot.slane %v1303, 4
      %v1305 = vrot.slane %v214, 7
      %v1306 = vsel %vm1274, %v1304, %v1305
      %s1307 = scalar_lea.vmem %s1, 192
      %v1308 = vld [vmem:[%s1307] sm:$0xff]
      %v1309 = vld [vmem:[%s1307 + $0x8] sm:$0xff]
      %v1310 = vld [vmem:[%s1307 + $0x10] sm:$0xff]
      %v1311 = vld [vmem:[%s1307 + $0x18] sm:$0xff]
      %v1312 = vunpack.c.l.b16 %v1278
      %v1313 = vunpack.c.l.b16 %v1282
      %v1314 = vunpack.c.l.b16 %v1286
      %v1315 = vunpack.c.l.b16 %v1290
      %v1316 = vunpack.c.l.b16 %v1294
      %v1317 = vunpack.c.l.b16 %v1298
      %v1318 = vunpack.c.l.b16 %v1302
      %v1319 = vunpack.c.l.b16 %v1306
      %v1320 = vpack.c.b16 %v1313, %v1312
      %v1321 = vpack.c.b16 %v1315, %v1314
      %v1322 = vpack.c.b16 %v1317, %v1316
      %v1323 = vpack.c.b16 %v1319, %v1318
      %v1328 = vunpack.c.l.b16 %v1308
      %v1329 = vunpack.c.h.b16 %v1308
      %v1330 = vunpack.c.l.b16 %v1309
      %v1331 = vunpack.c.h.b16 %v1309
      %v1332 = vunpack.c.l.b16 %v1310
      %v1333 = vunpack.c.h.b16 %v1310
      %v1334 = vunpack.c.l.b16 %v1311
      %v1335 = vunpack.c.h.b16 %v1311
      %v1336 = vpack.c.b16 %v1330, %v1328
      %v1337 = vpack.c.b16 %v1331, %v1329
      %v1338 = vpack.c.b16 %v1334, %v1332
      %v1339 = vpack.c.b16 %v1335, %v1333
      %v1345 = vsel %vm371, %v1320, 0
      %v1348 = vsel %vm371, %v1321, 0
      %v1351 = vsel %vm371, %v1322, 0
      %v1354 = vsel %vm371, %v1323, 0
      %1356 = vmatpush.bf16.msra.mxu0 0
      %1357 = vmatpush.bf16.msra.mxu0 0
      %1358 = vmatpush.bf16.msra.mxu0 0
      %1359 = vmatpush.bf16.msra.mxu0 0
      %1360 = vmatpush.bf16.msra.mxu0 0
      %1361 = vmatpush.bf16.msra.mxu0 0
      %1362 = vmatpush.bf16.msra.mxu0 %v1338
      %1363 = vmatpush.bf16.msra.mxu0 %v1336
      %1364 = vmatmul.bf16.gmra.mxu0 %v1345
      %v1365 = vpop.f32.mrf.mxu0
      %v1366 = vadd.f32 0.0, %v1365
      %v1367 = vpop.f32.mrf.mxu0
      %v1368 = vadd.f32 0.0, %v1367
      %1369 = vmatmul.bf16.gmra.mxu0 %v1348
      %v1370 = vpop.f32.mrf.mxu0
      %v1371 = vadd.f32 0.0, %v1370
      %v1372 = vpop.f32.mrf.mxu0
      %v1373 = vadd.f32 0.0, %v1372
      %1374 = vmatmul.bf16.gmra.mxu0 %v1351
      %v1375 = vpop.f32.mrf.mxu0
      %v1376 = vadd.f32 0.0, %v1375
      %v1377 = vpop.f32.mrf.mxu0
      %v1378 = vadd.f32 0.0, %v1377
      %1379 = vmatmul.bf16.gmra.mxu0 %v1354
      %v1380 = vpop.f32.mrf.mxu0
      %v1381 = vadd.f32 0.0, %v1380
      %v1382 = vpop.f32.mrf.mxu0
      %v1383 = vadd.f32 0.0, %v1382
      %1384 = vdwg.mxu0
      %1385 = vmatpush.bf16.msra.mxu0 0
      %1386 = vmatpush.bf16.msra.mxu0 0
      %1387 = vmatpush.bf16.msra.mxu0 0
      %1388 = vmatpush.bf16.msra.mxu0 0
      %1389 = vmatpush.bf16.msra.mxu0 0
      %1390 = vmatpush.bf16.msra.mxu0 0
      %1391 = vmatpush.bf16.msra.mxu0 %v1339
      %1392 = vmatpush.bf16.msra.mxu0 %v1337
      %1393 = vmatmul.bf16.gmra.mxu0 %v1345
      %v1394 = vpop.f32.mrf.mxu0
      %v1395 = vadd.f32 0.0, %v1394
      %v1396 = vpop.f32.mrf.mxu0
      %v1397 = vadd.f32 0.0, %v1396
      %1398 = vmatmul.bf16.gmra.mxu0 %v1348
      %v1399 = vpop.f32.mrf.mxu0
      %v1400 = vadd.f32 0.0, %v1399
      %v1401 = vpop.f32.mrf.mxu0
      %v1402 = vadd.f32 0.0, %v1401
      %1403 = vmatmul.bf16.gmra.mxu0 %v1351
      %v1404 = vpop.f32.mrf.mxu0
      %v1405 = vadd.f32 0.0, %v1404
      %v1406 = vpop.f32.mrf.mxu0
      %v1407 = vadd.f32 0.0, %v1406
      %1408 = vmatmul.bf16.gmra.mxu0 %v1354
      %v1409 = vpop.f32.mrf.mxu0
      %v1410 = vadd.f32 0.0, %v1409
      %v1411 = vpop.f32.mrf.mxu0
      %v1412 = vadd.f32 0.0, %v1411
      %1413 = vdwg.mxu0
      %v1414 = vadd.f32 %v1256, %v1366
      %v1415 = vadd.f32 %v1257, %v1395
      %v1416 = vadd.f32 %v1258, %v1368
      %v1417 = vadd.f32 %v1259, %v1397
      %v1418 = vadd.f32 %v1260, %v1371
      %v1419 = vadd.f32 %v1261, %v1400
      %v1420 = vadd.f32 %v1262, %v1373
      %v1421 = vadd.f32 %v1263, %v1402
      %v1422 = vadd.f32 %v1264, %v1376
      %v1423 = vadd.f32 %v1265, %v1405
      %v1424 = vadd.f32 %v1266, %v1378
      %v1425 = vadd.f32 %v1267, %v1407
      %v1426 = vadd.f32 %v1268, %v1381
      %v1427 = vadd.f32 %v1269, %v1410
      %v1428 = vadd.f32 %v1270, %v1383
      %v1429 = vadd.f32 %v1271, %v1412
      %v1430 = vld [vmem:[%s2] sm:$0x3]
      %v1432 = vperm.slane %v1430, 0
      %v1433 = vperm.slane %v1430, 1
      %v1436 = vmul.f32 %v1414, %v1432
      %v1437 = vmul.f32 %v1415, %v1433
      %v1438 = vmul.f32 %v1416, %v1432
      %v1439 = vmul.f32 %v1417, %v1433
      %v1440 = vmul.f32 %v1418, %v1432
      %v1441 = vmul.f32 %v1419, %v1433
      %v1442 = vmul.f32 %v1420, %v1432
      %v1443 = vmul.f32 %v1421, %v1433
      %v1444 = vmul.f32 %v1422, %v1432
      %v1445 = vmul.f32 %v1423, %v1433
      %v1446 = vmul.f32 %v1424, %v1432
      %v1447 = vmul.f32 %v1425, %v1433
      %v1448 = vmul.f32 %v1426, %v1432
      %v1449 = vmul.f32 %v1427, %v1433
      %v1450 = vmul.f32 %v1428, %v1432
      %v1451 = vmul.f32 %v1429, %v1433
      %v1452 = vld [vmem:[%s3] sm:$0x3]
      %v1454 = vperm.slane %v1452, 0
      %v1455 = vperm.slane %v1452, 1
      %v1458 = vadd.f32 %v1436, %v1454
      %v1459 = vadd.f32 %v1437, %v1455
      %v1460 = vadd.f32 %v1438, %v1454
      %v1461 = vadd.f32 %v1439, %v1455
      %v1462 = vadd.f32 %v1440, %v1454
      %v1463 = vadd.f32 %v1441, %v1455
      %v1464 = vadd.f32 %v1442, %v1454
      %v1465 = vadd.f32 %v1443, %v1455
      %v1466 = vadd.f32 %v1444, %v1454
      %v1467 = vadd.f32 %v1445, %v1455
      %v1468 = vadd.f32 %v1446, %v1454
      %v1469 = vadd.f32 %v1447, %v1455
      %v1470 = vadd.f32 %v1448, %v1454
      %v1471 = vadd.f32 %v1449, %v1455
      %v1472 = vadd.f32 %v1450, %v1454
      %v1473 = vadd.f32 %v1451, %v1455
      %v1474 = vmax.f32 %v1458, 0.0
      %v1475 = vmax.f32 %v1459, 0.0
      %v1476 = vmax.f32 %v1460, 0.0
      %v1477 = vmax.f32 %v1461, 0.0
      %v1478 = vmax.f32 %v1462, 0.0
      %v1479 = vmax.f32 %v1463, 0.0
      %v1480 = vmax.f32 %v1464, 0.0
      %v1481 = vmax.f32 %v1465, 0.0
      %v1482 = vmax.f32 %v1466, 0.0
      %v1483 = vmax.f32 %v1467, 0.0
      %v1484 = vmax.f32 %v1468, 0.0
      %v1485 = vmax.f32 %v1469, 0.0
      %v1486 = vmax.f32 %v1470, 0.0
      %v1487 = vmax.f32 %v1471, 0.0
      %v1488 = vmax.f32 %v1472, 0.0
      %v1489 = vmax.f32 %v1473, 0.0
      %v1490 = vpack.c.bf16 %v1475, %v1474
      %v1491 = vpack.c.bf16 %v1477, %v1476
      %v1492 = vpack.c.bf16 %v1479, %v1478
      %v1493 = vpack.c.bf16 %v1481, %v1480
      %v1494 = vpack.c.bf16 %v1483, %v1482
      %v1495 = vpack.c.bf16 %v1485, %v1484
      %v1496 = vpack.c.bf16 %v1487, %v1486
      %v1497 = vpack.c.bf16 %v1489, %v1488
      %vm1498 = vcmask 1043456
      %vm1499 = vcmask 523268
      %vm1500 = vmor %vm1499, %vm1498
      %1501 = vst.msk [vmem:[%s197] sm:$0xff] %vm1500, %v1490
      %1502 = vst.msk [vmem:[%s197 + $0x8] sm:$0xff] %vm1500, %v1491
      %1503 = vst.msk [vmem:[%s197 + $0x10] sm:$0xff] %vm1500, %v1492
      %1504 = vst.msk [vmem:[%s197 + $0x18] sm:$0xff] %vm1500, %v1493
      %1505 = vst.msk [vmem:[%s197 + $0x20] sm:$0xff] %vm1500, %v1494
      %1506 = vst.msk [vmem:[%s197 + $0x28] sm:$0xff] %vm1500, %v1495
      %1507 = vst.msk [vmem:[%s197 + $0x30] sm:$0xff] %vm1500, %v1496
      %1508 = vst.msk [vmem:[%s197 + $0x38] sm:$0xff] %vm1500, %v1497
      %p1509 = scmp.lt.s32.totalorder %s15, 1
      %s1510 = scalar_select %p1509, %s15, 1
      %s1511 = smul.addr %s1510, 16
      %s1512 = smul.addr %s1511, 4
      %s1513 = scalar_lea.vmem %s4, %s1512
      // Predicated region
      $region37: #{block2_module_b.14} parent=35 // pred_check
        %p1514 = pneg %p122
      $region38: #{block2_module_b.14} parent=35 // pred_check_branch
        %1516 = sbr.rel (%p1514) target = $region40
      $region39: #{block2_module_b.14} parent=35 // pred_region
        _
      $region40: #{block2_module_b.14} parent=35 // pred_fallthru
        _
    $region36: #{block2_module_b.14} parent=5 // pred_fallthru
      _
    %p1517 = scmp.le.s32.totalorder 2, %s10
    // Predicated region
    $region41: #{block2_module_b.14} parent=5 // pred_check
      %p1518 = pneg %p1517
    $region42: #{block2_module_b.14} parent=5 // pred_check_branch
      %1520 = sbr.rel (%p1518) target = $region44
    $region43: #{block2_module_b.14} parent=5 // pred_region
      %s1521 = ssub.s32 %s10, 2
      // Predicated region
      $region45: #{block2_module_b.14} parent=43 // pred_check
        %p1522 = pneg %p128
      $region46: #{block2_module_b.14} parent=43 // pred_check_branch
        %1524 = sbr.rel (%p1522) target = $region48
      $region47: #{block2_module_b.14} parent=43 // pred_region
        %p1525 = scmp.lt.s32.totalorder %s16, 1
        %s1526 = scalar_select %p1525, %s16, 1
        %s1527 = smul.addr %s1526, 16
        %s1528 = smul.addr %s1527, 4
        %s1529 = scalar_lea.vmem %s4, %s1528
      $region48: #{block2_module_b.14} parent=43 // pred_fallthru
        _
    $region44: #{block2_module_b.14} parent=5 // pred_fallthru
      _
  $region6: #{block2_module_b.14} parent=0 // loop_footer
    %s14 = sadd.s32 1, %s10
  $region7: #{block2_module_b.14} parent=0 // loop_footer_branch
    %9 = sbr.rel target = $region3
  $region8: #{block2_module_b.14} parent=0 // loop_exit
    _

// kernel: block2_module_b.10
$region0: #{block2_module_b.10}
  #allocation0 [shape = 'u32[]', space=smem, size = 0x4, offset = 0x4, fixed_abs, tag = 'smem constant byte address 0x4 - core index']
  #allocation1 [shape = 'u32[72,128]{1,0:T(1,128)}', space=vmem, size = 0x9000, scoped, tag = 'internal scratch']
  %s0 = inlined_call_operand.vmem [shape: bf16[2,14,8,32], index: 0, kind: input, shape index: {}]
  %s1 = inlined_call_operand.vmem [shape: bf16[7,32,192], index: 1, kind: input, shape index: {}]
  %s2 = inlined_call_operand.vmem [shape: f32[1,192], index: 2, kind: input, shape index: {}]
  %s3 = inlined_call_operand.vmem [shape: f32[1,192], index: 3, kind: input, shape index: {}]
  %s4 = inlined_call_operand.vmem [shape: bf16[2,8,8,192], index: 4, kind: output, shape index: {}]
  %s5 = sld [smem:[#allocation0]]
  $region49: #{block2_module_b.10} parent=0
    _
  %s7 = ssub.s32 1, %s5
  %s8 = scalar_select 0, %s7, %s5
  loop: start=0, step=1, limit=4
  $region2: #{block2_module_b.10} parent=0 // loop_pre_header
    _
  $region3: #{block2_module_b.10} parent=0 // loop_header
    %s10 = sphi 0, %s14
    %p11 = scmp.ge.s32.totalorder %s10, 4
    %s20 = sphi 0, %s22
    %s23 = sphi 0, %s20
    %s24 = sphi 0, %s23
    %s40 = sphi 0, %s24
    %s44 = sphi 0, %s44
    %s46 = sphi 0, %s44
    %s47 = sphi 0, %s46
    %s61 = sphi 0, %s47
    %s65 = sphi 0, %s65
    %s67 = sphi 0, %s65
    %s68 = sphi 0, %s67
    %s82 = sphi 0, %s68
    %s86 = sphi 0, %s86
    %s88 = sphi 0, %s86
    %s89 = sphi 0, %s88
    %s103 = sphi 0, %s89
    %s109 = sphi 0, %s111
    %s112 = sphi 0, %s109
    %s113 = sphi 0, %s112
    %s129 = sphi 0, %s113
  $region4: #{block2_module_b.10} parent=0 // loop_header_branch
    %13 = sbr.rel (%p11) target = $region8
  $region5: #{block2_module_b.10} parent=0 // loop_body
    %s15 = ssub.s32 %s10, 1
    %s16 = ssub.s32 %s10, 2
    %s17 = sadd.s32 %s10, 1
    %s18 = ssub.s32 %s10, %s17
    %p19 = scmp.eq.s32.totalorder %s18, 0
    %s21 = sadd.s32 %s20, 1
    %s22 = scalar_select %p19, %s20, %s21
    %p25 = pneg %p19
    %p26 = scmp.eq.s32.totalorder %s10, 1
    %p27 = por %p25, %p26
    %p28 = scmp.ne.s32.totalorder %s20, %s23
    %p29 = scmp.eq.s32.totalorder %s10, 0
    %p30 = por %p28, %p29
    %p31 = scmp.ne.s32.totalorder %s20, %s23
    %p32 = scmp.eq.s32.totalorder %s15, 1
    %p33 = por %p31, %p32
    %p34 = scmp.ne.s32.totalorder %s23, %s24
    %p35 = scmp.eq.s32.totalorder %s15, 0
    %p36 = por %p34, %p35
    %p37 = scmp.ne.s32.totalorder %s23, %s24
    %p38 = scmp.eq.s32.totalorder %s16, 1
    %p39 = por %p37, %p38
    %p41 = scmp.ne.s32.totalorder %s24, %s40
    %p42 = scmp.eq.s32.totalorder %s16, 0
    %p43 = por %p41, %p42
    %s45 = sadd.s32 %s44, 1
    %p48 = scmp.eq.s32.totalorder %s10, 1
    %p49 = scmp.ne.s32.totalorder %s44, %s46
    %p50 = scmp.eq.s32.totalorder %s10, 0
    %p51 = por %p49, %p50
    %p52 = scmp.ne.s32.totalorder %s44, %s46
    %p53 = scmp.eq.s32.totalorder %s15, 1
    %p54 = por %p52, %p53
    %p55 = scmp.ne.s32.totalorder %s46, %s47
    %p56 = scmp.eq.s32.totalorder %s15, 0
    %p57 = por %p55, %p56
    %p58 = scmp.ne.s32.totalorder %s46, %s47
    %p59 = scmp.eq.s32.totalorder %s16, 1
    %p60 = por %p58, %p59
    %p62 = scmp.ne.s32.totalorder %s47, %s61
    %p63 = scmp.eq.s32.totalorder %s16, 0
    %p64 = por %p62, %p63
    %s66 = sadd.s32 %s65, 1
    %p69 = scmp.eq.s32.totalorder %s10, 1
    %p70 = scmp.ne.s32.totalorder %s65, %s67
    %p71 = scmp.eq.s32.totalorder %s10, 0
    %p72 = por %p70, %p71
    %p73 = scmp.ne.s32.totalorder %s65, %s67
    %p74 = scmp.eq.s32.totalorder %s15, 1
    %p75 = por %p73, %p74
    %p76 = scmp.ne.s32.totalorder %s67, %s68
    %p77 = scmp.eq.s32.totalorder %s15, 0
    %p78 = por %p76, %p77
    %p79 = scmp.ne.s32.totalorder %s67, %s68
    %p80 = scmp.eq.s32.totalorder %s16, 1
    %p81 = por %p79, %p80
    %p83 = scmp.ne.s32.totalorder %s68, %s82
    %p84 = scmp.eq.s32.totalorder %s16, 0
    %p85 = por %p83, %p84
    %s87 = sadd.s32 %s86, 1
    %p90 = scmp.eq.s32.totalorder %s10, 1
    %p91 = scmp.ne.s32.totalorder %s86, %s88
    %p92 = scmp.eq.s32.totalorder %s10, 0
    %p93 = por %p91, %p92
    %p94 = scmp.ne.s32.totalorder %s86, %s88
    %p95 = scmp.eq.s32.totalorder %s15, 1
    %p96 = por %p94, %p95
    %p97 = scmp.ne.s32.totalorder %s88, %s89
    %p98 = scmp.eq.s32.totalorder %s15, 0
    %p99 = por %p97, %p98
    %p100 = scmp.ne.s32.totalorder %s88, %s89
    %p101 = scmp.eq.s32.totalorder %s16, 1
    %p102 = por %p100, %p101
    %p104 = scmp.ne.s32.totalorder %s89, %s103
    %p105 = scmp.eq.s32.totalorder %s16, 0
    %p106 = por %p104, %p105
    %s107 = ssub.s32 %s10, %s17
    %p108 = scmp.eq.s32.totalorder %s107, 0
    %s110 = sadd.s32 %s109, 1
    %s111 = scalar_select %p108, %s109, %s110
    %p114 = pneg %p108
    %p115 = scmp.eq.s32.totalorder %s10, 1
    %p116 = por %p114, %p115
    %p117 = scmp.ne.s32.totalorder %s109, %s112
    %p118 = scmp.eq.s32.totalorder %s10, 0
    %p119 = por %p117, %p118
    %p120 = scmp.ne.s32.totalorder %s109, %s112
    %p121 = scmp.eq.s32.totalorder %s15, 1
    %p122 = por %p120, %p121
    %p123 = scmp.ne.s32.totalorder %s112, %s113
    %p124 = scmp.eq.s32.totalorder %s15, 0
    %p125 = por %p123, %p124
    %p126 = scmp.ne.s32.totalorder %s112, %s113
    %p127 = scmp.eq.s32.totalorder %s16, 1
    %p128 = por %p126, %p127
    %p130 = scmp.ne.s32.totalorder %s113, %s129
    %p131 = scmp.eq.s32.totalorder %s16, 0
    %p132 = por %p130, %p131
    %p133 = scmp.le.s32.totalorder 1, %s10
    %p134 = scmp.lt.s32.totalorder %s10, 3
    %p135 = pnand %p133, %p134
    %p136 = pneg %p135
    // Predicated region
    $region9: #{block2_module_b.10} parent=5 // pred_check
      _
    $region10: #{block2_module_b.10} parent=5 // pred_check_branch
      %138 = sbr.rel (%p135) target = $region12
    $region11: #{block2_module_b.10} parent=5 // pred_region
      %s139 = ssub.s32 %s10, 1
      // Predicated region
      $region13: #{block2_module_b.10} parent=11 // pred_check
        %p140 = pneg %p57
      $region14: #{block2_module_b.10} parent=11 // pred_check_branch
        %142 = sbr.rel (%p140) target = $region16
      $region15: #{block2_module_b.10} parent=11 // pred_region
        _
      $region16: #{block2_module_b.10} parent=11 // pred_fallthru
        _
      // Predicated region
      $region17: #{block2_module_b.10} parent=11 // pred_check
        %p143 = pneg %p78
      $region18: #{block2_module_b.10} parent=11 // pred_check_branch
        %145 = sbr.rel (%p143) target = $region20
      $region19: #{block2_module_b.10} parent=11 // pred_region
        _
      $region20: #{block2_module_b.10} parent=11 // pred_fallthru
        _
      // Predicated region
      $region21: #{block2_module_b.10} parent=11 // pred_check
        %p146 = pneg %p99
      $region22: #{block2_module_b.10} parent=11 // pred_check_branch
        %148 = sbr.rel (%p146) target = $region24
      $region23: #{block2_module_b.10} parent=11 // pred_region
        _
      $region24: #{block2_module_b.10} parent=11 // pred_fallthru
        _
    $region12: #{block2_module_b.10} parent=5 // pred_fallthru
      _
    %p149 = scmp.lt.s32.totalorder %s10, 2
    // Predicated region
    $region25: #{block2_module_b.10} parent=5 // pred_check
      %p150 = pneg %p149
    $region26: #{block2_module_b.10} parent=5 // pred_check_branch
      %152 = sbr.rel (%p150) target = $region28
    $region27: #{block2_module_b.10} parent=5 // pred_region
      // Predicated region
      $region29: #{block2_module_b.10} parent=27 // pred_check
        %p153 = pneg %p30
      $region30: #{block2_module_b.10} parent=27 // pred_check_branch
        %155 = sbr.rel (%p153) target = $region32
      $region31: #{block2_module_b.10} parent=27 // pred_region
        %p156 = scmp.lt.s32.totalorder %s10, 1
        %s157 = scalar_select %p156, %s10, 1
        %s158 = smul.addr %s157, 14
        %s159 = smul.addr %s158, 4
        %s160 = scalar_lea.vmem %s0, %s159
      $region32: #{block2_module_b.10} parent=27 // pred_fallthru
        _
    $region28: #{block2_module_b.10} parent=5 // pred_fallthru
      _
    %p161 = scmp.le.s32.totalorder 1, %s10
    %p162 = scmp.lt.s32.totalorder %s10, 3
    %p163 = pnand %p161, %p162
    %p164 = pneg %p163
    // Predicated region
    $region33: #{block2_module_b.10} parent=5 // pred_check
      _
    $region34: #{block2_module_b.10} parent=5 // pred_check_branch
      %166 = sbr.rel (%p163) target = $region36
    $region35: #{block2_module_b.10} parent=5 // pred_region
      %s167 = ssub.s32 %s10, 1
      %p168 = scmp.lt.s32.totalorder %s15, 1
      %s169 = scalar_select %p168, %s15, 1
      %s170 = smul.addr %s169, 14
      %s171 = smul.addr %s170, 4
      %s172 = scalar_lea.vmem %s0, %s171
      %p173 = pneg %p36
      %p174 = pneg %p33
      %p175 = pneg %p57
      %p176 = pneg %p54
      %p177 = pneg %p78
      %p178 = pneg %p75
      %p179 = pneg %p99
      %p180 = pneg %p96
      %p181 = pneg %p125
      %p182 = pneg %p122
      %p183 = scmp.lt.s32.totalorder %s15, 1
      %s184 = scalar_select %p183, %s15, 1
      %s185 = smul.addr %s184, 16
      %s186 = smul.addr %s185, 4
      %s187 = scalar_lea.vmem %s4, %s186
      %p188 = scmp.lt.s32.totalorder %s15, 1
      %s189 = scalar_select %p188, %s15, 1
      %s190 = smul.addr %s189, 14
      %s191 = smul.addr %s190, 4
      %s192 = scalar_lea.vmem %s0, %s191
      %p193 = scmp.lt.s32.totalorder %s15, 1
      %s194 = scalar_select %p193, %s15, 1
      %s195 = smul.addr %s194, 16
      %s196 = smul.addr %s195, 4
      %s197 = scalar_lea.vmem %s4, %s196
      %v199 = vld [vmem:[%s192] sm:$0xf]
      %v200 = vld [vmem:[%s192 + $0x4] sm:$0xf]
      %v201 = vld [vmem:[%s192 + $0x8] sm:$0xf]
      %v202 = vld [vmem:[%s192 + $0xc] sm:$0xf]
      %v203 = vld [vmem:[%s192 + $0x10] sm:$0xf]
      %v204 = vld [vmem:[%s192 + $0x14] sm:$0xf]
      %v205 = vld [vmem:[%s192 + $0x18] sm:$0xf]
      %v206 = vld [vmem:[%s192 + $0x1c] sm:$0xf]
      %v207 = vld [vmem:[%s192 + $0x20] sm:$0xf]
      %v208 = vld [vmem:[%s192 + $0x24] sm:$0xf]
      %v209 = vld [vmem:[%s192 + $0x28] sm:$0xf]
      %v210 = vld [vmem:[%s192 + $0x2c] sm:$0xf]
      %v211 = vld [vmem:[%s192 + $0x30] sm:$0xf]
      %v212 = vld [vmem:[%s192 + $0x34] sm:$0xf]
      %v213 = vld [vmem:[%s1] sm:$0xff]
      %v214 = vld [vmem:[%s1 + $0x8] sm:$0xff]
      %v215 = vld [vmem:[%s1 + $0x10] sm:$0xff]
      %v216 = vld [vmem:[%s1 + $0x18] sm:$0xff]
      %s217 = scalar_lea.vmem %s1, 32
      %v218 = vld [vmem:[%s217] sm:$0xff]
      %v219 = vld [vmem:[%s217 + $0x8] sm:$0xff]
      %v220 = vld [vmem:[%s217 + $0x10] sm:$0xff]
      %v221 = vld [vmem:[%s217 + $0x18] sm:$0xff]
      %v230 = vunpack.c.l.b16 %v200
      %v231 = vunpack.c.l.b16 %v201
      %v232 = vunpack.c.l.b16 %v202
      %v233 = vunpack.c.l.b16 %v203
      %v234 = vunpack.c.l.b16 %v204
      %v235 = vunpack.c.l.b16 %v205
      %v236 = vunpack.c.l.b16 %v206
      %v237 = vunpack.c.l.b16 %v207
      %v238 = vpack.c.b16 %v231, %v230
      %v239 = vpack.c.b16 %v233, %v232
      %v240 = vpack.c.b16 %v235, %v234
      %v241 = vpack.c.b16 %v237, %v236
      %v246 = vunpack.c.l.b16 %v218
      %v247 = vunpack.c.h.b16 %v218
      %v248 = vunpack.c.l.b16 %v219
      %v249 = vunpack.c.h.b16 %v219
      %v250 = vunpack.c.l.b16 %v220
      %v251 = vunpack.c.h.b16 %v220
      %v252 = vunpack.c.l.b16 %v221
      %v253 = vunpack.c.h.b16 %v221
      %v254 = vpack.c.b16 %v248, %v246
      %v255 = vpack.c.b16 %v249, %v247
      %v256 = vpack.c.b16 %v252, %v250
      %v257 = vpack.c.b16 %v253, %v251
      %vm262 = vcmask 261120
      %v264 = vsel %vm262, %v238, 0
      %v267 = vsel %vm262, %v239, 0
      %v270 = vsel %vm262, %v240, 0
      %v273 = vsel %vm262, %v241, 0
      %275 = vmatpush.bf16.msra.mxu0 0
      %276 = vmatpush.bf16.msra.mxu0 0
      %277 = vmatpush.bf16.msra.mxu0 0
      %278 = vmatpush.bf16.msra.mxu0 0
      %279 = vmatpush.bf16.msra.mxu0 0
      %280 = vmatpush.bf16.msra.mxu0 0
      %281 = vmatpush.bf16.msra.mxu0 %v256
      %282 = vmatpush.bf16.msra.mxu0 %v254
      %283 = vmatmul.bf16.gmra.mxu0 %v264
      %v284 = vpop.f32.mrf.mxu0
      %v285 = vadd.f32 0.0, %v284
      %v286 = vpop.f32.mrf.mxu0
      %v287 = vadd.f32 0.0, %v286
      %288 = vmatmul.bf16.gmra.mxu0 %v267
      %v289 = vpop.f32.mrf.mxu0
      %v290 = vadd.f32 0.0, %v289
      %v291 = vpop.f32.mrf.mxu0
      %v292 = vadd.f32 0.0, %v291
      %293 = vmatmul.bf16.gmra.mxu0 %v270
      %v294 = vpop.f32.mrf.mxu0
      %v295 = vadd.f32 0.0, %v294
      %v296 = vpop.f32.mrf.mxu0
      %v297 = vadd.f32 0.0, %v296
      %298 = vmatmul.bf16.gmra.mxu0 %v273
      %v299 = vpop.f32.mrf.mxu0
      %v300 = vadd.f32 0.0, %v299
      %v301 = vpop.f32.mrf.mxu0
      %v302 = vadd.f32 0.0, %v301
      %303 = vdwg.mxu0
      %304 = vmatpush.bf16.msra.mxu0 0
      %305 = vmatpush.bf16.msra.mxu0 0
      %306 = vmatpush.bf16.msra.mxu0 0
      %307 = vmatpush.bf16.msra.mxu0 0
      %308 = vmatpush.bf16.msra.mxu0 0
      %309 = vmatpush.bf16.msra.mxu0 0
      %310 = vmatpush.bf16.msra.mxu0 %v257
      %311 = vmatpush.bf16.msra.mxu0 %v255
      %312 = vmatmul.bf16.gmra.mxu0 %v264
      %v313 = vpop.f32.mrf.mxu0
      %v314 = vadd.f32 0.0, %v313
      %v315 = vpop.f32.mrf.mxu0
      %v316 = vadd.f32 0.0, %v315
      %317 = vmatmul.bf16.gmra.mxu0 %v267
      %v318 = vpop.f32.mrf.mxu0
      %v319 = vadd.f32 0.0, %v318
      %v320 = vpop.f32.mrf.mxu0
      %v321 = vadd.f32 0.0, %v320
      %322 = vmatmul.bf16.gmra.mxu0 %v270
      %v323 = vpop.f32.mrf.mxu0
      %v324 = vadd.f32 0.0, %v323
      %v325 = vpop.f32.mrf.mxu0
      %v326 = vadd.f32 0.0, %v325
      %327 = vmatmul.bf16.gmra.mxu0 %v273
      %v328 = vpop.f32.mrf.mxu0
      %v329 = vadd.f32 0.0, %v328
      %v330 = vpop.f32.mrf.mxu0
      %v331 = vadd.f32 0.0, %v330
      %332 = vdwg.mxu0
      %v334 = vunpack.c.l.b16 %v199
      %v335 = vpack.c.b16 %v230, %v334
      %v336 = vpack.c.b16 %v232, %v231
      %v337 = vpack.c.b16 %v234, %v233
      %v338 = vpack.c.b16 %v236, %v235
      %v343 = vunpack.c.l.b16 %v213
      %v344 = vunpack.c.h.b16 %v213
      %v345 = vunpack.c.l.b16 %v214
      %v346 = vunpack.c.h.b16 %v214
      %v347 = vunpack.c.l.b16 %v215
      %v348 = vunpack.c.h.b16 %v215
      %v349 = vunpack.c.l.b16 %v216
      %v350 = vunpack.c.h.b16 %v216
      %v351 = vpack.c.b16 %v345, %v343
      %v352 = vpack.c.b16 %v346, %v344
      %v353 = vpack.c.b16 %v349, %v347
      %v354 = vpack.c.b16 %v350, %v348
      %v360 = vsel %vm262, %v335, 0
      %v363 = vsel %vm262, %v336, 0
      %v366 = vsel %vm262, %v337, 0
      %v369 = vsel %vm262, %v338, 0
      %371 = vmatpush.bf16.msra.mxu0 0
      %372 = vmatpush.bf16.msra.mxu0 0
      %373 = vmatpush.bf16.msra.mxu0 0
      %374 = vmatpush.bf16.msra.mxu0 0
      %375 = vmatpush.bf16.msra.mxu0 0
      %376 = vmatpush.bf16.msra.mxu0 0
      %377 = vmatpush.bf16.msra.mxu0 %v353
      %378 = vmatpush.bf16.msra.mxu0 %v351
      %379 = vmatmul.bf16.gmra.mxu0 %v360
      %v380 = vpop.f32.mrf.mxu0
      %v381 = vadd.f32 %v285, %v380
      %v382 = vpop.f32.mrf.mxu0
      %v383 = vadd.f32 %v287, %v382
      %384 = vmatmul.bf16.gmra.mxu0 %v363
      %v385 = vpop.f32.mrf.mxu0
      %v386 = vadd.f32 %v290, %v385
      %v387 = vpop.f32.mrf.mxu0
      %v388 = vadd.f32 %v292, %v387
      %389 = vmatmul.bf16.gmra.mxu0 %v366
      %v390 = vpop.f32.mrf.mxu0
      %v391 = vadd.f32 %v295, %v390
      %v392 = vpop.f32.mrf.mxu0
      %v393 = vadd.f32 %v297, %v392
      %394 = vmatmul.bf16.gmra.mxu0 %v369
      %v395 = vpop.f32.mrf.mxu0
      %v396 = vadd.f32 %v300, %v395
      %v397 = vpop.f32.mrf.mxu0
      %v398 = vadd.f32 %v302, %v397
      %399 = vdwg.mxu0
      %400 = vmatpush.bf16.msra.mxu0 0
      %401 = vmatpush.bf16.msra.mxu0 0
      %402 = vmatpush.bf16.msra.mxu0 0
      %403 = vmatpush.bf16.msra.mxu0 0
      %404 = vmatpush.bf16.msra.mxu0 0
      %405 = vmatpush.bf16.msra.mxu0 0
      %406 = vmatpush.bf16.msra.mxu0 %v354
      %407 = vmatpush.bf16.msra.mxu0 %v352
      %408 = vmatmul.bf16.gmra.mxu0 %v360
      %v409 = vpop.f32.mrf.mxu0
      %v410 = vadd.f32 %v314, %v409
      %v411 = vpop.f32.mrf.mxu0
      %v412 = vadd.f32 %v316, %v411
      %413 = vmatmul.bf16.gmra.mxu0 %v363
      %v414 = vpop.f32.mrf.mxu0
      %v415 = vadd.f32 %v319, %v414
      %v416 = vpop.f32.mrf.mxu0
      %v417 = vadd.f32 %v321, %v416
      %418 = vmatmul.bf16.gmra.mxu0 %v366
      %v419 = vpop.f32.mrf.mxu0
      %v420 = vadd.f32 %v324, %v419
      %v421 = vpop.f32.mrf.mxu0
      %v422 = vadd.f32 %v326, %v421
      %423 = vmatmul.bf16.gmra.mxu0 %v369
      %v424 = vpop.f32.mrf.mxu0
      %v425 = vadd.f32 %v329, %v424
      %v426 = vpop.f32.mrf.mxu0
      %v427 = vadd.f32 %v331, %v426
      %428 = vdwg.mxu0
      %s429 = scalar_lea.vmem %s1, 64
      %v430 = vld [vmem:[%s429] sm:$0xff]
      %v431 = vld [vmem:[%s429 + $0x8] sm:$0xff]
      %v432 = vld [vmem:[%s429 + $0x10] sm:$0xff]
      %v433 = vld [vmem:[%s429 + $0x18] sm:$0xff]
      %v435 = vunpack.c.l.b16 %v208
      %v436 = vpack.c.b16 %v435, %v237
      %v441 = vunpack.c.l.b16 %v430
      %v442 = vunpack.c.h.b16 %v430
      %v443 = vunpack.c.l.b16 %v431
      %v444 = vunpack.c.h.b16 %v431
      %v445 = vunpack.c.l.b16 %v432
      %v446 = vunpack.c.h.b16 %v432
      %v447 = vunpack.c.l.b16 %v433
      %v448 = vunpack.c.h.b16 %v433
      %v449 = vpack.c.b16 %v443, %v441
      %v450 = vpack.c.b16 %v444, %v442
      %v451 = vpack.c.b16 %v447, %v445
      %v452 = vpack.c.b16 %v448, %v446
      %v458 = vsel %vm262, %v436, 0
      %460 = vmatpush.bf16.msra.mxu0 0
      %461 = vmatpush.bf16.msra.mxu0 0
      %462 = vmatpush.bf16.msra.mxu0 0
      %463 = vmatpush.bf16.msra.mxu0 0
      %464 = vmatpush.bf16.msra.mxu0 0
      %465 = vmatpush.bf16.msra.mxu0 0
      %466 = vmatpush.bf16.msra.mxu0 %v451
      %467 = vmatpush.bf16.msra.mxu0 %v449
      %468 = vmatmul.bf16.gmra.mxu0 %v363
      %v469 = vpop.f32.mrf.mxu0
      %v470 = vadd.f32 0.0, %v469
      %v471 = vpop.f32.mrf.mxu0
      %v472 = vadd.f32 0.0, %v471
      %473 = vmatmul.bf16.gmra.mxu0 %v366
      %v474 = vpop.f32.mrf.mxu0
      %v475 = vadd.f32 0.0, %v474
      %v476 = vpop.f32.mrf.mxu0
      %v477 = vadd.f32 0.0, %v476
      %478 = vmatmul.bf16.gmra.mxu0 %v369
      %v479 = vpop.f32.mrf.mxu0
      %v480 = vadd.f32 0.0, %v479
      %v481 = vpop.f32.mrf.mxu0
      %v482 = vadd.f32 0.0, %v481
      %483 = vmatmul.bf16.gmra.mxu0 %v458
      %v484 = vpop.f32.mrf.mxu0
      %v485 = vadd.f32 0.0, %v484
      %v486 = vpop.f32.mrf.mxu0
      %v487 = vadd.f32 0.0, %v486
      %488 = vdwg.mxu0
      %489 = vmatpush.bf16.msra.mxu0 0
      %490 = vmatpush.bf16.msra.mxu0 0
      %491 = vmatpush.bf16.msra.mxu0 0
      %492 = vmatpush.bf16.msra.mxu0 0
      %493 = vmatpush.bf16.msra.mxu0 0
      %494 = vmatpush.bf16.msra.mxu0 0
      %495 = vmatpush.bf16.msra.mxu0 %v452
      %496 = vmatpush.bf16.msra.mxu0 %v450
      %497 = vmatmul.bf16.gmra.mxu0 %v363
      %v498 = vpop.f32.mrf.mxu0
      %v499 = vadd.f32 0.0, %v498
      %v500 = vpop.f32.mrf.mxu0
      %v501 = vadd.f32 0.0, %v500
      %502 = vmatmul.bf16.gmra.mxu0 %v366
      %v503 = vpop.f32.mrf.mxu0
      %v504 = vadd.f32 0.0, %v503
      %v505 = vpop.f32.mrf.mxu0
      %v506 = vadd.f32 0.0, %v505
      %507 = vmatmul.bf16.gmra.mxu0 %v369
      %v508 = vpop.f32.mrf.mxu0
      %v509 = vadd.f32 0.0, %v508
      %v510 = vpop.f32.mrf.mxu0
      %v511 = vadd.f32 0.0, %v510
      %512 = vmatmul.bf16.gmra.mxu0 %v458
      %v513 = vpop.f32.mrf.mxu0
      %v514 = vadd.f32 0.0, %v513
      %v515 = vpop.f32.mrf.mxu0
      %v516 = vadd.f32 0.0, %v515
      %517 = vdwg.mxu0
      %v518 = vadd.f32 %v381, %v470
      %v519 = vadd.f32 %v410, %v499
      %v520 = vadd.f32 %v383, %v472
      %v521 = vadd.f32 %v412, %v501
      %v522 = vadd.f32 %v386, %v475
      %v523 = vadd.f32 %v415, %v504
      %v524 = vadd.f32 %v388, %v477
      %v525 = vadd.f32 %v417, %v506
      %v526 = vadd.f32 %v391, %v480
      %v527 = vadd.f32 %v420, %v509
      %v528 = vadd.f32 %v393, %v482
      %v529 = vadd.f32 %v422, %v511
      %v530 = vadd.f32 %v396, %v485
      %v531 = vadd.f32 %v425, %v514
      %v532 = vadd.f32 %v398, %v487
      %v533 = vadd.f32 %v427, %v516
      %s534 = scalar_lea.vmem %s1, 96
      %v535 = vld [vmem:[%s534] sm:$0xff]
      %v536 = vld [vmem:[%s534 + $0x8] sm:$0xff]
      %v537 = vld [vmem:[%s534 + $0x10] sm:$0xff]
      %v538 = vld [vmem:[%s534 + $0x18] sm:$0xff]
      %v540 = vunpack.c.l.b16 %v209
      %v541 = vpack.c.b16 %v540, %v435
      %v546 = vunpack.c.l.b16 %v535
      %v547 = vunpack.c.h.b16 %v535
      %v548 = vunpack.c.l.b16 %v536
      %v549 = vunpack.c.h.b16 %v536
      %v550 = vunpack.c.l.b16 %v537
      %v551 = vunpack.c.h.b16 %v537
      %v552 = vunpack.c.l.b16 %v538
      %v553 = vunpack.c.h.b16 %v538
      %v554 = vpack.c.b16 %v548, %v546
      %v555 = vpack.c.b16 %v549, %v547
      %v556 = vpack.c.b16 %v552, %v550
      %v557 = vpack.c.b16 %v553, %v551
      %v563 = vsel %vm262, %v541, 0
      %565 = vmatpush.bf16.msra.mxu0 0
      %566 = vmatpush.bf16.msra.mxu0 0
      %567 = vmatpush.bf16.msra.mxu0 0
      %568 = vmatpush.bf16.msra.mxu0 0
      %569 = vmatpush.bf16.msra.mxu0 0
      %570 = vmatpush.bf16.msra.mxu0 0
      %571 = vmatpush.bf16.msra.mxu0 %v556
      %572 = vmatpush.bf16.msra.mxu0 %v554
      %573 = vmatmul.bf16.gmra.mxu0 %v267
      %v574 = vpop.f32.mrf.mxu0
      %v575 = vadd.f32 0.0, %v574
      %v576 = vpop.f32.mrf.mxu0
      %v577 = vadd.f32 0.0, %v576
      %578 = vmatmul.bf16.gmra.mxu0 %v270
      %v579 = vpop.f32.mrf.mxu0
      %v580 = vadd.f32 0.0, %v579
      %v581 = vpop.f32.mrf.mxu0
      %v582 = vadd.f32 0.0, %v581
      %583 = vmatmul.bf16.gmra.mxu0 %v273
      %v584 = vpop.f32.mrf.mxu0
      %v585 = vadd.f32 0.0, %v584
      %v586 = vpop.f32.mrf.mxu0
      %v587 = vadd.f32 0.0, %v586
      %588 = vmatmul.bf16.gmra.mxu0 %v563
      %v589 = vpop.f32.mrf.mxu0
      %v590 = vadd.f32 0.0, %v589
      %v591 = vpop.f32.mrf.mxu0
      %v592 = vadd.f32 0.0, %v591
      %593 = vdwg.mxu0
      %594 = vmatpush.bf16.msra.mxu0 0
      %595 = vmatpush.bf16.msra.mxu0 0
      %596 = vmatpush.bf16.msra.mxu0 0
      %597 = vmatpush.bf16.msra.mxu0 0
      %598 = vmatpush.bf16.msra.mxu0 0
      %599 = vmatpush.bf16.msra.mxu0 0
      %600 = vmatpush.bf16.msra.mxu0 %v557
      %601 = vmatpush.bf16.msra.mxu0 %v555
      %602 = vmatmul.bf16.gmra.mxu0 %v267
      %v603 = vpop.f32.mrf.mxu0
      %v604 = vadd.f32 0.0, %v603
      %v605 = vpop.f32.mrf.mxu0
      %v606 = vadd.f32 0.0, %v605
      %607 = vmatmul.bf16.gmra.mxu0 %v270
      %v608 = vpop.f32.mrf.mxu0
      %v609 = vadd.f32 0.0, %v608
      %v610 = vpop.f32.mrf.mxu0
      %v611 = vadd.f32 0.0, %v610
      %612 = vmatmul.bf16.gmra.mxu0 %v273
      %v613 = vpop.f32.mrf.mxu0
      %v614 = vadd.f32 0.0, %v613
      %v615 = vpop.f32.mrf.mxu0
      %v616 = vadd.f32 0.0, %v615
      %617 = vmatmul.bf16.gmra.mxu0 %v563
      %v618 = vpop.f32.mrf.mxu0
      %v619 = vadd.f32 0.0, %v618
      %v620 = vpop.f32.mrf.mxu0
      %v621 = vadd.f32 0.0, %v620
      %622 = vdwg.mxu0
      %v623 = vadd.f32 %v518, %v575
      %v624 = vadd.f32 %v519, %v604
      %v625 = vadd.f32 %v520, %v577
      %v626 = vadd.f32 %v521, %v606
      %v627 = vadd.f32 %v522, %v580
      %v628 = vadd.f32 %v523, %v609
      %v629 = vadd.f32 %v524, %v582
      %v630 = vadd.f32 %v525, %v611
      %v631 = vadd.f32 %v526, %v585
      %v632 = vadd.f32 %v527, %v614
      %v633 = vadd.f32 %v528, %v587
      %v634 = vadd.f32 %v529, %v616
      %v635 = vadd.f32 %v530, %v590
      %v636 = vadd.f32 %v531, %v619
      %v637 = vadd.f32 %v532, %v592
      %v638 = vadd.f32 %v533, %v621
      %s639 = scalar_lea.vmem %s1, 128
      %v640 = vld [vmem:[%s639] sm:$0xff]
      %v641 = vld [vmem:[%s639 + $0x8] sm:$0xff]
      %v642 = vld [vmem:[%s639 + $0x10] sm:$0xff]
      %v643 = vld [vmem:[%s639 + $0x18] sm:$0xff]
      %v645 = vunpack.c.l.b16 %v210
      %v646 = vpack.c.b16 %v645, %v540
      %v651 = vunpack.c.l.b16 %v640
      %v652 = vunpack.c.h.b16 %v640
      %v653 = vunpack.c.l.b16 %v641
      %v654 = vunpack.c.h.b16 %v641
      %v655 = vunpack.c.l.b16 %v642
      %v656 = vunpack.c.h.b16 %v642
      %v657 = vunpack.c.l.b16 %v643
      %v658 = vunpack.c.h.b16 %v643
      %v659 = vpack.c.b16 %v653, %v651
      %v660 = vpack.c.b16 %v654, %v652
      %v661 = vpack.c.b16 %v657, %v655
      %v662 = vpack.c.b16 %v658, %v656
      %v668 = vsel %vm262, %v646, 0
      %670 = vmatpush.bf16.msra.mxu0 0
      %671 = vmatpush.bf16.msra.mxu0 0
      %672 = vmatpush.bf16.msra.mxu0 0
      %673 = vmatpush.bf16.msra.mxu0 0
      %674 = vmatpush.bf16.msra.mxu0 0
      %675 = vmatpush.bf16.msra.mxu0 0
      %676 = vmatpush.bf16.msra.mxu0 %v661
      %677 = vmatpush.bf16.msra.mxu0 %v659
      %678 = vmatmul.bf16.gmra.mxu0 %v366
      %v679 = vpop.f32.mrf.mxu0
      %v680 = vadd.f32 0.0, %v679
      %v681 = vpop.f32.mrf.mxu0
      %v682 = vadd.f32 0.0, %v681
      %683 = vmatmul.bf16.gmra.mxu0 %v369
      %v684 = vpop.f32.mrf.mxu0
      %v685 = vadd.f32 0.0, %v684
      %v686 = vpop.f32.mrf.mxu0
      %v687 = vadd.f32 0.0, %v686
      %688 = vmatmul.bf16.gmra.mxu0 %v458
      %v689 = vpop.f32.mrf.mxu0
      %v690 = vadd.f32 0.0, %v689
      %v691 = vpop.f32.mrf.mxu0
      %v692 = vadd.f32 0.0, %v691
      %693 = vmatmul.bf16.gmra.mxu0 %v668
      %v694 = vpop.f32.mrf.mxu0
      %v695 = vadd.f32 0.0, %v694
      %v696 = vpop.f32.mrf.mxu0
      %v697 = vadd.f32 0.0, %v696
      %698 = vdwg.mxu0
      %699 = vmatpush.bf16.msra.mxu0 0
      %700 = vmatpush.bf16.msra.mxu0 0
      %701 = vmatpush.bf16.msra.mxu0 0
      %702 = vmatpush.bf16.msra.mxu0 0
      %703 = vmatpush.bf16.msra.mxu0 0
      %704 = vmatpush.bf16.msra.mxu0 0
      %705 = vmatpush.bf16.msra.mxu0 %v662
      %706 = vmatpush.bf16.msra.mxu0 %v660
      %707 = vmatmul.bf16.gmra.mxu0 %v366
      %v708 = vpop.f32.mrf.mxu0
      %v709 = vadd.f32 0.0, %v708
      %v710 = vpop.f32.mrf.mxu0
      %v711 = vadd.f32 0.0, %v710
      %712 = vmatmul.bf16.gmra.mxu0 %v369
      %v713 = vpop.f32.mrf.mxu0
      %v714 = vadd.f32 0.0, %v713
      %v715 = vpop.f32.mrf.mxu0
      %v716 = vadd.f32 0.0, %v715
      %717 = vmatmul.bf16.gmra.mxu0 %v458
      %v718 = vpop.f32.mrf.mxu0
      %v719 = vadd.f32 0.0, %v718
      %v720 = vpop.f32.mrf.mxu0
      %v721 = vadd.f32 0.0, %v720
      %722 = vmatmul.bf16.gmra.mxu0 %v668
      %v723 = vpop.f32.mrf.mxu0
      %v724 = vadd.f32 0.0, %v723
      %v725 = vpop.f32.mrf.mxu0
      %v726 = vadd.f32 0.0, %v725
      %727 = vdwg.mxu0
      %v728 = vadd.f32 %v623, %v680
      %v729 = vadd.f32 %v624, %v709
      %v730 = vadd.f32 %v625, %v682
      %v731 = vadd.f32 %v626, %v711
      %v732 = vadd.f32 %v627, %v685
      %v733 = vadd.f32 %v628, %v714
      %v734 = vadd.f32 %v629, %v687
      %v735 = vadd.f32 %v630, %v716
      %v736 = vadd.f32 %v631, %v690
      %v737 = vadd.f32 %v632, %v719
      %v738 = vadd.f32 %v633, %v692
      %v739 = vadd.f32 %v634, %v721
      %v740 = vadd.f32 %v635, %v695
      %v741 = vadd.f32 %v636, %v724
      %v742 = vadd.f32 %v637, %v697
      %v743 = vadd.f32 %v638, %v726
      %s744 = scalar_lea.vmem %s1, 160
      %v745 = vld [vmem:[%s744] sm:$0xff]
      %v746 = vld [vmem:[%s744 + $0x8] sm:$0xff]
      %v747 = vld [vmem:[%s744 + $0x10] sm:$0xff]
      %v748 = vld [vmem:[%s744 + $0x18] sm:$0xff]
      %v750 = vunpack.c.l.b16 %v211
      %v751 = vpack.c.b16 %v750, %v645
      %v756 = vunpack.c.l.b16 %v745
      %v757 = vunpack.c.h.b16 %v745
      %v758 = vunpack.c.l.b16 %v746
      %v759 = vunpack.c.h.b16 %v746
      %v760 = vunpack.c.l.b16 %v747
      %v761 = vunpack.c.h.b16 %v747
      %v762 = vunpack.c.l.b16 %v748
      %v763 = vunpack.c.h.b16 %v748
      %v764 = vpack.c.b16 %v758, %v756
      %v765 = vpack.c.b16 %v759, %v757
      %v766 = vpack.c.b16 %v762, %v760
      %v767 = vpack.c.b16 %v763, %v761
      %v773 = vsel %vm262, %v751, 0
      %775 = vmatpush.bf16.msra.mxu0 0
      %776 = vmatpush.bf16.msra.mxu0 0
      %777 = vmatpush.bf16.msra.mxu0 0
      %778 = vmatpush.bf16.msra.mxu0 0
      %779 = vmatpush.bf16.msra.mxu0 0
      %780 = vmatpush.bf16.msra.mxu0 0
      %781 = vmatpush.bf16.msra.mxu0 %v766
      %782 = vmatpush.bf16.msra.mxu0 %v764
      %783 = vmatmul.bf16.gmra.mxu0 %v270
      %v784 = vpop.f32.mrf.mxu0
      %v785 = vadd.f32 0.0, %v784
      %v786 = vpop.f32.mrf.mxu0
      %v787 = vadd.f32 0.0, %v786
      %788 = vmatmul.bf16.gmra.mxu0 %v273
      %v789 = vpop.f32.mrf.mxu0
      %v790 = vadd.f32 0.0, %v789
      %v791 = vpop.f32.mrf.mxu0
      %v792 = vadd.f32 0.0, %v791
      %793 = vmatmul.bf16.gmra.mxu0 %v563
      %v794 = vpop.f32.mrf.mxu0
      %v795 = vadd.f32 0.0, %v794
      %v796 = vpop.f32.mrf.mxu0
      %v797 = vadd.f32 0.0, %v796
      %798 = vmatmul.bf16.gmra.mxu0 %v773
      %v799 = vpop.f32.mrf.mxu0
      %v800 = vadd.f32 0.0, %v799
      %v801 = vpop.f32.mrf.mxu0
      %v802 = vadd.f32 0.0, %v801
      %803 = vdwg.mxu0
      %804 = vmatpush.bf16.msra.mxu0 0
      %805 = vmatpush.bf16.msra.mxu0 0
      %806 = vmatpush.bf16.msra.mxu0 0
      %807 = vmatpush.bf16.msra.mxu0 0
      %808 = vmatpush.bf16.msra.mxu0 0
      %809 = vmatpush.bf16.msra.mxu0 0
      %810 = vmatpush.bf16.msra.mxu0 %v767
      %811 = vmatpush.bf16.msra.mxu0 %v765
      %812 = vmatmul.bf16.gmra.mxu0 %v270
      %v813 = vpop.f32.mrf.mxu0
      %v814 = vadd.f32 0.0, %v813
      %v815 = vpop.f32.mrf.mxu0
      %v816 = vadd.f32 0.0, %v815
      %817 = vmatmul.bf16.gmra.mxu0 %v273
      %v818 = vpop.f32.mrf.mxu0
      %v819 = vadd.f32 0.0, %v818
      %v820 = vpop.f32.mrf.mxu0
      %v821 = vadd.f32 0.0, %v820
      %822 = vmatmul.bf16.gmra.mxu0 %v563
      %v823 = vpop.f32.mrf.mxu0
      %v824 = vadd.f32 0.0, %v823
      %v825 = vpop.f32.mrf.mxu0
      %v826 = vadd.f32 0.0, %v825
      %827 = vmatmul.bf16.gmra.mxu0 %v773
      %v828 = vpop.f32.mrf.mxu0
      %v829 = vadd.f32 0.0, %v828
      %v830 = vpop.f32.mrf.mxu0
      %v831 = vadd.f32 0.0, %v830
      %832 = vdwg.mxu0
      %v833 = vadd.f32 %v728, %v785
      %v834 = vadd.f32 %v729, %v814
      %v835 = vadd.f32 %v730, %v787
      %v836 = vadd.f32 %v731, %v816
      %v837 = vadd.f32 %v732, %v790
      %v838 = vadd.f32 %v733, %v819
      %v839 = vadd.f32 %v734, %v792
      %v840 = vadd.f32 %v735, %v821
      %v841 = vadd.f32 %v736, %v795
      %v842 = vadd.f32 %v737, %v824
      %v843 = vadd.f32 %v738, %v797
      %v844 = vadd.f32 %v739, %v826
      %v845 = vadd.f32 %v740, %v800
      %v846 = vadd.f32 %v741, %v829
      %v847 = vadd.f32 %v742, %v802
      %v848 = vadd.f32 %v743, %v831
      %s849 = scalar_lea.vmem %s1, 192
      %v850 = vld [vmem:[%s849] sm:$0xff]
      %v851 = vld [vmem:[%s849 + $0x8] sm:$0xff]
      %v852 = vld [vmem:[%s849 + $0x10] sm:$0xff]
      %v853 = vld [vmem:[%s849 + $0x18] sm:$0xff]
      %v855 = vunpack.c.l.b16 %v212
      %v856 = vpack.c.b16 %v855, %v750
      %v861 = vunpack.c.l.b16 %v850
      %v862 = vunpack.c.h.b16 %v850
      %v863 = vunpack.c.l.b16 %v851
      %v864 = vunpack.c.h.b16 %v851
      %v865 = vunpack.c.l.b16 %v852
      %v866 = vunpack.c.h.b16 %v852
      %v867 = vunpack.c.l.b16 %v853
      %v868 = vunpack.c.h.b16 %v853
      %v869 = vpack.c.b16 %v863, %v861
      %v870 = vpack.c.b16 %v864, %v862
      %v871 = vpack.c.b16 %v867, %v865
      %v872 = vpack.c.b16 %v868, %v866
      %v878 = vsel %vm262, %v856, 0
      %880 = vmatpush.bf16.msra.mxu0 0
      %881 = vmatpush.bf16.msra.mxu0 0
      %882 = vmatpush.bf16.msra.mxu0 0
      %883 = vmatpush.bf16.msra.mxu0 0
      %884 = vmatpush.bf16.msra.mxu0 0
      %885 = vmatpush.bf16.msra.mxu0 0
      %886 = vmatpush.bf16.msra.mxu0 %v871
      %887 = vmatpush.bf16.msra.mxu0 %v869
      %888 = vmatmul.bf16.gmra.mxu0 %v369
      %v889 = vpop.f32.mrf.mxu0
      %v890 = vadd.f32 0.0, %v889
      %v891 = vpop.f32.mrf.mxu0
      %v892 = vadd.f32 0.0, %v891
      %893 = vmatmul.bf16.gmra.mxu0 %v458
      %v894 = vpop.f32.mrf.mxu0
      %v895 = vadd.f32 0.0, %v894
      %v896 = vpop.f32.mrf.mxu0
      %v897 = vadd.f32 0.0, %v896
      %898 = vmatmul.bf16.gmra.mxu0 %v668
      %v899 = vpop.f32.mrf.mxu0
      %v900 = vadd.f32 0.0, %v899
      %v901 = vpop.f32.mrf.mxu0
      %v902 = vadd.f32 0.0, %v901
      %903 = vmatmul.bf16.gmra.mxu0 %v878
      %v904 = vpop.f32.mrf.mxu0
      %v905 = vadd.f32 0.0, %v904
      %v906 = vpop.f32.mrf.mxu0
      %v907 = vadd.f32 0.0, %v906
      %908 = vdwg.mxu0
      %909 = vmatpush.bf16.msra.mxu0 0
      %910 = vmatpush.bf16.msra.mxu0 0
      %911 = vmatpush.bf16.msra.mxu0 0
      %912 = vmatpush.bf16.msra.mxu0 0
      %913 = vmatpush.bf16.msra.mxu0 0
      %914 = vmatpush.bf16.msra.mxu0 0
      %915 = vmatpush.bf16.msra.mxu0 %v872
      %916 = vmatpush.bf16.msra.mxu0 %v870
      %917 = vmatmul.bf16.gmra.mxu0 %v369
      %v918 = vpop.f32.mrf.mxu0
      %v919 = vadd.f32 0.0, %v918
      %v920 = vpop.f32.mrf.mxu0
      %v921 = vadd.f32 0.0, %v920
      %922 = vmatmul.bf16.gmra.mxu0 %v458
      %v923 = vpop.f32.mrf.mxu0
      %v924 = vadd.f32 0.0, %v923
      %v925 = vpop.f32.mrf.mxu0
      %v926 = vadd.f32 0.0, %v925
      %927 = vmatmul.bf16.gmra.mxu0 %v668
      %v928 = vpop.f32.mrf.mxu0
      %v929 = vadd.f32 0.0, %v928
      %v930 = vpop.f32.mrf.mxu0
      %v931 = vadd.f32 0.0, %v930
      %932 = vmatmul.bf16.gmra.mxu0 %v878
      %v933 = vpop.f32.mrf.mxu0
      %v934 = vadd.f32 0.0, %v933
      %v935 = vpop.f32.mrf.mxu0
      %v936 = vadd.f32 0.0, %v935
      %937 = vdwg.mxu0
      %v938 = vadd.f32 %v833, %v890
      %v939 = vadd.f32 %v834, %v919
      %v940 = vadd.f32 %v835, %v892
      %v941 = vadd.f32 %v836, %v921
      %v942 = vadd.f32 %v837, %v895
      %v943 = vadd.f32 %v838, %v924
      %v944 = vadd.f32 %v839, %v897
      %v945 = vadd.f32 %v840, %v926
      %v946 = vadd.f32 %v841, %v900
      %v947 = vadd.f32 %v842, %v929
      %v948 = vadd.f32 %v843, %v902
      %v949 = vadd.f32 %v844, %v931
      %v950 = vadd.f32 %v845, %v905
      %v951 = vadd.f32 %v846, %v934
      %v952 = vadd.f32 %v847, %v907
      %v953 = vadd.f32 %v848, %v936
      %v954 = vld [vmem:[%s2] sm:$0x3]
      %v956 = vperm.slane %v954, 0
      %v957 = vperm.slane %v954, 1
      %v960 = vmul.f32 %v938, %v956
      %v961 = vmul.f32 %v939, %v957
      %v962 = vmul.f32 %v940, %v956
      %v963 = vmul.f32 %v941, %v957
      %v964 = vmul.f32 %v942, %v956
      %v965 = vmul.f32 %v943, %v957
      %v966 = vmul.f32 %v944, %v956
      %v967 = vmul.f32 %v945, %v957
      %v968 = vmul.f32 %v946, %v956
      %v969 = vmul.f32 %v947, %v957
      %v970 = vmul.f32 %v948, %v956
      %v971 = vmul.f32 %v949, %v957
      %v972 = vmul.f32 %v950, %v956
      %v973 = vmul.f32 %v951, %v957
      %v974 = vmul.f32 %v952, %v956
      %v975 = vmul.f32 %v953, %v957
      %v976 = vld [vmem:[%s3] sm:$0x3]
      %v978 = vperm.slane %v976, 0
      %v979 = vperm.slane %v976, 1
      %v982 = vadd.f32 %v960, %v978
      %v983 = vadd.f32 %v961, %v979
      %v984 = vadd.f32 %v962, %v978
      %v985 = vadd.f32 %v963, %v979
      %v986 = vadd.f32 %v964, %v978
      %v987 = vadd.f32 %v965, %v979
      %v988 = vadd.f32 %v966, %v978
      %v989 = vadd.f32 %v967, %v979
      %v990 = vadd.f32 %v968, %v978
      %v991 = vadd.f32 %v969, %v979
      %v992 = vadd.f32 %v970, %v978
      %v993 = vadd.f32 %v971, %v979
      %v994 = vadd.f32 %v972, %v978
      %v995 = vadd.f32 %v973, %v979
      %v996 = vadd.f32 %v974, %v978
      %v997 = vadd.f32 %v975, %v979
      %v998 = vmax.f32 %v982, 0.0
      %v999 = vmax.f32 %v983, 0.0
      %v1000 = vmax.f32 %v984, 0.0
      %v1001 = vmax.f32 %v985, 0.0
      %v1002 = vmax.f32 %v986, 0.0
      %v1003 = vmax.f32 %v987, 0.0
      %v1004 = vmax.f32 %v988, 0.0
      %v1005 = vmax.f32 %v989, 0.0
      %v1006 = vmax.f32 %v990, 0.0
      %v1007 = vmax.f32 %v991, 0.0
      %v1008 = vmax.f32 %v992, 0.0
      %v1009 = vmax.f32 %v993, 0.0
      %v1010 = vmax.f32 %v994, 0.0
      %v1011 = vmax.f32 %v995, 0.0
      %v1012 = vmax.f32 %v996, 0.0
      %v1013 = vmax.f32 %v997, 0.0
      %v1014 = vpack.c.bf16 %v999, %v998
      %v1015 = vpack.c.bf16 %v1001, %v1000
      %v1016 = vpack.c.bf16 %v1003, %v1002
      %v1017 = vpack.c.bf16 %v1005, %v1004
      %v1018 = vpack.c.bf16 %v1007, %v1006
      %v1019 = vpack.c.bf16 %v1009, %v1008
      %v1020 = vpack.c.bf16 %v1011, %v1010
      %v1021 = vpack.c.bf16 %v1013, %v1012
      %vm1022 = vcmask 1043456
      %vm1023 = vcmask 523268
      %vm1024 = vmor %vm1023, %vm1022
      %1025 = vst.msk [vmem:[%s197] sm:$0xff] %vm1024, %v1014
      %1026 = vst.msk [vmem:[%s197 + $0x8] sm:$0xff] %vm1024, %v1015
      %1027 = vst.msk [vmem:[%s197 + $0x10] sm:$0xff] %vm1024, %v1016
      %1028 = vst.msk [vmem:[%s197 + $0x18] sm:$0xff] %vm1024, %v1017
      %1029 = vst.msk [vmem:[%s197 + $0x20] sm:$0xff] %vm1024, %v1018
      %1030 = vst.msk [vmem:[%s197 + $0x28] sm:$0xff] %vm1024, %v1019
      %1031 = vst.msk [vmem:[%s197 + $0x30] sm:$0xff] %vm1024, %v1020
      %1032 = vst.msk [vmem:[%s197 + $0x38] sm:$0xff] %vm1024, %v1021
      %p1033 = scmp.lt.s32.totalorder %s15, 1
      %s1034 = scalar_select %p1033, %s15, 1
      %s1035 = smul.addr %s1034, 16
      %s1036 = smul.addr %s1035, 4
      %s1037 = scalar_lea.vmem %s4, %s1036
      // Predicated region
      $region37: #{block2_module_b.10} parent=35 // pred_check
        %p1038 = pneg %p122
      $region38: #{block2_module_b.10} parent=35 // pred_check_branch
        %1040 = sbr.rel (%p1038) target = $region40
      $region39: #{block2_module_b.10} parent=35 // pred_region
        _
      $region40: #{block2_module_b.10} parent=35 // pred_fallthru
        _
    $region36: #{block2_module_b.10} parent=5 // pred_fallthru
      _
    %p1041 = scmp.le.s32.totalorder 2, %s10
    // Predicated region
    $region41: #{block2_module_b.10} parent=5 // pred_check
      %p1042 = pneg %p1041
    $region42: #{block2_module_b.10} parent=5 // pred_check_branch
      %1044 = sbr.rel (%p1042) target = $region44
    $region43: #{block2_module_b.10} parent=5 // pred_region
      %s1045 = ssub.s32 %s10, 2
      // Predicated region
      $region45: #{block2_module_b.10} parent=43 // pred_check
        %p1046 = pneg %p128
      $region46: #{block2_module_b.10} parent=43 // pred_check_branch
        %1048 = sbr.rel (%p1046) target = $region48
      $region47: #{block2_module_b.10} parent=43 // pred_region
        %p1049 = scmp.lt.s32.totalorder %s16, 1
        %s1050 = scalar_select %p1049, %s16, 1
        %s1051 = smul.addr %s1050, 16
        %s1052 = smul.addr %s1051, 4
        %s1053 = scalar_lea.vmem %s4, %s1052
      $region48: #{block2_module_b.10} parent=43 // pred_fallthru
        _
    $region44: #{block2_module_b.10} parent=5 // pred_fallthru
      _
  $region6: #{block2_module_b.10} parent=0 // loop_footer
    %s14 = sadd.s32 1, %s10
  $region7: #{block2_module_b.10} parent=0 // loop_footer_branch
    %9 = sbr.rel target = $region3
  $region8: #{block2_module_b.10} parent=0 // loop_exit
    _

// kernel: block2_module_b.15
$region0: #{block2_module_b.15}
  #allocation0 [shape = 'u32[]', space=smem, size = 0x4, offset = 0x4, fixed_abs, tag = 'smem constant byte address 0x4 - core index']
  #allocation1 [shape = 'u32[72,128]{1,0:T(1,128)}', space=vmem, size = 0x9000, scoped, tag = 'internal scratch']
  %s0 = inlined_call_operand.vmem [shape: bf16[2,10,10,768], index: 0, kind: input, shape index: {}]
  %s1 = inlined_call_operand.vmem [shape: bf16[768,192], index: 1, kind: input, shape index: {}]
  %s2 = inlined_call_operand.vmem [shape: f32[1,192], index: 2, kind: input, shape index: {}]
  %s3 = inlined_call_operand.vmem [shape: f32[1,192], index: 3, kind: input, shape index: {}]
  %s4 = inlined_call_operand.vmem [shape: bf16[2,8,8,192], index: 4, kind: output, shape index: {}]
  %s5 = sld [smem:[#allocation0]]
  $region49: #{block2_module_b.15} parent=0
    _
  %s7 = ssub.s32 1, %s5
  %s8 = scalar_select 0, %s7, %s5
  loop: start=0, step=1, limit=4
  $region2: #{block2_module_b.15} parent=0 // loop_pre_header
    _
  $region3: #{block2_module_b.15} parent=0 // loop_header
    %s10 = sphi 0, %s14
    %p11 = scmp.ge.s32.totalorder %s10, 4
    %s20 = sphi 0, %s22
    %s23 = sphi 0, %s20
    %s24 = sphi 0, %s23
    %s40 = sphi 0, %s24
    %s44 = sphi 0, %s44
    %s46 = sphi 0, %s44
    %s47 = sphi 0, %s46
    %s61 = sphi 0, %s47
    %s65 = sphi 0, %s65
    %s67 = sphi 0, %s65
    %s68 = sphi 0, %s67
    %s82 = sphi 0, %s68
    %s86 = sphi 0, %s86
    %s88 = sphi 0, %s86
    %s89 = sphi 0, %s88
    %s103 = sphi 0, %s89
    %s109 = sphi 0, %s111
    %s112 = sphi 0, %s109
    %s113 = sphi 0, %s112
    %s129 = sphi 0, %s113
  $region4: #{block2_module_b.15} parent=0 // loop_header_branch
    %13 = sbr.rel (%p11) target = $region8
  $region5: #{block2_module_b.15} parent=0 // loop_body
    %s15 = ssub.s32 %s10, 1
    %s16 = ssub.s32 %s10, 2
    %s17 = sadd.s32 %s10, 1
    %s18 = ssub.s32 %s10, %s17
    %p19 = scmp.eq.s32.totalorder %s18, 0
    %s21 = sadd.s32 %s20, 1
    %s22 = scalar_select %p19, %s20, %s21
    %p25 = pneg %p19
    %p26 = scmp.eq.s32.totalorder %s10, 1
    %p27 = por %p25, %p26
    %p28 = scmp.ne.s32.totalorder %s20, %s23
    %p29 = scmp.eq.s32.totalorder %s10, 0
    %p30 = por %p28, %p29
    %p31 = scmp.ne.s32.totalorder %s20, %s23
    %p32 = scmp.eq.s32.totalorder %s15, 1
    %p33 = por %p31, %p32
    %p34 = scmp.ne.s32.totalorder %s23, %s24
    %p35 = scmp.eq.s32.totalorder %s15, 0
    %p36 = por %p34, %p35
    %p37 = scmp.ne.s32.totalorder %s23, %s24
    %p38 = scmp.eq.s32.totalorder %s16, 1
    %p39 = por %p37, %p38
    %p41 = scmp.ne.s32.totalorder %s24, %s40
    %p42 = scmp.eq.s32.totalorder %s16, 0
    %p43 = por %p41, %p42
    %s45 = sadd.s32 %s44, 1
    %p48 = scmp.eq.s32.totalorder %s10, 1
    %p49 = scmp.ne.s32.totalorder %s44, %s46
    %p50 = scmp.eq.s32.totalorder %s10, 0
    %p51 = por %p49, %p50
    %p52 = scmp.ne.s32.totalorder %s44, %s46
    %p53 = scmp.eq.s32.totalorder %s15, 1
    %p54 = por %p52, %p53
    %p55 = scmp.ne.s32.totalorder %s46, %s47
    %p56 = scmp.eq.s32.totalorder %s15, 0
    %p57 = por %p55, %p56
    %p58 = scmp.ne.s32.totalorder %s46, %s47
    %p59 = scmp.eq.s32.totalorder %s16, 1
    %p60 = por %p58, %p59
    %p62 = scmp.ne.s32.totalorder %s47, %s61
    %p63 = scmp.eq.s32.totalorder %s16, 0
    %p64 = por %p62, %p63
    %s66 = sadd.s32 %s65, 1
    %p69 = scmp.eq.s32.totalorder %s10, 1
    %p70 = scmp.ne.s32.totalorder %s65, %s67
    %p71 = scmp.eq.s32.totalorder %s10, 0
    %p72 = por %p70, %p71
    %p73 = scmp.ne.s32.totalorder %s65, %s67
    %p74 = scmp.eq.s32.totalorder %s15, 1
    %p75 = por %p73, %p74
    %p76 = scmp.ne.s32.totalorder %s67, %s68
    %p77 = scmp.eq.s32.totalorder %s15, 0
    %p78 = por %p76, %p77
    %p79 = scmp.ne.s32.totalorder %s67, %s68
    %p80 = scmp.eq.s32.totalorder %s16, 1
    %p81 = por %p79, %p80
    %p83 = scmp.ne.s32.totalorder %s68, %s82
    %p84 = scmp.eq.s32.totalorder %s16, 0
    %p85 = por %p83, %p84
    %s87 = sadd.s32 %s86, 1
    %p90 = scmp.eq.s32.totalorder %s10, 1
    %p91 = scmp.ne.s32.totalorder %s86, %s88
    %p92 = scmp.eq.s32.totalorder %s10, 0
    %p93 = por %p91, %p92
    %p94 = scmp.ne.s32.totalorder %s86, %s88
    %p95 = scmp.eq.s32.totalorder %s15, 1
    %p96 = por %p94, %p95
    %p97 = scmp.ne.s32.totalorder %s88, %s89
    %p98 = scmp.eq.s32.totalorder %s15, 0
    %p99 = por %p97, %p98
    %p100 = scmp.ne.s32.totalorder %s88, %s89
    %p101 = scmp.eq.s32.totalorder %s16, 1
    %p102 = por %p100, %p101
    %p104 = scmp.ne.s32.totalorder %s89, %s103
    %p105 = scmp.eq.s32.totalorder %s16, 0
    %p106 = por %p104, %p105
    %s107 = ssub.s32 %s10, %s17
    %p108 = scmp.eq.s32.totalorder %s107, 0
    %s110 = sadd.s32 %s109, 1
    %s111 = scalar_select %p108, %s109, %s110
    %p114 = pneg %p108
    %p115 = scmp.eq.s32.totalorder %s10, 1
    %p116 = por %p114, %p115
    %p117 = scmp.ne.s32.totalorder %s109, %s112
    %p118 = scmp.eq.s32.totalorder %s10, 0
    %p119 = por %p117, %p118
    %p120 = scmp.ne.s32.totalorder %s109, %s112
    %p121 = scmp.eq.s32.totalorder %s15, 1
    %p122 = por %p120, %p121
    %p123 = scmp.ne.s32.totalorder %s112, %s113
    %p124 = scmp.eq.s32.totalorder %s15, 0
    %p125 = por %p123, %p124
    %p126 = scmp.ne.s32.totalorder %s112, %s113
    %p127 = scmp.eq.s32.totalorder %s16, 1
    %p128 = por %p126, %p127
    %p130 = scmp.ne.s32.totalorder %s113, %s129
    %p131 = scmp.eq.s32.totalorder %s16, 0
    %p132 = por %p130, %p131
    %p133 = scmp.le.s32.totalorder 1, %s10
    %p134 = scmp.lt.s32.totalorder %s10, 3
    %p135 = pnand %p133, %p134
    %p136 = pneg %p135
    // Predicated region
    $region9: #{block2_module_b.15} parent=5 // pred_check
      _
    $region10: #{block2_module_b.15} parent=5 // pred_check_branch
      %138 = sbr.rel (%p135) target = $region12
    $region11: #{block2_module_b.15} parent=5 // pred_region
      %s139 = ssub.s32 %s10, 1
      // Predicated region
      $region13: #{block2_module_b.15} parent=11 // pred_check
        %p140 = pneg %p57
      $region14: #{block2_module_b.15} parent=11 // pred_check_branch
        %142 = sbr.rel (%p140) target = $region16
      $region15: #{block2_module_b.15} parent=11 // pred_region
        _
      $region16: #{block2_module_b.15} parent=11 // pred_fallthru
        _
      // Predicated region
      $region17: #{block2_module_b.15} parent=11 // pred_check
        %p143 = pneg %p78
      $region18: #{block2_module_b.15} parent=11 // pred_check_branch
        %145 = sbr.rel (%p143) target = $region20
      $region19: #{block2_module_b.15} parent=11 // pred_region
        _
      $region20: #{block2_module_b.15} parent=11 // pred_fallthru
        _
      // Predicated region
      $region21: #{block2_module_b.15} parent=11 // pred_check
        %p146 = pneg %p99
      $region22: #{block2_module_b.15} parent=11 // pred_check_branch
        %148 = sbr.rel (%p146) target = $region24
      $region23: #{block2_module_b.15} parent=11 // pred_region
        _
      $region24: #{block2_module_b.15} parent=11 // pred_fallthru
        _
    $region12: #{block2_module_b.15} parent=5 // pred_fallthru
      _
    %p149 = scmp.lt.s32.totalorder %s10, 2
    // Predicated region
    $region25: #{block2_module_b.15} parent=5 // pred_check
      %p150 = pneg %p149
    $region26: #{block2_module_b.15} parent=5 // pred_check_branch
      %152 = sbr.rel (%p150) target = $region28
    $region27: #{block2_module_b.15} parent=5 // pred_region
      // Predicated region
      $region29: #{block2_module_b.15} parent=27 // pred_check
        %p153 = pneg %p30
      $region30: #{block2_module_b.15} parent=27 // pred_check_branch
        %155 = sbr.rel (%p153) target = $region32
      $region31: #{block2_module_b.15} parent=27 // pred_region
        %p156 = scmp.lt.s32.totalorder %s10, 1
        %s157 = scalar_select %p156, %s10, 1
        %s158 = smul.addr %s157, 120
        %s159 = smul.addr %s158, 4
        %s160 = scalar_lea.vmem %s0, %s159
      $region32: #{block2_module_b.15} parent=27 // pred_fallthru
        _
    $region28: #{block2_module_b.15} parent=5 // pred_fallthru
      _
    %p161 = scmp.le.s32.totalorder 1, %s10
    %p162 = scmp.lt.s32.totalorder %s10, 3
    %p163 = pnand %p161, %p162
    %p164 = pneg %p163
    // Predicated region
    $region33: #{block2_module_b.15} parent=5 // pred_check
      _
    $region34: #{block2_module_b.15} parent=5 // pred_check_branch
      %166 = sbr.rel (%p163) target = $region36
    $region35: #{block2_module_b.15} parent=5 // pred_region
      %s167 = ssub.s32 %s10, 1
      %p168 = scmp.lt.s32.totalorder %s15, 1
      %s169 = scalar_select %p168, %s15, 1
      %s170 = smul.addr %s169, 120
      %s171 = smul.addr %s170, 4
      %s172 = scalar_lea.vmem %s0, %s171
      %p173 = pneg %p36
      %p174 = pneg %p33
      %p175 = pneg %p57
      %p176 = pneg %p54
      %p177 = pneg %p78
      %p178 = pneg %p75
      %p179 = pneg %p99
      %p180 = pneg %p96
      %p181 = pneg %p125
      %p182 = pneg %p122
      %p183 = scmp.lt.s32.totalorder %s15, 1
      %s184 = scalar_select %p183, %s15, 1
      %s185 = smul.addr %s184, 16
      %s186 = smul.addr %s185, 4
      %s187 = scalar_lea.vmem %s4, %s186
      %p188 = scmp.lt.s32.totalorder %s15, 1
      %s189 = scalar_select %p188, %s15, 1
      %s190 = smul.addr %s189, 120
      %s191 = smul.addr %s190, 4
      %s192 = scalar_lea.vmem %s0, %s191
      %p193 = scmp.lt.s32.totalorder %s15, 1
      %s194 = scalar_select %p193, %s15, 1
      %s195 = smul.addr %s194, 16
      %s196 = smul.addr %s195, 4
      %s197 = scalar_lea.vmem %s4, %s196
      %v198 = vld [vmem:[%s192] sm:$0xff]
      %v199 = vld [vmem:[%s192 + $0x8] sm:$0xff]
      %v200 = vld [vmem:[%s192 + $0x10] sm:$0xff]
      %v201 = vld [vmem:[%s192 + $0x18] sm:$0x11]
      %v202 = vld [vmem:[%s192 + $0x20] sm:$0x11]
      %v203 = vld [vmem:[%s192 + $0x28] sm:$0x11]
      %v204 = vld [vmem:[%s192 + $0x30] sm:$0xff]
      %v205 = vld [vmem:[%s192 + $0x38] sm:$0xff]
      %v206 = vld [vmem:[%s192 + $0x40] sm:$0xff]
      %v207 = vld [vmem:[%s192 + $0x48] sm:$0x11]
      %v208 = vld [vmem:[%s192 + $0x50] sm:$0x11]
      %v209 = vld [vmem:[%s192 + $0x58] sm:$0x11]
      %v210 = vld [vmem:[%s192 + $0x60] sm:$0xff]
      %v211 = vld [vmem:[%s192 + $0x68] sm:$0xff]
      %v212 = vld [vmem:[%s192 + $0x70] sm:$0xff]
      %v213 = vld [vmem:[%s192 + $0x78] sm:$0x11]
      %v214 = vld [vmem:[%s192 + $0x80] sm:$0x11]
      %v215 = vld [vmem:[%s192 + $0x88] sm:$0x11]
      %v216 = vld [vmem:[%s192 + $0x90] sm:$0xff]
      %v217 = vld [vmem:[%s192 + $0x98] sm:$0xff]
      %v218 = vld [vmem:[%s192 + $0xa0] sm:$0xff]
      %v219 = vld [vmem:[%s192 + $0xa8] sm:$0x11]
      %v220 = vld [vmem:[%s192 + $0xb0] sm:$0x11]
      %v221 = vld [vmem:[%s192 + $0xb8] sm:$0x11]
      %v222 = vld [vmem:[%s192 + $0xc0] sm:$0xff]
      %v223 = vld [vmem:[%s192 + $0xc8] sm:$0xff]
      %v224 = vld [vmem:[%s192 + $0xd0] sm:$0xff]
      %v225 = vld [vmem:[%s192 + $0xd8] sm:$0x11]
      %v226 = vld [vmem:[%s192 + $0xe0] sm:$0x11]
      %v227 = vld [vmem:[%s192 + $0xe8] sm:$0x11]
      %v228 = vld [vmem:[%s192 + $0xf0] sm:$0xff]
      %v229 = vld [vmem:[%s192 + $0xf8] sm:$0xff]
      %v230 = vld [vmem:[%s192 + $0x100] sm:$0xff]
      %v231 = vld [vmem:[%s192 + $0x108] sm:$0x11]
      %v232 = vld [vmem:[%s192 + $0x110] sm:$0x11]
      %v233 = vld [vmem:[%s192 + $0x118] sm:$0x11]
      %v234 = vld [vmem:[%s192 + $0x120] sm:$0xff]
      %v235 = vld [vmem:[%s192 + $0x128] sm:$0xff]
      %v236 = vld [vmem:[%s192 + $0x130] sm:$0xff]
      %v237 = vld [vmem:[%s192 + $0x138] sm:$0x11]
      %v238 = vld [vmem:[%s192 + $0x140] sm:$0x11]
      %v239 = vld [vmem:[%s192 + $0x148] sm:$0x11]
      %v240 = vld [vmem:[%s192 + $0x150] sm:$0xff]
      %v241 = vld [vmem:[%s192 + $0x158] sm:$0xff]
      %v242 = vld [vmem:[%s192 + $0x160] sm:$0xff]
      %v243 = vld [vmem:[%s192 + $0x168] sm:$0x11]
      %v244 = vld [vmem:[%s192 + $0x170] sm:$0x11]
      %v245 = vld [vmem:[%s192 + $0x178] sm:$0x11]
      %v246 = vld [vmem:[%s192 + $0x180] sm:$0xff]
      %v247 = vld [vmem:[%s192 + $0x188] sm:$0xff]
      %v248 = vld [vmem:[%s192 + $0x190] sm:$0xff]
      %v249 = vld [vmem:[%s192 + $0x198] sm:$0x11]
      %v250 = vld [vmem:[%s192 + $0x1a0] sm:$0x11]
      %v251 = vld [vmem:[%s192 + $0x1a8] sm:$0x11]
      %v252 = vld [vmem:[%s192 + $0x1b0] sm:$0xff]
      %v253 = vld [vmem:[%s192 + $0x1b8] sm:$0xff]
      %v254 = vld [vmem:[%s192 + $0x1c0] sm:$0xff]
      %v255 = vld [vmem:[%s192 + $0x1c8] sm:$0x11]
      %v256 = vld [vmem:[%s192 + $0x1d0] sm:$0x11]
      %v257 = vld [vmem:[%s192 + $0x1d8] sm:$0x11]
      %v258 = vunpack.c.l.bf16 %v198
      %v259 = vunpack.c.h.bf16 %v198
      %v260 = vunpack.c.l.bf16 %v199
      %v261 = vunpack.c.h.bf16 %v199
      %v262 = vunpack.c.l.bf16 %v200
      %v263 = vunpack.c.h.bf16 %v200
      %v264 = vunpack.c.l.bf16 %v204
      %v265 = vunpack.c.h.bf16 %v204
      %v266 = vunpack.c.l.bf16 %v205
      %v267 = vunpack.c.h.bf16 %v205
      %v268 = vunpack.c.l.bf16 %v206
      %v269 = vunpack.c.h.bf16 %v206
      %v270 = vunpack.c.l.bf16 %v210
      %v271 = vunpack.c.h.bf16 %v210
      %v272 = vunpack.c.l.bf16 %v211
      %v273 = vunpack.c.h.bf16 %v211
      %v274 = vunpack.c.l.bf16 %v212
      %v275 = vunpack.c.h.bf16 %v212
      %v276 = vunpack.c.l.bf16 %v216
      %v277 = vunpack.c.h.bf16 %v216
      %v278 = vunpack.c.l.bf16 %v217
      %v279 = vunpack.c.h.bf16 %v217
      %v280 = vunpack.c.l.bf16 %v218
      %v281 = vunpack.c.h.bf16 %v218
      %v282 = vunpack.c.l.bf16 %v222
      %v283 = vunpack.c.h.bf16 %v222
      %v284 = vunpack.c.l.bf16 %v223
      %v285 = vunpack.c.h.bf16 %v223
      %v286 = vunpack.c.l.bf16 %v224
      %v287 = vunpack.c.h.bf16 %v224
      %v288 = vunpack.c.l.bf16 %v228
      %v289 = vunpack.c.h.bf16 %v228
      %v290 = vunpack.c.l.bf16 %v229
      %v291 = vunpack.c.h.bf16 %v229
      %v292 = vunpack.c.l.bf16 %v230
      %v293 = vunpack.c.h.bf16 %v230
      %v294 = vunpack.c.l.bf16 %v234
      %v295 = vunpack.c.h.bf16 %v234
      %v296 = vunpack.c.l.bf16 %v235
      %v297 = vunpack.c.h.bf16 %v235
      %v298 = vunpack.c.l.bf16 %v236
      %v299 = vunpack.c.h.bf16 %v236
      %v300 = vunpack.c.l.bf16 %v240
      %v301 = vunpack.c.h.bf16 %v240
      %v302 = vunpack.c.l.bf16 %v241
      %v303 = vunpack.c.h.bf16 %v241
      %v304 = vunpack.c.l.bf16 %v242
      %v305 = vunpack.c.h.bf16 %v242
      %v306 = vunpack.c.l.bf16 %v246
      %v307 = vunpack.c.h.bf16 %v246
      %v308 = vunpack.c.l.bf16 %v247
      %v309 = vunpack.c.h.bf16 %v247
      %v310 = vunpack.c.l.bf16 %v248
      %v311 = vunpack.c.h.bf16 %v248
      %v312 = vunpack.c.l.bf16 %v252
      %v313 = vunpack.c.h.bf16 %v252
      %v314 = vunpack.c.l.bf16 %v253
      %v315 = vunpack.c.h.bf16 %v253
      %v316 = vunpack.c.l.bf16 %v254
      %v317 = vunpack.c.h.bf16 %v254
      %v318 = vunpack.c.l.bf16 %v201
      %v319 = vunpack.c.h.bf16 %v201
      %v320 = vunpack.c.l.bf16 %v202
      %v321 = vunpack.c.h.bf16 %v202
      %v322 = vunpack.c.l.bf16 %v203
      %v323 = vunpack.c.h.bf16 %v203
      %v324 = vunpack.c.l.bf16 %v207
      %v325 = vunpack.c.h.bf16 %v207
      %v326 = vunpack.c.l.bf16 %v208
      %v327 = vunpack.c.h.bf16 %v208
      %v328 = vunpack.c.l.bf16 %v209
      %v329 = vunpack.c.h.bf16 %v209
      %v330 = vunpack.c.l.bf16 %v213
      %v331 = vunpack.c.h.bf16 %v213
      %v332 = vunpack.c.l.bf16 %v214
      %v333 = vunpack.c.h.bf16 %v214
      %v334 = vunpack.c.l.bf16 %v215
      %v335 = vunpack.c.h.bf16 %v215
      %v336 = vunpack.c.l.bf16 %v219
      %v337 = vunpack.c.h.bf16 %v219
      %v338 = vunpack.c.l.bf16 %v220
      %v339 = vunpack.c.h.bf16 %v220
      %v340 = vunpack.c.l.bf16 %v221
      %v341 = vunpack.c.h.bf16 %v221
      %v342 = vunpack.c.l.bf16 %v225
      %v343 = vunpack.c.h.bf16 %v225
      %v344 = vunpack.c.l.bf16 %v226
      %v345 = vunpack.c.h.bf16 %v226
      %v346 = vunpack.c.l.bf16 %v227
      %v347 = vunpack.c.h.bf16 %v227
      %v348 = vunpack.c.l.bf16 %v231
      %v349 = vunpack.c.h.bf16 %v231
      %v350 = vunpack.c.l.bf16 %v232
      %v351 = vunpack.c.h.bf16 %v232
      %v352 = vunpack.c.l.bf16 %v233
      %v353 = vunpack.c.h.bf16 %v233
      %v354 = vunpack.c.l.bf16 %v237
      %v355 = vunpack.c.h.bf16 %v237
      %v356 = vunpack.c.l.bf16 %v238
      %v357 = vunpack.c.h.bf16 %v238
      %v358 = vunpack.c.l.bf16 %v239
      %v359 = vunpack.c.h.bf16 %v239
      %v360 = vunpack.c.l.bf16 %v243
      %v361 = vunpack.c.h.bf16 %v243
      %v362 = vunpack.c.l.bf16 %v244
      %v363 = vunpack.c.h.bf16 %v244
      %v364 = vunpack.c.l.bf16 %v245
      %v365 = vunpack.c.h.bf16 %v245
      %v366 = vunpack.c.l.bf16 %v249
      %v367 = vunpack.c.h.bf16 %v249
      %v368 = vunpack.c.l.bf16 %v250
      %v369 = vunpack.c.h.bf16 %v250
      %v370 = vunpack.c.l.bf16 %v251
      %v371 = vunpack.c.h.bf16 %v251
      %v372 = vunpack.c.l.bf16 %v255
      %v373 = vunpack.c.h.bf16 %v255
      %v374 = vunpack.c.l.bf16 %v256
      %v375 = vunpack.c.h.bf16 %v256
      %v376 = vunpack.c.l.bf16 %v257
      %v377 = vunpack.c.h.bf16 %v257
      %vm498 = vcmask 1046528
      %v499 = vrot.slane %v258, 1
      %v500 = vrot.slane %v318, 1
      %v501 = vsel %vm498, %v499, %v500
      %v502 = vrot.slane %v259, 1
      %v503 = vrot.slane %v319, 1
      %v504 = vsel %vm498, %v502, %v503
      %v505 = vrot.slane %v260, 1
      %v506 = vrot.slane %v320, 1
      %v507 = vsel %vm498, %v505, %v506
      %v508 = vrot.slane %v261, 1
      %v509 = vrot.slane %v321, 1
      %v510 = vsel %vm498, %v508, %v509
      %v511 = vrot.slane %v262, 1
      %v512 = vrot.slane %v322, 1
      %v513 = vsel %vm498, %v511, %v512
      %v514 = vrot.slane %v263, 1
      %v515 = vrot.slane %v323, 1
      %v516 = vsel %vm498, %v514, %v515
      %v517 = vrot.slane %v264, 1
      %v518 = vrot.slane %v324, 1
      %v519 = vsel %vm498, %v517, %v518
      %v520 = vrot.slane %v265, 1
      %v521 = vrot.slane %v325, 1
      %v522 = vsel %vm498, %v520, %v521
      %v523 = vrot.slane %v266, 1
      %v524 = vrot.slane %v326, 1
      %v525 = vsel %vm498, %v523, %v524
      %v526 = vrot.slane %v267, 1
      %v527 = vrot.slane %v327, 1
      %v528 = vsel %vm498, %v526, %v527
      %v529 = vrot.slane %v268, 1
      %v530 = vrot.slane %v328, 1
      %v531 = vsel %vm498, %v529, %v530
      %v532 = vrot.slane %v269, 1
      %v533 = vrot.slane %v329, 1
      %v534 = vsel %vm498, %v532, %v533
      %v535 = vrot.slane %v270, 1
      %v536 = vrot.slane %v330, 1
      %v537 = vsel %vm498, %v535, %v536
      %v538 = vrot.slane %v271, 1
      %v539 = vrot.slane %v331, 1
      %v540 = vsel %vm498, %v538, %v539
      %v541 = vrot.slane %v272, 1
      %v542 = vrot.slane %v332, 1
      %v543 = vsel %vm498, %v541, %v542
      %v544 = vrot.slane %v273, 1
      %v545 = vrot.slane %v333, 1
      %v546 = vsel %vm498, %v544, %v545
      %v547 = vrot.slane %v274, 1
      %v548 = vrot.slane %v334, 1
      %v549 = vsel %vm498, %v547, %v548
      %v550 = vrot.slane %v275, 1
      %v551 = vrot.slane %v335, 1
      %v552 = vsel %vm498, %v550, %v551
      %v553 = vrot.slane %v276, 1
      %v554 = vrot.slane %v336, 1
      %v555 = vsel %vm498, %v553, %v554
      %v556 = vrot.slane %v277, 1
      %v557 = vrot.slane %v337, 1
      %v558 = vsel %vm498, %v556, %v557
      %v559 = vrot.slane %v278, 1
      %v560 = vrot.slane %v338, 1
      %v561 = vsel %vm498, %v559, %v560
      %v562 = vrot.slane %v279, 1
      %v563 = vrot.slane %v339, 1
      %v564 = vsel %vm498, %v562, %v563
      %v565 = vrot.slane %v280, 1
      %v566 = vrot.slane %v340, 1
      %v567 = vsel %vm498, %v565, %v566
      %v568 = vrot.slane %v281, 1
      %v569 = vrot.slane %v341, 1
      %v570 = vsel %vm498, %v568, %v569
      %v571 = vrot.slane %v282, 1
      %v572 = vrot.slane %v342, 1
      %v573 = vsel %vm498, %v571, %v572
      %v574 = vrot.slane %v283, 1
      %v575 = vrot.slane %v343, 1
      %v576 = vsel %vm498, %v574, %v575
      %v577 = vrot.slane %v284, 1
      %v578 = vrot.slane %v344, 1
      %v579 = vsel %vm498, %v577, %v578
      %v580 = vrot.slane %v285, 1
      %v581 = vrot.slane %v345, 1
      %v582 = vsel %vm498, %v580, %v581
      %v583 = vrot.slane %v286, 1
      %v584 = vrot.slane %v346, 1
      %v585 = vsel %vm498, %v583, %v584
      %v586 = vrot.slane %v287, 1
      %v587 = vrot.slane %v347, 1
      %v588 = vsel %vm498, %v586, %v587
      %v589 = vrot.slane %v288, 1
      %v590 = vrot.slane %v348, 1
      %v591 = vsel %vm498, %v589, %v590
      %v592 = vrot.slane %v289, 1
      %v593 = vrot.slane %v349, 1
      %v594 = vsel %vm498, %v592, %v593
      %v595 = vrot.slane %v290, 1
      %v596 = vrot.slane %v350, 1
      %v597 = vsel %vm498, %v595, %v596
      %v598 = vrot.slane %v291, 1
      %v599 = vrot.slane %v351, 1
      %v600 = vsel %vm498, %v598, %v599
      %v601 = vrot.slane %v292, 1
      %v602 = vrot.slane %v352, 1
      %v603 = vsel %vm498, %v601, %v602
      %v604 = vrot.slane %v293, 1
      %v605 = vrot.slane %v353, 1
      %v606 = vsel %vm498, %v604, %v605
      %v607 = vrot.slane %v294, 1
      %v608 = vrot.slane %v354, 1
      %v609 = vsel %vm498, %v607, %v608
      %v610 = vrot.slane %v295, 1
      %v611 = vrot.slane %v355, 1
      %v612 = vsel %vm498, %v610, %v611
      %v613 = vrot.slane %v296, 1
      %v614 = vrot.slane %v356, 1
      %v615 = vsel %vm498, %v613, %v614
      %v616 = vrot.slane %v297, 1
      %v617 = vrot.slane %v357, 1
      %v618 = vsel %vm498, %v616, %v617
      %v619 = vrot.slane %v298, 1
      %v620 = vrot.slane %v358, 1
      %v621 = vsel %vm498, %v619, %v620
      %v622 = vrot.slane %v299, 1
      %v623 = vrot.slane %v359, 1
      %v624 = vsel %vm498, %v622, %v623
      %v625 = vrot.slane %v300, 1
      %v626 = vrot.slane %v360, 1
      %v627 = vsel %vm498, %v625, %v626
      %v628 = vrot.slane %v301, 1
      %v629 = vrot.slane %v361, 1
      %v630 = vsel %vm498, %v628, %v629
      %v631 = vrot.slane %v302, 1
      %v632 = vrot.slane %v362, 1
      %v633 = vsel %vm498, %v631, %v632
      %v634 = vrot.slane %v303, 1
      %v635 = vrot.slane %v363, 1
      %v636 = vsel %vm498, %v634, %v635
      %v637 = vrot.slane %v304, 1
      %v638 = vrot.slane %v364, 1
      %v639 = vsel %vm498, %v637, %v638
      %v640 = vrot.slane %v305, 1
      %v641 = vrot.slane %v365, 1
      %v642 = vsel %vm498, %v640, %v641
      %v643 = vrot.slane %v306, 1
      %v644 = vrot.slane %v366, 1
      %v645 = vsel %vm498, %v643, %v644
      %v646 = vrot.slane %v307, 1
      %v647 = vrot.slane %v367, 1
      %v648 = vsel %vm498, %v646, %v647
      %v649 = vrot.slane %v308, 1
      %v650 = vrot.slane %v368, 1
      %v651 = vsel %vm498, %v649, %v650
      %v652 = vrot.slane %v309, 1
      %v653 = vrot.slane %v369, 1
      %v654 = vsel %vm498, %v652, %v653
      %v655 = vrot.slane %v310, 1
      %v656 = vrot.slane %v370, 1
      %v657 = vsel %vm498, %v655, %v656
      %v658 = vrot.slane %v311, 1
      %v659 = vrot.slane %v371, 1
      %v660 = vsel %vm498, %v658, %v659
      %v661 = vrot.slane %v312, 1
      %v662 = vrot.slane %v372, 1
      %v663 = vsel %vm498, %v661, %v662
      %v664 = vrot.slane %v313, 1
      %v665 = vrot.slane %v373, 1
      %v666 = vsel %vm498, %v664, %v665
      %v667 = vrot.slane %v314, 1
      %v668 = vrot.slane %v374, 1
      %v669 = vsel %vm498, %v667, %v668
      %v670 = vrot.slane %v315, 1
      %v671 = vrot.slane %v375, 1
      %v672 = vsel %vm498, %v670, %v671
      %v673 = vrot.slane %v316, 1
      %v674 = vrot.slane %v376, 1
      %v675 = vsel %vm498, %v673, %v674
      %v676 = vrot.slane %v317, 1
      %v677 = vrot.slane %v377, 1
      %v678 = vsel %vm498, %v676, %v677
      %v739 = vadd.f32 %v258, %v501
      %v740 = vadd.f32 %v259, %v504
      %v741 = vadd.f32 %v260, %v507
      %v742 = vadd.f32 %v261, %v510
      %v743 = vadd.f32 %v262, %v513
      %v744 = vadd.f32 %v263, %v516
      %v745 = vadd.f32 %v264, %v519
      %v746 = vadd.f32 %v265, %v522
      %v747 = vadd.f32 %v266, %v525
      %v748 = vadd.f32 %v267, %v528
      %v749 = vadd.f32 %v268, %v531
      %v750 = vadd.f32 %v269, %v534
      %v751 = vadd.f32 %v270, %v537
      %v752 = vadd.f32 %v271, %v540
      %v753 = vadd.f32 %v272, %v543
      %v754 = vadd.f32 %v273, %v546
      %v755 = vadd.f32 %v274, %v549
      %v756 = vadd.f32 %v275, %v552
      %v757 = vadd.f32 %v276, %v555
      %v758 = vadd.f32 %v277, %v558
      %v759 = vadd.f32 %v278, %v561
      %v760 = vadd.f32 %v279, %v564
      %v761 = vadd.f32 %v280, %v567
      %v762 = vadd.f32 %v281, %v570
      %v763 = vadd.f32 %v282, %v573
      %v764 = vadd.f32 %v283, %v576
      %v765 = vadd.f32 %v284, %v579
      %v766 = vadd.f32 %v285, %v582
      %v767 = vadd.f32 %v286, %v585
      %v768 = vadd.f32 %v287, %v588
      %v769 = vadd.f32 %v288, %v591
      %v770 = vadd.f32 %v289, %v594
      %v771 = vadd.f32 %v290, %v597
      %v772 = vadd.f32 %v291, %v600
      %v773 = vadd.f32 %v292, %v603
      %v774 = vadd.f32 %v293, %v606
      %v775 = vadd.f32 %v294, %v609
      %v776 = vadd.f32 %v295, %v612
      %v777 = vadd.f32 %v296, %v615
      %v778 = vadd.f32 %v297, %v618
      %v779 = vadd.f32 %v298, %v621
      %v780 = vadd.f32 %v299, %v624
      %v781 = vadd.f32 %v300, %v627
      %v782 = vadd.f32 %v301, %v630
      %v783 = vadd.f32 %v302, %v633
      %v784 = vadd.f32 %v303, %v636
      %v785 = vadd.f32 %v304, %v639
      %v786 = vadd.f32 %v305, %v642
      %v787 = vadd.f32 %v306, %v645
      %v788 = vadd.f32 %v307, %v648
      %v789 = vadd.f32 %v308, %v651
      %v790 = vadd.f32 %v309, %v654
      %v791 = vadd.f32 %v310, %v657
      %v792 = vadd.f32 %v311, %v660
      %v793 = vadd.f32 %v312, %v663
      %v794 = vadd.f32 %v313, %v666
      %v795 = vadd.f32 %v314, %v669
      %v796 = vadd.f32 %v315, %v672
      %v797 = vadd.f32 %v316, %v675
      %v798 = vadd.f32 %v317, %v678
      %vm799 = vcmask 1045504
      %v800 = vrot.slane %v258, 2
      %v801 = vrot.slane %v318, 2
      %v802 = vsel %vm799, %v800, %v801
      %v803 = vrot.slane %v259, 2
      %v804 = vrot.slane %v319, 2
      %v805 = vsel %vm799, %v803, %v804
      %v806 = vrot.slane %v260, 2
      %v807 = vrot.slane %v320, 2
      %v808 = vsel %vm799, %v806, %v807
      %v809 = vrot.slane %v261, 2
      %v810 = vrot.slane %v321, 2
      %v811 = vsel %vm799, %v809, %v810
      %v812 = vrot.slane %v262, 2
      %v813 = vrot.slane %v322, 2
      %v814 = vsel %vm799, %v812, %v813
      %v815 = vrot.slane %v263, 2
      %v816 = vrot.slane %v323, 2
      %v817 = vsel %vm799, %v815, %v816
      %v818 = vrot.slane %v264, 2
      %v819 = vrot.slane %v324, 2
      %v820 = vsel %vm799, %v818, %v819
      %v821 = vrot.slane %v265, 2
      %v822 = vrot.slane %v325, 2
      %v823 = vsel %vm799, %v821, %v822
      %v824 = vrot.slane %v266, 2
      %v825 = vrot.slane %v326, 2
      %v826 = vsel %vm799, %v824, %v825
      %v827 = vrot.slane %v267, 2
      %v828 = vrot.slane %v327, 2
      %v829 = vsel %vm799, %v827, %v828
      %v830 = vrot.slane %v268, 2
      %v831 = vrot.slane %v328, 2
      %v832 = vsel %vm799, %v830, %v831
      %v833 = vrot.slane %v269, 2
      %v834 = vrot.slane %v329, 2
      %v835 = vsel %vm799, %v833, %v834
      %v836 = vrot.slane %v270, 2
      %v837 = vrot.slane %v330, 2
      %v838 = vsel %vm799, %v836, %v837
      %v839 = vrot.slane %v271, 2
      %v840 = vrot.slane %v331, 2
      %v841 = vsel %vm799, %v839, %v840
      %v842 = vrot.slane %v272, 2
      %v843 = vrot.slane %v332, 2
      %v844 = vsel %vm799, %v842, %v843
      %v845 = vrot.slane %v273, 2
      %v846 = vrot.slane %v333, 2
      %v847 = vsel %vm799, %v845, %v846
      %v848 = vrot.slane %v274, 2
      %v849 = vrot.slane %v334, 2
      %v850 = vsel %vm799, %v848, %v849
      %v851 = vrot.slane %v275, 2
      %v852 = vrot.slane %v335, 2
      %v853 = vsel %vm799, %v851, %v852
      %v854 = vrot.slane %v276, 2
      %v855 = vrot.slane %v336, 2
      %v856 = vsel %vm799, %v854, %v855
      %v857 = vrot.slane %v277, 2
      %v858 = vrot.slane %v337, 2
      %v859 = vsel %vm799, %v857, %v858
      %v860 = vrot.slane %v278, 2
      %v861 = vrot.slane %v338, 2
      %v862 = vsel %vm799, %v860, %v861
      %v863 = vrot.slane %v279, 2
      %v864 = vrot.slane %v339, 2
      %v865 = vsel %vm799, %v863, %v864
      %v866 = vrot.slane %v280, 2
      %v867 = vrot.slane %v340, 2
      %v868 = vsel %vm799, %v866, %v867
      %v869 = vrot.slane %v281, 2
      %v870 = vrot.slane %v341, 2
      %v871 = vsel %vm799, %v869, %v870
      %v872 = vrot.slane %v282, 2
      %v873 = vrot.slane %v342, 2
      %v874 = vsel %vm799, %v872, %v873
      %v875 = vrot.slane %v283, 2
      %v876 = vrot.slane %v343, 2
      %v877 = vsel %vm799, %v875, %v876
      %v878 = vrot.slane %v284, 2
      %v879 = vrot.slane %v344, 2
      %v880 = vsel %vm799, %v878, %v879
      %v881 = vrot.slane %v285, 2
      %v882 = vrot.slane %v345, 2
      %v883 = vsel %vm799, %v881, %v882
      %v884 = vrot.slane %v286, 2
      %v885 = vrot.slane %v346, 2
      %v886 = vsel %vm799, %v884, %v885
      %v887 = vrot.slane %v287, 2
      %v888 = vrot.slane %v347, 2
      %v889 = vsel %vm799, %v887, %v888
      %v890 = vrot.slane %v288, 2
      %v891 = vrot.slane %v348, 2
      %v892 = vsel %vm799, %v890, %v891
      %v893 = vrot.slane %v289, 2
      %v894 = vrot.slane %v349, 2
      %v895 = vsel %vm799, %v893, %v894
      %v896 = vrot.slane %v290, 2
      %v897 = vrot.slane %v350, 2
      %v898 = vsel %vm799, %v896, %v897
      %v899 = vrot.slane %v291, 2
      %v900 = vrot.slane %v351, 2
      %v901 = vsel %vm799, %v899, %v900
      %v902 = vrot.slane %v292, 2
      %v903 = vrot.slane %v352, 2
      %v904 = vsel %vm799, %v902, %v903
      %v905 = vrot.slane %v293, 2
      %v906 = vrot.slane %v353, 2
      %v907 = vsel %vm799, %v905, %v906
      %v908 = vrot.slane %v294, 2
      %v909 = vrot.slane %v354, 2
      %v910 = vsel %vm799, %v908, %v909
      %v911 = vrot.slane %v295, 2
      %v912 = vrot.slane %v355, 2
      %v913 = vsel %vm799, %v911, %v912
      %v914 = vrot.slane %v296, 2
      %v915 = vrot.slane %v356, 2
      %v916 = vsel %vm799, %v914, %v915
      %v917 = vrot.slane %v297, 2
      %v918 = vrot.slane %v357, 2
      %v919 = vsel %vm799, %v917, %v918
      %v920 = vrot.slane %v298, 2
      %v921 = vrot.slane %v358, 2
      %v922 = vsel %vm799, %v920, %v921
      %v923 = vrot.slane %v299, 2
      %v924 = vrot.slane %v359, 2
      %v925 = vsel %vm799, %v923, %v924
      %v926 = vrot.slane %v300, 2
      %v927 = vrot.slane %v360, 2
      %v928 = vsel %vm799, %v926, %v927
      %v929 = vrot.slane %v301, 2
      %v930 = vrot.slane %v361, 2
      %v931 = vsel %vm799, %v929, %v930
      %v932 = vrot.slane %v302, 2
      %v933 = vrot.slane %v362, 2
      %v934 = vsel %vm799, %v932, %v933
      %v935 = vrot.slane %v303, 2
      %v936 = vrot.slane %v363, 2
      %v937 = vsel %vm799, %v935, %v936
      %v938 = vrot.slane %v304, 2
      %v939 = vrot.slane %v364, 2
      %v940 = vsel %vm799, %v938, %v939
      %v941 = vrot.slane %v305, 2
      %v942 = vrot.slane %v365, 2
      %v943 = vsel %vm799, %v941, %v942
      %v944 = vrot.slane %v306, 2
      %v945 = vrot.slane %v366, 2
      %v946 = vsel %vm799, %v944, %v945
      %v947 = vrot.slane %v307, 2
      %v948 = vrot.slane %v367, 2
      %v949 = vsel %vm799, %v947, %v948
      %v950 = vrot.slane %v308, 2
      %v951 = vrot.slane %v368, 2
      %v952 = vsel %vm799, %v950, %v951
      %v953 = vrot.slane %v309, 2
      %v954 = vrot.slane %v369, 2
      %v955 = vsel %vm799, %v953, %v954
      %v956 = vrot.slane %v310, 2
      %v957 = vrot.slane %v370, 2
      %v958 = vsel %vm799, %v956, %v957
      %v959 = vrot.slane %v311, 2
      %v960 = vrot.slane %v371, 2
      %v961 = vsel %vm799, %v959, %v960
      %v962 = vrot.slane %v312, 2
      %v963 = vrot.slane %v372, 2
      %v964 = vsel %vm799, %v962, %v963
      %v965 = vrot.slane %v313, 2
      %v966 = vrot.slane %v373, 2
      %v967 = vsel %vm799, %v965, %v966
      %v968 = vrot.slane %v314, 2
      %v969 = vrot.slane %v374, 2
      %v970 = vsel %vm799, %v968, %v969
      %v971 = vrot.slane %v315, 2
      %v972 = vrot.slane %v375, 2
      %v973 = vsel %vm799, %v971, %v972
      %v974 = vrot.slane %v316, 2
      %v975 = vrot.slane %v376, 2
      %v976 = vsel %vm799, %v974, %v975
      %v977 = vrot.slane %v317, 2
      %v978 = vrot.slane %v377, 2
      %v979 = vsel %vm799, %v977, %v978
      %v1040 = vadd.f32 %v739, %v802
      %v1041 = vadd.f32 %v740, %v805
      %v1042 = vadd.f32 %v741, %v808
      %v1043 = vadd.f32 %v742, %v811
      %v1044 = vadd.f32 %v743, %v814
      %v1045 = vadd.f32 %v744, %v817
      %v1046 = vadd.f32 %v745, %v820
      %v1047 = vadd.f32 %v746, %v823
      %v1048 = vadd.f32 %v747, %v826
      %v1049 = vadd.f32 %v748, %v829
      %v1050 = vadd.f32 %v749, %v832
      %v1051 = vadd.f32 %v750, %v835
      %v1052 = vadd.f32 %v751, %v838
      %v1053 = vadd.f32 %v752, %v841
      %v1054 = vadd.f32 %v753, %v844
      %v1055 = vadd.f32 %v754, %v847
      %v1056 = vadd.f32 %v755, %v850
      %v1057 = vadd.f32 %v756, %v853
      %v1058 = vadd.f32 %v757, %v856
      %v1059 = vadd.f32 %v758, %v859
      %v1060 = vadd.f32 %v759, %v862
      %v1061 = vadd.f32 %v760, %v865
      %v1062 = vadd.f32 %v761, %v868
      %v1063 = vadd.f32 %v762, %v871
      %v1064 = vadd.f32 %v763, %v874
      %v1065 = vadd.f32 %v764, %v877
      %v1066 = vadd.f32 %v765, %v880
      %v1067 = vadd.f32 %v766, %v883
      %v1068 = vadd.f32 %v767, %v886
      %v1069 = vadd.f32 %v768, %v889
      %v1070 = vadd.f32 %v769, %v892
      %v1071 = vadd.f32 %v770, %v895
      %v1072 = vadd.f32 %v771, %v898
      %v1073 = vadd.f32 %v772, %v901
      %v1074 = vadd.f32 %v773, %v904
      %v1075 = vadd.f32 %v774, %v907
      %v1076 = vadd.f32 %v775, %v910
      %v1077 = vadd.f32 %v776, %v913
      %v1078 = vadd.f32 %v777, %v916
      %v1079 = vadd.f32 %v778, %v919
      %v1080 = vadd.f32 %v779, %v922
      %v1081 = vadd.f32 %v780, %v925
      %v1082 = vadd.f32 %v781, %v928
      %v1083 = vadd.f32 %v782, %v931
      %v1084 = vadd.f32 %v783, %v934
      %v1085 = vadd.f32 %v784, %v937
      %v1086 = vadd.f32 %v785, %v940
      %v1087 = vadd.f32 %v786, %v943
      %v1088 = vadd.f32 %v787, %v946
      %v1089 = vadd.f32 %v788, %v949
      %v1090 = vadd.f32 %v789, %v952
      %v1091 = vadd.f32 %v790, %v955
      %v1092 = vadd.f32 %v791, %v958
      %v1093 = vadd.f32 %v792, %v961
      %v1094 = vadd.f32 %v793, %v964
      %v1095 = vadd.f32 %v794, %v967
      %v1096 = vadd.f32 %v795, %v970
      %v1097 = vadd.f32 %v796, %v973
      %v1098 = vadd.f32 %v797, %v976
      %v1099 = vadd.f32 %v798, %v979
      %v1100 = vadd.f32 %v1040, %v1046
      %v1101 = vadd.f32 %v1041, %v1047
      %v1102 = vadd.f32 %v1042, %v1048
      %v1103 = vadd.f32 %v1043, %v1049
      %v1104 = vadd.f32 %v1044, %v1050
      %v1105 = vadd.f32 %v1045, %v1051
      %v1106 = vadd.f32 %v1046, %v1052
      %v1107 = vadd.f32 %v1047, %v1053
      %v1108 = vadd.f32 %v1048, %v1054
      %v1109 = vadd.f32 %v1049, %v1055
      %v1110 = vadd.f32 %v1050, %v1056
      %v1111 = vadd.f32 %v1051, %v1057
      %v1112 = vadd.f32 %v1052, %v1058
      %v1113 = vadd.f32 %v1053, %v1059
      %v1114 = vadd.f32 %v1054, %v1060
      %v1115 = vadd.f32 %v1055, %v1061
      %v1116 = vadd.f32 %v1056, %v1062
      %v1117 = vadd.f32 %v1057, %v1063
      %v1118 = vadd.f32 %v1058, %v1064
      %v1119 = vadd.f32 %v1059, %v1065
      %v1120 = vadd.f32 %v1060, %v1066
      %v1121 = vadd.f32 %v1061, %v1067
      %v1122 = vadd.f32 %v1062, %v1068
      %v1123 = vadd.f32 %v1063, %v1069
      %v1124 = vadd.f32 %v1064, %v1070
      %v1125 = vadd.f32 %v1065, %v1071
      %v1126 = vadd.f32 %v1066, %v1072
      %v1127 = vadd.f32 %v1067, %v1073
      %v1128 = vadd.f32 %v1068, %v1074
      %v1129 = vadd.f32 %v1069, %v1075
      %v1130 = vadd.f32 %v1070, %v1076
      %v1131 = vadd.f32 %v1071, %v1077
      %v1132 = vadd.f32 %v1072, %v1078
      %v1133 = vadd.f32 %v1073, %v1079
      %v1134 = vadd.f32 %v1074, %v1080
      %v1135 = vadd.f32 %v1075, %v1081
      %v1136 = vadd.f32 %v1076, %v1082
      %v1137 = vadd.f32 %v1077, %v1083
      %v1138 = vadd.f32 %v1078, %v1084
      %v1139 = vadd.f32 %v1079, %v1085
      %v1140 = vadd.f32 %v1080, %v1086
      %v1141 = vadd.f32 %v1081, %v1087
      %v1142 = vadd.f32 %v1082, %v1088
      %v1143 = vadd.f32 %v1083, %v1089
      %v1144 = vadd.f32 %v1084, %v1090
      %v1145 = vadd.f32 %v1085, %v1091
      %v1146 = vadd.f32 %v1086, %v1092
      %v1147 = vadd.f32 %v1087, %v1093
      %v1148 = vadd.f32 %v1100, %v1052
      %v1149 = vadd.f32 %v1101, %v1053
      %v1150 = vadd.f32 %v1102, %v1054
      %v1151 = vadd.f32 %v1103, %v1055
      %v1152 = vadd.f32 %v1104, %v1056
      %v1153 = vadd.f32 %v1105, %v1057
      %v1154 = vadd.f32 %v1106, %v1058
      %v1155 = vadd.f32 %v1107, %v1059
      %v1156 = vadd.f32 %v1108, %v1060
      %v1157 = vadd.f32 %v1109, %v1061
      %v1158 = vadd.f32 %v1110, %v1062
      %v1159 = vadd.f32 %v1111, %v1063
      %v1160 = vadd.f32 %v1112, %v1064
      %v1161 = vadd.f32 %v1113, %v1065
      %v1162 = vadd.f32 %v1114, %v1066
      %v1163 = vadd.f32 %v1115, %v1067
      %v1164 = vadd.f32 %v1116, %v1068
      %v1165 = vadd.f32 %v1117, %v1069
      %v1166 = vadd.f32 %v1118, %v1070
      %v1167 = vadd.f32 %v1119, %v1071
      %v1168 = vadd.f32 %v1120, %v1072
      %v1169 = vadd.f32 %v1121, %v1073
      %v1170 = vadd.f32 %v1122, %v1074
      %v1171 = vadd.f32 %v1123, %v1075
      %v1172 = vadd.f32 %v1124, %v1076
      %v1173 = vadd.f32 %v1125, %v1077
      %v1174 = vadd.f32 %v1126, %v1078
      %v1175 = vadd.f32 %v1127, %v1079
      %v1176 = vadd.f32 %v1128, %v1080
      %v1177 = vadd.f32 %v1129, %v1081
      %v1178 = vadd.f32 %v1130, %v1082
      %v1179 = vadd.f32 %v1131, %v1083
      %v1180 = vadd.f32 %v1132, %v1084
      %v1181 = vadd.f32 %v1133, %v1085
      %v1182 = vadd.f32 %v1134, %v1086
      %v1183 = vadd.f32 %v1135, %v1087
      %v1184 = vadd.f32 %v1136, %v1088
      %v1185 = vadd.f32 %v1137, %v1089
      %v1186 = vadd.f32 %v1138, %v1090
      %v1187 = vadd.f32 %v1139, %v1091
      %v1188 = vadd.f32 %v1140, %v1092
      %v1189 = vadd.f32 %v1141, %v1093
      %v1190 = vadd.f32 %v1142, %v1094
      %v1191 = vadd.f32 %v1143, %v1095
      %v1192 = vadd.f32 %v1144, %v1096
      %v1193 = vadd.f32 %v1145, %v1097
      %v1194 = vadd.f32 %v1146, %v1098
      %v1195 = vadd.f32 %v1147, %v1099
      %v1196 = vpack.c.bf16 %v1154, %v1148
      %v1197 = vpack.c.bf16 %v1155, %v1149
      %v1198 = vpack.c.bf16 %v1156, %v1150
      %v1199 = vpack.c.bf16 %v1157, %v1151
      %v1200 = vpack.c.bf16 %v1158, %v1152
      %v1201 = vpack.c.bf16 %v1159, %v1153
      %v1202 = vpack.c.bf16 %v1166, %v1160
      %v1203 = vpack.c.bf16 %v1167, %v1161
      %v1204 = vpack.c.bf16 %v1168, %v1162
      %v1205 = vpack.c.bf16 %v1169, %v1163
      %v1206 = vpack.c.bf16 %v1170, %v1164
      %v1207 = vpack.c.bf16 %v1171, %v1165
      %v1208 = vpack.c.bf16 %v1178, %v1172
      %v1209 = vpack.c.bf16 %v1179, %v1173
      %v1210 = vpack.c.bf16 %v1180, %v1174
      %v1211 = vpack.c.bf16 %v1181, %v1175
      %v1212 = vpack.c.bf16 %v1182, %v1176
      %v1213 = vpack.c.bf16 %v1183, %v1177
      %v1214 = vpack.c.bf16 %v1190, %v1184
      %v1215 = vpack.c.bf16 %v1191, %v1185
      %v1216 = vpack.c.bf16 %v1192, %v1186
      %v1217 = vpack.c.bf16 %v1193, %v1187
      %v1218 = vpack.c.bf16 %v1194, %v1188
      %v1219 = vpack.c.bf16 %v1195, %v1189
      %v1220 = vld [vmem:[%s1] sm:$0xff]
      %v1221 = vld [vmem:[%s1 + $0x8] sm:$0xff]
      %v1222 = vld [vmem:[%s1 + $0x10] sm:$0xff]
      %v1223 = vld [vmem:[%s1 + $0x18] sm:$0xff]
      %v1224 = vld [vmem:[%s1 + $0x20] sm:$0xff]
      %v1225 = vld [vmem:[%s1 + $0x28] sm:$0xff]
      %v1226 = vld [vmem:[%s1 + $0x30] sm:$0xff]
      %v1227 = vld [vmem:[%s1 + $0x38] sm:$0xff]
      %v1228 = vld [vmem:[%s1 + $0x40] sm:$0xff]
      %v1229 = vld [vmem:[%s1 + $0x48] sm:$0xff]
      %v1230 = vld [vmem:[%s1 + $0x50] sm:$0xff]
      %v1231 = vld [vmem:[%s1 + $0x58] sm:$0xff]
      %v1232 = vld [vmem:[%s1 + $0x60] sm:$0xff]
      %v1233 = vld [vmem:[%s1 + $0x68] sm:$0xff]
      %v1234 = vld [vmem:[%s1 + $0x70] sm:$0xff]
      %v1235 = vld [vmem:[%s1 + $0x78] sm:$0xff]
      %v1236 = vld [vmem:[%s1 + $0x80] sm:$0xff]
      %v1237 = vld [vmem:[%s1 + $0x88] sm:$0xff]
      %v1238 = vld [vmem:[%s1 + $0x90] sm:$0xff]
      %v1239 = vld [vmem:[%s1 + $0x98] sm:$0xff]
      %v1240 = vld [vmem:[%s1 + $0xa0] sm:$0xff]
      %v1241 = vld [vmem:[%s1 + $0xa8] sm:$0xff]
      %v1242 = vld [vmem:[%s1 + $0xb0] sm:$0xff]
      %v1243 = vld [vmem:[%s1 + $0xb8] sm:$0xff]
      %v1244 = vld [vmem:[%s1 + $0xc0] sm:$0xff]
      %v1245 = vld [vmem:[%s1 + $0xc8] sm:$0xff]
      %v1246 = vld [vmem:[%s1 + $0xd0] sm:$0xff]
      %v1247 = vld [vmem:[%s1 + $0xd8] sm:$0xff]
      %v1248 = vld [vmem:[%s1 + $0xe0] sm:$0xff]
      %v1249 = vld [vmem:[%s1 + $0xe8] sm:$0xff]
      %v1250 = vld [vmem:[%s1 + $0xf0] sm:$0xff]
      %v1251 = vld [vmem:[%s1 + $0xf8] sm:$0xff]
      %v1252 = vld [vmem:[%s1 + $0x100] sm:$0xff]
      %v1253 = vld [vmem:[%s1 + $0x108] sm:$0xff]
      %v1254 = vld [vmem:[%s1 + $0x110] sm:$0xff]
      %v1255 = vld [vmem:[%s1 + $0x118] sm:$0xff]
      %v1256 = vld [vmem:[%s1 + $0x120] sm:$0xff]
      %v1257 = vld [vmem:[%s1 + $0x128] sm:$0xff]
      %v1258 = vld [vmem:[%s1 + $0x130] sm:$0xff]
      %v1259 = vld [vmem:[%s1 + $0x138] sm:$0xff]
      %v1260 = vld [vmem:[%s1 + $0x140] sm:$0xff]
      %v1261 = vld [vmem:[%s1 + $0x148] sm:$0xff]
      %v1262 = vld [vmem:[%s1 + $0x150] sm:$0xff]
      %v1263 = vld [vmem:[%s1 + $0x158] sm:$0xff]
      %v1264 = vld [vmem:[%s1 + $0x160] sm:$0xff]
      %v1265 = vld [vmem:[%s1 + $0x168] sm:$0xff]
      %v1266 = vld [vmem:[%s1 + $0x170] sm:$0xff]
      %v1267 = vld [vmem:[%s1 + $0x178] sm:$0xff]
      %v1268 = vld [vmem:[%s1 + $0x180] sm:$0xff]
      %v1269 = vld [vmem:[%s1 + $0x188] sm:$0xff]
      %v1270 = vld [vmem:[%s1 + $0x190] sm:$0xff]
      %v1271 = vld [vmem:[%s1 + $0x198] sm:$0xff]
      %v1272 = vld [vmem:[%s1 + $0x1a0] sm:$0xff]
      %v1273 = vld [vmem:[%s1 + $0x1a8] sm:$0xff]
      %v1274 = vld [vmem:[%s1 + $0x1b0] sm:$0xff]
      %v1275 = vld [vmem:[%s1 + $0x1b8] sm:$0xff]
      %v1276 = vld [vmem:[%s1 + $0x1c0] sm:$0xff]
      %v1277 = vld [vmem:[%s1 + $0x1c8] sm:$0xff]
      %v1278 = vld [vmem:[%s1 + $0x1d0] sm:$0xff]
      %v1279 = vld [vmem:[%s1 + $0x1d8] sm:$0xff]
      %v1280 = vld [vmem:[%s1 + $0x1e0] sm:$0xff]
      %v1281 = vld [vmem:[%s1 + $0x1e8] sm:$0xff]
      %v1282 = vld [vmem:[%s1 + $0x1f0] sm:$0xff]
      %v1283 = vld [vmem:[%s1 + $0x1f8] sm:$0xff]
      %v1284 = vld [vmem:[%s1 + $0x200] sm:$0xff]
      %v1285 = vld [vmem:[%s1 + $0x208] sm:$0xff]
      %v1286 = vld [vmem:[%s1 + $0x210] sm:$0xff]
      %v1287 = vld [vmem:[%s1 + $0x218] sm:$0xff]
      %v1288 = vld [vmem:[%s1 + $0x220] sm:$0xff]
      %v1289 = vld [vmem:[%s1 + $0x228] sm:$0xff]
      %v1290 = vld [vmem:[%s1 + $0x230] sm:$0xff]
      %v1291 = vld [vmem:[%s1 + $0x238] sm:$0xff]
      %v1292 = vld [vmem:[%s1 + $0x240] sm:$0xff]
      %v1293 = vld [vmem:[%s1 + $0x248] sm:$0xff]
      %v1294 = vld [vmem:[%s1 + $0x250] sm:$0xff]
      %v1295 = vld [vmem:[%s1 + $0x258] sm:$0xff]
      %v1296 = vld [vmem:[%s1 + $0x260] sm:$0xff]
      %v1297 = vld [vmem:[%s1 + $0x268] sm:$0xff]
      %v1298 = vld [vmem:[%s1 + $0x270] sm:$0xff]
      %v1299 = vld [vmem:[%s1 + $0x278] sm:$0xff]
      %v1300 = vld [vmem:[%s1 + $0x280] sm:$0xff]
      %v1301 = vld [vmem:[%s1 + $0x288] sm:$0xff]
      %v1302 = vld [vmem:[%s1 + $0x290] sm:$0xff]
      %v1303 = vld [vmem:[%s1 + $0x298] sm:$0xff]
      %v1304 = vld [vmem:[%s1 + $0x2a0] sm:$0xff]
      %v1305 = vld [vmem:[%s1 + $0x2a8] sm:$0xff]
      %v1306 = vld [vmem:[%s1 + $0x2b0] sm:$0xff]
      %v1307 = vld [vmem:[%s1 + $0x2b8] sm:$0xff]
      %v1308 = vld [vmem:[%s1 + $0x2c0] sm:$0xff]
      %v1309 = vld [vmem:[%s1 + $0x2c8] sm:$0xff]
      %v1310 = vld [vmem:[%s1 + $0x2d0] sm:$0xff]
      %v1311 = vld [vmem:[%s1 + $0x2d8] sm:$0xff]
      %v1312 = vld [vmem:[%s1 + $0x2e0] sm:$0xff]
      %v1313 = vld [vmem:[%s1 + $0x2e8] sm:$0xff]
      %v1314 = vld [vmem:[%s1 + $0x2f0] sm:$0xff]
      %v1315 = vld [vmem:[%s1 + $0x2f8] sm:$0xff]
      %v1412 = vunpack.c.l.b16 %v1220
      %v1413 = vunpack.c.h.b16 %v1220
      %v1414 = vunpack.c.l.b16 %v1221
      %v1415 = vunpack.c.h.b16 %v1221
      %v1416 = vunpack.c.l.b16 %v1222
      %v1417 = vunpack.c.h.b16 %v1222
      %v1418 = vunpack.c.l.b16 %v1223
      %v1419 = vunpack.c.h.b16 %v1223
      %v1420 = vunpack.c.l.b16 %v1224
      %v1421 = vunpack.c.h.b16 %v1224
      %v1422 = vunpack.c.l.b16 %v1225
      %v1423 = vunpack.c.h.b16 %v1225
      %v1424 = vunpack.c.l.b16 %v1226
      %v1425 = vunpack.c.h.b16 %v1226
      %v1426 = vunpack.c.l.b16 %v1227
      %v1427 = vunpack.c.h.b16 %v1227
      %v1428 = vunpack.c.l.b16 %v1228
      %v1429 = vunpack.c.h.b16 %v1228
      %v1430 = vunpack.c.l.b16 %v1229
      %v1431 = vunpack.c.h.b16 %v1229
      %v1432 = vunpack.c.l.b16 %v1230
      %v1433 = vunpack.c.h.b16 %v1230
      %v1434 = vunpack.c.l.b16 %v1231
      %v1435 = vunpack.c.h.b16 %v1231
      %v1436 = vunpack.c.l.b16 %v1232
      %v1437 = vunpack.c.h.b16 %v1232
      %v1438 = vunpack.c.l.b16 %v1233
      %v1439 = vunpack.c.h.b16 %v1233
      %v1440 = vunpack.c.l.b16 %v1234
      %v1441 = vunpack.c.h.b16 %v1234
      %v1442 = vunpack.c.l.b16 %v1235
      %v1443 = vunpack.c.h.b16 %v1235
      %v1444 = vunpack.c.l.b16 %v1236
      %v1445 = vunpack.c.h.b16 %v1236
      %v1446 = vunpack.c.l.b16 %v1237
      %v1447 = vunpack.c.h.b16 %v1237
      %v1448 = vunpack.c.l.b16 %v1238
      %v1449 = vunpack.c.h.b16 %v1238
      %v1450 = vunpack.c.l.b16 %v1239
      %v1451 = vunpack.c.h.b16 %v1239
      %v1452 = vunpack.c.l.b16 %v1240
      %v1453 = vunpack.c.h.b16 %v1240
      %v1454 = vunpack.c.l.b16 %v1241
      %v1455 = vunpack.c.h.b16 %v1241
      %v1456 = vunpack.c.l.b16 %v1242
      %v1457 = vunpack.c.h.b16 %v1242
      %v1458 = vunpack.c.l.b16 %v1243
      %v1459 = vunpack.c.h.b16 %v1243
      %v1460 = vunpack.c.l.b16 %v1244
      %v1461 = vunpack.c.h.b16 %v1244
      %v1462 = vunpack.c.l.b16 %v1245
      %v1463 = vunpack.c.h.b16 %v1245
      %v1464 = vunpack.c.l.b16 %v1246
      %v1465 = vunpack.c.h.b16 %v1246
      %v1466 = vunpack.c.l.b16 %v1247
      %v1467 = vunpack.c.h.b16 %v1247
      %v1468 = vunpack.c.l.b16 %v1248
      %v1469 = vunpack.c.h.b16 %v1248
      %v1470 = vunpack.c.l.b16 %v1249
      %v1471 = vunpack.c.h.b16 %v1249
      %v1472 = vunpack.c.l.b16 %v1250
      %v1473 = vunpack.c.h.b16 %v1250
      %v1474 = vunpack.c.l.b16 %v1251
      %v1475 = vunpack.c.h.b16 %v1251
      %v1476 = vunpack.c.l.b16 %v1252
      %v1477 = vunpack.c.h.b16 %v1252
      %v1478 = vunpack.c.l.b16 %v1253
      %v1479 = vunpack.c.h.b16 %v1253
      %v1480 = vunpack.c.l.b16 %v1254
      %v1481 = vunpack.c.h.b16 %v1254
      %v1482 = vunpack.c.l.b16 %v1255
      %v1483 = vunpack.c.h.b16 %v1255
      %v1484 = vunpack.c.l.b16 %v1256
      %v1485 = vunpack.c.h.b16 %v1256
      %v1486 = vunpack.c.l.b16 %v1257
      %v1487 = vunpack.c.h.b16 %v1257
      %v1488 = vunpack.c.l.b16 %v1258
      %v1489 = vunpack.c.h.b16 %v1258
      %v1490 = vunpack.c.l.b16 %v1259
      %v1491 = vunpack.c.h.b16 %v1259
      %v1492 = vunpack.c.l.b16 %v1260
      %v1493 = vunpack.c.h.b16 %v1260
      %v1494 = vunpack.c.l.b16 %v1261
      %v1495 = vunpack.c.h.b16 %v1261
      %v1496 = vunpack.c.l.b16 %v1262
      %v1497 = vunpack.c.h.b16 %v1262
      %v1498 = vunpack.c.l.b16 %v1263
      %v1499 = vunpack.c.h.b16 %v1263
      %v1500 = vunpack.c.l.b16 %v1264
      %v1501 = vunpack.c.h.b16 %v1264
      %v1502 = vunpack.c.l.b16 %v1265
      %v1503 = vunpack.c.h.b16 %v1265
      %v1504 = vunpack.c.l.b16 %v1266
      %v1505 = vunpack.c.h.b16 %v1266
      %v1506 = vunpack.c.l.b16 %v1267
      %v1507 = vunpack.c.h.b16 %v1267
      %v1508 = vunpack.c.l.b16 %v1268
      %v1509 = vunpack.c.h.b16 %v1268
      %v1510 = vunpack.c.l.b16 %v1269
      %v1511 = vunpack.c.h.b16 %v1269
      %v1512 = vunpack.c.l.b16 %v1270
      %v1513 = vunpack.c.h.b16 %v1270
      %v1514 = vunpack.c.l.b16 %v1271
      %v1515 = vunpack.c.h.b16 %v1271
      %v1516 = vunpack.c.l.b16 %v1272
      %v1517 = vunpack.c.h.b16 %v1272
      %v1518 = vunpack.c.l.b16 %v1273
      %v1519 = vunpack.c.h.b16 %v1273
      %v1520 = vunpack.c.l.b16 %v1274
      %v1521 = vunpack.c.h.b16 %v1274
      %v1522 = vunpack.c.l.b16 %v1275
      %v1523 = vunpack.c.h.b16 %v1275
      %v1524 = vunpack.c.l.b16 %v1276
      %v1525 = vunpack.c.h.b16 %v1276
      %v1526 = vunpack.c.l.b16 %v1277
      %v1527 = vunpack.c.h.b16 %v1277
      %v1528 = vunpack.c.l.b16 %v1278
      %v1529 = vunpack.c.h.b16 %v1278
      %v1530 = vunpack.c.l.b16 %v1279
      %v1531 = vunpack.c.h.b16 %v1279
      %v1532 = vunpack.c.l.b16 %v1280
      %v1533 = vunpack.c.h.b16 %v1280
      %v1534 = vunpack.c.l.b16 %v1281
      %v1535 = vunpack.c.h.b16 %v1281
      %v1536 = vunpack.c.l.b16 %v1282
      %v1537 = vunpack.c.h.b16 %v1282
      %v1538 = vunpack.c.l.b16 %v1283
      %v1539 = vunpack.c.h.b16 %v1283
      %v1540 = vunpack.c.l.b16 %v1284
      %v1541 = vunpack.c.h.b16 %v1284
      %v1542 = vunpack.c.l.b16 %v1285
      %v1543 = vunpack.c.h.b16 %v1285
      %v1544 = vunpack.c.l.b16 %v1286
      %v1545 = vunpack.c.h.b16 %v1286
      %v1546 = vunpack.c.l.b16 %v1287
      %v1547 = vunpack.c.h.b16 %v1287
      %v1548 = vunpack.c.l.b16 %v1288
      %v1549 = vunpack.c.h.b16 %v1288
      %v1550 = vunpack.c.l.b16 %v1289
      %v1551 = vunpack.c.h.b16 %v1289
      %v1552 = vunpack.c.l.b16 %v1290
      %v1553 = vunpack.c.h.b16 %v1290
      %v1554 = vunpack.c.l.b16 %v1291
      %v1555 = vunpack.c.h.b16 %v1291
      %v1556 = vunpack.c.l.b16 %v1292
      %v1557 = vunpack.c.h.b16 %v1292
      %v1558 = vunpack.c.l.b16 %v1293
      %v1559 = vunpack.c.h.b16 %v1293
      %v1560 = vunpack.c.l.b16 %v1294
      %v1561 = vunpack.c.h.b16 %v1294
      %v1562 = vunpack.c.l.b16 %v1295
      %v1563 = vunpack.c.h.b16 %v1295
      %v1564 = vunpack.c.l.b16 %v1296
      %v1565 = vunpack.c.h.b16 %v1296
      %v1566 = vunpack.c.l.b16 %v1297
      %v1567 = vunpack.c.h.b16 %v1297
      %v1568 = vunpack.c.l.b16 %v1298
      %v1569 = vunpack.c.h.b16 %v1298
      %v1570 = vunpack.c.l.b16 %v1299
      %v1571 = vunpack.c.h.b16 %v1299
      %v1572 = vunpack.c.l.b16 %v1300
      %v1573 = vunpack.c.h.b16 %v1300
      %v1574 = vunpack.c.l.b16 %v1301
      %v1575 = vunpack.c.h.b16 %v1301
      %v1576 = vunpack.c.l.b16 %v1302
      %v1577 = vunpack.c.h.b16 %v1302
      %v1578 = vunpack.c.l.b16 %v1303
      %v1579 = vunpack.c.h.b16 %v1303
      %v1580 = vunpack.c.l.b16 %v1304
      %v1581 = vunpack.c.h.b16 %v1304
      %v1582 = vunpack.c.l.b16 %v1305
      %v1583 = vunpack.c.h.b16 %v1305
      %v1584 = vunpack.c.l.b16 %v1306
      %v1585 = vunpack.c.h.b16 %v1306
      %v1586 = vunpack.c.l.b16 %v1307
      %v1587 = vunpack.c.h.b16 %v1307
      %v1588 = vunpack.c.l.b16 %v1308
      %v1589 = vunpack.c.h.b16 %v1308
      %v1590 = vunpack.c.l.b16 %v1309
      %v1591 = vunpack.c.h.b16 %v1309
      %v1592 = vunpack.c.l.b16 %v1310
      %v1593 = vunpack.c.h.b16 %v1310
      %v1594 = vunpack.c.l.b16 %v1311
      %v1595 = vunpack.c.h.b16 %v1311
      %v1596 = vunpack.c.l.b16 %v1312
      %v1597 = vunpack.c.h.b16 %v1312
      %v1598 = vunpack.c.l.b16 %v1313
      %v1599 = vunpack.c.h.b16 %v1313
      %v1600 = vunpack.c.l.b16 %v1314
      %v1601 = vunpack.c.h.b16 %v1314
      %v1602 = vunpack.c.l.b16 %v1315
      %v1603 = vunpack.c.h.b16 %v1315
      %v1604 = vpack.c.b16 %v1414, %v1412
      %v1605 = vpack.c.b16 %v1415, %v1413
      %v1606 = vpack.c.b16 %v1418, %v1416
      %v1607 = vpack.c.b16 %v1419, %v1417
      %v1608 = vpack.c.b16 %v1422, %v1420
      %v1609 = vpack.c.b16 %v1423, %v1421
      %v1610 = vpack.c.b16 %v1426, %v1424
      %v1611 = vpack.c.b16 %v1427, %v1425
      %v1612 = vpack.c.b16 %v1430, %v1428
      %v1613 = vpack.c.b16 %v1431, %v1429
      %v1614 = vpack.c.b16 %v1434, %v1432
      %v1615 = vpack.c.b16 %v1435, %v1433
      %v1616 = vpack.c.b16 %v1438, %v1436
      %v1617 = vpack.c.b16 %v1439, %v1437
      %v1618 = vpack.c.b16 %v1442, %v1440
      %v1619 = vpack.c.b16 %v1443, %v1441
      %v1620 = vpack.c.b16 %v1446, %v1444
      %v1621 = vpack.c.b16 %v1447, %v1445
      %v1622 = vpack.c.b16 %v1450, %v1448
      %v1623 = vpack.c.b16 %v1451, %v1449
      %v1624 = vpack.c.b16 %v1454, %v1452
      %v1625 = vpack.c.b16 %v1455, %v1453
      %v1626 = vpack.c.b16 %v1458, %v1456
      %v1627 = vpack.c.b16 %v1459, %v1457
      %v1628 = vpack.c.b16 %v1462, %v1460
      %v1629 = vpack.c.b16 %v1463, %v1461
      %v1630 = vpack.c.b16 %v1466, %v1464
      %v1631 = vpack.c.b16 %v1467, %v1465
      %v1632 = vpack.c.b16 %v1470, %v1468
      %v1633 = vpack.c.b16 %v1471, %v1469
      %v1634 = vpack.c.b16 %v1474, %v1472
      %v1635 = vpack.c.b16 %v1475, %v1473
      %v1636 = vpack.c.b16 %v1478, %v1476
      %v1637 = vpack.c.b16 %v1479, %v1477
      %v1638 = vpack.c.b16 %v1482, %v1480
      %v1639 = vpack.c.b16 %v1483, %v1481
      %v1640 = vpack.c.b16 %v1486, %v1484
      %v1641 = vpack.c.b16 %v1487, %v1485
      %v1642 = vpack.c.b16 %v1490, %v1488
      %v1643 = vpack.c.b16 %v1491, %v1489
      %v1644 = vpack.c.b16 %v1494, %v1492
      %v1645 = vpack.c.b16 %v1495, %v1493
      %v1646 = vpack.c.b16 %v1498, %v1496
      %v1647 = vpack.c.b16 %v1499, %v1497
      %v1648 = vpack.c.b16 %v1502, %v1500
      %v1649 = vpack.c.b16 %v1503, %v1501
      %v1650 = vpack.c.b16 %v1506, %v1504
      %v1651 = vpack.c.b16 %v1507, %v1505
      %v1652 = vpack.c.b16 %v1510, %v1508
      %v1653 = vpack.c.b16 %v1511, %v1509
      %v1654 = vpack.c.b16 %v1514, %v1512
      %v1655 = vpack.c.b16 %v1515, %v1513
      %v1656 = vpack.c.b16 %v1518, %v1516
      %v1657 = vpack.c.b16 %v1519, %v1517
      %v1658 = vpack.c.b16 %v1522, %v1520
      %v1659 = vpack.c.b16 %v1523, %v1521
      %v1660 = vpack.c.b16 %v1526, %v1524
      %v1661 = vpack.c.b16 %v1527, %v1525
      %v1662 = vpack.c.b16 %v1530, %v1528
      %v1663 = vpack.c.b16 %v1531, %v1529
      %v1664 = vpack.c.b16 %v1534, %v1532
      %v1665 = vpack.c.b16 %v1535, %v1533
      %v1666 = vpack.c.b16 %v1538, %v1536
      %v1667 = vpack.c.b16 %v1539, %v1537
      %v1668 = vpack.c.b16 %v1542, %v1540
      %v1669 = vpack.c.b16 %v1543, %v1541
      %v1670 = vpack.c.b16 %v1546, %v1544
      %v1671 = vpack.c.b16 %v1547, %v1545
      %v1672 = vpack.c.b16 %v1550, %v1548
      %v1673 = vpack.c.b16 %v1551, %v1549
      %v1674 = vpack.c.b16 %v1554, %v1552
      %v1675 = vpack.c.b16 %v1555, %v1553
      %v1676 = vpack.c.b16 %v1558, %v1556
      %v1677 = vpack.c.b16 %v1559, %v1557
      %v1678 = vpack.c.b16 %v1562, %v1560
      %v1679 = vpack.c.b16 %v1563, %v1561
      %v1680 = vpack.c.b16 %v1566, %v1564
      %v1681 = vpack.c.b16 %v1567, %v1565
      %v1682 = vpack.c.b16 %v1570, %v1568
      %v1683 = vpack.c.b16 %v1571, %v1569
      %v1684 = vpack.c.b16 %v1574, %v1572
      %v1685 = vpack.c.b16 %v1575, %v1573
      %v1686 = vpack.c.b16 %v1578, %v1576
      %v1687 = vpack.c.b16 %v1579, %v1577
      %v1688 = vpack.c.b16 %v1582, %v1580
      %v1689 = vpack.c.b16 %v1583, %v1581
      %v1690 = vpack.c.b16 %v1586, %v1584
      %v1691 = vpack.c.b16 %v1587, %v1585
      %v1692 = vpack.c.b16 %v1590, %v1588
      %v1693 = vpack.c.b16 %v1591, %v1589
      %v1694 = vpack.c.b16 %v1594, %v1592
      %v1695 = vpack.c.b16 %v1595, %v1593
      %v1696 = vpack.c.b16 %v1598, %v1596
      %v1697 = vpack.c.b16 %v1599, %v1597
      %v1698 = vpack.c.b16 %v1602, %v1600
      %v1699 = vpack.c.b16 %v1603, %v1601
      %1796 = vmatpush.bf16.msra.mxu0 %v1618
      %1797 = vmatpush.bf16.msra.mxu0 %v1616
      %1798 = vmatpush.bf16.msra.mxu0 %v1614
      %1799 = vmatpush.bf16.msra.mxu0 %v1612
      %1800 = vmatpush.bf16.msra.mxu0 %v1610
      %1801 = vmatpush.bf16.msra.mxu0 %v1608
      %1802 = vmatpush.bf16.msra.mxu0 %v1606
      %1803 = vmatpush.bf16.msra.mxu0 %v1604
      %1804 = vmatmul.bf16.gmra.mxu0 %v1196
      %v1805 = vpop.f32.mrf.mxu0
      %v1806 = vadd.f32 0.0, %v1805
      %v1807 = vpop.f32.mrf.mxu0
      %v1808 = vadd.f32 0.0, %v1807
      %1809 = vmatmul.bf16.gmra.mxu0 %v1202
      %v1810 = vpop.f32.mrf.mxu0
      %v1811 = vadd.f32 0.0, %v1810
      %v1812 = vpop.f32.mrf.mxu0
      %v1813 = vadd.f32 0.0, %v1812
      %1814 = vmatmul.bf16.gmra.mxu0 %v1208
      %v1815 = vpop.f32.mrf.mxu0
      %v1816 = vadd.f32 0.0, %v1815
      %v1817 = vpop.f32.mrf.mxu0
      %v1818 = vadd.f32 0.0, %v1817
      %1819 = vmatmul.bf16.gmra.mxu0 %v1214
      %v1820 = vpop.f32.mrf.mxu0
      %v1821 = vadd.f32 0.0, %v1820
      %v1822 = vpop.f32.mrf.mxu0
      %v1823 = vadd.f32 0.0, %v1822
      %1824 = vdwg.mxu0
      %1825 = vmatpush.bf16.msra.mxu0 %v1634
      %1826 = vmatpush.bf16.msra.mxu0 %v1632
      %1827 = vmatpush.bf16.msra.mxu0 %v1630
      %1828 = vmatpush.bf16.msra.mxu0 %v1628
      %1829 = vmatpush.bf16.msra.mxu0 %v1626
      %1830 = vmatpush.bf16.msra.mxu0 %v1624
      %1831 = vmatpush.bf16.msra.mxu0 %v1622
      %1832 = vmatpush.bf16.msra.mxu0 %v1620
      %1833 = vmatmul.bf16.gmra.mxu0 %v1197
      %v1834 = vpop.f32.mrf.mxu0
      %v1835 = vadd.f32 %v1806, %v1834
      %v1836 = vpop.f32.mrf.mxu0
      %v1837 = vadd.f32 %v1808, %v1836
      %1838 = vmatmul.bf16.gmra.mxu0 %v1203
      %v1839 = vpop.f32.mrf.mxu0
      %v1840 = vadd.f32 %v1811, %v1839
      %v1841 = vpop.f32.mrf.mxu0
      %v1842 = vadd.f32 %v1813, %v1841
      %1843 = vmatmul.bf16.gmra.mxu0 %v1209
      %v1844 = vpop.f32.mrf.mxu0
      %v1845 = vadd.f32 %v1816, %v1844
      %v1846 = vpop.f32.mrf.mxu0
      %v1847 = vadd.f32 %v1818, %v1846
      %1848 = vmatmul.bf16.gmra.mxu0 %v1215
      %v1849 = vpop.f32.mrf.mxu0
      %v1850 = vadd.f32 %v1821, %v1849
      %v1851 = vpop.f32.mrf.mxu0
      %v1852 = vadd.f32 %v1823, %v1851
      %1853 = vdwg.mxu0
      %1854 = vmatpush.bf16.msra.mxu0 %v1650
      %1855 = vmatpush.bf16.msra.mxu0 %v1648
      %1856 = vmatpush.bf16.msra.mxu0 %v1646
      %1857 = vmatpush.bf16.msra.mxu0 %v1644
      %1858 = vmatpush.bf16.msra.mxu0 %v1642
      %1859 = vmatpush.bf16.msra.mxu0 %v1640
      %1860 = vmatpush.bf16.msra.mxu0 %v1638
      %1861 = vmatpush.bf16.msra.mxu0 %v1636
      %1862 = vmatmul.bf16.gmra.mxu0 %v1198
      %v1863 = vpop.f32.mrf.mxu0
      %v1864 = vadd.f32 %v1835, %v1863
      %v1865 = vpop.f32.mrf.mxu0
      %v1866 = vadd.f32 %v1837, %v1865
      %1867 = vmatmul.bf16.gmra.mxu0 %v1204
      %v1868 = vpop.f32.mrf.mxu0
      %v1869 = vadd.f32 %v1840, %v1868
      %v1870 = vpop.f32.mrf.mxu0
      %v1871 = vadd.f32 %v1842, %v1870
      %1872 = vmatmul.bf16.gmra.mxu0 %v1210
      %v1873 = vpop.f32.mrf.mxu0
      %v1874 = vadd.f32 %v1845, %v1873
      %v1875 = vpop.f32.mrf.mxu0
      %v1876 = vadd.f32 %v1847, %v1875
      %1877 = vmatmul.bf16.gmra.mxu0 %v1216
      %v1878 = vpop.f32.mrf.mxu0
      %v1879 = vadd.f32 %v1850, %v1878
      %v1880 = vpop.f32.mrf.mxu0
      %v1881 = vadd.f32 %v1852, %v1880
      %1882 = vdwg.mxu0
      %1883 = vmatpush.bf16.msra.mxu0 %v1666
      %1884 = vmatpush.bf16.msra.mxu0 %v1664
      %1885 = vmatpush.bf16.msra.mxu0 %v1662
      %1886 = vmatpush.bf16.msra.mxu0 %v1660
      %1887 = vmatpush.bf16.msra.mxu0 %v1658
      %1888 = vmatpush.bf16.msra.mxu0 %v1656
      %1889 = vmatpush.bf16.msra.mxu0 %v1654
      %1890 = vmatpush.bf16.msra.mxu0 %v1652
      %1891 = vmatmul.bf16.gmra.mxu0 %v1199
      %v1892 = vpop.f32.mrf.mxu0
      %v1893 = vadd.f32 %v1864, %v1892
      %v1894 = vpop.f32.mrf.mxu0
      %v1895 = vadd.f32 %v1866, %v1894
      %1896 = vmatmul.bf16.gmra.mxu0 %v1205
      %v1897 = vpop.f32.mrf.mxu0
      %v1898 = vadd.f32 %v1869, %v1897
      %v1899 = vpop.f32.mrf.mxu0
      %v1900 = vadd.f32 %v1871, %v1899
      %1901 = vmatmul.bf16.gmra.mxu0 %v1211
      %v1902 = vpop.f32.mrf.mxu0
      %v1903 = vadd.f32 %v1874, %v1902
      %v1904 = vpop.f32.mrf.mxu0
      %v1905 = vadd.f32 %v1876, %v1904
      %1906 = vmatmul.bf16.gmra.mxu0 %v1217
      %v1907 = vpop.f32.mrf.mxu0
      %v1908 = vadd.f32 %v1879, %v1907
      %v1909 = vpop.f32.mrf.mxu0
      %v1910 = vadd.f32 %v1881, %v1909
      %1911 = vdwg.mxu0
      %1912 = vmatpush.bf16.msra.mxu0 %v1682
      %1913 = vmatpush.bf16.msra.mxu0 %v1680
      %1914 = vmatpush.bf16.msra.mxu0 %v1678
      %1915 = vmatpush.bf16.msra.mxu0 %v1676
      %1916 = vmatpush.bf16.msra.mxu0 %v1674
      %1917 = vmatpush.bf16.msra.mxu0 %v1672
      %1918 = vmatpush.bf16.msra.mxu0 %v1670
      %1919 = vmatpush.bf16.msra.mxu0 %v1668
      %1920 = vmatmul.bf16.gmra.mxu0 %v1200
      %v1921 = vpop.f32.mrf.mxu0
      %v1922 = vadd.f32 %v1893, %v1921
      %v1923 = vpop.f32.mrf.mxu0
      %v1924 = vadd.f32 %v1895, %v1923
      %1925 = vmatmul.bf16.gmra.mxu0 %v1206
      %v1926 = vpop.f32.mrf.mxu0
      %v1927 = vadd.f32 %v1898, %v1926
      %v1928 = vpop.f32.mrf.mxu0
      %v1929 = vadd.f32 %v1900, %v1928
      %1930 = vmatmul.bf16.gmra.mxu0 %v1212
      %v1931 = vpop.f32.mrf.mxu0
      %v1932 = vadd.f32 %v1903, %v1931
      %v1933 = vpop.f32.mrf.mxu0
      %v1934 = vadd.f32 %v1905, %v1933
      %1935 = vmatmul.bf16.gmra.mxu0 %v1218
      %v1936 = vpop.f32.mrf.mxu0
      %v1937 = vadd.f32 %v1908, %v1936
      %v1938 = vpop.f32.mrf.mxu0
      %v1939 = vadd.f32 %v1910, %v1938
      %1940 = vdwg.mxu0
      %1941 = vmatpush.bf16.msra.mxu0 %v1698
      %1942 = vmatpush.bf16.msra.mxu0 %v1696
      %1943 = vmatpush.bf16.msra.mxu0 %v1694
      %1944 = vmatpush.bf16.msra.mxu0 %v1692
      %1945 = vmatpush.bf16.msra.mxu0 %v1690
      %1946 = vmatpush.bf16.msra.mxu0 %v1688
      %1947 = vmatpush.bf16.msra.mxu0 %v1686
      %1948 = vmatpush.bf16.msra.mxu0 %v1684
      %1949 = vmatmul.bf16.gmra.mxu0 %v1201
      %v1950 = vpop.f32.mrf.mxu0
      %v1951 = vadd.f32 %v1922, %v1950
      %v1952 = vpop.f32.mrf.mxu0
      %v1953 = vadd.f32 %v1924, %v1952
      %1954 = vmatmul.bf16.gmra.mxu0 %v1207
      %v1955 = vpop.f32.mrf.mxu0
      %v1956 = vadd.f32 %v1927, %v1955
      %v1957 = vpop.f32.mrf.mxu0
      %v1958 = vadd.f32 %v1929, %v1957
      %1959 = vmatmul.bf16.gmra.mxu0 %v1213
      %v1960 = vpop.f32.mrf.mxu0
      %v1961 = vadd.f32 %v1932, %v1960
      %v1962 = vpop.f32.mrf.mxu0
      %v1963 = vadd.f32 %v1934, %v1962
      %1964 = vmatmul.bf16.gmra.mxu0 %v1219
      %v1965 = vpop.f32.mrf.mxu0
      %v1966 = vadd.f32 %v1937, %v1965
      %v1967 = vpop.f32.mrf.mxu0
      %v1968 = vadd.f32 %v1939, %v1967
      %1969 = vdwg.mxu0
      %1970 = vmatpush.bf16.msra.mxu0 %v1619
      %1971 = vmatpush.bf16.msra.mxu0 %v1617
      %1972 = vmatpush.bf16.msra.mxu0 %v1615
      %1973 = vmatpush.bf16.msra.mxu0 %v1613
      %1974 = vmatpush.bf16.msra.mxu0 %v1611
      %1975 = vmatpush.bf16.msra.mxu0 %v1609
      %1976 = vmatpush.bf16.msra.mxu0 %v1607
      %1977 = vmatpush.bf16.msra.mxu0 %v1605
      %1978 = vmatmul.bf16.gmra.mxu0 %v1196
      %v1979 = vpop.f32.mrf.mxu0
      %v1980 = vadd.f32 0.0, %v1979
      %v1981 = vpop.f32.mrf.mxu0
      %v1982 = vadd.f32 0.0, %v1981
      %1983 = vmatmul.bf16.gmra.mxu0 %v1202
      %v1984 = vpop.f32.mrf.mxu0
      %v1985 = vadd.f32 0.0, %v1984
      %v1986 = vpop.f32.mrf.mxu0
      %v1987 = vadd.f32 0.0, %v1986
      %1988 = vmatmul.bf16.gmra.mxu0 %v1208
      %v1989 = vpop.f32.mrf.mxu0
      %v1990 = vadd.f32 0.0, %v1989
      %v1991 = vpop.f32.mrf.mxu0
      %v1992 = vadd.f32 0.0, %v1991
      %1993 = vmatmul.bf16.gmra.mxu0 %v1214
      %v1994 = vpop.f32.mrf.mxu0
      %v1995 = vadd.f32 0.0, %v1994
      %v1996 = vpop.f32.mrf.mxu0
      %v1997 = vadd.f32 0.0, %v1996
      %1998 = vdwg.mxu0
      %1999 = vmatpush.bf16.msra.mxu0 %v1635
      %2000 = vmatpush.bf16.msra.mxu0 %v1633
      %2001 = vmatpush.bf16.msra.mxu0 %v1631
      %2002 = vmatpush.bf16.msra.mxu0 %v1629
      %2003 = vmatpush.bf16.msra.mxu0 %v1627
      %2004 = vmatpush.bf16.msra.mxu0 %v1625
      %2005 = vmatpush.bf16.msra.mxu0 %v1623
      %2006 = vmatpush.bf16.msra.mxu0 %v1621
      %2007 = vmatmul.bf16.gmra.mxu0 %v1197
      %v2008 = vpop.f32.mrf.mxu0
      %v2009 = vadd.f32 %v1980, %v2008
      %v2010 = vpop.f32.mrf.mxu0
      %v2011 = vadd.f32 %v1982, %v2010
      %2012 = vmatmul.bf16.gmra.mxu0 %v1203
      %v2013 = vpop.f32.mrf.mxu0
      %v2014 = vadd.f32 %v1985, %v2013
      %v2015 = vpop.f32.mrf.mxu0
      %v2016 = vadd.f32 %v1987, %v2015
      %2017 = vmatmul.bf16.gmra.mxu0 %v1209
      %v2018 = vpop.f32.mrf.mxu0
      %v2019 = vadd.f32 %v1990, %v2018
      %v2020 = vpop.f32.mrf.mxu0
      %v2021 = vadd.f32 %v1992, %v2020
      %2022 = vmatmul.bf16.gmra.mxu0 %v1215
      %v2023 = vpop.f32.mrf.mxu0
      %v2024 = vadd.f32 %v1995, %v2023
      %v2025 = vpop.f32.mrf.mxu0
      %v2026 = vadd.f32 %v1997, %v2025
      %2027 = vdwg.mxu0
      %2028 = vmatpush.bf16.msra.mxu0 %v1651
      %2029 = vmatpush.bf16.msra.mxu0 %v1649
      %2030 = vmatpush.bf16.msra.mxu0 %v1647
      %2031 = vmatpush.bf16.msra.mxu0 %v1645
      %2032 = vmatpush.bf16.msra.mxu0 %v1643
      %2033 = vmatpush.bf16.msra.mxu0 %v1641
      %2034 = vmatpush.bf16.msra.mxu0 %v1639
      %2035 = vmatpush.bf16.msra.mxu0 %v1637
      %2036 = vmatmul.bf16.gmra.mxu0 %v1198
      %v2037 = vpop.f32.mrf.mxu0
      %v2038 = vadd.f32 %v2009, %v2037
      %v2039 = vpop.f32.mrf.mxu0
      %v2040 = vadd.f32 %v2011, %v2039
      %2041 = vmatmul.bf16.gmra.mxu0 %v1204
      %v2042 = vpop.f32.mrf.mxu0
      %v2043 = vadd.f32 %v2014, %v2042
      %v2044 = vpop.f32.mrf.mxu0
      %v2045 = vadd.f32 %v2016, %v2044
      %2046 = vmatmul.bf16.gmra.mxu0 %v1210
      %v2047 = vpop.f32.mrf.mxu0
      %v2048 = vadd.f32 %v2019, %v2047
      %v2049 = vpop.f32.mrf.mxu0
      %v2050 = vadd.f32 %v2021, %v2049
      %2051 = vmatmul.bf16.gmra.mxu0 %v1216
      %v2052 = vpop.f32.mrf.mxu0
      %v2053 = vadd.f32 %v2024, %v2052
      %v2054 = vpop.f32.mrf.mxu0
      %v2055 = vadd.f32 %v2026, %v2054
      %2056 = vdwg.mxu0
      %2057 = vmatpush.bf16.msra.mxu0 %v1667
      %2058 = vmatpush.bf16.msra.mxu0 %v1665
      %2059 = vmatpush.bf16.msra.mxu0 %v1663
      %2060 = vmatpush.bf16.msra.mxu0 %v1661
      %2061 = vmatpush.bf16.msra.mxu0 %v1659
      %2062 = vmatpush.bf16.msra.mxu0 %v1657
      %2063 = vmatpush.bf16.msra.mxu0 %v1655
      %2064 = vmatpush.bf16.msra.mxu0 %v1653
      %2065 = vmatmul.bf16.gmra.mxu0 %v1199
      %v2066 = vpop.f32.mrf.mxu0
      %v2067 = vadd.f32 %v2038, %v2066
      %v2068 = vpop.f32.mrf.mxu0
      %v2069 = vadd.f32 %v2040, %v2068
      %2070 = vmatmul.bf16.gmra.mxu0 %v1205
      %v2071 = vpop.f32.mrf.mxu0
      %v2072 = vadd.f32 %v2043, %v2071
      %v2073 = vpop.f32.mrf.mxu0
      %v2074 = vadd.f32 %v2045, %v2073
      %2075 = vmatmul.bf16.gmra.mxu0 %v1211
      %v2076 = vpop.f32.mrf.mxu0
      %v2077 = vadd.f32 %v2048, %v2076
      %v2078 = vpop.f32.mrf.mxu0
      %v2079 = vadd.f32 %v2050, %v2078
      %2080 = vmatmul.bf16.gmra.mxu0 %v1217
      %v2081 = vpop.f32.mrf.mxu0
      %v2082 = vadd.f32 %v2053, %v2081
      %v2083 = vpop.f32.mrf.mxu0
      %v2084 = vadd.f32 %v2055, %v2083
      %2085 = vdwg.mxu0
      %2086 = vmatpush.bf16.msra.mxu0 %v1683
      %2087 = vmatpush.bf16.msra.mxu0 %v1681
      %2088 = vmatpush.bf16.msra.mxu0 %v1679
      %2089 = vmatpush.bf16.msra.mxu0 %v1677
      %2090 = vmatpush.bf16.msra.mxu0 %v1675
      %2091 = vmatpush.bf16.msra.mxu0 %v1673
      %2092 = vmatpush.bf16.msra.mxu0 %v1671
      %2093 = vmatpush.bf16.msra.mxu0 %v1669
      %2094 = vmatmul.bf16.gmra.mxu0 %v1200
      %v2095 = vpop.f32.mrf.mxu0
      %v2096 = vadd.f32 %v2067, %v2095
      %v2097 = vpop.f32.mrf.mxu0
      %v2098 = vadd.f32 %v2069, %v2097
      %2099 = vmatmul.bf16.gmra.mxu0 %v1206
      %v2100 = vpop.f32.mrf.mxu0
      %v2101 = vadd.f32 %v2072, %v2100
      %v2102 = vpop.f32.mrf.mxu0
      %v2103 = vadd.f32 %v2074, %v2102
      %2104 = vmatmul.bf16.gmra.mxu0 %v1212
      %v2105 = vpop.f32.mrf.mxu0
      %v2106 = vadd.f32 %v2077, %v2105
      %v2107 = vpop.f32.mrf.mxu0
      %v2108 = vadd.f32 %v2079, %v2107
      %2109 = vmatmul.bf16.gmra.mxu0 %v1218
      %v2110 = vpop.f32.mrf.mxu0
      %v2111 = vadd.f32 %v2082, %v2110
      %v2112 = vpop.f32.mrf.mxu0
      %v2113 = vadd.f32 %v2084, %v2112
      %2114 = vdwg.mxu0
      %2115 = vmatpush.bf16.msra.mxu0 %v1699
      %2116 = vmatpush.bf16.msra.mxu0 %v1697
      %2117 = vmatpush.bf16.msra.mxu0 %v1695
      %2118 = vmatpush.bf16.msra.mxu0 %v1693
      %2119 = vmatpush.bf16.msra.mxu0 %v1691
      %2120 = vmatpush.bf16.msra.mxu0 %v1689
      %2121 = vmatpush.bf16.msra.mxu0 %v1687
      %2122 = vmatpush.bf16.msra.mxu0 %v1685
      %2123 = vmatmul.bf16.gmra.mxu0 %v1201
      %v2124 = vpop.f32.mrf.mxu0
      %v2125 = vadd.f32 %v2096, %v2124
      %v2126 = vpop.f32.mrf.mxu0
      %v2127 = vadd.f32 %v2098, %v2126
      %2128 = vmatmul.bf16.gmra.mxu0 %v1207
      %v2129 = vpop.f32.mrf.mxu0
      %v2130 = vadd.f32 %v2101, %v2129
      %v2131 = vpop.f32.mrf.mxu0
      %v2132 = vadd.f32 %v2103, %v2131
      %2133 = vmatmul.bf16.gmra.mxu0 %v1213
      %v2134 = vpop.f32.mrf.mxu0
      %v2135 = vadd.f32 %v2106, %v2134
      %v2136 = vpop.f32.mrf.mxu0
      %v2137 = vadd.f32 %v2108, %v2136
      %2138 = vmatmul.bf16.gmra.mxu0 %v1219
      %v2139 = vpop.f32.mrf.mxu0
      %v2140 = vadd.f32 %v2111, %v2139
      %v2141 = vpop.f32.mrf.mxu0
      %v2142 = vadd.f32 %v2113, %v2141
      %2143 = vdwg.mxu0
      %v2144 = vld [vmem:[%s2] sm:$0x3]
      %v2146 = vperm.slane %v2144, 0
      %v2147 = vperm.slane %v2144, 1
      %v2150 = vmul.f32 %v1951, %v2146
      %v2151 = vmul.f32 %v2125, %v2147
      %v2152 = vmul.f32 %v1953, %v2146
      %v2153 = vmul.f32 %v2127, %v2147
      %v2154 = vmul.f32 %v1956, %v2146
      %v2155 = vmul.f32 %v2130, %v2147
      %v2156 = vmul.f32 %v1958, %v2146
      %v2157 = vmul.f32 %v2132, %v2147
      %v2158 = vmul.f32 %v1961, %v2146
      %v2159 = vmul.f32 %v2135, %v2147
      %v2160 = vmul.f32 %v1963, %v2146
      %v2161 = vmul.f32 %v2137, %v2147
      %v2162 = vmul.f32 %v1966, %v2146
      %v2163 = vmul.f32 %v2140, %v2147
      %v2164 = vmul.f32 %v1968, %v2146
      %v2165 = vmul.f32 %v2142, %v2147
      %v2166 = vld [vmem:[%s3] sm:$0x3]
      %v2168 = vperm.slane %v2166, 0
      %v2169 = vperm.slane %v2166, 1
      %v2172 = vadd.f32 %v2150, %v2168
      %v2173 = vadd.f32 %v2151, %v2169
      %v2174 = vadd.f32 %v2152, %v2168
      %v2175 = vadd.f32 %v2153, %v2169
      %v2176 = vadd.f32 %v2154, %v2168
      %v2177 = vadd.f32 %v2155, %v2169
      %v2178 = vadd.f32 %v2156, %v2168
      %v2179 = vadd.f32 %v2157, %v2169
      %v2180 = vadd.f32 %v2158, %v2168
      %v2181 = vadd.f32 %v2159, %v2169
      %v2182 = vadd.f32 %v2160, %v2168
      %v2183 = vadd.f32 %v2161, %v2169
      %v2184 = vadd.f32 %v2162, %v2168
      %v2185 = vadd.f32 %v2163, %v2169
      %v2186 = vadd.f32 %v2164, %v2168
      %v2187 = vadd.f32 %v2165, %v2169
      %v2188 = vmax.f32 %v2172, 0.0
      %v2189 = vmax.f32 %v2173, 0.0
      %v2190 = vmax.f32 %v2174, 0.0
      %v2191 = vmax.f32 %v2175, 0.0
      %v2192 = vmax.f32 %v2176, 0.0
      %v2193 = vmax.f32 %v2177, 0.0
      %v2194 = vmax.f32 %v2178, 0.0
      %v2195 = vmax.f32 %v2179, 0.0
      %v2196 = vmax.f32 %v2180, 0.0
      %v2197 = vmax.f32 %v2181, 0.0
      %v2198 = vmax.f32 %v2182, 0.0
      %v2199 = vmax.f32 %v2183, 0.0
      %v2200 = vmax.f32 %v2184, 0.0
      %v2201 = vmax.f32 %v2185, 0.0
      %v2202 = vmax.f32 %v2186, 0.0
      %v2203 = vmax.f32 %v2187, 0.0
      %v2204 = vpack.c.bf16 %v2189, %v2188
      %v2205 = vpack.c.bf16 %v2191, %v2190
      %v2206 = vpack.c.bf16 %v2193, %v2192
      %v2207 = vpack.c.bf16 %v2195, %v2194
      %v2208 = vpack.c.bf16 %v2197, %v2196
      %v2209 = vpack.c.bf16 %v2199, %v2198
      %v2210 = vpack.c.bf16 %v2201, %v2200
      %v2211 = vpack.c.bf16 %v2203, %v2202
      %vm2212 = vcmask 1043456
      %vm2213 = vcmask 523268
      %vm2214 = vmor %vm2213, %vm2212
      %2215 = vst.msk [vmem:[%s197] sm:$0xff] %vm2214, %v2204
      %2216 = vst.msk [vmem:[%s197 + $0x8] sm:$0xff] %vm2214, %v2205
      %2217 = vst.msk [vmem:[%s197 + $0x10] sm:$0xff] %vm2214, %v2206
      %2218 = vst.msk [vmem:[%s197 + $0x18] sm:$0xff] %vm2214, %v2207
      %2219 = vst.msk [vmem:[%s197 + $0x20] sm:$0xff] %vm2214, %v2208
      %2220 = vst.msk [vmem:[%s197 + $0x28] sm:$0xff] %vm2214, %v2209
      %2221 = vst.msk [vmem:[%s197 + $0x30] sm:$0xff] %vm2214, %v2210
      %2222 = vst.msk [vmem:[%s197 + $0x38] sm:$0xff] %vm2214, %v2211
      %p2223 = scmp.lt.s32.totalorder %s15, 1
      %s2224 = scalar_select %p2223, %s15, 1
      %s2225 = smul.addr %s2224, 16
      %s2226 = smul.addr %s2225, 4
      %s2227 = scalar_lea.vmem %s4, %s2226
      // Predicated region
      $region37: #{block2_module_b.15} parent=35 // pred_check
        %p2228 = pneg %p122
      $region38: #{block2_module_b.15} parent=35 // pred_check_branch
        %2230 = sbr.rel (%p2228) target = $region40
      $region39: #{block2_module_b.15} parent=35 // pred_region
        _
      $region40: #{block2_module_b.15} parent=35 // pred_fallthru
        _
    $region36: #{block2_module_b.15} parent=5 // pred_fallthru
      _
    %p2231 = scmp.le.s32.totalorder 2, %s10
    // Predicated region
    $region41: #{block2_module_b.15} parent=5 // pred_check
      %p2232 = pneg %p2231
    $region42: #{block2_module_b.15} parent=5 // pred_check_branch
      %2234 = sbr.rel (%p2232) target = $region44
    $region43: #{block2_module_b.15} parent=5 // pred_region
      %s2235 = ssub.s32 %s10, 2
      // Predicated region
      $region45: #{block2_module_b.15} parent=43 // pred_check
        %p2236 = pneg %p128
      $region46: #{block2_module_b.15} parent=43 // pred_check_branch
        %2238 = sbr.rel (%p2236) target = $region48
      $region47: #{block2_module_b.15} parent=43 // pred_region
        %p2239 = scmp.lt.s32.totalorder %s16, 1
        %s2240 = scalar_select %p2239, %s16, 1
        %s2241 = smul.addr %s2240, 16
        %s2242 = smul.addr %s2241, 4
        %s2243 = scalar_lea.vmem %s4, %s2242
      $region48: #{block2_module_b.15} parent=43 // pred_fallthru
        _
    $region44: #{block2_module_b.15} parent=5 // pred_fallthru
      _
  $region6: #{block2_module_b.15} parent=0 // loop_footer
    %s14 = sadd.s32 1, %s10
  $region7: #{block2_module_b.15} parent=0 // loop_footer_branch
    %9 = sbr.rel target = $region3
  $region8: #{block2_module_b.15} parent=0 // loop_exit
    _

</llo_original>
